<compile_context>
chip_gen: v5e
topology: v5e:2x2
jax: 0.10.0
libtpu: 0.0.40
codegen_flags: <defaults>
</compile_context>

<pallas_src>
import functools

import jax
import jax.numpy as jnp
import numpy as np
from jax import lax
from jax.experimental import pallas as pl
from jax.experimental.pallas import tpu as pltpu

_LANES = 128
_MXU_MIN_K = 16   # below this contraction depth, VPU broadcast-FMAs beat the MXU


def _round_up(x, m):
    return (x + m - 1) // m * m


@functools.lru_cache(maxsize=None)
def _vmem_capacity_bytes():
    try:
        cap = getattr(pltpu.get_tpu_info(), "vmem_capacity_bytes", None)
        if cap:
            return int(cap)
    except Exception:
        pass
    return 64 * 1024 * 1024          # conservative default (v7x-sized)


def _compiler_params(block_bytes, scratch_bytes=0, dims=("parallel",)):
    # Generation-aware scoped-VMEM budget: never more than 75% of physical VMEM
    # (~48 MiB on v7x, ~96 MiB on v5e/v6e), never below what the blocks need.
    need = 2 * block_bytes + scratch_bytes
    cap = _vmem_capacity_bytes()
    limit = int(min(max(2 * need, 16 * 1024 * 1024), (3 * cap) // 4))
    return pltpu.CompilerParams(dimension_semantics=dims,
                                vmem_limit_bytes=limit)


def _accum_outer(acc, w_blk, x_blk, use_mxu):
    """acc (Co,S) += w_blk (Co,K) @ x_blk (K,S).

    MXU contraction when K is big enough to feed it; unrolled VPU
    broadcast-FMAs otherwise (tiny K would starve the MXU)."""
    if use_mxu:
        return acc + jnp.dot(w_blk, x_blk, preferred_element_type=jnp.float32)
    for c in range(w_blk.shape[1]):
        acc = acc + w_blk[:, c:c + 1] * x_blk[c:c + 1, :]
    return acc


# ----------------------------------------------------------------------------
# Kernel 1: ConvTranspose2d kernel=2, stride=2 (phase-major output).
# Batch * spatial is packed onto lanes so the output store is lane-dense.
# ----------------------------------------------------------------------------
def _upconv2x2_kernel(x_ref, w_ref, b_ref, o_ref, *, use_mxu):
    # x: (Cin, TB) lane tile over batch*spatial; w: (4*C1, Cin); b: (4*C1, 1)
    x = x_ref[...]
    w = w_ref[...]
    acc = jnp.broadcast_to(b_ref[...], (w.shape[0], x.shape[1])).astype(jnp.float32)
    acc = _accum_outer(acc, w, x, use_mxu)
    o_ref[...] = acc.astype(o_ref.dtype)


def conv_transpose_2x2_s2(x1, wt, bt):
    """x1: (N, Cin, Hh, Wh) NCHW; wt: torch layout (Cin, C1, 2, 2); bt: (C1,)."""
    N, Cin, Hh, Wh = x1.shape
    C1 = wt.shape[1]
    R = 4 * C1
    L_raw = N * Hh * Wh
    Lw = _round_up(L_raw, _LANES)            # lane-dense output width

    w_r = jnp.transpose(wt, (1, 2, 3, 0)).reshape(R, Cin)   # rows (co, a, b)
    b_r = jnp.repeat(bt, 4).reshape(R, 1)

    # pack batch*spatial onto lanes (transpose of the smallest tensor involved)
    x_r = jnp.transpose(x1, (1, 0, 2, 3)).reshape(Cin, L_raw)
    if Lw != L_raw:
        x_r = jnp.pad(x_r, ((0, 0), (0, Lw - L_raw)))        # tiny wrapper pad

    TB = 512 if Lw % 512 == 0 else (256 if Lw % 256 == 0 else _LANES)
    blk_bytes = 4 * (Cin * TB + R * Cin + R + R * TB)
    y = pl.pallas_call(
        functools.partial(_upconv2x2_kernel, use_mxu=Cin >= _MXU_MIN_K),
        out_shape=jax.ShapeDtypeStruct((R, Lw), jnp.float32),
        grid=(Lw // TB,),
        in_specs=[pl.BlockSpec((Cin, TB), lambda t: (0, t)),
                  pl.BlockSpec((R, Cin), lambda t: (0, 0)),
                  pl.BlockSpec((R, 1), lambda t: (0, 0))],
        out_specs=pl.BlockSpec((R, TB), lambda t: (0, t)),
        compiler_params=_compiler_params(blk_bytes),
    )(x_r, w_r, b_r)

    # 2x2 phase interleave (co,a,b) rows -> spatial: XLA pass on the smallest
    # (Cin/2-channel, half-res) tensor in the pipeline.
    y = y[:, :L_raw].reshape(C1, 2, 2, N, Hh, Wh)
    y = jnp.transpose(y, (3, 0, 4, 1, 5, 2)).reshape(N, C1, 2 * Hh, 2 * Wh)
    return y


# ----------------------------------------------------------------------------
# Kernel 2: fully fused  pad+concat -> Conv5x5+BN+ReLU -> Conv3x3+BN+ReLU.
# Everything between the input streams and the final output stays in VMEM.
# ----------------------------------------------------------------------------
def _double_conv_kernel(x2_ref, x1u_ref, w1a_ref, w1b_ref, off1_ref,
                        w2_ref, off2_ref, mask_ref, o_ref,
                        bufa_ref, bufb_ref, b1_ref,
                        *, H, W, Wg, S1, S2, C1, Cout, mxu1, mxu2):
    # ---- in-VMEM zero padding: place both unpadded streams at offset (3, 3)
    #      of a flat width-Wg grid.  The channel concat is fused: two streams.
    bufa_ref[...] = jnp.zeros_like(bufa_ref)
    bufb_ref[...] = jnp.zeros_like(bufb_ref)
    for r in range(H):                       # static unroll; H row slabs/stream
        dst = (3 + r) * Wg + 3
        src = r * W
        bufa_ref[:, dst:dst + W] = x2_ref[0, :, src:src + W]
        bufb_ref[:, dst:dst + W] = x1u_ref[0, :, src:src + W]

    # ---- conv1 5x5 'same' + folded BN + ReLU, computed directly in the
    #      (+1,+1)-shifted layout conv2 needs; the ring mask supplies conv2's
    #      zero padding (no crop / re-pad / HBM round trip).
    taps5 = [(dy, dx) for dy in range(5) for dx in range(5)]
    acc1 = jnp.zeros((Cout, S1), jnp.float32)
    for t, (dy, dx) in enumerate(taps5):
        off = dy * Wg + dx
        acc1 = _accum_outer(acc1, w1a_ref[:, t * C1:(t + 1) * C1],
                            bufa_ref[:, off:off + S1], mxu1)
        acc1 = _accum_outer(acc1, w1b_ref[:, t * C1:(t + 1) * C1],
                            bufb_ref[:, off:off + S1], mxu1)
    b1_ref[...] = jnp.maximum(acc1 + off1_ref[...], 0.0) * mask_ref[...]

    # ---- conv2 3x3 'same' + folded BN + ReLU, straight from the VMEM-resident
    #      conv1 output.  Output width S2 is a multiple of 128 (lane-dense).
    taps3 = [(dy, dx) for dy in range(3) for dx in range(3)]
    acc2 = jnp.zeros((Cout, S2), jnp.float32)
    for t, (dy, dx) in enumerate(taps3):
        off = dy * Wg + dx
        acc2 = _accum_outer(acc2, w2_ref[:, t * Cout:(t + 1) * Cout],
                            b1_ref[:, off:off + S2], mxu2)
    o_ref[0] = jnp.maximum(acc2 + off2_ref[...], 0.0).astype(o_ref.dtype)


def double_conv_fused(x2, x1u, w1, b1, g1, be1, m1, v1,
                      w2, b2, g2, be2, m2, v2, eps=1e-5):
    """Fused DoubleConv on the logical concat [x2, x1u] (never materialized)."""
    N, C1, H, W = x2.shape
    assert x1u.shape == (N, C1, H, W)
    Cout, Ctot, KH1, KW1 = w1.shape
    assert Ctot == 2 * C1 and KH1 == 5 and KW1 == 5
    assert w2.shape == (Cout, Cout, 3, 3)

    # shared flat padded grid (row stride Wg everywhere); minimal ext sizes
    Wg = W + 6                                    # 3 left + 3 right
    S2 = _round_up(H * Wg, _LANES)                # lane-dense final output width
    S1 = _round_up(max((H + 2) * Wg, S2 + 2 * Wg + 2), _LANES)
    L_in = _round_up(S1 + 4 * Wg + 5, _LANES)     # covers every 5x5 tap shift

    # BN (eval) folded into the weights; conv bias + BN shift into one offset
    inv1 = g1 / jnp.sqrt(v1 + eps)
    w1f = jnp.transpose(w1, (0, 2, 3, 1)) * inv1[:, None, None, None]
    w1a = w1f[..., :C1].reshape(Cout, 25 * C1)    # x2 stream, cols (tap, ch)
    w1b = w1f[..., C1:].reshape(Cout, 25 * C1)    # upsampled stream
    off1 = (be1 + (b1 - m1) * inv1).reshape(Cout, 1)

    inv2 = g2 / jnp.sqrt(v2 + eps)
    w2c = (jnp.transpose(w2, (0, 2, 3, 1)) * inv2[:, None, None, None]
           ).reshape(Cout, 9 * Cout)
    off2 = (be2 + (b2 - m2) * inv2).reshape(Cout, 1)

    # ring mask: 1 on the HxW interior at offset (1,1), 0 elsewhere -> realizes
    # conv2's zero padding on conv1's VMEM-resident output.
    rr, cc = np.arange(S1) // Wg, np.arange(S1) % Wg
    mask = jnp.asarray(((rr >= 1) & (rr <= H) & (cc >= 1) & (cc <= W))
                       .astype(np.float32)).reshape(1, S1)

    x2f = x2.reshape(N, C1, H * W)                # unpadded; padded in-kernel
    x1f = x1u.reshape(N, C1, H * W)

    kernel = functools.partial(
        _double_conv_kernel, H=H, W=W, Wg=Wg, S1=S1, S2=S2, C1=C1, Cout=Cout,
        mxu1=C1 >= _MXU_MIN_K, mxu2=Cout >= _MXU_MIN_K)

    blk_bytes = 4 * (2 * C1 * H * W + 2 * Cout * 25 * C1 + Cout
                     + Cout * 9 * Cout + Cout + S1 + Cout * S2)
    scratch_bytes = 4 * (2 * C1 * L_in + Cout * S1)

    out = pl.pallas_call(
        kernel,
        out_shape=jax.ShapeDtypeStruct((N, Cout, S2), jnp.float32),
        grid=(N,),
        in_specs=[pl.BlockSpec((1, C1, H * W), lambda n: (n, 0, 0)),
                  pl.BlockSpec((1, C1, H * W), lambda n: (n, 0, 0)),
                  pl.BlockSpec((Cout, 25 * C1), lambda n: (0, 0)),
                  pl.BlockSpec((Cout, 25 * C1), lambda n: (0, 0)),
                  pl.BlockSpec((Cout, 1), lambda n: (0, 0)),
                  pl.BlockSpec((Cout, 9 * Cout), lambda n: (0, 0)),
                  pl.BlockSpec((Cout, 1), lambda n: (0, 0)),
                  pl.BlockSpec((1, S1), lambda n: (0, 0))],
        out_specs=pl.BlockSpec((1, Cout, S2), lambda n: (n, 0, 0)),
        scratch_shapes=[pltpu.VMEM((C1, L_in), jnp.float32),
                        pltpu.VMEM((C1, L_in), jnp.float32),
                        pltpu.VMEM((Cout, S1), jnp.float32)],
        compiler_params=_compiler_params(blk_bytes, scratch_bytes),
    )(x2f, x1f, w1a, w1b, off1, w2c, off2, mask)

    # crop the width-Wg flat grid back to the valid H x W window (wrapper side)
    return out[:, :, :H * Wg].reshape(N, Cout, H, Wg)[:, :, :, :W]


# ----------------------------------------------------------------------------
# `Up.forward` (inputs / output in PyTorch NCHW convention, end-to-end)
# ----------------------------------------------------------------------------
def up_forward(p, x1, x2):
    N, _, H, W = x2.shape
    x1u = conv_transpose_2x2_s2(x1, p["up_w"], p["up_b"])

    dY = H - x1u.shape[2]
    dX = W - x1u.shape[3]
    if dY or dX:                               # static; no-op when sizes match
        x1u = jnp.pad(x1u, ((0, 0), (0, 0),
                            (dY // 2, dY - dY // 2),
                            (dX // 2, dX - dX // 2)))

    # cat([x2, x1u], dim=1) + conv1+BN+ReLU + conv2+BN+ReLU in one pallas_call.
    return double_conv_fused(
        x2, x1u,
        p["c1_w"], p["c1_b"], p["bn1_g"], p["bn1_b"], p["bn1_m"], p["bn1_v"],
        p["c2_w"], p["c2_b"], p["bn2_g"], p["bn2_b"], p["bn2_m"], p["bn2_v"])


# ----------------------------------------------------------------------------
# Pure-JAX reference (for correctness check)
# ----------------------------------------------------------------------------
def up_reference(p, x1, x2, eps=1e-5):
    N, Cin, Hh, Wh = x1.shape
    C1 = p["up_w"].shape[1]
    y = jnp.einsum("ncij,cdab->ndiajb", x1, p["up_w"],
                   precision=lax.Precision.HIGHEST)
    y = y.reshape(N, C1, 2 * Hh, 2 * Wh) + p["up_b"][None, :, None, None]
    diffY = x2.shape[2] - y.shape[2]
    diffX = x2.shape[3] - y.shape[3]
    y = jnp.pad(y, ((0, 0), (0, 0),
                    (diffY // 2, diffY - diffY // 2),
                    (diffX // 2, diffX - diffX // 2)))
    x = jnp.concatenate([x2, y], axis=1)

    def cbr(x, w, b, g, bt, m, v):
        z = lax.conv_general_dilated(
            x, w, (1, 1), "SAME",
            dimension_numbers=("NCHW", "OIHW", "NCHW"),
            precision=lax.Precision.HIGHEST)
        z = z + b[None, :, None, None]
        z = (z - m[None, :, None, None]) * (g / jnp.sqrt(v + eps))[None, :, None, None]
        z = z + bt[None, :, None, None]
        return jnp.maximum(z, 0.0)

    x = cbr(x, p["c1_w"], p["c1_b"], p["bn1_g"], p["bn1_b"], p["bn1_m"], p["bn1_v"])
    x = cbr(x, p["c2_w"], p["c2_b"], p["bn2_g"], p["bn2_b"], p["bn2_m"], p["bn2_v"])
    return x


# ----------------------------------------------------------------------------
# Deterministic parameter init (shapes from the module's __init__)
# ----------------------------------------------------------------------------
def init_params(key, in_channels, out_channels):
    ks = jax.random.split(key, 12)
    cin, mid, cout = in_channels, in_channels // 2, out_channels
    f32 = jnp.float32
    return {
        # ConvTranspose2d(cin, cin//2, 2, 2): weight (cin, cin//2, 2, 2)
        "up_w": 0.2 * jax.random.normal(ks[0], (cin, mid, 2, 2), f32),
        "up_b": 0.1 * jax.random.normal(ks[1], (mid,), f32),
        # Conv2d(cin, cout, 5)
        "c1_w": 0.1 * jax.random.normal(ks[2], (cout, cin, 5, 5), f32),
        "c1_b": 0.1 * jax.random.normal(ks[3], (cout,), f32),
        "bn1_g": 1.0 + 0.1 * jax.random.normal(ks[4], (cout,), f32),
        "bn1_b": 0.1 * jax.random.normal(ks[5], (cout,), f32),
        "bn1_m": 0.1 * jax.random.normal(ks[6], (cout,), f32),
        "bn1_v": 0.5 + jnp.abs(jax.random.normal(ks[7], (cout,), f32)),
        # Conv2d(cout, cout, 3)
        "c2_w": 0.1 * jax.random.normal(ks[8], (cout, cout, 3, 3), f32),
        "c2_b": 0.1 * jax.random.normal(ks[9], (cout,), f32),
        "bn2_g": 1.0 + 0.1 * jax.random.normal(ks[10], (cout,), f32),
        "bn2_b": 0.1 * jax.random.normal(ks[11], (cout,), f32),
        "bn2_m": jnp.zeros((cout,), f32),
        "bn2_v": jnp.ones((cout,), f32),
    }


if __name__ == "__main__":
    key = jax.random.PRNGKey(0)
    k_p, k_x1, k_x2 = jax.random.split(key, 3)

    in_channels, out_channels = 4, 4
    N, H, W = 2, 16, 16                      # x2 spatial size; x1 is half-res

    params = init_params(k_p, in_channels, out_channels)
    x1 = jax.random.normal(k_x1, (N, in_channels, H // 2, W // 2), jnp.float32)
    x2 = jax.random.normal(k_x2, (N, in_channels // 2, H, W), jnp.float32)

    out = jax.block_until_ready(jax.jit(up_forward)(params, x1, x2))
    ref = jax.block_until_ready(up_reference(params, x1, x2))

    assert out.shape == (N, out_channels, H, W), out.shape
    np.testing.assert_allclose(np.asarray(out), np.asarray(ref),
                               rtol=1e-4, atol=1e-4)
    print("KERNEL_OK")
</pallas_src>

<mosaic_0001>
module attributes {stable_mosaic.version = 11 : i64} {
  func.func @_upconv2x2_kernel(%arg0: i32, %arg1: memref<4x128xf32, #tpu.memory_space<vmem>>, %arg2: memref<8x4xf32, #tpu.memory_space<vmem>>, %arg3: memref<8x1xf32, #tpu.memory_space<vmem>>, %arg4: memref<8x128xf32, #tpu.memory_space<vmem>>) attributes {dimension_semantics = [#tpu.dimension_semantics<parallel>], iteration_bounds = array<i64: 1>, scalar_prefetch = 0 : i64, scratch_operands = 0 : i64, tpu.core_type = #tpu.core_type<tc>, window_params = [{transform_indices = @transform_0, window_bounds = array<i64: 4, 128>}, {pipeline_mode = #tpu.pipeline_mode<synchronous>, transform_indices = @transform_1, window_bounds = array<i64: 8, 4>}, {pipeline_mode = #tpu.pipeline_mode<synchronous>, transform_indices = @transform_2, window_bounds = array<i64: 8, 1>}, {transform_indices = @transform_3, window_bounds = array<i64: 8, 128>}]} {
    %c0 = arith.constant 0 : index
    %c0_0 = arith.constant 0 : index
    %0 = vector.load %arg1[%c0, %c0_0] : memref<4x128xf32, #tpu.memory_space<vmem>>, vector<4x128xf32>
    %c0_1 = arith.constant 0 : index
    %c0_2 = arith.constant 0 : index
    %1 = vector.load %arg2[%c0_1, %c0_2] : memref<8x4xf32, #tpu.memory_space<vmem>>, vector<8x4xf32>
    %c0_3 = arith.constant 0 : index
    %c0_4 = arith.constant 0 : index
    %2 = vector.load %arg3[%c0_3, %c0_4] : memref<8x1xf32, #tpu.memory_space<vmem>>, vector<8x1xf32>
    %3 = vector.shape_cast %2 : vector<8x1xf32> to vector<8x1xf32>
    %4 = vector.broadcast %3 : vector<8x1xf32> to vector<8x128xf32>
    %5 = vector.extract_strided_slice %1 {offsets = [0, 0], sizes = [8, 1], strides = [1, 1]} : vector<8x4xf32> to vector<8x1xf32>
    %6 = vector.extract_strided_slice %0 {offsets = [0, 0], sizes = [1, 128], strides = [1, 1]} : vector<4x128xf32> to vector<1x128xf32>
    %7 = vector.broadcast %5 : vector<8x1xf32> to vector<8x128xf32>
    %8 = vector.broadcast %6 : vector<1x128xf32> to vector<8x128xf32>
    %9 = arith.mulf %7, %8 : vector<8x128xf32>
    %10 = arith.addf %4, %9 : vector<8x128xf32>
    %11 = vector.extract_strided_slice %1 {offsets = [0, 1], sizes = [8, 1], strides = [1, 1]} : vector<8x4xf32> to vector<8x1xf32>
    %12 = vector.extract_strided_slice %0 {offsets = [1, 0], sizes = [1, 128], strides = [1, 1]} : vector<4x128xf32> to vector<1x128xf32>
    %13 = vector.broadcast %11 : vector<8x1xf32> to vector<8x128xf32>
    %14 = vector.broadcast %12 : vector<1x128xf32> to vector<8x128xf32>
    %15 = arith.mulf %13, %14 : vector<8x128xf32>
    %16 = arith.addf %10, %15 : vector<8x128xf32>
    %17 = vector.extract_strided_slice %1 {offsets = [0, 2], sizes = [8, 1], strides = [1, 1]} : vector<8x4xf32> to vector<8x1xf32>
    %18 = vector.extract_strided_slice %0 {offsets = [2, 0], sizes = [1, 128], strides = [1, 1]} : vector<4x128xf32> to vector<1x128xf32>
    %19 = vector.broadcast %17 : vector<8x1xf32> to vector<8x128xf32>
    %20 = vector.broadcast %18 : vector<1x128xf32> to vector<8x128xf32>
    %21 = arith.mulf %19, %20 : vector<8x128xf32>
    %22 = arith.addf %16, %21 : vector<8x128xf32>
    %23 = vector.extract_strided_slice %1 {offsets = [0, 3], sizes = [8, 1], strides = [1, 1]} : vector<8x4xf32> to vector<8x1xf32>
    %24 = vector.extract_strided_slice %0 {offsets = [3, 0], sizes = [1, 128], strides = [1, 1]} : vector<4x128xf32> to vector<1x128xf32>
    %25 = vector.broadcast %23 : vector<8x1xf32> to vector<8x128xf32>
    %26 = vector.broadcast %24 : vector<1x128xf32> to vector<8x128xf32>
    %27 = arith.mulf %25, %26 : vector<8x128xf32>
    %28 = arith.addf %22, %27 : vector<8x128xf32>
    %c0_5 = arith.constant 0 : index
    %c0_6 = arith.constant 0 : index
    %29 = vector.load %arg4[%c0_5, %c0_6] : memref<8x128xf32, #tpu.memory_space<vmem>>, vector<8x128xf32>
    tpu.vector_store %arg4[%c0_5, %c0_6], %28 {strides = array<i32>} : memref<8x128xf32, #tpu.memory_space<vmem>>, vector<8x128xf32>,
    return
  }
  func.func @transform_0(%arg0: i32) -> (i32, i32) {
    %c0_i32 = arith.constant 0 : i32
    %c0_i32_0 = arith.constant 0 : i32
    return %c0_i32, %arg0 : i32, i32
  }
  func.func @transform_1(%arg0: i32) -> (i32, i32) {
    %c0_i32 = arith.constant 0 : i32
    %c0_i32_0 = arith.constant 0 : i32
    %c0_i32_1 = arith.constant 0 : i32
    return %c0_i32, %c0_i32_0 : i32, i32
  }
  func.func @transform_2(%arg0: i32) -> (i32, i32) {
    %c0_i32 = arith.constant 0 : i32
    %c0_i32_0 = arith.constant 0 : i32
    %c0_i32_1 = arith.constant 0 : i32
    return %c0_i32, %c0_i32_0 : i32, i32
  }
  func.func @transform_3(%arg0: i32) -> (i32, i32) {
    %c0_i32 = arith.constant 0 : i32
    %c0_i32_0 = arith.constant 0 : i32
    return %c0_i32, %arg0 : i32, i32
  }
}

module attributes {stable_mosaic.version = 11 : i64} {
  func.func @_double_conv_kernel(%arg0: i32, %arg1: memref<1x2x256xf32, #tpu.memory_space<vmem>>, %arg2: memref<1x2x256xf32, #tpu.memory_space<vmem>>, %arg3: memref<4x50xf32, #tpu.memory_space<vmem>>, %arg4: memref<4x50xf32, #tpu.memory_space<vmem>>, %arg5: memref<4x1xf32, #tpu.memory_space<vmem>>, %arg6: memref<4x36xf32, #tpu.memory_space<vmem>>, %arg7: memref<4x1xf32, #tpu.memory_space<vmem>>, %arg8: memref<1x512xf32, #tpu.memory_space<vmem>>, %arg9: memref<1x4x384xf32, #tpu.memory_space<vmem>>, %arg10: memref<2x640xf32, #tpu.memory_space<vmem>>, %arg11: memref<2x640xf32, #tpu.memory_space<vmem>>, %arg12: memref<4x512xf32, #tpu.memory_space<vmem>>) attributes {dimension_semantics = [#tpu.dimension_semantics<parallel>], iteration_bounds = array<i64: 2>, scalar_prefetch = 0 : i64, scratch_operands = 3 : i64, tpu.core_type = #tpu.core_type<tc>, window_params = [{transform_indices = @transform_0, window_bounds = array<i64: 1, 2, 256>}, {transform_indices = @transform_1, window_bounds = array<i64: 1, 2, 256>}, {pipeline_mode = #tpu.pipeline_mode<synchronous>, transform_indices = @transform_2, window_bounds = array<i64: 4, 50>}, {pipeline_mode = #tpu.pipeline_mode<synchronous>, transform_indices = @transform_3, window_bounds = array<i64: 4, 50>}, {pipeline_mode = #tpu.pipeline_mode<synchronous>, transform_indices = @transform_4, window_bounds = array<i64: 4, 1>}, {pipeline_mode = #tpu.pipeline_mode<synchronous>, transform_indices = @transform_5, window_bounds = array<i64: 4, 36>}, {pipeline_mode = #tpu.pipeline_mode<synchronous>, transform_indices = @transform_6, window_bounds = array<i64: 4, 1>}, {pipeline_mode = #tpu.pipeline_mode<synchronous>, transform_indices = @transform_7, window_bounds = array<i64: 1, 512>}, {transform_indices = @transform_8, window_bounds = array<i64: 1, 4, 384>}]} {
    %cst = arith.constant 0.000000e+00 : f32
    %0 = vector.broadcast %cst : f32 to vector<2x640xf32>
    %c0 = arith.constant 0 : index
    %c0_0 = arith.constant 0 : index
    %1 = vector.load %arg10[%c0, %c0_0] : memref<2x640xf32, #tpu.memory_space<vmem>>, vector<2x640xf32>
    tpu.vector_store %arg10[%c0, %c0_0], %0 {strides = array<i32>} : memref<2x640xf32, #tpu.memory_space<vmem>>, vector<2x640xf32>,
    %cst_1 = arith.constant 0.000000e+00 : f32
    %2 = vector.broadcast %cst_1 : f32 to vector<2x640xf32>
    %c0_2 = arith.constant 0 : index
    %c0_3 = arith.constant 0 : index
    %3 = vector.load %arg11[%c0_2, %c0_3] : memref<2x640xf32, #tpu.memory_space<vmem>>, vector<2x640xf32>
    tpu.vector_store %arg11[%c0_2, %c0_3], %2 {strides = array<i32>} : memref<2x640xf32, #tpu.memory_space<vmem>>, vector<2x640xf32>,
    %c0_4 = arith.constant 0 : index
    %c0_5 = arith.constant 0 : index
    %c0_6 = arith.constant 0 : index
    %4 = vector.load %arg1[%c0_4, %c0_5, %c0_6] : memref<1x2x256xf32, #tpu.memory_space<vmem>>, vector<1x2x16xf32>
    %5 = vector.shape_cast %4 : vector<1x2x16xf32> to vector<2x16xf32>
    %c0_7 = arith.constant 0 : index
    %c69 = arith.constant 69 : index
    %6 = vector.load %arg10[%c0_7, %c69] : memref<2x640xf32, #tpu.memory_space<vmem>>, vector<2x16xf32>
    tpu.vector_store %arg10[%c0_7, %c69], %5 {strides = array<i32>} : memref<2x640xf32, #tpu.memory_space<vmem>>, vector<2x16xf32>,
    %c0_8 = arith.constant 0 : index
    %c0_9 = arith.constant 0 : index
    %c0_10 = arith.constant 0 : index
    %7 = vector.load %arg2[%c0_8, %c0_9, %c0_10] : memref<1x2x256xf32, #tpu.memory_space<vmem>>, vector<1x2x16xf32>
    %8 = vector.shape_cast %7 : vector<1x2x16xf32> to vector<2x16xf32>
    %c0_11 = arith.constant 0 : index
    %c69_12 = arith.constant 69 : index
    %9 = vector.load %arg11[%c0_11, %c69_12] : memref<2x640xf32, #tpu.memory_space<vmem>>, vector<2x16xf32>
    tpu.vector_store %arg11[%c0_11, %c69_12], %8 {strides = array<i32>} : memref<2x640xf32, #tpu.memory_space<vmem>>, vector<2x16xf32>,
    %c0_13 = arith.constant 0 : index
    %c0_14 = arith.constant 0 : index
    %c16 = arith.constant 16 : index
    %10 = vector.load %arg1[%c0_13, %c0_14, %c16] : memref<1x2x256xf32, #tpu.memory_space<vmem>>, vector<1x2x16xf32>
    %11 = vector.shape_cast %10 : vector<1x2x16xf32> to vector<2x16xf32>
    %c0_15 = arith.constant 0 : index
    %c91 = arith.constant 91 : index
    %12 = vector.load %arg10[%c0_15, %c91] : memref<2x640xf32, #tpu.memory_space<vmem>>, vector<2x16xf32>
    tpu.vector_store %arg10[%c0_15, %c91], %11 {strides = array<i32>} : memref<2x640xf32, #tpu.memory_space<vmem>>, vector<2x16xf32>,
    %c0_16 = arith.constant 0 : index
    %c0_17 = arith.constant 0 : index
    %c16_18 = arith.constant 16 : index
    %13 = vector.load %arg2[%c0_16, %c0_17, %c16_18] : memref<1x2x256xf32, #tpu.memory_space<vmem>>, vector<1x2x16xf32>
    %14 = vector.shape_cast %13 : vector<1x2x16xf32> to vector<2x16xf32>
    %c0_19 = arith.constant 0 : index
    %c91_20 = arith.constant 91 : index
    %15 = vector.load %arg11[%c0_19, %c91_20] : memref<2x640xf32, #tpu.memory_space<vmem>>, vector<2x16xf32>
    tpu.vector_store %arg11[%c0_19, %c91_20], %14 {strides = array<i32>} : memref<2x640xf32, #tpu.memory_space<vmem>>, vector<2x16xf32>,
    %c0_21 = arith.constant 0 : index
    %c0_22 = arith.constant 0 : index
    %c32 = arith.constant 32 : index
    %16 = vector.load %arg1[%c0_21, %c0_22, %c32] : memref<1x2x256xf32, #tpu.memory_space<vmem>>, vector<1x2x16xf32>
    %17 = vector.shape_cast %16 : vector<1x2x16xf32> to vector<2x16xf32>
    %c0_23 = arith.constant 0 : index
    %c113 = arith.constant 113 : index
    %18 = vector.load %arg10[%c0_23, %c113] : memref<2x640xf32, #tpu.memory_space<vmem>>, vector<2x16xf32>
    tpu.vector_store %arg10[%c0_23, %c113], %17 {strides = array<i32>} : memref<2x640xf32, #tpu.memory_space<vmem>>, vector<2x16xf32>,
    %c0_24 = arith.constant 0 : index
    %c0_25 = arith.constant 0 : index
    %c32_26 = arith.constant 32 : index
    %19 = vector.load %arg2[%c0_24, %c0_25, %c32_26] : memref<1x2x256xf32, #tpu.memory_space<vmem>>, vector<1x2x16xf32>
    %20 = vector.shape_cast %19 : vector<1x2x16xf32> to vector<2x16xf32>
    %c0_27 = arith.constant 0 : index
    %c113_28 = arith.constant 113 : index
    %21 = vector.load %arg11[%c0_27, %c113_28] : memref<2x640xf32, #tpu.memory_space<vmem>>, vector<2x16xf32>
    tpu.vector_store %arg11[%c0_27, %c113_28], %20 {strides = array<i32>} : memref<2x640xf32, #tpu.memory_space<vmem>>, vector<2x16xf32>,
    %c0_29 = arith.constant 0 : index
    %c0_30 = arith.constant 0 : index
    %c48 = arith.constant 48 : index
    %22 = vector.load %arg1[%c0_29, %c0_30, %c48] : memref<1x2x256xf32, #tpu.memory_space<vmem>>, vector<1x2x16xf32>
    %23 = vector.shape_cast %22 : vector<1x2x16xf32> to vector<2x16xf32>
    %c0_31 = arith.constant 0 : index
    %c135 = arith.constant 135 : index
    %24 = vector.load %arg10[%c0_31, %c135] : memref<2x640xf32, #tpu.memory_space<vmem>>, vector<2x16xf32>
    tpu.vector_store %arg10[%c0_31, %c135], %23 {strides = array<i32>} : memref<2x640xf32, #tpu.memory_space<vmem>>, vector<2x16xf32>,
    %c0_32 = arith.constant 0 : index
    %c0_33 = arith.constant 0 : index
    %c48_34 = arith.constant 48 : index
    %25 = vector.load %arg2[%c0_32, %c0_33, %c48_34] : memref<1x2x256xf32, #tpu.memory_space<vmem>>, vector<1x2x16xf32>
    %26 = vector.shape_cast %25 : vector<1x2x16xf32> to vector<2x16xf32>
    %c0_35 = arith.constant 0 : index
    %c135_36 = arith.constant 135 : index
    %27 = vector.load %arg11[%c0_35, %c135_36] : memref<2x640xf32, #tpu.memory_space<vmem>>, vector<2x16xf32>
    tpu.vector_store %arg11[%c0_35, %c135_36], %26 {strides = array<i32>} : memref<2x640xf32, #tpu.memory_space<vmem>>, vector<2x16xf32>,
    %c0_37 = arith.constant 0 : index
    %c0_38 = arith.constant 0 : index
    %c64 = arith.constant 64 : index
    %28 = vector.load %arg1[%c0_37, %c0_38, %c64] : memref<1x2x256xf32, #tpu.memory_space<vmem>>, vector<1x2x16xf32>
    %29 = vector.shape_cast %28 : vector<1x2x16xf32> to vector<2x16xf32>
    %c0_39 = arith.constant 0 : index
    %c157 = arith.constant 157 : index
    %30 = vector.load %arg10[%c0_39, %c157] : memref<2x640xf32, #tpu.memory_space<vmem>>, vector<2x16xf32>
    tpu.vector_store %arg10[%c0_39, %c157], %29 {strides = array<i32>} : memref<2x640xf32, #tpu.memory_space<vmem>>, vector<2x16xf32>,
    %c0_40 = arith.constant 0 : index
    %c0_41 = arith.constant 0 : index
    %c64_42 = arith.constant 64 : index
    %31 = vector.load %arg2[%c0_40, %c0_41, %c64_42] : memref<1x2x256xf32, #tpu.memory_space<vmem>>, vector<1x2x16xf32>
    %32 = vector.shape_cast %31 : vector<1x2x16xf32> to vector<2x16xf32>
    %c0_43 = arith.constant 0 : index
    %c157_44 = arith.constant 157 : index
    %33 = vector.load %arg11[%c0_43, %c157_44] : memref<2x640xf32, #tpu.memory_space<vmem>>, vector<2x16xf32>
    tpu.vector_store %arg11[%c0_43, %c157_44], %32 {strides = array<i32>} : memref<2x640xf32, #tpu.memory_space<vmem>>, vector<2x16xf32>,
    %c0_45 = arith.constant 0 : index
    %c0_46 = arith.constant 0 : index
    %c80 = arith.constant 80 : index
    %34 = vector.load %arg1[%c0_45, %c0_46, %c80] : memref<1x2x256xf32, #tpu.memory_space<vmem>>, vector<1x2x16xf32>
    %35 = vector.shape_cast %34 : vector<1x2x16xf32> to vector<2x16xf32>
    %c0_47 = arith.constant 0 : index
    %c179 = arith.constant 179 : index
    %36 = vector.load %arg10[%c0_47, %c179] : memref<2x640xf32, #tpu.memory_space<vmem>>, vector<2x16xf32>
    tpu.vector_store %arg10[%c0_47, %c179], %35 {strides = array<i32>} : memref<2x640xf32, #tpu.memory_space<vmem>>, vector<2x16xf32>,
    %c0_48 = arith.constant 0 : index
    %c0_49 = arith.constant 0 : index
    %c80_50 = arith.constant 80 : index
    %37 = vector.load %arg2[%c0_48, %c0_49, %c80_50] : memref<1x2x256xf32, #tpu.memory_space<vmem>>, vector<1x2x16xf32>
    %38 = vector.shape_cast %37 : vector<1x2x16xf32> to vector<2x16xf32>
    %c0_51 = arith.constant 0 : index
    %c179_52 = arith.constant 179 : index
    %39 = vector.load %arg11[%c0_51, %c179_52] : memref<2x640xf32, #tpu.memory_space<vmem>>, vector<2x16xf32>
    tpu.vector_store %arg11[%c0_51, %c179_52], %38 {strides = array<i32>} : memref<2x640xf32, #tpu.memory_space<vmem>>, vector<2x16xf32>,
    %c0_53 = arith.constant 0 : index
    %c0_54 = arith.constant 0 : index
    %c96 = arith.constant 96 : index
    %40 = vector.load %arg1[%c0_53, %c0_54, %c96] : memref<1x2x256xf32, #tpu.memory_space<vmem>>, vector<1x2x16xf32>
    %41 = vector.shape_cast %40 : vector<1x2x16xf32> to vector<2x16xf32>
    %c0_55 = arith.constant 0 : index
    %c201 = arith.constant 201 : index
    %42 = vector.load %arg10[%c0_55, %c201] : memref<2x640xf32, #tpu.memory_space<vmem>>, vector<2x16xf32>
    tpu.vector_store %arg10[%c0_55, %c201], %41 {strides = array<i32>} : memref<2x640xf32, #tpu.memory_space<vmem>>, vector<2x16xf32>,
    %c0_56 = arith.constant 0 : index
    %c0_57 = arith.constant 0 : index
    %c96_58 = arith.constant 96 : index
    %43 = vector.load %arg2[%c0_56, %c0_57, %c96_58] : memref<1x2x256xf32, #tpu.memory_space<vmem>>, vector<1x2x16xf32>
    %44 = vector.shape_cast %43 : vector<1x2x16xf32> to vector<2x16xf32>
    %c0_59 = arith.constant 0 : index
    %c201_60 = arith.constant 201 : index
    %45 = vector.load %arg11[%c0_59, %c201_60] : memref<2x640xf32, #tpu.memory_space<vmem>>, vector<2x16xf32>
    tpu.vector_store %arg11[%c0_59, %c201_60], %44 {strides = array<i32>} : memref<2x640xf32, #tpu.memory_space<vmem>>, vector<2x16xf32>,
    %c0_61 = arith.constant 0 : index
    %c0_62 = arith.constant 0 : index
    %c112 = arith.constant 112 : index
    %46 = vector.load %arg1[%c0_61, %c0_62, %c112] : memref<1x2x256xf32, #tpu.memory_space<vmem>>, vector<1x2x16xf32>
    %47 = vector.shape_cast %46 : vector<1x2x16xf32> to vector<2x16xf32>
    %c0_63 = arith.constant 0 : index
    %c223 = arith.constant 223 : index
    %48 = vector.load %arg10[%c0_63, %c223] : memref<2x640xf32, #tpu.memory_space<vmem>>, vector<2x16xf32>
    tpu.vector_store %arg10[%c0_63, %c223], %47 {strides = array<i32>} : memref<2x640xf32, #tpu.memory_space<vmem>>, vector<2x16xf32>,
    %c0_64 = arith.constant 0 : index
    %c0_65 = arith.constant 0 : index
    %c112_66 = arith.constant 112 : index
    %49 = vector.load %arg2[%c0_64, %c0_65, %c112_66] : memref<1x2x256xf32, #tpu.memory_space<vmem>>, vector<1x2x16xf32>
    %50 = vector.shape_cast %49 : vector<1x2x16xf32> to vector<2x16xf32>
    %c0_67 = arith.constant 0 : index
    %c223_68 = arith.constant 223 : index
    %51 = vector.load %arg11[%c0_67, %c223_68] : memref<2x640xf32, #tpu.memory_space<vmem>>, vector<2x16xf32>
    tpu.vector_store %arg11[%c0_67, %c223_68], %50 {strides = array<i32>} : memref<2x640xf32, #tpu.memory_space<vmem>>, vector<2x16xf32>,
    %c0_69 = arith.constant 0 : index
    %c0_70 = arith.constant 0 : index
    %c128 = arith.constant 128 : index
    %52 = vector.load %arg1[%c0_69, %c0_70, %c128] : memref<1x2x256xf32, #tpu.memory_space<vmem>>, vector<1x2x16xf32>
    %53 = vector.shape_cast %52 : vector<1x2x16xf32> to vector<2x16xf32>
    %c0_71 = arith.constant 0 : index
    %c245 = arith.constant 245 : index
    %54 = vector.load %arg10[%c0_71, %c245] : memref<2x640xf32, #tpu.memory_space<vmem>>, vector<2x16xf32>
    tpu.vector_store %arg10[%c0_71, %c245], %53 {strides = array<i32>} : memref<2x640xf32, #tpu.memory_space<vmem>>, vector<2x16xf32>,
    %c0_72 = arith.constant 0 : index
    %c0_73 = arith.constant 0 : index
    %c128_74 = arith.constant 128 : index
    %55 = vector.load %arg2[%c0_72, %c0_73, %c128_74] : memref<1x2x256xf32, #tpu.memory_space<vmem>>, vector<1x2x16xf32>
    %56 = vector.shape_cast %55 : vector<1x2x16xf32> to vector<2x16xf32>
    %c0_75 = arith.constant 0 : index
    %c245_76 = arith.constant 245 : index
    %57 = vector.load %arg11[%c0_75, %c245_76] : memref<2x640xf32, #tpu.memory_space<vmem>>, vector<2x16xf32>
    tpu.vector_store %arg11[%c0_75, %c245_76], %56 {strides = array<i32>} : memref<2x640xf32, #tpu.memory_space<vmem>>, vector<2x16xf32>,
    %c0_77 = arith.constant 0 : index
    %c0_78 = arith.constant 0 : index
    %c144 = arith.constant 144 : index
    %58 = vector.load %arg1[%c0_77, %c0_78, %c144] : memref<1x2x256xf32, #tpu.memory_space<vmem>>, vector<1x2x16xf32>
    %59 = vector.shape_cast %58 : vector<1x2x16xf32> to vector<2x16xf32>
    %c0_79 = arith.constant 0 : index
    %c267 = arith.constant 267 : index
    %60 = vector.load %arg10[%c0_79, %c267] : memref<2x640xf32, #tpu.memory_space<vmem>>, vector<2x16xf32>
    tpu.vector_store %arg10[%c0_79, %c267], %59 {strides = array<i32>} : memref<2x640xf32, #tpu.memory_space<vmem>>, vector<2x16xf32>,
    %c0_80 = arith.constant 0 : index
    %c0_81 = arith.constant 0 : index
    %c144_82 = arith.constant 144 : index
    %61 = vector.load %arg2[%c0_80, %c0_81, %c144_82] : memref<1x2x256xf32, #tpu.memory_space<vmem>>, vector<1x2x16xf32>
    %62 = vector.shape_cast %61 : vector<1x2x16xf32> to vector<2x16xf32>
    %c0_83 = arith.constant 0 : index
    %c267_84 = arith.constant 267 : index
    %63 = vector.load %arg11[%c0_83, %c267_84] : memref<2x640xf32, #tpu.memory_space<vmem>>, vector<2x16xf32>
    tpu.vector_store %arg11[%c0_83, %c267_84], %62 {strides = array<i32>} : memref<2x640xf32, #tpu.memory_space<vmem>>, vector<2x16xf32>,
    %c0_85 = arith.constant 0 : index
    %c0_86 = arith.constant 0 : index
    %c160 = arith.constant 160 : index
    %64 = vector.load %arg1[%c0_85, %c0_86, %c160] : memref<1x2x256xf32, #tpu.memory_space<vmem>>, vector<1x2x16xf32>
    %65 = vector.shape_cast %64 : vector<1x2x16xf32> to vector<2x16xf32>
    %c0_87 = arith.constant 0 : index
    %c289 = arith.constant 289 : index
    %66 = vector.load %arg10[%c0_87, %c289] : memref<2x640xf32, #tpu.memory_space<vmem>>, vector<2x16xf32>
    tpu.vector_store %arg10[%c0_87, %c289], %65 {strides = array<i32>} : memref<2x640xf32, #tpu.memory_space<vmem>>, vector<2x16xf32>,
    %c0_88 = arith.constant 0 : index
    %c0_89 = arith.constant 0 : index
    %c160_90 = arith.constant 160 : index
    %67 = vector.load %arg2[%c0_88, %c0_89, %c160_90] : memref<1x2x256xf32, #tpu.memory_space<vmem>>, vector<1x2x16xf32>
    %68 = vector.shape_cast %67 : vector<1x2x16xf32> to vector<2x16xf32>
    %c0_91 = arith.constant 0 : index
    %c289_92 = arith.constant 289 : index
    %69 = vector.load %arg11[%c0_91, %c289_92] : memref<2x640xf32, #tpu.memory_space<vmem>>, vector<2x16xf32>
    tpu.vector_store %arg11[%c0_91, %c289_92], %68 {strides = array<i32>} : memref<2x640xf32, #tpu.memory_space<vmem>>, vector<2x16xf32>,
    %c0_93 = arith.constant 0 : index
    %c0_94 = arith.constant 0 : index
    %c176 = arith.constant 176 : index
    %70 = vector.load %arg1[%c0_93, %c0_94, %c176] : memref<1x2x256xf32, #tpu.memory_space<vmem>>, vector<1x2x16xf32>
    %71 = vector.shape_cast %70 : vector<1x2x16xf32> to vector<2x16xf32>
    %c0_95 = arith.constant 0 : index
    %c311 = arith.constant 311 : index
    %72 = vector.load %arg10[%c0_95, %c311] : memref<2x640xf32, #tpu.memory_space<vmem>>, vector<2x16xf32>
    tpu.vector_store %arg10[%c0_95, %c311], %71 {strides = array<i32>} : memref<2x640xf32, #tpu.memory_space<vmem>>, vector<2x16xf32>,
    %c0_96 = arith.constant 0 : index
    %c0_97 = arith.constant 0 : index
    %c176_98 = arith.constant 176 : index
    %73 = vector.load %arg2[%c0_96, %c0_97, %c176_98] : memref<1x2x256xf32, #tpu.memory_space<vmem>>, vector<1x2x16xf32>
    %74 = vector.shape_cast %73 : vector<1x2x16xf32> to vector<2x16xf32>
    %c0_99 = arith.constant 0 : index
    %c311_100 = arith.constant 311 : index
    %75 = vector.load %arg11[%c0_99, %c311_100] : memref<2x640xf32, #tpu.memory_space<vmem>>, vector<2x16xf32>
    tpu.vector_store %arg11[%c0_99, %c311_100], %74 {strides = array<i32>} : memref<2x640xf32, #tpu.memory_space<vmem>>, vector<2x16xf32>,
    %c0_101 = arith.constant 0 : index
    %c0_102 = arith.constant 0 : index
    %c192 = arith.constant 192 : index
    %76 = vector.load %arg1[%c0_101, %c0_102, %c192] : memref<1x2x256xf32, #tpu.memory_space<vmem>>, vector<1x2x16xf32>
    %77 = vector.shape_cast %76 : vector<1x2x16xf32> to vector<2x16xf32>
    %c0_103 = arith.constant 0 : index
    %c333 = arith.constant 333 : index
    %78 = vector.load %arg10[%c0_103, %c333] : memref<2x640xf32, #tpu.memory_space<vmem>>, vector<2x16xf32>
    tpu.vector_store %arg10[%c0_103, %c333], %77 {strides = array<i32>} : memref<2x640xf32, #tpu.memory_space<vmem>>, vector<2x16xf32>,
    %c0_104 = arith.constant 0 : index
    %c0_105 = arith.constant 0 : index
    %c192_106 = arith.constant 192 : index
    %79 = vector.load %arg2[%c0_104, %c0_105, %c192_106] : memref<1x2x256xf32, #tpu.memory_space<vmem>>, vector<1x2x16xf32>
    %80 = vector.shape_cast %79 : vector<1x2x16xf32> to vector<2x16xf32>
    %c0_107 = arith.constant 0 : index
    %c333_108 = arith.constant 333 : index
    %81 = vector.load %arg11[%c0_107, %c333_108] : memref<2x640xf32, #tpu.memory_space<vmem>>, vector<2x16xf32>
    tpu.vector_store %arg11[%c0_107, %c333_108], %80 {strides = array<i32>} : memref<2x640xf32, #tpu.memory_space<vmem>>, vector<2x16xf32>,
    %c0_109 = arith.constant 0 : index
    %c0_110 = arith.constant 0 : index
    %c208 = arith.constant 208 : index
    %82 = vector.load %arg1[%c0_109, %c0_110, %c208] : memref<1x2x256xf32, #tpu.memory_space<vmem>>, vector<1x2x16xf32>
    %83 = vector.shape_cast %82 : vector<1x2x16xf32> to vector<2x16xf32>
    %c0_111 = arith.constant 0 : index
    %c355 = arith.constant 355 : index
    %84 = vector.load %arg10[%c0_111, %c355] : memref<2x640xf32, #tpu.memory_space<vmem>>, vector<2x16xf32>
    tpu.vector_store %arg10[%c0_111, %c355], %83 {strides = array<i32>} : memref<2x640xf32, #tpu.memory_space<vmem>>, vector<2x16xf32>,
    %c0_112 = arith.constant 0 : index
    %c0_113 = arith.constant 0 : index
    %c208_114 = arith.constant 208 : index
    %85 = vector.load %arg2[%c0_112, %c0_113, %c208_114] : memref<1x2x256xf32, #tpu.memory_space<vmem>>, vector<1x2x16xf32>
    %86 = vector.shape_cast %85 : vector<1x2x16xf32> to vector<2x16xf32>
    %c0_115 = arith.constant 0 : index
    %c355_116 = arith.constant 355 : index
    %87 = vector.load %arg11[%c0_115, %c355_116] : memref<2x640xf32, #tpu.memory_space<vmem>>, vector<2x16xf32>
    tpu.vector_store %arg11[%c0_115, %c355_116], %86 {strides = array<i32>} : memref<2x640xf32, #tpu.memory_space<vmem>>, vector<2x16xf32>,
    %c0_117 = arith.constant 0 : index
    %c0_118 = arith.constant 0 : index
    %c224 = arith.constant 224 : index
    %88 = vector.load %arg1[%c0_117, %c0_118, %c224] : memref<1x2x256xf32, #tpu.memory_space<vmem>>, vector<1x2x16xf32>
    %89 = vector.shape_cast %88 : vector<1x2x16xf32> to vector<2x16xf32>
    %c0_119 = arith.constant 0 : index
    %c377 = arith.constant 377 : index
    %90 = vector.load %arg10[%c0_119, %c377] : memref<2x640xf32, #tpu.memory_space<vmem>>, vector<2x16xf32>
    tpu.vector_store %arg10[%c0_119, %c377], %89 {strides = array<i32>} : memref<2x640xf32, #tpu.memory_space<vmem>>, vector<2x16xf32>,
    %c0_120 = arith.constant 0 : index
    %c0_121 = arith.constant 0 : index
    %c224_122 = arith.constant 224 : index
    %91 = vector.load %arg2[%c0_120, %c0_121, %c224_122] : memref<1x2x256xf32, #tpu.memory_space<vmem>>, vector<1x2x16xf32>
    %92 = vector.shape_cast %91 : vector<1x2x16xf32> to vector<2x16xf32>
    %c0_123 = arith.constant 0 : index
    %c377_124 = arith.constant 377 : index
    %93 = vector.load %arg11[%c0_123, %c377_124] : memref<2x640xf32, #tpu.memory_space<vmem>>, vector<2x16xf32>
    tpu.vector_store %arg11[%c0_123, %c377_124], %92 {strides = array<i32>} : memref<2x640xf32, #tpu.memory_space<vmem>>, vector<2x16xf32>,
    %c0_125 = arith.constant 0 : index
    %c0_126 = arith.constant 0 : index
    %c240 = arith.constant 240 : index
    %94 = vector.load %arg1[%c0_125, %c0_126, %c240] : memref<1x2x256xf32, #tpu.memory_space<vmem>>, vector<1x2x16xf32>
    %95 = vector.shape_cast %94 : vector<1x2x16xf32> to vector<2x16xf32>
    %c0_127 = arith.constant 0 : index
    %c399 = arith.constant 399 : index
    %96 = vector.load %arg10[%c0_127, %c399] : memref<2x640xf32, #tpu.memory_space<vmem>>, vector<2x16xf32>
    tpu.vector_store %arg10[%c0_127, %c399], %95 {strides = array<i32>} : memref<2x640xf32, #tpu.memory_space<vmem>>, vector<2x16xf32>,
    %c0_128 = arith.constant 0 : index
    %c0_129 = arith.constant 0 : index
    %c240_130 = arith.constant 240 : index
    %97 = vector.load %arg2[%c0_128, %c0_129, %c240_130] : memref<1x2x256xf32, #tpu.memory_space<vmem>>, vector<1x2x16xf32>
    %98 = vector.shape_cast %97 : vector<1x2x16xf32> to vector<2x16xf32>
    %c0_131 = arith.constant 0 : index
    %c399_132 = arith.constant 399 : index
    %99 = vector.load %arg11[%c0_131, %c399_132] : memref<2x640xf32, #tpu.memory_space<vmem>>, vector<2x16xf32>
    tpu.vector_store %arg11[%c0_131, %c399_132], %98 {strides = array<i32>} : memref<2x640xf32, #tpu.memory_space<vmem>>, vector<2x16xf32>,
    %cst_133 = arith.constant 0.000000e+00 : f32
    %100 = vector.broadcast %cst_133 : f32 to vector<4x512xf32>
    %c0_134 = arith.constant 0 : index
    %c0_135 = arith.constant 0 : index
    %101 = vector.load %arg3[%c0_134, %c0_135] : memref<4x50xf32, #tpu.memory_space<vmem>>, vector<4x2xf32>
    %c0_136 = arith.constant 0 : index
    %c0_137 = arith.constant 0 : index
    %102 = vector.load %arg10[%c0_136, %c0_137] : memref<2x640xf32, #tpu.memory_space<vmem>>, vector<2x512xf32>
    %103 = vector.extract_strided_slice %101 {offsets = [0, 0], sizes = [4, 1], strides = [1, 1]} : vector<4x2xf32> to vector<4x1xf32>
    %104 = vector.extract_strided_slice %102 {offsets = [0, 0], sizes = [1, 512], strides = [1, 1]} : vector<2x512xf32> to vector<1x512xf32>
    %105 = vector.broadcast %103 : vector<4x1xf32> to vector<4x512xf32>
    %106 = vector.broadcast %104 : vector<1x512xf32> to vector<4x512xf32>
    %107 = arith.mulf %105, %106 : vector<4x512xf32>
    %108 = arith.addf %100, %107 : vector<4x512xf32>
    %109 = vector.extract_strided_slice %101 {offsets = [0, 1], sizes = [4, 1], strides = [1, 1]} : vector<4x2xf32> to vector<4x1xf32>
    %110 = vector.extract_strided_slice %102 {offsets = [1, 0], sizes = [1, 512], strides = [1, 1]} : vector<2x512xf32> to vector<1x512xf32>
    %111 = vector.broadcast %109 : vector<4x1xf32> to vector<4x512xf32>
    %112 = vector.broadcast %110 : vector<1x512xf32> to vector<4x512xf32>
    %113 = arith.mulf %111, %112 : vector<4x512xf32>
    %114 = arith.addf %108, %113 : vector<4x512xf32>
    %c0_138 = arith.constant 0 : index
    %c0_139 = arith.constant 0 : index
    %115 = vector.load %arg4[%c0_138, %c0_139] : memref<4x50xf32, #tpu.memory_space<vmem>>, vector<4x2xf32>
    %c0_140 = arith.constant 0 : index
    %c0_141 = arith.constant 0 : index
    %116 = vector.load %arg11[%c0_140, %c0_141] : memref<2x640xf32, #tpu.memory_space<vmem>>, vector<2x512xf32>
    %117 = vector.extract_strided_slice %115 {offsets = [0, 0], sizes = [4, 1], strides = [1, 1]} : vector<4x2xf32> to vector<4x1xf32>
    %118 = vector.extract_strided_slice %116 {offsets = [0, 0], sizes = [1, 512], strides = [1, 1]} : vector<2x512xf32> to vector<1x512xf32>
    %119 = vector.broadcast %117 : vector<4x1xf32> to vector<4x512xf32>
    %120 = vector.broadcast %118 : vector<1x512xf32> to vector<4x512xf32>
    %121 = arith.mulf %119, %120 : vector<4x512xf32>
    %122 = arith.addf %114, %121 : vector<4x512xf32>
    %123 = vector.extract_strided_slice %115 {offsets = [0, 1], sizes = [4, 1], strides = [1, 1]} : vector<4x2xf32> to vector<4x1xf32>
    %124 = vector.extract_strided_slice %116 {offsets = [1, 0], sizes = [1, 512], strides = [1, 1]} : vector<2x512xf32> to vector<1x512xf32>
    %125 = vector.broadcast %123 : vector<4x1xf32> to vector<4x512xf32>
    %126 = vector.broadcast %124 : vector<1x512xf32> to vector<4x512xf32>
    %127 = arith.mulf %125, %126 : vector<4x512xf32>
    %128 = arith.addf %122, %127 : vector<4x512xf32>
    %c0_142 = arith.constant 0 : index
    %c2 = arith.constant 2 : index
    %129 = vector.load %arg3[%c0_142, %c2] : memref<4x50xf32, #tpu.memory_space<vmem>>, vector<4x2xf32>
    %c0_143 = arith.constant 0 : index
    %c1 = arith.constant 1 : index
    %130 = vector.load %arg10[%c0_143, %c1] : memref<2x640xf32, #tpu.memory_space<vmem>>, vector<2x512xf32>
    %131 = vector.extract_strided_slice %129 {offsets = [0, 0], sizes = [4, 1], strides = [1, 1]} : vector<4x2xf32> to vector<4x1xf32>
    %132 = vector.extract_strided_slice %130 {offsets = [0, 0], sizes = [1, 512], strides = [1, 1]} : vector<2x512xf32> to vector<1x512xf32>
    %133 = vector.broadcast %131 : vector<4x1xf32> to vector<4x512xf32>
    %134 = vector.broadcast %132 : vector<1x512xf32> to vector<4x512xf32>
    %135 = arith.mulf %133, %134 : vector<4x512xf32>
    %136 = arith.addf %128, %135 : vector<4x512xf32>
    %137 = vector.extract_strided_slice %129 {offsets = [0, 1], sizes = [4, 1], strides = [1, 1]} : vector<4x2xf32> to vector<4x1xf32>
    %138 = vector.extract_strided_slice %130 {offsets = [1, 0], sizes = [1, 512], strides = [1, 1]} : vector<2x512xf32> to vector<1x512xf32>
    %139 = vector.broadcast %137 : vector<4x1xf32> to vector<4x512xf32>
    %140 = vector.broadcast %138 : vector<1x512xf32> to vector<4x512xf32>
    %141 = arith.mulf %139, %140 : vector<4x512xf32>
    %142 = arith.addf %136, %141 : vector<4x512xf32>
    %c0_144 = arith.constant 0 : index
    %c2_145 = arith.constant 2 : index
    %143 = vector.load %arg4[%c0_144, %c2_145] : memref<4x50xf32, #tpu.memory_space<vmem>>, vector<4x2xf32>
    %c0_146 = arith.constant 0 : index
    %c1_147 = arith.constant 1 : index
    %144 = vector.load %arg11[%c0_146, %c1_147] : memref<2x640xf32, #tpu.memory_space<vmem>>, vector<2x512xf32>
    %145 = vector.extract_strided_slice %143 {offsets = [0, 0], sizes = [4, 1], strides = [1, 1]} : vector<4x2xf32> to vector<4x1xf32>
    %146 = vector.extract_strided_slice %144 {offsets = [0, 0], sizes = [1, 512], strides = [1, 1]} : vector<2x512xf32> to vector<1x512xf32>
    %147 = vector.broadcast %145 : vector<4x1xf32> to vector<4x512xf32>
    %148 = vector.broadcast %146 : vector<1x512xf32> to vector<4x512xf32>
    %149 = arith.mulf %147, %148 : vector<4x512xf32>
    %150 = arith.addf %142, %149 : vector<4x512xf32>
    %151 = vector.extract_strided_slice %143 {offsets = [0, 1], sizes = [4, 1], strides = [1, 1]} : vector<4x2xf32> to vector<4x1xf32>
    %152 = vector.extract_strided_slice %144 {offsets = [1, 0], sizes = [1, 512], strides = [1, 1]} : vector<2x512xf32> to vector<1x512xf32>
    %153 = vector.broadcast %151 : vector<4x1xf32> to vector<4x512xf32>
    %154 = vector.broadcast %152 : vector<1x512xf32> to vector<4x512xf32>
    %155 = arith.mulf %153, %154 : vector<4x512xf32>
    %156 = arith.addf %150, %155 : vector<4x512xf32>
    %c0_148 = arith.constant 0 : index
    %c4 = arith.constant 4 : index
    %157 = vector.load %arg3[%c0_148, %c4] : memref<4x50xf32, #tpu.memory_space<vmem>>, vector<4x2xf32>
    %c0_149 = arith.constant 0 : index
    %c2_150 = arith.constant 2 : index
    %158 = vector.load %arg10[%c0_149, %c2_150] : memref<2x640xf32, #tpu.memory_space<vmem>>, vector<2x512xf32>
    %159 = vector.extract_strided_slice %157 {offsets = [0, 0], sizes = [4, 1], strides = [1, 1]} : vector<4x2xf32> to vector<4x1xf32>
    %160 = vector.extract_strided_slice %158 {offsets = [0, 0], sizes = [1, 512], strides = [1, 1]} : vector<2x512xf32> to vector<1x512xf32>
    %161 = vector.broadcast %159 : vector<4x1xf32> to vector<4x512xf32>
    %162 = vector.broadcast %160 : vector<1x512xf32> to vector<4x512xf32>
    %163 = arith.mulf %161, %162 : vector<4x512xf32>
    %164 = arith.addf %156, %163 : vector<4x512xf32>
    %165 = vector.extract_strided_slice %157 {offsets = [0, 1], sizes = [4, 1], strides = [1, 1]} : vector<4x2xf32> to vector<4x1xf32>
    %166 = vector.extract_strided_slice %158 {offsets = [1, 0], sizes = [1, 512], strides = [1, 1]} : vector<2x512xf32> to vector<1x512xf32>
    %167 = vector.broadcast %165 : vector<4x1xf32> to vector<4x512xf32>
    %168 = vector.broadcast %166 : vector<1x512xf32> to vector<4x512xf32>
    %169 = arith.mulf %167, %168 : vector<4x512xf32>
    %170 = arith.addf %164, %169 : vector<4x512xf32>
    %c0_151 = arith.constant 0 : index
    %c4_152 = arith.constant 4 : index
    %171 = vector.load %arg4[%c0_151, %c4_152] : memref<4x50xf32, #tpu.memory_space<vmem>>, vector<4x2xf32>
    %c0_153 = arith.constant 0 : index
    %c2_154 = arith.constant 2 : index
    %172 = vector.load %arg11[%c0_153, %c2_154] : memref<2x640xf32, #tpu.memory_space<vmem>>, vector<2x512xf32>
    %173 = vector.extract_strided_slice %171 {offsets = [0, 0], sizes = [4, 1], strides = [1, 1]} : vector<4x2xf32> to vector<4x1xf32>
    %174 = vector.extract_strided_slice %172 {offsets = [0, 0], sizes = [1, 512], strides = [1, 1]} : vector<2x512xf32> to vector<1x512xf32>
    %175 = vector.broadcast %173 : vector<4x1xf32> to vector<4x512xf32>
    %176 = vector.broadcast %174 : vector<1x512xf32> to vector<4x512xf32>
    %177 = arith.mulf %175, %176 : vector<4x512xf32>
    %178 = arith.addf %170, %177 : vector<4x512xf32>
    %179 = vector.extract_strided_slice %171 {offsets = [0, 1], sizes = [4, 1], strides = [1, 1]} : vector<4x2xf32> to vector<4x1xf32>
    %180 = vector.extract_strided_slice %172 {offsets = [1, 0], sizes = [1, 512], strides = [1, 1]} : vector<2x512xf32> to vector<1x512xf32>
    %181 = vector.broadcast %179 : vector<4x1xf32> to vector<4x512xf32>
    %182 = vector.broadcast %180 : vector<1x512xf32> to vector<4x512xf32>
    %183 = arith.mulf %181, %182 : vector<4x512xf32>
    %184 = arith.addf %178, %183 : vector<4x512xf32>
    %c0_155 = arith.constant 0 : index
    %c6 = arith.constant 6 : index
    %185 = vector.load %arg3[%c0_155, %c6] : memref<4x50xf32, #tpu.memory_space<vmem>>, vector<4x2xf32>
    %c0_156 = arith.constant 0 : index
    %c3 = arith.constant 3 : index
    %186 = vector.load %arg10[%c0_156, %c3] : memref<2x640xf32, #tpu.memory_space<vmem>>, vector<2x512xf32>
    %187 = vector.extract_strided_slice %185 {offsets = [0, 0], sizes = [4, 1], strides = [1, 1]} : vector<4x2xf32> to vector<4x1xf32>
    %188 = vector.extract_strided_slice %186 {offsets = [0, 0], sizes = [1, 512], strides = [1, 1]} : vector<2x512xf32> to vector<1x512xf32>
    %189 = vector.broadcast %187 : vector<4x1xf32> to vector<4x512xf32>
    %190 = vector.broadcast %188 : vector<1x512xf32> to vector<4x512xf32>
    %191 = arith.mulf %189, %190 : vector<4x512xf32>
    %192 = arith.addf %184, %191 : vector<4x512xf32>
    %193 = vector.extract_strided_slice %185 {offsets = [0, 1], sizes = [4, 1], strides = [1, 1]} : vector<4x2xf32> to vector<4x1xf32>
    %194 = vector.extract_strided_slice %186 {offsets = [1, 0], sizes = [1, 512], strides = [1, 1]} : vector<2x512xf32> to vector<1x512xf32>
    %195 = vector.broadcast %193 : vector<4x1xf32> to vector<4x512xf32>
    %196 = vector.broadcast %194 : vector<1x512xf32> to vector<4x512xf32>
    %197 = arith.mulf %195, %196 : vector<4x512xf32>
    %198 = arith.addf %192, %197 : vector<4x512xf32>
    %c0_157 = arith.constant 0 : index
    %c6_158 = arith.constant 6 : index
    %199 = vector.load %arg4[%c0_157, %c6_158] : memref<4x50xf32, #tpu.memory_space<vmem>>, vector<4x2xf32>
    %c0_159 = arith.constant 0 : index
    %c3_160 = arith.constant 3 : index
    %200 = vector.load %arg11[%c0_159, %c3_160] : memref<2x640xf32, #tpu.memory_space<vmem>>, vector<2x512xf32>
    %201 = vector.extract_strided_slice %199 {offsets = [0, 0], sizes = [4, 1], strides = [1, 1]} : vector<4x2xf32> to vector<4x1xf32>
    %202 = vector.extract_strided_slice %200 {offsets = [0, 0], sizes = [1, 512], strides = [1, 1]} : vector<2x512xf32> to vector<1x512xf32>
    %203 = vector.broadcast %201 : vector<4x1xf32> to vector<4x512xf32>
    %204 = vector.broadcast %202 : vector<1x512xf32> to vector<4x512xf32>
    %205 = arith.mulf %203, %204 : vector<4x512xf32>
    %206 = arith.addf %198, %205 : vector<4x512xf32>
    %207 = vector.extract_strided_slice %199 {offsets = [0, 1], sizes = [4, 1], strides = [1, 1]} : vector<4x2xf32> to vector<4x1xf32>
    %208 = vector.extract_strided_slice %200 {offsets = [1, 0], sizes = [1, 512], strides = [1, 1]} : vector<2x512xf32> to vector<1x512xf32>
    %209 = vector.broadcast %207 : vector<4x1xf32> to vector<4x512xf32>
    %210 = vector.broadcast %208 : vector<1x512xf32> to vector<4x512xf32>
    %211 = arith.mulf %209, %210 : vector<4x512xf32>
    %212 = arith.addf %206, %211 : vector<4x512xf32>
    %c0_161 = arith.constant 0 : index
    %c8 = arith.constant 8 : index
    %213 = vector.load %arg3[%c0_161, %c8] : memref<4x50xf32, #tpu.memory_space<vmem>>, vector<4x2xf32>
    %c0_162 = arith.constant 0 : index
    %c4_163 = arith.constant 4 : index
    %214 = vector.load %arg10[%c0_162, %c4_163] : memref<2x640xf32, #tpu.memory_space<vmem>>, vector<2x512xf32>
    %215 = vector.extract_strided_slice %213 {offsets = [0, 0], sizes = [4, 1], strides = [1, 1]} : vector<4x2xf32> to vector<4x1xf32>
    %216 = vector.extract_strided_slice %214 {offsets = [0, 0], sizes = [1, 512], strides = [1, 1]} : vector<2x512xf32> to vector<1x512xf32>
    %217 = vector.broadcast %215 : vector<4x1xf32> to vector<4x512xf32>
    %218 = vector.broadcast %216 : vector<1x512xf32> to vector<4x512xf32>
    %219 = arith.mulf %217, %218 : vector<4x512xf32>
    %220 = arith.addf %212, %219 : vector<4x512xf32>
    %221 = vector.extract_strided_slice %213 {offsets = [0, 1], sizes = [4, 1], strides = [1, 1]} : vector<4x2xf32> to vector<4x1xf32>
    %222 = vector.extract_strided_slice %214 {offsets = [1, 0], sizes = [1, 512], strides = [1, 1]} : vector<2x512xf32> to vector<1x512xf32>
    %223 = vector.broadcast %221 : vector<4x1xf32> to vector<4x512xf32>
    %224 = vector.broadcast %222 : vector<1x512xf32> to vector<4x512xf32>
    %225 = arith.mulf %223, %224 : vector<4x512xf32>
    %226 = arith.addf %220, %225 : vector<4x512xf32>
    %c0_164 = arith.constant 0 : index
    %c8_165 = arith.constant 8 : index
    %227 = vector.load %arg4[%c0_164, %c8_165] : memref<4x50xf32, #tpu.memory_space<vmem>>, vector<4x2xf32>
    %c0_166 = arith.constant 0 : index
    %c4_167 = arith.constant 4 : index
    %228 = vector.load %arg11[%c0_166, %c4_167] : memref<2x640xf32, #tpu.memory_space<vmem>>, vector<2x512xf32>
    %229 = vector.extract_strided_slice %227 {offsets = [0, 0], sizes = [4, 1], strides = [1, 1]} : vector<4x2xf32> to vector<4x1xf32>
    %230 = vector.extract_strided_slice %228 {offsets = [0, 0], sizes = [1, 512], strides = [1, 1]} : vector<2x512xf32> to vector<1x512xf32>
    %231 = vector.broadcast %229 : vector<4x1xf32> to vector<4x512xf32>
    %232 = vector.broadcast %230 : vector<1x512xf32> to vector<4x512xf32>
    %233 = arith.mulf %231, %232 : vector<4x512xf32>
    %234 = arith.addf %226, %233 : vector<4x512xf32>
    %235 = vector.extract_strided_slice %227 {offsets = [0, 1], sizes = [4, 1], strides = [1, 1]} : vector<4x2xf32> to vector<4x1xf32>
    %236 = vector.extract_strided_slice %228 {offsets = [1, 0], sizes = [1, 512], strides = [1, 1]} : vector<2x512xf32> to vector<1x512xf32>
    %237 = vector.broadcast %235 : vector<4x1xf32> to vector<4x512xf32>
    %238 = vector.broadcast %236 : vector<1x512xf32> to vector<4x512xf32>
    %239 = arith.mulf %237, %238 : vector<4x512xf32>
    %240 = arith.addf %234, %239 : vector<4x512xf32>
    %c0_168 = arith.constant 0 : index
    %c10 = arith.constant 10 : index
    %241 = vector.load %arg3[%c0_168, %c10] : memref<4x50xf32, #tpu.memory_space<vmem>>, vector<4x2xf32>
    %c0_169 = arith.constant 0 : index
    %c22 = arith.constant 22 : index
    %242 = vector.load %arg10[%c0_169, %c22] : memref<2x640xf32, #tpu.memory_space<vmem>>, vector<2x512xf32>
    %243 = vector.extract_strided_slice %241 {offsets = [0, 0], sizes = [4, 1], strides = [1, 1]} : vector<4x2xf32> to vector<4x1xf32>
    %244 = vector.extract_strided_slice %242 {offsets = [0, 0], sizes = [1, 512], strides = [1, 1]} : vector<2x512xf32> to vector<1x512xf32>
    %245 = vector.broadcast %243 : vector<4x1xf32> to vector<4x512xf32>
    %246 = vector.broadcast %244 : vector<1x512xf32> to vector<4x512xf32>
    %247 = arith.mulf %245, %246 : vector<4x512xf32>
    %248 = arith.addf %240, %247 : vector<4x512xf32>
    %249 = vector.extract_strided_slice %241 {offsets = [0, 1], sizes = [4, 1], strides = [1, 1]} : vector<4x2xf32> to vector<4x1xf32>
    %250 = vector.extract_strided_slice %242 {offsets = [1, 0], sizes = [1, 512], strides = [1, 1]} : vector<2x512xf32> to vector<1x512xf32>
    %251 = vector.broadcast %249 : vector<4x1xf32> to vector<4x512xf32>
    %252 = vector.broadcast %250 : vector<1x512xf32> to vector<4x512xf32>
    %253 = arith.mulf %251, %252 : vector<4x512xf32>
    %254 = arith.addf %248, %253 : vector<4x512xf32>
    %c0_170 = arith.constant 0 : index
    %c10_171 = arith.constant 10 : index
    %255 = vector.load %arg4[%c0_170, %c10_171] : memref<4x50xf32, #tpu.memory_space<vmem>>, vector<4x2xf32>
    %c0_172 = arith.constant 0 : index
    %c22_173 = arith.constant 22 : index
    %256 = vector.load %arg11[%c0_172, %c22_173] : memref<2x640xf32, #tpu.memory_space<vmem>>, vector<2x512xf32>
    %257 = vector.extract_strided_slice %255 {offsets = [0, 0], sizes = [4, 1], strides = [1, 1]} : vector<4x2xf32> to vector<4x1xf32>
    %258 = vector.extract_strided_slice %256 {offsets = [0, 0], sizes = [1, 512], strides = [1, 1]} : vector<2x512xf32> to vector<1x512xf32>
    %259 = vector.broadcast %257 : vector<4x1xf32> to vector<4x512xf32>
    %260 = vector.broadcast %258 : vector<1x512xf32> to vector<4x512xf32>
    %261 = arith.mulf %259, %260 : vector<4x512xf32>
    %262 = arith.addf %254, %261 : vector<4x512xf32>
    %263 = vector.extract_strided_slice %255 {offsets = [0, 1], sizes = [4, 1], strides = [1, 1]} : vector<4x2xf32> to vector<4x1xf32>
    %264 = vector.extract_strided_slice %256 {offsets = [1, 0], sizes = [1, 512], strides = [1, 1]} : vector<2x512xf32> to vector<1x512xf32>
    %265 = vector.broadcast %263 : vector<4x1xf32> to vector<4x512xf32>
    %266 = vector.broadcast %264 : vector<1x512xf32> to vector<4x512xf32>
    %267 = arith.mulf %265, %266 : vector<4x512xf32>
    %268 = arith.addf %262, %267 : vector<4x512xf32>
    %c0_174 = arith.constant 0 : index
    %c12 = arith.constant 12 : index
    %269 = vector.load %arg3[%c0_174, %c12] : memref<4x50xf32, #tpu.memory_space<vmem>>, vector<4x2xf32>
    %c0_175 = arith.constant 0 : index
    %c23 = arith.constant 23 : index
    %270 = vector.load %arg10[%c0_175, %c23] : memref<2x640xf32, #tpu.memory_space<vmem>>, vector<2x512xf32>
    %271 = vector.extract_strided_slice %269 {offsets = [0, 0], sizes = [4, 1], strides = [1, 1]} : vector<4x2xf32> to vector<4x1xf32>
    %272 = vector.extract_strided_slice %270 {offsets = [0, 0], sizes = [1, 512], strides = [1, 1]} : vector<2x512xf32> to vector<1x512xf32>
    %273 = vector.broadcast %271 : vector<4x1xf32> to vector<4x512xf32>
    %274 = vector.broadcast %272 : vector<1x512xf32> to vector<4x512xf32>
    %275 = arith.mulf %273, %274 : vector<4x512xf32>
    %276 = arith.addf %268, %275 : vector<4x512xf32>
    %277 = vector.extract_strided_slice %269 {offsets = [0, 1], sizes = [4, 1], strides = [1, 1]} : vector<4x2xf32> to vector<4x1xf32>
    %278 = vector.extract_strided_slice %270 {offsets = [1, 0], sizes = [1, 512], strides = [1, 1]} : vector<2x512xf32> to vector<1x512xf32>
    %279 = vector.broadcast %277 : vector<4x1xf32> to vector<4x512xf32>
    %280 = vector.broadcast %278 : vector<1x512xf32> to vector<4x512xf32>
    %281 = arith.mulf %279, %280 : vector<4x512xf32>
    %282 = arith.addf %276, %281 : vector<4x512xf32>
    %c0_176 = arith.constant 0 : index
    %c12_177 = arith.constant 12 : index
    %283 = vector.load %arg4[%c0_176, %c12_177] : memref<4x50xf32, #tpu.memory_space<vmem>>, vector<4x2xf32>
    %c0_178 = arith.constant 0 : index
    %c23_179 = arith.constant 23 : index
    %284 = vector.load %arg11[%c0_178, %c23_179] : memref<2x640xf32, #tpu.memory_space<vmem>>, vector<2x512xf32>
    %285 = vector.extract_strided_slice %283 {offsets = [0, 0], sizes = [4, 1], strides = [1, 1]} : vector<4x2xf32> to vector<4x1xf32>
    %286 = vector.extract_strided_slice %284 {offsets = [0, 0], sizes = [1, 512], strides = [1, 1]} : vector<2x512xf32> to vector<1x512xf32>
    %287 = vector.broadcast %285 : vector<4x1xf32> to vector<4x512xf32>
    %288 = vector.broadcast %286 : vector<1x512xf32> to vector<4x512xf32>
    %289 = arith.mulf %287, %288 : vector<4x512xf32>
    %290 = arith.addf %282, %289 : vector<4x512xf32>
    %291 = vector.extract_strided_slice %283 {offsets = [0, 1], sizes = [4, 1], strides = [1, 1]} : vector<4x2xf32> to vector<4x1xf32>
    %292 = vector.extract_strided_slice %284 {offsets = [1, 0], sizes = [1, 512], strides = [1, 1]} : vector<2x512xf32> to vector<1x512xf32>
    %293 = vector.broadcast %291 : vector<4x1xf32> to vector<4x512xf32>
    %294 = vector.broadcast %292 : vector<1x512xf32> to vector<4x512xf32>
    %295 = arith.mulf %293, %294 : vector<4x512xf32>
    %296 = arith.addf %290, %295 : vector<4x512xf32>
    %c0_180 = arith.constant 0 : index
    %c14 = arith.constant 14 : index
    %297 = vector.load %arg3[%c0_180, %c14] : memref<4x50xf32, #tpu.memory_space<vmem>>, vector<4x2xf32>
    %c0_181 = arith.constant 0 : index
    %c24 = arith.constant 24 : index
    %298 = vector.load %arg10[%c0_181, %c24] : memref<2x640xf32, #tpu.memory_space<vmem>>, vector<2x512xf32>
    %299 = vector.extract_strided_slice %297 {offsets = [0, 0], sizes = [4, 1], strides = [1, 1]} : vector<4x2xf32> to vector<4x1xf32>
    %300 = vector.extract_strided_slice %298 {offsets = [0, 0], sizes = [1, 512], strides = [1, 1]} : vector<2x512xf32> to vector<1x512xf32>
    %301 = vector.broadcast %299 : vector<4x1xf32> to vector<4x512xf32>
    %302 = vector.broadcast %300 : vector<1x512xf32> to vector<4x512xf32>
    %303 = arith.mulf %301, %302 : vector<4x512xf32>
    %304 = arith.addf %296, %303 : vector<4x512xf32>
    %305 = vector.extract_strided_slice %297 {offsets = [0, 1], sizes = [4, 1], strides = [1, 1]} : vector<4x2xf32> to vector<4x1xf32>
    %306 = vector.extract_strided_slice %298 {offsets = [1, 0], sizes = [1, 512], strides = [1, 1]} : vector<2x512xf32> to vector<1x512xf32>
    %307 = vector.broadcast %305 : vector<4x1xf32> to vector<4x512xf32>
    %308 = vector.broadcast %306 : vector<1x512xf32> to vector<4x512xf32>
    %309 = arith.mulf %307, %308 : vector<4x512xf32>
    %310 = arith.addf %304, %309 : vector<4x512xf32>
    %c0_182 = arith.constant 0 : index
    %c14_183 = arith.constant 14 : index
    %311 = vector.load %arg4[%c0_182, %c14_183] : memref<4x50xf32, #tpu.memory_space<vmem>>, vector<4x2xf32>
    %c0_184 = arith.constant 0 : index
    %c24_185 = arith.constant 24 : index
    %312 = vector.load %arg11[%c0_184, %c24_185] : memref<2x640xf32, #tpu.memory_space<vmem>>, vector<2x512xf32>
    %313 = vector.extract_strided_slice %311 {offsets = [0, 0], sizes = [4, 1], strides = [1, 1]} : vector<4x2xf32> to vector<4x1xf32>
    %314 = vector.extract_strided_slice %312 {offsets = [0, 0], sizes = [1, 512], strides = [1, 1]} : vector<2x512xf32> to vector<1x512xf32>
    %315 = vector.broadcast %313 : vector<4x1xf32> to vector<4x512xf32>
    %316 = vector.broadcast %314 : vector<1x512xf32> to vector<4x512xf32>
    %317 = arith.mulf %315, %316 : vector<4x512xf32>
    %318 = arith.addf %310, %317 : vector<4x512xf32>
    %319 = vector.extract_strided_slice %311 {offsets = [0, 1], sizes = [4, 1], strides = [1, 1]} : vector<4x2xf32> to vector<4x1xf32>
    %320 = vector.extract_strided_slice %312 {offsets = [1, 0], sizes = [1, 512], strides = [1, 1]} : vector<2x512xf32> to vector<1x512xf32>
    %321 = vector.broadcast %319 : vector<4x1xf32> to vector<4x512xf32>
    %322 = vector.broadcast %320 : vector<1x512xf32> to vector<4x512xf32>
    %323 = arith.mulf %321, %322 : vector<4x512xf32>
    %324 = arith.addf %318, %323 : vector<4x512xf32>
    %c0_186 = arith.constant 0 : index
    %c16_187 = arith.constant 16 : index
    %325 = vector.load %arg3[%c0_186, %c16_187] : memref<4x50xf32, #tpu.memory_space<vmem>>, vector<4x2xf32>
    %c0_188 = arith.constant 0 : index
    %c25 = arith.constant 25 : index
    %326 = vector.load %arg10[%c0_188, %c25] : memref<2x640xf32, #tpu.memory_space<vmem>>, vector<2x512xf32>
    %327 = vector.extract_strided_slice %325 {offsets = [0, 0], sizes = [4, 1], strides = [1, 1]} : vector<4x2xf32> to vector<4x1xf32>
    %328 = vector.extract_strided_slice %326 {offsets = [0, 0], sizes = [1, 512], strides = [1, 1]} : vector<2x512xf32> to vector<1x512xf32>
    %329 = vector.broadcast %327 : vector<4x1xf32> to vector<4x512xf32>
    %330 = vector.broadcast %328 : vector<1x512xf32> to vector<4x512xf32>
    %331 = arith.mulf %329, %330 : vector<4x512xf32>
    %332 = arith.addf %324, %331 : vector<4x512xf32>
    %333 = vector.extract_strided_slice %325 {offsets = [0, 1], sizes = [4, 1], strides = [1, 1]} : vector<4x2xf32> to vector<4x1xf32>
    %334 = vector.extract_strided_slice %326 {offsets = [1, 0], sizes = [1, 512], strides = [1, 1]} : vector<2x512xf32> to vector<1x512xf32>
    %335 = vector.broadcast %333 : vector<4x1xf32> to vector<4x512xf32>
    %336 = vector.broadcast %334 : vector<1x512xf32> to vector<4x512xf32>
    %337 = arith.mulf %335, %336 : vector<4x512xf32>
    %338 = arith.addf %332, %337 : vector<4x512xf32>
    %c0_189 = arith.constant 0 : index
    %c16_190 = arith.constant 16 : index
    %339 = vector.load %arg4[%c0_189, %c16_190] : memref<4x50xf32, #tpu.memory_space<vmem>>, vector<4x2xf32>
    %c0_191 = arith.constant 0 : index
    %c25_192 = arith.constant 25 : index
    %340 = vector.load %arg11[%c0_191, %c25_192] : memref<2x640xf32, #tpu.memory_space<vmem>>, vector<2x512xf32>
    %341 = vector.extract_strided_slice %339 {offsets = [0, 0], sizes = [4, 1], strides = [1, 1]} : vector<4x2xf32> to vector<4x1xf32>
    %342 = vector.extract_strided_slice %340 {offsets = [0, 0], sizes = [1, 512], strides = [1, 1]} : vector<2x512xf32> to vector<1x512xf32>
    %343 = vector.broadcast %341 : vector<4x1xf32> to vector<4x512xf32>
    %344 = vector.broadcast %342 : vector<1x512xf32> to vector<4x512xf32>
    %345 = arith.mulf %343, %344 : vector<4x512xf32>
    %346 = arith.addf %338, %345 : vector<4x512xf32>
    %347 = vector.extract_strided_slice %339 {offsets = [0, 1], sizes = [4, 1], strides = [1, 1]} : vector<4x2xf32> to vector<4x1xf32>
    %348 = vector.extract_strided_slice %340 {offsets = [1, 0], sizes = [1, 512], strides = [1, 1]} : vector<2x512xf32> to vector<1x512xf32>
    %349 = vector.broadcast %347 : vector<4x1xf32> to vector<4x512xf32>
    %350 = vector.broadcast %348 : vector<1x512xf32> to vector<4x512xf32>
    %351 = arith.mulf %349, %350 : vector<4x512xf32>
    %352 = arith.addf %346, %351 : vector<4x512xf32>
    %c0_193 = arith.constant 0 : index
    %c18 = arith.constant 18 : index
    %353 = vector.load %arg3[%c0_193, %c18] : memref<4x50xf32, #tpu.memory_space<vmem>>, vector<4x2xf32>
    %c0_194 = arith.constant 0 : index
    %c26 = arith.constant 26 : index
    %354 = vector.load %arg10[%c0_194, %c26] : memref<2x640xf32, #tpu.memory_space<vmem>>, vector<2x512xf32>
    %355 = vector.extract_strided_slice %353 {offsets = [0, 0], sizes = [4, 1], strides = [1, 1]} : vector<4x2xf32> to vector<4x1xf32>
    %356 = vector.extract_strided_slice %354 {offsets = [0, 0], sizes = [1, 512], strides = [1, 1]} : vector<2x512xf32> to vector<1x512xf32>
    %357 = vector.broadcast %355 : vector<4x1xf32> to vector<4x512xf32>
    %358 = vector.broadcast %356 : vector<1x512xf32> to vector<4x512xf32>
    %359 = arith.mulf %357, %358 : vector<4x512xf32>
    %360 = arith.addf %352, %359 : vector<4x512xf32>
    %361 = vector.extract_strided_slice %353 {offsets = [0, 1], sizes = [4, 1], strides = [1, 1]} : vector<4x2xf32> to vector<4x1xf32>
    %362 = vector.extract_strided_slice %354 {offsets = [1, 0], sizes = [1, 512], strides = [1, 1]} : vector<2x512xf32> to vector<1x512xf32>
    %363 = vector.broadcast %361 : vector<4x1xf32> to vector<4x512xf32>
    %364 = vector.broadcast %362 : vector<1x512xf32> to vector<4x512xf32>
    %365 = arith.mulf %363, %364 : vector<4x512xf32>
    %366 = arith.addf %360, %365 : vector<4x512xf32>
    %c0_195 = arith.constant 0 : index
    %c18_196 = arith.constant 18 : index
    %367 = vector.load %arg4[%c0_195, %c18_196] : memref<4x50xf32, #tpu.memory_space<vmem>>, vector<4x2xf32>
    %c0_197 = arith.constant 0 : index
    %c26_198 = arith.constant 26 : index
    %368 = vector.load %arg11[%c0_197, %c26_198] : memref<2x640xf32, #tpu.memory_space<vmem>>, vector<2x512xf32>
    %369 = vector.extract_strided_slice %367 {offsets = [0, 0], sizes = [4, 1], strides = [1, 1]} : vector<4x2xf32> to vector<4x1xf32>
    %370 = vector.extract_strided_slice %368 {offsets = [0, 0], sizes = [1, 512], strides = [1, 1]} : vector<2x512xf32> to vector<1x512xf32>
    %371 = vector.broadcast %369 : vector<4x1xf32> to vector<4x512xf32>
    %372 = vector.broadcast %370 : vector<1x512xf32> to vector<4x512xf32>
    %373 = arith.mulf %371, %372 : vector<4x512xf32>
    %374 = arith.addf %366, %373 : vector<4x512xf32>
    %375 = vector.extract_strided_slice %367 {offsets = [0, 1], sizes = [4, 1], strides = [1, 1]} : vector<4x2xf32> to vector<4x1xf32>
    %376 = vector.extract_strided_slice %368 {offsets = [1, 0], sizes = [1, 512], strides = [1, 1]} : vector<2x512xf32> to vector<1x512xf32>
    %377 = vector.broadcast %375 : vector<4x1xf32> to vector<4x512xf32>
    %378 = vector.broadcast %376 : vector<1x512xf32> to vector<4x512xf32>
    %379 = arith.mulf %377, %378 : vector<4x512xf32>
    %380 = arith.addf %374, %379 : vector<4x512xf32>
    %c0_199 = arith.constant 0 : index
    %c20 = arith.constant 20 : index
    %381 = vector.load %arg3[%c0_199, %c20] : memref<4x50xf32, #tpu.memory_space<vmem>>, vector<4x2xf32>
    %c0_200 = arith.constant 0 : index
    %c44 = arith.constant 44 : index
    %382 = vector.load %arg10[%c0_200, %c44] : memref<2x640xf32, #tpu.memory_space<vmem>>, vector<2x512xf32>
    %383 = vector.extract_strided_slice %381 {offsets = [0, 0], sizes = [4, 1], strides = [1, 1]} : vector<4x2xf32> to vector<4x1xf32>
    %384 = vector.extract_strided_slice %382 {offsets = [0, 0], sizes = [1, 512], strides = [1, 1]} : vector<2x512xf32> to vector<1x512xf32>
    %385 = vector.broadcast %383 : vector<4x1xf32> to vector<4x512xf32>
    %386 = vector.broadcast %384 : vector<1x512xf32> to vector<4x512xf32>
    %387 = arith.mulf %385, %386 : vector<4x512xf32>
    %388 = arith.addf %380, %387 : vector<4x512xf32>
    %389 = vector.extract_strided_slice %381 {offsets = [0, 1], sizes = [4, 1], strides = [1, 1]} : vector<4x2xf32> to vector<4x1xf32>
    %390 = vector.extract_strided_slice %382 {offsets = [1, 0], sizes = [1, 512], strides = [1, 1]} : vector<2x512xf32> to vector<1x512xf32>
    %391 = vector.broadcast %389 : vector<4x1xf32> to vector<4x512xf32>
    %392 = vector.broadcast %390 : vector<1x512xf32> to vector<4x512xf32>
    %393 = arith.mulf %391, %392 : vector<4x512xf32>
    %394 = arith.addf %388, %393 : vector<4x512xf32>
    %c0_201 = arith.constant 0 : index
    %c20_202 = arith.constant 20 : index
    %395 = vector.load %arg4[%c0_201, %c20_202] : memref<4x50xf32, #tpu.memory_space<vmem>>, vector<4x2xf32>
    %c0_203 = arith.constant 0 : index
    %c44_204 = arith.constant 44 : index
    %396 = vector.load %arg11[%c0_203, %c44_204] : memref<2x640xf32, #tpu.memory_space<vmem>>, vector<2x512xf32>
    %397 = vector.extract_strided_slice %395 {offsets = [0, 0], sizes = [4, 1], strides = [1, 1]} : vector<4x2xf32> to vector<4x1xf32>
    %398 = vector.extract_strided_slice %396 {offsets = [0, 0], sizes = [1, 512], strides = [1, 1]} : vector<2x512xf32> to vector<1x512xf32>
    %399 = vector.broadcast %397 : vector<4x1xf32> to vector<4x512xf32>
    %400 = vector.broadcast %398 : vector<1x512xf32> to vector<4x512xf32>
    %401 = arith.mulf %399, %400 : vector<4x512xf32>
    %402 = arith.addf %394, %401 : vector<4x512xf32>
    %403 = vector.extract_strided_slice %395 {offsets = [0, 1], sizes = [4, 1], strides = [1, 1]} : vector<4x2xf32> to vector<4x1xf32>
    %404 = vector.extract_strided_slice %396 {offsets = [1, 0], sizes = [1, 512], strides = [1, 1]} : vector<2x512xf32> to vector<1x512xf32>
    %405 = vector.broadcast %403 : vector<4x1xf32> to vector<4x512xf32>
    %406 = vector.broadcast %404 : vector<1x512xf32> to vector<4x512xf32>
    %407 = arith.mulf %405, %406 : vector<4x512xf32>
    %408 = arith.addf %402, %407 : vector<4x512xf32>
    %c0_205 = arith.constant 0 : index
    %c22_206 = arith.constant 22 : index
    %409 = vector.load %arg3[%c0_205, %c22_206] : memref<4x50xf32, #tpu.memory_space<vmem>>, vector<4x2xf32>
    %c0_207 = arith.constant 0 : index
    %c45 = arith.constant 45 : index
    %410 = vector.load %arg10[%c0_207, %c45] : memref<2x640xf32, #tpu.memory_space<vmem>>, vector<2x512xf32>
    %411 = vector.extract_strided_slice %409 {offsets = [0, 0], sizes = [4, 1], strides = [1, 1]} : vector<4x2xf32> to vector<4x1xf32>
    %412 = vector.extract_strided_slice %410 {offsets = [0, 0], sizes = [1, 512], strides = [1, 1]} : vector<2x512xf32> to vector<1x512xf32>
    %413 = vector.broadcast %411 : vector<4x1xf32> to vector<4x512xf32>
    %414 = vector.broadcast %412 : vector<1x512xf32> to vector<4x512xf32>
    %415 = arith.mulf %413, %414 : vector<4x512xf32>
    %416 = arith.addf %408, %415 : vector<4x512xf32>
    %417 = vector.extract_strided_slice %409 {offsets = [0, 1], sizes = [4, 1], strides = [1, 1]} : vector<4x2xf32> to vector<4x1xf32>
    %418 = vector.extract_strided_slice %410 {offsets = [1, 0], sizes = [1, 512], strides = [1, 1]} : vector<2x512xf32> to vector<1x512xf32>
    %419 = vector.broadcast %417 : vector<4x1xf32> to vector<4x512xf32>
    %420 = vector.broadcast %418 : vector<1x512xf32> to vector<4x512xf32>
    %421 = arith.mulf %419, %420 : vector<4x512xf32>
    %422 = arith.addf %416, %421 : vector<4x512xf32>
    %c0_208 = arith.constant 0 : index
    %c22_209 = arith.constant 22 : index
    %423 = vector.load %arg4[%c0_208, %c22_209] : memref<4x50xf32, #tpu.memory_space<vmem>>, vector<4x2xf32>
    %c0_210 = arith.constant 0 : index
    %c45_211 = arith.constant 45 : index
    %424 = vector.load %arg11[%c0_210, %c45_211] : memref<2x640xf32, #tpu.memory_space<vmem>>, vector<2x512xf32>
    %425 = vector.extract_strided_slice %423 {offsets = [0, 0], sizes = [4, 1], strides = [1, 1]} : vector<4x2xf32> to vector<4x1xf32>
    %426 = vector.extract_strided_slice %424 {offsets = [0, 0], sizes = [1, 512], strides = [1, 1]} : vector<2x512xf32> to vector<1x512xf32>
    %427 = vector.broadcast %425 : vector<4x1xf32> to vector<4x512xf32>
    %428 = vector.broadcast %426 : vector<1x512xf32> to vector<4x512xf32>
    %429 = arith.mulf %427, %428 : vector<4x512xf32>
    %430 = arith.addf %422, %429 : vector<4x512xf32>
    %431 = vector.extract_strided_slice %423 {offsets = [0, 1], sizes = [4, 1], strides = [1, 1]} : vector<4x2xf32> to vector<4x1xf32>
    %432 = vector.extract_strided_slice %424 {offsets = [1, 0], sizes = [1, 512], strides = [1, 1]} : vector<2x512xf32> to vector<1x512xf32>
    %433 = vector.broadcast %431 : vector<4x1xf32> to vector<4x512xf32>
    %434 = vector.broadcast %432 : vector<1x512xf32> to vector<4x512xf32>
    %435 = arith.mulf %433, %434 : vector<4x512xf32>
    %436 = arith.addf %430, %435 : vector<4x512xf32>
    %c0_212 = arith.constant 0 : index
    %c24_213 = arith.constant 24 : index
    %437 = vector.load %arg3[%c0_212, %c24_213] : memref<4x50xf32, #tpu.memory_space<vmem>>, vector<4x2xf32>
    %c0_214 = arith.constant 0 : index
    %c46 = arith.constant 46 : index
    %438 = vector.load %arg10[%c0_214, %c46] : memref<2x640xf32, #tpu.memory_space<vmem>>, vector<2x512xf32>
    %439 = vector.extract_strided_slice %437 {offsets = [0, 0], sizes = [4, 1], strides = [1, 1]} : vector<4x2xf32> to vector<4x1xf32>
    %440 = vector.extract_strided_slice %438 {offsets = [0, 0], sizes = [1, 512], strides = [1, 1]} : vector<2x512xf32> to vector<1x512xf32>
    %441 = vector.broadcast %439 : vector<4x1xf32> to vector<4x512xf32>
    %442 = vector.broadcast %440 : vector<1x512xf32> to vector<4x512xf32>
    %443 = arith.mulf %441, %442 : vector<4x512xf32>
    %444 = arith.addf %436, %443 : vector<4x512xf32>
    %445 = vector.extract_strided_slice %437 {offsets = [0, 1], sizes = [4, 1], strides = [1, 1]} : vector<4x2xf32> to vector<4x1xf32>
    %446 = vector.extract_strided_slice %438 {offsets = [1, 0], sizes = [1, 512], strides = [1, 1]} : vector<2x512xf32> to vector<1x512xf32>
    %447 = vector.broadcast %445 : vector<4x1xf32> to vector<4x512xf32>
    %448 = vector.broadcast %446 : vector<1x512xf32> to vector<4x512xf32>
    %449 = arith.mulf %447, %448 : vector<4x512xf32>
    %450 = arith.addf %444, %449 : vector<4x512xf32>
    %c0_215 = arith.constant 0 : index
    %c24_216 = arith.constant 24 : index
    %451 = vector.load %arg4[%c0_215, %c24_216] : memref<4x50xf32, #tpu.memory_space<vmem>>, vector<4x2xf32>
    %c0_217 = arith.constant 0 : index
    %c46_218 = arith.constant 46 : index
    %452 = vector.load %arg11[%c0_217, %c46_218] : memref<2x640xf32, #tpu.memory_space<vmem>>, vector<2x512xf32>
    %453 = vector.extract_strided_slice %451 {offsets = [0, 0], sizes = [4, 1], strides = [1, 1]} : vector<4x2xf32> to vector<4x1xf32>
    %454 = vector.extract_strided_slice %452 {offsets = [0, 0], sizes = [1, 512], strides = [1, 1]} : vector<2x512xf32> to vector<1x512xf32>
    %455 = vector.broadcast %453 : vector<4x1xf32> to vector<4x512xf32>
    %456 = vector.broadcast %454 : vector<1x512xf32> to vector<4x512xf32>
    %457 = arith.mulf %455, %456 : vector<4x512xf32>
    %458 = arith.addf %450, %457 : vector<4x512xf32>
    %459 = vector.extract_strided_slice %451 {offsets = [0, 1], sizes = [4, 1], strides = [1, 1]} : vector<4x2xf32> to vector<4x1xf32>
    %460 = vector.extract_strided_slice %452 {offsets = [1, 0], sizes = [1, 512], strides = [1, 1]} : vector<2x512xf32> to vector<1x512xf32>
    %461 = vector.broadcast %459 : vector<4x1xf32> to vector<4x512xf32>
    %462 = vector.broadcast %460 : vector<1x512xf32> to vector<4x512xf32>
    %463 = arith.mulf %461, %462 : vector<4x512xf32>
    %464 = arith.addf %458, %463 : vector<4x512xf32>
    %c0_219 = arith.constant 0 : index
    %c26_220 = arith.constant 26 : index
    %465 = vector.load %arg3[%c0_219, %c26_220] : memref<4x50xf32, #tpu.memory_space<vmem>>, vector<4x2xf32>
    %c0_221 = arith.constant 0 : index
    %c47 = arith.constant 47 : index
    %466 = vector.load %arg10[%c0_221, %c47] : memref<2x640xf32, #tpu.memory_space<vmem>>, vector<2x512xf32>
    %467 = vector.extract_strided_slice %465 {offsets = [0, 0], sizes = [4, 1], strides = [1, 1]} : vector<4x2xf32> to vector<4x1xf32>
    %468 = vector.extract_strided_slice %466 {offsets = [0, 0], sizes = [1, 512], strides = [1, 1]} : vector<2x512xf32> to vector<1x512xf32>
    %469 = vector.broadcast %467 : vector<4x1xf32> to vector<4x512xf32>
    %470 = vector.broadcast %468 : vector<1x512xf32> to vector<4x512xf32>
    %471 = arith.mulf %469, %470 : vector<4x512xf32>
    %472 = arith.addf %464, %471 : vector<4x512xf32>
    %473 = vector.extract_strided_slice %465 {offsets = [0, 1], sizes = [4, 1], strides = [1, 1]} : vector<4x2xf32> to vector<4x1xf32>
    %474 = vector.extract_strided_slice %466 {offsets = [1, 0], sizes = [1, 512], strides = [1, 1]} : vector<2x512xf32> to vector<1x512xf32>
    %475 = vector.broadcast %473 : vector<4x1xf32> to vector<4x512xf32>
    %476 = vector.broadcast %474 : vector<1x512xf32> to vector<4x512xf32>
    %477 = arith.mulf %475, %476 : vector<4x512xf32>
    %478 = arith.addf %472, %477 : vector<4x512xf32>
    %c0_222 = arith.constant 0 : index
    %c26_223 = arith.constant 26 : index
    %479 = vector.load %arg4[%c0_222, %c26_223] : memref<4x50xf32, #tpu.memory_space<vmem>>, vector<4x2xf32>
    %c0_224 = arith.constant 0 : index
    %c47_225 = arith.constant 47 : index
    %480 = vector.load %arg11[%c0_224, %c47_225] : memref<2x640xf32, #tpu.memory_space<vmem>>, vector<2x512xf32>
    %481 = vector.extract_strided_slice %479 {offsets = [0, 0], sizes = [4, 1], strides = [1, 1]} : vector<4x2xf32> to vector<4x1xf32>
    %482 = vector.extract_strided_slice %480 {offsets = [0, 0], sizes = [1, 512], strides = [1, 1]} : vector<2x512xf32> to vector<1x512xf32>
    %483 = vector.broadcast %481 : vector<4x1xf32> to vector<4x512xf32>
    %484 = vector.broadcast %482 : vector<1x512xf32> to vector<4x512xf32>
    %485 = arith.mulf %483, %484 : vector<4x512xf32>
    %486 = arith.addf %478, %485 : vector<4x512xf32>
    %487 = vector.extract_strided_slice %479 {offsets = [0, 1], sizes = [4, 1], strides = [1, 1]} : vector<4x2xf32> to vector<4x1xf32>
    %488 = vector.extract_strided_slice %480 {offsets = [1, 0], sizes = [1, 512], strides = [1, 1]} : vector<2x512xf32> to vector<1x512xf32>
    %489 = vector.broadcast %487 : vector<4x1xf32> to vector<4x512xf32>
    %490 = vector.broadcast %488 : vector<1x512xf32> to vector<4x512xf32>
    %491 = arith.mulf %489, %490 : vector<4x512xf32>
    %492 = arith.addf %486, %491 : vector<4x512xf32>
    %c0_226 = arith.constant 0 : index
    %c28 = arith.constant 28 : index
    %493 = vector.load %arg3[%c0_226, %c28] : memref<4x50xf32, #tpu.memory_space<vmem>>, vector<4x2xf32>
    %c0_227 = arith.constant 0 : index
    %c48_228 = arith.constant 48 : index
    %494 = vector.load %arg10[%c0_227, %c48_228] : memref<2x640xf32, #tpu.memory_space<vmem>>, vector<2x512xf32>
    %495 = vector.extract_strided_slice %493 {offsets = [0, 0], sizes = [4, 1], strides = [1, 1]} : vector<4x2xf32> to vector<4x1xf32>
    %496 = vector.extract_strided_slice %494 {offsets = [0, 0], sizes = [1, 512], strides = [1, 1]} : vector<2x512xf32> to vector<1x512xf32>
    %497 = vector.broadcast %495 : vector<4x1xf32> to vector<4x512xf32>
    %498 = vector.broadcast %496 : vector<1x512xf32> to vector<4x512xf32>
    %499 = arith.mulf %497, %498 : vector<4x512xf32>
    %500 = arith.addf %492, %499 : vector<4x512xf32>
    %501 = vector.extract_strided_slice %493 {offsets = [0, 1], sizes = [4, 1], strides = [1, 1]} : vector<4x2xf32> to vector<4x1xf32>
    %502 = vector.extract_strided_slice %494 {offsets = [1, 0], sizes = [1, 512], strides = [1, 1]} : vector<2x512xf32> to vector<1x512xf32>
    %503 = vector.broadcast %501 : vector<4x1xf32> to vector<4x512xf32>
    %504 = vector.broadcast %502 : vector<1x512xf32> to vector<4x512xf32>
    %505 = arith.mulf %503, %504 : vector<4x512xf32>
    %506 = arith.addf %500, %505 : vector<4x512xf32>
    %c0_229 = arith.constant 0 : index
    %c28_230 = arith.constant 28 : index
    %507 = vector.load %arg4[%c0_229, %c28_230] : memref<4x50xf32, #tpu.memory_space<vmem>>, vector<4x2xf32>
    %c0_231 = arith.constant 0 : index
    %c48_232 = arith.constant 48 : index
    %508 = vector.load %arg11[%c0_231, %c48_232] : memref<2x640xf32, #tpu.memory_space<vmem>>, vector<2x512xf32>
    %509 = vector.extract_strided_slice %507 {offsets = [0, 0], sizes = [4, 1], strides = [1, 1]} : vector<4x2xf32> to vector<4x1xf32>
    %510 = vector.extract_strided_slice %508 {offsets = [0, 0], sizes = [1, 512], strides = [1, 1]} : vector<2x512xf32> to vector<1x512xf32>
    %511 = vector.broadcast %509 : vector<4x1xf32> to vector<4x512xf32>
    %512 = vector.broadcast %510 : vector<1x512xf32> to vector<4x512xf32>
    %513 = arith.mulf %511, %512 : vector<4x512xf32>
    %514 = arith.addf %506, %513 : vector<4x512xf32>
    %515 = vector.extract_strided_slice %507 {offsets = [0, 1], sizes = [4, 1], strides = [1, 1]} : vector<4x2xf32> to vector<4x1xf32>
    %516 = vector.extract_strided_slice %508 {offsets = [1, 0], sizes = [1, 512], strides = [1, 1]} : vector<2x512xf32> to vector<1x512xf32>
    %517 = vector.broadcast %515 : vector<4x1xf32> to vector<4x512xf32>
    %518 = vector.broadcast %516 : vector<1x512xf32> to vector<4x512xf32>
    %519 = arith.mulf %517, %518 : vector<4x512xf32>
    %520 = arith.addf %514, %519 : vector<4x512xf32>
    %c0_233 = arith.constant 0 : index
    %c30 = arith.constant 30 : index
    %521 = vector.load %arg3[%c0_233, %c30] : memref<4x50xf32, #tpu.memory_space<vmem>>, vector<4x2xf32>
    %c0_234 = arith.constant 0 : index
    %c66 = arith.constant 66 : index
    %522 = vector.load %arg10[%c0_234, %c66] : memref<2x640xf32, #tpu.memory_space<vmem>>, vector<2x512xf32>
    %523 = vector.extract_strided_slice %521 {offsets = [0, 0], sizes = [4, 1], strides = [1, 1]} : vector<4x2xf32> to vector<4x1xf32>
    %524 = vector.extract_strided_slice %522 {offsets = [0, 0], sizes = [1, 512], strides = [1, 1]} : vector<2x512xf32> to vector<1x512xf32>
    %525 = vector.broadcast %523 : vector<4x1xf32> to vector<4x512xf32>
    %526 = vector.broadcast %524 : vector<1x512xf32> to vector<4x512xf32>
    %527 = arith.mulf %525, %526 : vector<4x512xf32>
    %528 = arith.addf %520, %527 : vector<4x512xf32>
    %529 = vector.extract_strided_slice %521 {offsets = [0, 1], sizes = [4, 1], strides = [1, 1]} : vector<4x2xf32> to vector<4x1xf32>
    %530 = vector.extract_strided_slice %522 {offsets = [1, 0], sizes = [1, 512], strides = [1, 1]} : vector<2x512xf32> to vector<1x512xf32>
    %531 = vector.broadcast %529 : vector<4x1xf32> to vector<4x512xf32>
    %532 = vector.broadcast %530 : vector<1x512xf32> to vector<4x512xf32>
    %533 = arith.mulf %531, %532 : vector<4x512xf32>
    %534 = arith.addf %528, %533 : vector<4x512xf32>
    %c0_235 = arith.constant 0 : index
    %c30_236 = arith.constant 30 : index
    %535 = vector.load %arg4[%c0_235, %c30_236] : memref<4x50xf32, #tpu.memory_space<vmem>>, vector<4x2xf32>
    %c0_237 = arith.constant 0 : index
    %c66_238 = arith.constant 66 : index
    %536 = vector.load %arg11[%c0_237, %c66_238] : memref<2x640xf32, #tpu.memory_space<vmem>>, vector<2x512xf32>
    %537 = vector.extract_strided_slice %535 {offsets = [0, 0], sizes = [4, 1], strides = [1, 1]} : vector<4x2xf32> to vector<4x1xf32>
    %538 = vector.extract_strided_slice %536 {offsets = [0, 0], sizes = [1, 512], strides = [1, 1]} : vector<2x512xf32> to vector<1x512xf32>
    %539 = vector.broadcast %537 : vector<4x1xf32> to vector<4x512xf32>
    %540 = vector.broadcast %538 : vector<1x512xf32> to vector<4x512xf32>
    %541 = arith.mulf %539, %540 : vector<4x512xf32>
    %542 = arith.addf %534, %541 : vector<4x512xf32>
    %543 = vector.extract_strided_slice %535 {offsets = [0, 1], sizes = [4, 1], strides = [1, 1]} : vector<4x2xf32> to vector<4x1xf32>
    %544 = vector.extract_strided_slice %536 {offsets = [1, 0], sizes = [1, 512], strides = [1, 1]} : vector<2x512xf32> to vector<1x512xf32>
    %545 = vector.broadcast %543 : vector<4x1xf32> to vector<4x512xf32>
    %546 = vector.broadcast %544 : vector<1x512xf32> to vector<4x512xf32>
    %547 = arith.mulf %545, %546 : vector<4x512xf32>
    %548 = arith.addf %542, %547 : vector<4x512xf32>
    %c0_239 = arith.constant 0 : index
    %c32_240 = arith.constant 32 : index
    %549 = vector.load %arg3[%c0_239, %c32_240] : memref<4x50xf32, #tpu.memory_space<vmem>>, vector<4x2xf32>
    %c0_241 = arith.constant 0 : index
    %c67 = arith.constant 67 : index
    %550 = vector.load %arg10[%c0_241, %c67] : memref<2x640xf32, #tpu.memory_space<vmem>>, vector<2x512xf32>
    %551 = vector.extract_strided_slice %549 {offsets = [0, 0], sizes = [4, 1], strides = [1, 1]} : vector<4x2xf32> to vector<4x1xf32>
    %552 = vector.extract_strided_slice %550 {offsets = [0, 0], sizes = [1, 512], strides = [1, 1]} : vector<2x512xf32> to vector<1x512xf32>
    %553 = vector.broadcast %551 : vector<4x1xf32> to vector<4x512xf32>
    %554 = vector.broadcast %552 : vector<1x512xf32> to vector<4x512xf32>
    %555 = arith.mulf %553, %554 : vector<4x512xf32>
    %556 = arith.addf %548, %555 : vector<4x512xf32>
    %557 = vector.extract_strided_slice %549 {offsets = [0, 1], sizes = [4, 1], strides = [1, 1]} : vector<4x2xf32> to vector<4x1xf32>
    %558 = vector.extract_strided_slice %550 {offsets = [1, 0], sizes = [1, 512], strides = [1, 1]} : vector<2x512xf32> to vector<1x512xf32>
    %559 = vector.broadcast %557 : vector<4x1xf32> to vector<4x512xf32>
    %560 = vector.broadcast %558 : vector<1x512xf32> to vector<4x512xf32>
    %561 = arith.mulf %559, %560 : vector<4x512xf32>
    %562 = arith.addf %556, %561 : vector<4x512xf32>
    %c0_242 = arith.constant 0 : index
    %c32_243 = arith.constant 32 : index
    %563 = vector.load %arg4[%c0_242, %c32_243] : memref<4x50xf32, #tpu.memory_space<vmem>>, vector<4x2xf32>
    %c0_244 = arith.constant 0 : index
    %c67_245 = arith.constant 67 : index
    %564 = vector.load %arg11[%c0_244, %c67_245] : memref<2x640xf32, #tpu.memory_space<vmem>>, vector<2x512xf32>
    %565 = vector.extract_strided_slice %563 {offsets = [0, 0], sizes = [4, 1], strides = [1, 1]} : vector<4x2xf32> to vector<4x1xf32>
    %566 = vector.extract_strided_slice %564 {offsets = [0, 0], sizes = [1, 512], strides = [1, 1]} : vector<2x512xf32> to vector<1x512xf32>
    %567 = vector.broadcast %565 : vector<4x1xf32> to vector<4x512xf32>
    %568 = vector.broadcast %566 : vector<1x512xf32> to vector<4x512xf32>
    %569 = arith.mulf %567, %568 : vector<4x512xf32>
    %570 = arith.addf %562, %569 : vector<4x512xf32>
    %571 = vector.extract_strided_slice %563 {offsets = [0, 1], sizes = [4, 1], strides = [1, 1]} : vector<4x2xf32> to vector<4x1xf32>
    %572 = vector.extract_strided_slice %564 {offsets = [1, 0], sizes = [1, 512], strides = [1, 1]} : vector<2x512xf32> to vector<1x512xf32>
    %573 = vector.broadcast %571 : vector<4x1xf32> to vector<4x512xf32>
    %574 = vector.broadcast %572 : vector<1x512xf32> to vector<4x512xf32>
    %575 = arith.mulf %573, %574 : vector<4x512xf32>
    %576 = arith.addf %570, %575 : vector<4x512xf32>
    %c0_246 = arith.constant 0 : index
    %c34 = arith.constant 34 : index
    %577 = vector.load %arg3[%c0_246, %c34] : memref<4x50xf32, #tpu.memory_space<vmem>>, vector<4x2xf32>
    %c0_247 = arith.constant 0 : index
    %c68 = arith.constant 68 : index
    %578 = vector.load %arg10[%c0_247, %c68] : memref<2x640xf32, #tpu.memory_space<vmem>>, vector<2x512xf32>
    %579 = vector.extract_strided_slice %577 {offsets = [0, 0], sizes = [4, 1], strides = [1, 1]} : vector<4x2xf32> to vector<4x1xf32>
    %580 = vector.extract_strided_slice %578 {offsets = [0, 0], sizes = [1, 512], strides = [1, 1]} : vector<2x512xf32> to vector<1x512xf32>
    %581 = vector.broadcast %579 : vector<4x1xf32> to vector<4x512xf32>
    %582 = vector.broadcast %580 : vector<1x512xf32> to vector<4x512xf32>
    %583 = arith.mulf %581, %582 : vector<4x512xf32>
    %584 = arith.addf %576, %583 : vector<4x512xf32>
    %585 = vector.extract_strided_slice %577 {offsets = [0, 1], sizes = [4, 1], strides = [1, 1]} : vector<4x2xf32> to vector<4x1xf32>
    %586 = vector.extract_strided_slice %578 {offsets = [1, 0], sizes = [1, 512], strides = [1, 1]} : vector<2x512xf32> to vector<1x512xf32>
    %587 = vector.broadcast %585 : vector<4x1xf32> to vector<4x512xf32>
    %588 = vector.broadcast %586 : vector<1x512xf32> to vector<4x512xf32>
    %589 = arith.mulf %587, %588 : vector<4x512xf32>
    %590 = arith.addf %584, %589 : vector<4x512xf32>
    %c0_248 = arith.constant 0 : index
    %c34_249 = arith.constant 34 : index
    %591 = vector.load %arg4[%c0_248, %c34_249] : memref<4x50xf32, #tpu.memory_space<vmem>>, vector<4x2xf32>
    %c0_250 = arith.constant 0 : index
    %c68_251 = arith.constant 68 : index
    %592 = vector.load %arg11[%c0_250, %c68_251] : memref<2x640xf32, #tpu.memory_space<vmem>>, vector<2x512xf32>
    %593 = vector.extract_strided_slice %591 {offsets = [0, 0], sizes = [4, 1], strides = [1, 1]} : vector<4x2xf32> to vector<4x1xf32>
    %594 = vector.extract_strided_slice %592 {offsets = [0, 0], sizes = [1, 512], strides = [1, 1]} : vector<2x512xf32> to vector<1x512xf32>
    %595 = vector.broadcast %593 : vector<4x1xf32> to vector<4x512xf32>
    %596 = vector.broadcast %594 : vector<1x512xf32> to vector<4x512xf32>
    %597 = arith.mulf %595, %596 : vector<4x512xf32>
    %598 = arith.addf %590, %597 : vector<4x512xf32>
    %599 = vector.extract_strided_slice %591 {offsets = [0, 1], sizes = [4, 1], strides = [1, 1]} : vector<4x2xf32> to vector<4x1xf32>
    %600 = vector.extract_strided_slice %592 {offsets = [1, 0], sizes = [1, 512], strides = [1, 1]} : vector<2x512xf32> to vector<1x512xf32>
    %601 = vector.broadcast %599 : vector<4x1xf32> to vector<4x512xf32>
    %602 = vector.broadcast %600 : vector<1x512xf32> to vector<4x512xf32>
    %603 = arith.mulf %601, %602 : vector<4x512xf32>
    %604 = arith.addf %598, %603 : vector<4x512xf32>
    %c0_252 = arith.constant 0 : index
    %c36 = arith.constant 36 : index
    %605 = vector.load %arg3[%c0_252, %c36] : memref<4x50xf32, #tpu.memory_space<vmem>>, vector<4x2xf32>
    %c0_253 = arith.constant 0 : index
    %c69_254 = arith.constant 69 : index
    %606 = vector.load %arg10[%c0_253, %c69_254] : memref<2x640xf32, #tpu.memory_space<vmem>>, vector<2x512xf32>
    %607 = vector.extract_strided_slice %605 {offsets = [0, 0], sizes = [4, 1], strides = [1, 1]} : vector<4x2xf32> to vector<4x1xf32>
    %608 = vector.extract_strided_slice %606 {offsets = [0, 0], sizes = [1, 512], strides = [1, 1]} : vector<2x512xf32> to vector<1x512xf32>
    %609 = vector.broadcast %607 : vector<4x1xf32> to vector<4x512xf32>
    %610 = vector.broadcast %608 : vector<1x512xf32> to vector<4x512xf32>
    %611 = arith.mulf %609, %610 : vector<4x512xf32>
    %612 = arith.addf %604, %611 : vector<4x512xf32>
    %613 = vector.extract_strided_slice %605 {offsets = [0, 1], sizes = [4, 1], strides = [1, 1]} : vector<4x2xf32> to vector<4x1xf32>
    %614 = vector.extract_strided_slice %606 {offsets = [1, 0], sizes = [1, 512], strides = [1, 1]} : vector<2x512xf32> to vector<1x512xf32>
    %615 = vector.broadcast %613 : vector<4x1xf32> to vector<4x512xf32>
    %616 = vector.broadcast %614 : vector<1x512xf32> to vector<4x512xf32>
    %617 = arith.mulf %615, %616 : vector<4x512xf32>
    %618 = arith.addf %612, %617 : vector<4x512xf32>
    %c0_255 = arith.constant 0 : index
    %c36_256 = arith.constant 36 : index
    %619 = vector.load %arg4[%c0_255, %c36_256] : memref<4x50xf32, #tpu.memory_space<vmem>>, vector<4x2xf32>
    %c0_257 = arith.constant 0 : index
    %c69_258 = arith.constant 69 : index
    %620 = vector.load %arg11[%c0_257, %c69_258] : memref<2x640xf32, #tpu.memory_space<vmem>>, vector<2x512xf32>
    %621 = vector.extract_strided_slice %619 {offsets = [0, 0], sizes = [4, 1], strides = [1, 1]} : vector<4x2xf32> to vector<4x1xf32>
    %622 = vector.extract_strided_slice %620 {offsets = [0, 0], sizes = [1, 512], strides = [1, 1]} : vector<2x512xf32> to vector<1x512xf32>
    %623 = vector.broadcast %621 : vector<4x1xf32> to vector<4x512xf32>
    %624 = vector.broadcast %622 : vector<1x512xf32> to vector<4x512xf32>
    %625 = arith.mulf %623, %624 : vector<4x512xf32>
    %626 = arith.addf %618, %625 : vector<4x512xf32>
    %627 = vector.extract_strided_slice %619 {offsets = [0, 1], sizes = [4, 1], strides = [1, 1]} : vector<4x2xf32> to vector<4x1xf32>
    %628 = vector.extract_strided_slice %620 {offsets = [1, 0], sizes = [1, 512], strides = [1, 1]} : vector<2x512xf32> to vector<1x512xf32>
    %629 = vector.broadcast %627 : vector<4x1xf32> to vector<4x512xf32>
    %630 = vector.broadcast %628 : vector<1x512xf32> to vector<4x512xf32>
    %631 = arith.mulf %629, %630 : vector<4x512xf32>
    %632 = arith.addf %626, %631 : vector<4x512xf32>
    %c0_259 = arith.constant 0 : index
    %c38 = arith.constant 38 : index
    %633 = vector.load %arg3[%c0_259, %c38] : memref<4x50xf32, #tpu.memory_space<vmem>>, vector<4x2xf32>
    %c0_260 = arith.constant 0 : index
    %c70 = arith.constant 70 : index
    %634 = vector.load %arg10[%c0_260, %c70] : memref<2x640xf32, #tpu.memory_space<vmem>>, vector<2x512xf32>
    %635 = vector.extract_strided_slice %633 {offsets = [0, 0], sizes = [4, 1], strides = [1, 1]} : vector<4x2xf32> to vector<4x1xf32>
    %636 = vector.extract_strided_slice %634 {offsets = [0, 0], sizes = [1, 512], strides = [1, 1]} : vector<2x512xf32> to vector<1x512xf32>
    %637 = vector.broadcast %635 : vector<4x1xf32> to vector<4x512xf32>
    %638 = vector.broadcast %636 : vector<1x512xf32> to vector<4x512xf32>
    %639 = arith.mulf %637, %638 : vector<4x512xf32>
    %640 = arith.addf %632, %639 : vector<4x512xf32>
    %641 = vector.extract_strided_slice %633 {offsets = [0, 1], sizes = [4, 1], strides = [1, 1]} : vector<4x2xf32> to vector<4x1xf32>
    %642 = vector.extract_strided_slice %634 {offsets = [1, 0], sizes = [1, 512], strides = [1, 1]} : vector<2x512xf32> to vector<1x512xf32>
    %643 = vector.broadcast %641 : vector<4x1xf32> to vector<4x512xf32>
    %644 = vector.broadcast %642 : vector<1x512xf32> to vector<4x512xf32>
    %645 = arith.mulf %643, %644 : vector<4x512xf32>
    %646 = arith.addf %640, %645 : vector<4x512xf32>
    %c0_261 = arith.constant 0 : index
    %c38_262 = arith.constant 38 : index
    %647 = vector.load %arg4[%c0_261, %c38_262] : memref<4x50xf32, #tpu.memory_space<vmem>>, vector<4x2xf32>
    %c0_263 = arith.constant 0 : index
    %c70_264 = arith.constant 70 : index
    %648 = vector.load %arg11[%c0_263, %c70_264] : memref<2x640xf32, #tpu.memory_space<vmem>>, vector<2x512xf32>
    %649 = vector.extract_strided_slice %647 {offsets = [0, 0], sizes = [4, 1], strides = [1, 1]} : vector<4x2xf32> to vector<4x1xf32>
    %650 = vector.extract_strided_slice %648 {offsets = [0, 0], sizes = [1, 512], strides = [1, 1]} : vector<2x512xf32> to vector<1x512xf32>
    %651 = vector.broadcast %649 : vector<4x1xf32> to vector<4x512xf32>
    %652 = vector.broadcast %650 : vector<1x512xf32> to vector<4x512xf32>
    %653 = arith.mulf %651, %652 : vector<4x512xf32>
    %654 = arith.addf %646, %653 : vector<4x512xf32>
    %655 = vector.extract_strided_slice %647 {offsets = [0, 1], sizes = [4, 1], strides = [1, 1]} : vector<4x2xf32> to vector<4x1xf32>
    %656 = vector.extract_strided_slice %648 {offsets = [1, 0], sizes = [1, 512], strides = [1, 1]} : vector<2x512xf32> to vector<1x512xf32>
    %657 = vector.broadcast %655 : vector<4x1xf32> to vector<4x512xf32>
    %658 = vector.broadcast %656 : vector<1x512xf32> to vector<4x512xf32>
    %659 = arith.mulf %657, %658 : vector<4x512xf32>
    %660 = arith.addf %654, %659 : vector<4x512xf32>
    %c0_265 = arith.constant 0 : index
    %c40 = arith.constant 40 : index
    %661 = vector.load %arg3[%c0_265, %c40] : memref<4x50xf32, #tpu.memory_space<vmem>>, vector<4x2xf32>
    %c0_266 = arith.constant 0 : index
    %c88 = arith.constant 88 : index
    %662 = vector.load %arg10[%c0_266, %c88] : memref<2x640xf32, #tpu.memory_space<vmem>>, vector<2x512xf32>
    %663 = vector.extract_strided_slice %661 {offsets = [0, 0], sizes = [4, 1], strides = [1, 1]} : vector<4x2xf32> to vector<4x1xf32>
    %664 = vector.extract_strided_slice %662 {offsets = [0, 0], sizes = [1, 512], strides = [1, 1]} : vector<2x512xf32> to vector<1x512xf32>
    %665 = vector.broadcast %663 : vector<4x1xf32> to vector<4x512xf32>
    %666 = vector.broadcast %664 : vector<1x512xf32> to vector<4x512xf32>
    %667 = arith.mulf %665, %666 : vector<4x512xf32>
    %668 = arith.addf %660, %667 : vector<4x512xf32>
    %669 = vector.extract_strided_slice %661 {offsets = [0, 1], sizes = [4, 1], strides = [1, 1]} : vector<4x2xf32> to vector<4x1xf32>
    %670 = vector.extract_strided_slice %662 {offsets = [1, 0], sizes = [1, 512], strides = [1, 1]} : vector<2x512xf32> to vector<1x512xf32>
    %671 = vector.broadcast %669 : vector<4x1xf32> to vector<4x512xf32>
    %672 = vector.broadcast %670 : vector<1x512xf32> to vector<4x512xf32>
    %673 = arith.mulf %671, %672 : vector<4x512xf32>
    %674 = arith.addf %668, %673 : vector<4x512xf32>
    %c0_267 = arith.constant 0 : index
    %c40_268 = arith.constant 40 : index
    %675 = vector.load %arg4[%c0_267, %c40_268] : memref<4x50xf32, #tpu.memory_space<vmem>>, vector<4x2xf32>
    %c0_269 = arith.constant 0 : index
    %c88_270 = arith.constant 88 : index
    %676 = vector.load %arg11[%c0_269, %c88_270] : memref<2x640xf32, #tpu.memory_space<vmem>>, vector<2x512xf32>
    %677 = vector.extract_strided_slice %675 {offsets = [0, 0], sizes = [4, 1], strides = [1, 1]} : vector<4x2xf32> to vector<4x1xf32>
    %678 = vector.extract_strided_slice %676 {offsets = [0, 0], sizes = [1, 512], strides = [1, 1]} : vector<2x512xf32> to vector<1x512xf32>
    %679 = vector.broadcast %677 : vector<4x1xf32> to vector<4x512xf32>
    %680 = vector.broadcast %678 : vector<1x512xf32> to vector<4x512xf32>
    %681 = arith.mulf %679, %680 : vector<4x512xf32>
    %682 = arith.addf %674, %681 : vector<4x512xf32>
    %683 = vector.extract_strided_slice %675 {offsets = [0, 1], sizes = [4, 1], strides = [1, 1]} : vector<4x2xf32> to vector<4x1xf32>
    %684 = vector.extract_strided_slice %676 {offsets = [1, 0], sizes = [1, 512], strides = [1, 1]} : vector<2x512xf32> to vector<1x512xf32>
    %685 = vector.broadcast %683 : vector<4x1xf32> to vector<4x512xf32>
    %686 = vector.broadcast %684 : vector<1x512xf32> to vector<4x512xf32>
    %687 = arith.mulf %685, %686 : vector<4x512xf32>
    %688 = arith.addf %682, %687 : vector<4x512xf32>
    %c0_271 = arith.constant 0 : index
    %c42 = arith.constant 42 : index
    %689 = vector.load %arg3[%c0_271, %c42] : memref<4x50xf32, #tpu.memory_space<vmem>>, vector<4x2xf32>
    %c0_272 = arith.constant 0 : index
    %c89 = arith.constant 89 : index
    %690 = vector.load %arg10[%c0_272, %c89] : memref<2x640xf32, #tpu.memory_space<vmem>>, vector<2x512xf32>
    %691 = vector.extract_strided_slice %689 {offsets = [0, 0], sizes = [4, 1], strides = [1, 1]} : vector<4x2xf32> to vector<4x1xf32>
    %692 = vector.extract_strided_slice %690 {offsets = [0, 0], sizes = [1, 512], strides = [1, 1]} : vector<2x512xf32> to vector<1x512xf32>
    %693 = vector.broadcast %691 : vector<4x1xf32> to vector<4x512xf32>
    %694 = vector.broadcast %692 : vector<1x512xf32> to vector<4x512xf32>
    %695 = arith.mulf %693, %694 : vector<4x512xf32>
    %696 = arith.addf %688, %695 : vector<4x512xf32>
    %697 = vector.extract_strided_slice %689 {offsets = [0, 1], sizes = [4, 1], strides = [1, 1]} : vector<4x2xf32> to vector<4x1xf32>
    %698 = vector.extract_strided_slice %690 {offsets = [1, 0], sizes = [1, 512], strides = [1, 1]} : vector<2x512xf32> to vector<1x512xf32>
    %699 = vector.broadcast %697 : vector<4x1xf32> to vector<4x512xf32>
    %700 = vector.broadcast %698 : vector<1x512xf32> to vector<4x512xf32>
    %701 = arith.mulf %699, %700 : vector<4x512xf32>
    %702 = arith.addf %696, %701 : vector<4x512xf32>
    %c0_273 = arith.constant 0 : index
    %c42_274 = arith.constant 42 : index
    %703 = vector.load %arg4[%c0_273, %c42_274] : memref<4x50xf32, #tpu.memory_space<vmem>>, vector<4x2xf32>
    %c0_275 = arith.constant 0 : index
    %c89_276 = arith.constant 89 : index
    %704 = vector.load %arg11[%c0_275, %c89_276] : memref<2x640xf32, #tpu.memory_space<vmem>>, vector<2x512xf32>
    %705 = vector.extract_strided_slice %703 {offsets = [0, 0], sizes = [4, 1], strides = [1, 1]} : vector<4x2xf32> to vector<4x1xf32>
    %706 = vector.extract_strided_slice %704 {offsets = [0, 0], sizes = [1, 512], strides = [1, 1]} : vector<2x512xf32> to vector<1x512xf32>
    %707 = vector.broadcast %705 : vector<4x1xf32> to vector<4x512xf32>
    %708 = vector.broadcast %706 : vector<1x512xf32> to vector<4x512xf32>
    %709 = arith.mulf %707, %708 : vector<4x512xf32>
    %710 = arith.addf %702, %709 : vector<4x512xf32>
    %711 = vector.extract_strided_slice %703 {offsets = [0, 1], sizes = [4, 1], strides = [1, 1]} : vector<4x2xf32> to vector<4x1xf32>
    %712 = vector.extract_strided_slice %704 {offsets = [1, 0], sizes = [1, 512], strides = [1, 1]} : vector<2x512xf32> to vector<1x512xf32>
    %713 = vector.broadcast %711 : vector<4x1xf32> to vector<4x512xf32>
    %714 = vector.broadcast %712 : vector<1x512xf32> to vector<4x512xf32>
    %715 = arith.mulf %713, %714 : vector<4x512xf32>
    %716 = arith.addf %710, %715 : vector<4x512xf32>
    %c0_277 = arith.constant 0 : index
    %c44_278 = arith.constant 44 : index
    %717 = vector.load %arg3[%c0_277, %c44_278] : memref<4x50xf32, #tpu.memory_space<vmem>>, vector<4x2xf32>
    %c0_279 = arith.constant 0 : index
    %c90 = arith.constant 90 : index
    %718 = vector.load %arg10[%c0_279, %c90] : memref<2x640xf32, #tpu.memory_space<vmem>>, vector<2x512xf32>
    %719 = vector.extract_strided_slice %717 {offsets = [0, 0], sizes = [4, 1], strides = [1, 1]} : vector<4x2xf32> to vector<4x1xf32>
    %720 = vector.extract_strided_slice %718 {offsets = [0, 0], sizes = [1, 512], strides = [1, 1]} : vector<2x512xf32> to vector<1x512xf32>
    %721 = vector.broadcast %719 : vector<4x1xf32> to vector<4x512xf32>
    %722 = vector.broadcast %720 : vector<1x512xf32> to vector<4x512xf32>
    %723 = arith.mulf %721, %722 : vector<4x512xf32>
    %724 = arith.addf %716, %723 : vector<4x512xf32>
    %725 = vector.extract_strided_slice %717 {offsets = [0, 1], sizes = [4, 1], strides = [1, 1]} : vector<4x2xf32> to vector<4x1xf32>
    %726 = vector.extract_strided_slice %718 {offsets = [1, 0], sizes = [1, 512], strides = [1, 1]} : vector<2x512xf32> to vector<1x512xf32>
    %727 = vector.broadcast %725 : vector<4x1xf32> to vector<4x512xf32>
    %728 = vector.broadcast %726 : vector<1x512xf32> to vector<4x512xf32>
    %729 = arith.mulf %727, %728 : vector<4x512xf32>
    %730 = arith.addf %724, %729 : vector<4x512xf32>
    %c0_280 = arith.constant 0 : index
    %c44_281 = arith.constant 44 : index
    %731 = vector.load %arg4[%c0_280, %c44_281] : memref<4x50xf32, #tpu.memory_space<vmem>>, vector<4x2xf32>
    %c0_282 = arith.constant 0 : index
    %c90_283 = arith.constant 90 : index
    %732 = vector.load %arg11[%c0_282, %c90_283] : memref<2x640xf32, #tpu.memory_space<vmem>>, vector<2x512xf32>
    %733 = vector.extract_strided_slice %731 {offsets = [0, 0], sizes = [4, 1], strides = [1, 1]} : vector<4x2xf32> to vector<4x1xf32>
    %734 = vector.extract_strided_slice %732 {offsets = [0, 0], sizes = [1, 512], strides = [1, 1]} : vector<2x512xf32> to vector<1x512xf32>
    %735 = vector.broadcast %733 : vector<4x1xf32> to vector<4x512xf32>
    %736 = vector.broadcast %734 : vector<1x512xf32> to vector<4x512xf32>
    %737 = arith.mulf %735, %736 : vector<4x512xf32>
    %738 = arith.addf %730, %737 : vector<4x512xf32>
    %739 = vector.extract_strided_slice %731 {offsets = [0, 1], sizes = [4, 1], strides = [1, 1]} : vector<4x2xf32> to vector<4x1xf32>
    %740 = vector.extract_strided_slice %732 {offsets = [1, 0], sizes = [1, 512], strides = [1, 1]} : vector<2x512xf32> to vector<1x512xf32>
    %741 = vector.broadcast %739 : vector<4x1xf32> to vector<4x512xf32>
    %742 = vector.broadcast %740 : vector<1x512xf32> to vector<4x512xf32>
    %743 = arith.mulf %741, %742 : vector<4x512xf32>
    %744 = arith.addf %738, %743 : vector<4x512xf32>
    %c0_284 = arith.constant 0 : index
    %c46_285 = arith.constant 46 : index
    %745 = vector.load %arg3[%c0_284, %c46_285] : memref<4x50xf32, #tpu.memory_space<vmem>>, vector<4x2xf32>
    %c0_286 = arith.constant 0 : index
    %c91_287 = arith.constant 91 : index
    %746 = vector.load %arg10[%c0_286, %c91_287] : memref<2x640xf32, #tpu.memory_space<vmem>>, vector<2x512xf32>
    %747 = vector.extract_strided_slice %745 {offsets = [0, 0], sizes = [4, 1], strides = [1, 1]} : vector<4x2xf32> to vector<4x1xf32>
    %748 = vector.extract_strided_slice %746 {offsets = [0, 0], sizes = [1, 512], strides = [1, 1]} : vector<2x512xf32> to vector<1x512xf32>
    %749 = vector.broadcast %747 : vector<4x1xf32> to vector<4x512xf32>
    %750 = vector.broadcast %748 : vector<1x512xf32> to vector<4x512xf32>
    %751 = arith.mulf %749, %750 : vector<4x512xf32>
    %752 = arith.addf %744, %751 : vector<4x512xf32>
    %753 = vector.extract_strided_slice %745 {offsets = [0, 1], sizes = [4, 1], strides = [1, 1]} : vector<4x2xf32> to vector<4x1xf32>
    %754 = vector.extract_strided_slice %746 {offsets = [1, 0], sizes = [1, 512], strides = [1, 1]} : vector<2x512xf32> to vector<1x512xf32>
    %755 = vector.broadcast %753 : vector<4x1xf32> to vector<4x512xf32>
    %756 = vector.broadcast %754 : vector<1x512xf32> to vector<4x512xf32>
    %757 = arith.mulf %755, %756 : vector<4x512xf32>
    %758 = arith.addf %752, %757 : vector<4x512xf32>
    %c0_288 = arith.constant 0 : index
    %c46_289 = arith.constant 46 : index
    %759 = vector.load %arg4[%c0_288, %c46_289] : memref<4x50xf32, #tpu.memory_space<vmem>>, vector<4x2xf32>
    %c0_290 = arith.constant 0 : index
    %c91_291 = arith.constant 91 : index
    %760 = vector.load %arg11[%c0_290, %c91_291] : memref<2x640xf32, #tpu.memory_space<vmem>>, vector<2x512xf32>
    %761 = vector.extract_strided_slice %759 {offsets = [0, 0], sizes = [4, 1], strides = [1, 1]} : vector<4x2xf32> to vector<4x1xf32>
    %762 = vector.extract_strided_slice %760 {offsets = [0, 0], sizes = [1, 512], strides = [1, 1]} : vector<2x512xf32> to vector<1x512xf32>
    %763 = vector.broadcast %761 : vector<4x1xf32> to vector<4x512xf32>
    %764 = vector.broadcast %762 : vector<1x512xf32> to vector<4x512xf32>
    %765 = arith.mulf %763, %764 : vector<4x512xf32>
    %766 = arith.addf %758, %765 : vector<4x512xf32>
    %767 = vector.extract_strided_slice %759 {offsets = [0, 1], sizes = [4, 1], strides = [1, 1]} : vector<4x2xf32> to vector<4x1xf32>
    %768 = vector.extract_strided_slice %760 {offsets = [1, 0], sizes = [1, 512], strides = [1, 1]} : vector<2x512xf32> to vector<1x512xf32>
    %769 = vector.broadcast %767 : vector<4x1xf32> to vector<4x512xf32>
    %770 = vector.broadcast %768 : vector<1x512xf32> to vector<4x512xf32>
    %771 = arith.mulf %769, %770 : vector<4x512xf32>
    %772 = arith.addf %766, %771 : vector<4x512xf32>
    %c0_292 = arith.constant 0 : index
    %c48_293 = arith.constant 48 : index
    %773 = vector.load %arg3[%c0_292, %c48_293] : memref<4x50xf32, #tpu.memory_space<vmem>>, vector<4x2xf32>
    %c0_294 = arith.constant 0 : index
    %c92 = arith.constant 92 : index
    %774 = vector.load %arg10[%c0_294, %c92] : memref<2x640xf32, #tpu.memory_space<vmem>>, vector<2x512xf32>
    %775 = vector.extract_strided_slice %773 {offsets = [0, 0], sizes = [4, 1], strides = [1, 1]} : vector<4x2xf32> to vector<4x1xf32>
    %776 = vector.extract_strided_slice %774 {offsets = [0, 0], sizes = [1, 512], strides = [1, 1]} : vector<2x512xf32> to vector<1x512xf32>
    %777 = vector.broadcast %775 : vector<4x1xf32> to vector<4x512xf32>
    %778 = vector.broadcast %776 : vector<1x512xf32> to vector<4x512xf32>
    %779 = arith.mulf %777, %778 : vector<4x512xf32>
    %780 = arith.addf %772, %779 : vector<4x512xf32>
    %781 = vector.extract_strided_slice %773 {offsets = [0, 1], sizes = [4, 1], strides = [1, 1]} : vector<4x2xf32> to vector<4x1xf32>
    %782 = vector.extract_strided_slice %774 {offsets = [1, 0], sizes = [1, 512], strides = [1, 1]} : vector<2x512xf32> to vector<1x512xf32>
    %783 = vector.broadcast %781 : vector<4x1xf32> to vector<4x512xf32>
    %784 = vector.broadcast %782 : vector<1x512xf32> to vector<4x512xf32>
    %785 = arith.mulf %783, %784 : vector<4x512xf32>
    %786 = arith.addf %780, %785 : vector<4x512xf32>
    %c0_295 = arith.constant 0 : index
    %c48_296 = arith.constant 48 : index
    %787 = vector.load %arg4[%c0_295, %c48_296] : memref<4x50xf32, #tpu.memory_space<vmem>>, vector<4x2xf32>
    %c0_297 = arith.constant 0 : index
    %c92_298 = arith.constant 92 : index
    %788 = vector.load %arg11[%c0_297, %c92_298] : memref<2x640xf32, #tpu.memory_space<vmem>>, vector<2x512xf32>
    %789 = vector.extract_strided_slice %787 {offsets = [0, 0], sizes = [4, 1], strides = [1, 1]} : vector<4x2xf32> to vector<4x1xf32>
    %790 = vector.extract_strided_slice %788 {offsets = [0, 0], sizes = [1, 512], strides = [1, 1]} : vector<2x512xf32> to vector<1x512xf32>
    %791 = vector.broadcast %789 : vector<4x1xf32> to vector<4x512xf32>
    %792 = vector.broadcast %790 : vector<1x512xf32> to vector<4x512xf32>
    %793 = arith.mulf %791, %792 : vector<4x512xf32>
    %794 = arith.addf %786, %793 : vector<4x512xf32>
    %795 = vector.extract_strided_slice %787 {offsets = [0, 1], sizes = [4, 1], strides = [1, 1]} : vector<4x2xf32> to vector<4x1xf32>
    %796 = vector.extract_strided_slice %788 {offsets = [1, 0], sizes = [1, 512], strides = [1, 1]} : vector<2x512xf32> to vector<1x512xf32>
    %797 = vector.broadcast %795 : vector<4x1xf32> to vector<4x512xf32>
    %798 = vector.broadcast %796 : vector<1x512xf32> to vector<4x512xf32>
    %799 = arith.mulf %797, %798 : vector<4x512xf32>
    %800 = arith.addf %794, %799 : vector<4x512xf32>
    %c0_299 = arith.constant 0 : index
    %c0_300 = arith.constant 0 : index
    %801 = vector.load %arg5[%c0_299, %c0_300] : memref<4x1xf32, #tpu.memory_space<vmem>>, vector<4x1xf32>
    %802 = vector.broadcast %801 : vector<4x1xf32> to vector<4x512xf32>
    %803 = arith.addf %800, %802 : vector<4x512xf32>
    %cst_301 = arith.constant 0.000000e+00 : f32
    %804 = vector.broadcast %cst_301 : f32 to vector<4x512xf32>
    %805 = arith.maximumf %803, %804 : vector<4x512xf32>
    %c0_302 = arith.constant 0 : index
    %c0_303 = arith.constant 0 : index
    %806 = vector.load %arg8[%c0_302, %c0_303] : memref<1x512xf32, #tpu.memory_space<vmem>>, vector<1x512xf32>
    %807 = vector.broadcast %806 : vector<1x512xf32> to vector<4x512xf32>
    %808 = arith.mulf %805, %807 : vector<4x512xf32>
    %c0_304 = arith.constant 0 : index
    %c0_305 = arith.constant 0 : index
    %809 = vector.load %arg12[%c0_304, %c0_305] : memref<4x512xf32, #tpu.memory_space<vmem>>, vector<4x512xf32>
    tpu.vector_store %arg12[%c0_304, %c0_305], %808 {strides = array<i32>} : memref<4x512xf32, #tpu.memory_space<vmem>>, vector<4x512xf32>,
    %cst_306 = arith.constant 0.000000e+00 : f32
    %810 = vector.broadcast %cst_306 : f32 to vector<4x384xf32>
    %c0_307 = arith.constant 0 : index
    %c0_308 = arith.constant 0 : index
    %811 = vector.load %arg6[%c0_307, %c0_308] : memref<4x36xf32, #tpu.memory_space<vmem>>, vector<4x4xf32>
    %c0_309 = arith.constant 0 : index
    %c0_310 = arith.constant 0 : index
    %812 = vector.load %arg12[%c0_309, %c0_310] : memref<4x512xf32, #tpu.memory_space<vmem>>, vector<4x384xf32>
    %813 = vector.extract_strided_slice %811 {offsets = [0, 0], sizes = [4, 1], strides = [1, 1]} : vector<4x4xf32> to vector<4x1xf32>
    %814 = vector.extract_strided_slice %812 {offsets = [0, 0], sizes = [1, 384], strides = [1, 1]} : vector<4x384xf32> to vector<1x384xf32>
    %815 = vector.broadcast %813 : vector<4x1xf32> to vector<4x384xf32>
    %816 = vector.broadcast %814 : vector<1x384xf32> to vector<4x384xf32>
    %817 = arith.mulf %815, %816 : vector<4x384xf32>
    %818 = arith.addf %810, %817 : vector<4x384xf32>
    %819 = vector.extract_strided_slice %811 {offsets = [0, 1], sizes = [4, 1], strides = [1, 1]} : vector<4x4xf32> to vector<4x1xf32>
    %820 = vector.extract_strided_slice %812 {offsets = [1, 0], sizes = [1, 384], strides = [1, 1]} : vector<4x384xf32> to vector<1x384xf32>
    %821 = vector.broadcast %819 : vector<4x1xf32> to vector<4x384xf32>
    %822 = vector.broadcast %820 : vector<1x384xf32> to vector<4x384xf32>
    %823 = arith.mulf %821, %822 : vector<4x384xf32>
    %824 = arith.addf %818, %823 : vector<4x384xf32>
    %825 = vector.extract_strided_slice %811 {offsets = [0, 2], sizes = [4, 1], strides = [1, 1]} : vector<4x4xf32> to vector<4x1xf32>
    %826 = vector.extract_strided_slice %812 {offsets = [2, 0], sizes = [1, 384], strides = [1, 1]} : vector<4x384xf32> to vector<1x384xf32>
    %827 = vector.broadcast %825 : vector<4x1xf32> to vector<4x384xf32>
    %828 = vector.broadcast %826 : vector<1x384xf32> to vector<4x384xf32>
    %829 = arith.mulf %827, %828 : vector<4x384xf32>
    %830 = arith.addf %824, %829 : vector<4x384xf32>
    %831 = vector.extract_strided_slice %811 {offsets = [0, 3], sizes = [4, 1], strides = [1, 1]} : vector<4x4xf32> to vector<4x1xf32>
    %832 = vector.extract_strided_slice %812 {offsets = [3, 0], sizes = [1, 384], strides = [1, 1]} : vector<4x384xf32> to vector<1x384xf32>
    %833 = vector.broadcast %831 : vector<4x1xf32> to vector<4x384xf32>
    %834 = vector.broadcast %832 : vector<1x384xf32> to vector<4x384xf32>
    %835 = arith.mulf %833, %834 : vector<4x384xf32>
    %836 = arith.addf %830, %835 : vector<4x384xf32>
    %c0_311 = arith.constant 0 : index
    %c4_312 = arith.constant 4 : index
    %837 = vector.load %arg6[%c0_311, %c4_312] : memref<4x36xf32, #tpu.memory_space<vmem>>, vector<4x4xf32>
    %c0_313 = arith.constant 0 : index
    %c1_314 = arith.constant 1 : index
    %838 = vector.load %arg12[%c0_313, %c1_314] : memref<4x512xf32, #tpu.memory_space<vmem>>, vector<4x384xf32>
    %839 = vector.extract_strided_slice %837 {offsets = [0, 0], sizes = [4, 1], strides = [1, 1]} : vector<4x4xf32> to vector<4x1xf32>
    %840 = vector.extract_strided_slice %838 {offsets = [0, 0], sizes = [1, 384], strides = [1, 1]} : vector<4x384xf32> to vector<1x384xf32>
    %841 = vector.broadcast %839 : vector<4x1xf32> to vector<4x384xf32>
    %842 = vector.broadcast %840 : vector<1x384xf32> to vector<4x384xf32>
    %843 = arith.mulf %841, %842 : vector<4x384xf32>
    %844 = arith.addf %836, %843 : vector<4x384xf32>
    %845 = vector.extract_strided_slice %837 {offsets = [0, 1], sizes = [4, 1], strides = [1, 1]} : vector<4x4xf32> to vector<4x1xf32>
    %846 = vector.extract_strided_slice %838 {offsets = [1, 0], sizes = [1, 384], strides = [1, 1]} : vector<4x384xf32> to vector<1x384xf32>
    %847 = vector.broadcast %845 : vector<4x1xf32> to vector<4x384xf32>
    %848 = vector.broadcast %846 : vector<1x384xf32> to vector<4x384xf32>
    %849 = arith.mulf %847, %848 : vector<4x384xf32>
    %850 = arith.addf %844, %849 : vector<4x384xf32>
    %851 = vector.extract_strided_slice %837 {offsets = [0, 2], sizes = [4, 1], strides = [1, 1]} : vector<4x4xf32> to vector<4x1xf32>
    %852 = vector.extract_strided_slice %838 {offsets = [2, 0], sizes = [1, 384], strides = [1, 1]} : vector<4x384xf32> to vector<1x384xf32>
    %853 = vector.broadcast %851 : vector<4x1xf32> to vector<4x384xf32>
    %854 = vector.broadcast %852 : vector<1x384xf32> to vector<4x384xf32>
    %855 = arith.mulf %853, %854 : vector<4x384xf32>
    %856 = arith.addf %850, %855 : vector<4x384xf32>
    %857 = vector.extract_strided_slice %837 {offsets = [0, 3], sizes = [4, 1], strides = [1, 1]} : vector<4x4xf32> to vector<4x1xf32>
    %858 = vector.extract_strided_slice %838 {offsets = [3, 0], sizes = [1, 384], strides = [1, 1]} : vector<4x384xf32> to vector<1x384xf32>
    %859 = vector.broadcast %857 : vector<4x1xf32> to vector<4x384xf32>
    %860 = vector.broadcast %858 : vector<1x384xf32> to vector<4x384xf32>
    %861 = arith.mulf %859, %860 : vector<4x384xf32>
    %862 = arith.addf %856, %861 : vector<4x384xf32>
    %c0_315 = arith.constant 0 : index
    %c8_316 = arith.constant 8 : index
    %863 = vector.load %arg6[%c0_315, %c8_316] : memref<4x36xf32, #tpu.memory_space<vmem>>, vector<4x4xf32>
    %c0_317 = arith.constant 0 : index
    %c2_318 = arith.constant 2 : index
    %864 = vector.load %arg12[%c0_317, %c2_318] : memref<4x512xf32, #tpu.memory_space<vmem>>, vector<4x384xf32>
    %865 = vector.extract_strided_slice %863 {offsets = [0, 0], sizes = [4, 1], strides = [1, 1]} : vector<4x4xf32> to vector<4x1xf32>
    %866 = vector.extract_strided_slice %864 {offsets = [0, 0], sizes = [1, 384], strides = [1, 1]} : vector<4x384xf32> to vector<1x384xf32>
    %867 = vector.broadcast %865 : vector<4x1xf32> to vector<4x384xf32>
    %868 = vector.broadcast %866 : vector<1x384xf32> to vector<4x384xf32>
    %869 = arith.mulf %867, %868 : vector<4x384xf32>
    %870 = arith.addf %862, %869 : vector<4x384xf32>
    %871 = vector.extract_strided_slice %863 {offsets = [0, 1], sizes = [4, 1], strides = [1, 1]} : vector<4x4xf32> to vector<4x1xf32>
    %872 = vector.extract_strided_slice %864 {offsets = [1, 0], sizes = [1, 384], strides = [1, 1]} : vector<4x384xf32> to vector<1x384xf32>
    %873 = vector.broadcast %871 : vector<4x1xf32> to vector<4x384xf32>
    %874 = vector.broadcast %872 : vector<1x384xf32> to vector<4x384xf32>
    %875 = arith.mulf %873, %874 : vector<4x384xf32>
    %876 = arith.addf %870, %875 : vector<4x384xf32>
    %877 = vector.extract_strided_slice %863 {offsets = [0, 2], sizes = [4, 1], strides = [1, 1]} : vector<4x4xf32> to vector<4x1xf32>
    %878 = vector.extract_strided_slice %864 {offsets = [2, 0], sizes = [1, 384], strides = [1, 1]} : vector<4x384xf32> to vector<1x384xf32>
    %879 = vector.broadcast %877 : vector<4x1xf32> to vector<4x384xf32>
    %880 = vector.broadcast %878 : vector<1x384xf32> to vector<4x384xf32>
    %881 = arith.mulf %879, %880 : vector<4x384xf32>
    %882 = arith.addf %876, %881 : vector<4x384xf32>
    %883 = vector.extract_strided_slice %863 {offsets = [0, 3], sizes = [4, 1], strides = [1, 1]} : vector<4x4xf32> to vector<4x1xf32>
    %884 = vector.extract_strided_slice %864 {offsets = [3, 0], sizes = [1, 384], strides = [1, 1]} : vector<4x384xf32> to vector<1x384xf32>
    %885 = vector.broadcast %883 : vector<4x1xf32> to vector<4x384xf32>
    %886 = vector.broadcast %884 : vector<1x384xf32> to vector<4x384xf32>
    %887 = arith.mulf %885, %886 : vector<4x384xf32>
    %888 = arith.addf %882, %887 : vector<4x384xf32>
    %c0_319 = arith.constant 0 : index
    %c12_320 = arith.constant 12 : index
    %889 = vector.load %arg6[%c0_319, %c12_320] : memref<4x36xf32, #tpu.memory_space<vmem>>, vector<4x4xf32>
    %c0_321 = arith.constant 0 : index
    %c22_322 = arith.constant 22 : index
    %890 = vector.load %arg12[%c0_321, %c22_322] : memref<4x512xf32, #tpu.memory_space<vmem>>, vector<4x384xf32>
    %891 = vector.extract_strided_slice %889 {offsets = [0, 0], sizes = [4, 1], strides = [1, 1]} : vector<4x4xf32> to vector<4x1xf32>
    %892 = vector.extract_strided_slice %890 {offsets = [0, 0], sizes = [1, 384], strides = [1, 1]} : vector<4x384xf32> to vector<1x384xf32>
    %893 = vector.broadcast %891 : vector<4x1xf32> to vector<4x384xf32>
    %894 = vector.broadcast %892 : vector<1x384xf32> to vector<4x384xf32>
    %895 = arith.mulf %893, %894 : vector<4x384xf32>
    %896 = arith.addf %888, %895 : vector<4x384xf32>
    %897 = vector.extract_strided_slice %889 {offsets = [0, 1], sizes = [4, 1], strides = [1, 1]} : vector<4x4xf32> to vector<4x1xf32>
    %898 = vector.extract_strided_slice %890 {offsets = [1, 0], sizes = [1, 384], strides = [1, 1]} : vector<4x384xf32> to vector<1x384xf32>
    %899 = vector.broadcast %897 : vector<4x1xf32> to vector<4x384xf32>
    %900 = vector.broadcast %898 : vector<1x384xf32> to vector<4x384xf32>
    %901 = arith.mulf %899, %900 : vector<4x384xf32>
    %902 = arith.addf %896, %901 : vector<4x384xf32>
    %903 = vector.extract_strided_slice %889 {offsets = [0, 2], sizes = [4, 1], strides = [1, 1]} : vector<4x4xf32> to vector<4x1xf32>
    %904 = vector.extract_strided_slice %890 {offsets = [2, 0], sizes = [1, 384], strides = [1, 1]} : vector<4x384xf32> to vector<1x384xf32>
    %905 = vector.broadcast %903 : vector<4x1xf32> to vector<4x384xf32>
    %906 = vector.broadcast %904 : vector<1x384xf32> to vector<4x384xf32>
    %907 = arith.mulf %905, %906 : vector<4x384xf32>
    %908 = arith.addf %902, %907 : vector<4x384xf32>
    %909 = vector.extract_strided_slice %889 {offsets = [0, 3], sizes = [4, 1], strides = [1, 1]} : vector<4x4xf32> to vector<4x1xf32>
    %910 = vector.extract_strided_slice %890 {offsets = [3, 0], sizes = [1, 384], strides = [1, 1]} : vector<4x384xf32> to vector<1x384xf32>
    %911 = vector.broadcast %909 : vector<4x1xf32> to vector<4x384xf32>
    %912 = vector.broadcast %910 : vector<1x384xf32> to vector<4x384xf32>
    %913 = arith.mulf %911, %912 : vector<4x384xf32>
    %914 = arith.addf %908, %913 : vector<4x384xf32>
    %c0_323 = arith.constant 0 : index
    %c16_324 = arith.constant 16 : index
    %915 = vector.load %arg6[%c0_323, %c16_324] : memref<4x36xf32, #tpu.memory_space<vmem>>, vector<4x4xf32>
    %c0_325 = arith.constant 0 : index
    %c23_326 = arith.constant 23 : index
    %916 = vector.load %arg12[%c0_325, %c23_326] : memref<4x512xf32, #tpu.memory_space<vmem>>, vector<4x384xf32>
    %917 = vector.extract_strided_slice %915 {offsets = [0, 0], sizes = [4, 1], strides = [1, 1]} : vector<4x4xf32> to vector<4x1xf32>
    %918 = vector.extract_strided_slice %916 {offsets = [0, 0], sizes = [1, 384], strides = [1, 1]} : vector<4x384xf32> to vector<1x384xf32>
    %919 = vector.broadcast %917 : vector<4x1xf32> to vector<4x384xf32>
    %920 = vector.broadcast %918 : vector<1x384xf32> to vector<4x384xf32>
    %921 = arith.mulf %919, %920 : vector<4x384xf32>
    %922 = arith.addf %914, %921 : vector<4x384xf32>
    %923 = vector.extract_strided_slice %915 {offsets = [0, 1], sizes = [4, 1], strides = [1, 1]} : vector<4x4xf32> to vector<4x1xf32>
    %924 = vector.extract_strided_slice %916 {offsets = [1, 0], sizes = [1, 384], strides = [1, 1]} : vector<4x384xf32> to vector<1x384xf32>
    %925 = vector.broadcast %923 : vector<4x1xf32> to vector<4x384xf32>
    %926 = vector.broadcast %924 : vector<1x384xf32> to vector<4x384xf32>
    %927 = arith.mulf %925, %926 : vector<4x384xf32>
    %928 = arith.addf %922, %927 : vector<4x384xf32>
    %929 = vector.extract_strided_slice %915 {offsets = [0, 2], sizes = [4, 1], strides = [1, 1]} : vector<4x4xf32> to vector<4x1xf32>
    %930 = vector.extract_strided_slice %916 {offsets = [2, 0], sizes = [1, 384], strides = [1, 1]} : vector<4x384xf32> to vector<1x384xf32>
    %931 = vector.broadcast %929 : vector<4x1xf32> to vector<4x384xf32>
    %932 = vector.broadcast %930 : vector<1x384xf32> to vector<4x384xf32>
    %933 = arith.mulf %931, %932 : vector<4x384xf32>
    %934 = arith.addf %928, %933 : vector<4x384xf32>
    %935 = vector.extract_strided_slice %915 {offsets = [0, 3], sizes = [4, 1], strides = [1, 1]} : vector<4x4xf32> to vector<4x1xf32>
    %936 = vector.extract_strided_slice %916 {offsets = [3, 0], sizes = [1, 384], strides = [1, 1]} : vector<4x384xf32> to vector<1x384xf32>
    %937 = vector.broadcast %935 : vector<4x1xf32> to vector<4x384xf32>
    %938 = vector.broadcast %936 : vector<1x384xf32> to vector<4x384xf32>
    %939 = arith.mulf %937, %938 : vector<4x384xf32>
    %940 = arith.addf %934, %939 : vector<4x384xf32>
    %c0_327 = arith.constant 0 : index
    %c20_328 = arith.constant 20 : index
    %941 = vector.load %arg6[%c0_327, %c20_328] : memref<4x36xf32, #tpu.memory_space<vmem>>, vector<4x4xf32>
    %c0_329 = arith.constant 0 : index
    %c24_330 = arith.constant 24 : index
    %942 = vector.load %arg12[%c0_329, %c24_330] : memref<4x512xf32, #tpu.memory_space<vmem>>, vector<4x384xf32>
    %943 = vector.extract_strided_slice %941 {offsets = [0, 0], sizes = [4, 1], strides = [1, 1]} : vector<4x4xf32> to vector<4x1xf32>
    %944 = vector.extract_strided_slice %942 {offsets = [0, 0], sizes = [1, 384], strides = [1, 1]} : vector<4x384xf32> to vector<1x384xf32>
    %945 = vector.broadcast %943 : vector<4x1xf32> to vector<4x384xf32>
    %946 = vector.broadcast %944 : vector<1x384xf32> to vector<4x384xf32>
    %947 = arith.mulf %945, %946 : vector<4x384xf32>
    %948 = arith.addf %940, %947 : vector<4x384xf32>
    %949 = vector.extract_strided_slice %941 {offsets = [0, 1], sizes = [4, 1], strides = [1, 1]} : vector<4x4xf32> to vector<4x1xf32>
    %950 = vector.extract_strided_slice %942 {offsets = [1, 0], sizes = [1, 384], strides = [1, 1]} : vector<4x384xf32> to vector<1x384xf32>
    %951 = vector.broadcast %949 : vector<4x1xf32> to vector<4x384xf32>
    %952 = vector.broadcast %950 : vector<1x384xf32> to vector<4x384xf32>
    %953 = arith.mulf %951, %952 : vector<4x384xf32>
    %954 = arith.addf %948, %953 : vector<4x384xf32>
    %955 = vector.extract_strided_slice %941 {offsets = [0, 2], sizes = [4, 1], strides = [1, 1]} : vector<4x4xf32> to vector<4x1xf32>
    %956 = vector.extract_strided_slice %942 {offsets = [2, 0], sizes = [1, 384], strides = [1, 1]} : vector<4x384xf32> to vector<1x384xf32>
    %957 = vector.broadcast %955 : vector<4x1xf32> to vector<4x384xf32>
    %958 = vector.broadcast %956 : vector<1x384xf32> to vector<4x384xf32>
    %959 = arith.mulf %957, %958 : vector<4x384xf32>
    %960 = arith.addf %954, %959 : vector<4x384xf32>
    %961 = vector.extract_strided_slice %941 {offsets = [0, 3], sizes = [4, 1], strides = [1, 1]} : vector<4x4xf32> to vector<4x1xf32>
    %962 = vector.extract_strided_slice %942 {offsets = [3, 0], sizes = [1, 384], strides = [1, 1]} : vector<4x384xf32> to vector<1x384xf32>
    %963 = vector.broadcast %961 : vector<4x1xf32> to vector<4x384xf32>
    %964 = vector.broadcast %962 : vector<1x384xf32> to vector<4x384xf32>
    %965 = arith.mulf %963, %964 : vector<4x384xf32>
    %966 = arith.addf %960, %965 : vector<4x384xf32>
    %c0_331 = arith.constant 0 : index
    %c24_332 = arith.constant 24 : index
    %967 = vector.load %arg6[%c0_331, %c24_332] : memref<4x36xf32, #tpu.memory_space<vmem>>, vector<4x4xf32>
    %c0_333 = arith.constant 0 : index
    %c44_334 = arith.constant 44 : index
    %968 = vector.load %arg12[%c0_333, %c44_334] : memref<4x512xf32, #tpu.memory_space<vmem>>, vector<4x384xf32>
    %969 = vector.extract_strided_slice %967 {offsets = [0, 0], sizes = [4, 1], strides = [1, 1]} : vector<4x4xf32> to vector<4x1xf32>
    %970 = vector.extract_strided_slice %968 {offsets = [0, 0], sizes = [1, 384], strides = [1, 1]} : vector<4x384xf32> to vector<1x384xf32>
    %971 = vector.broadcast %969 : vector<4x1xf32> to vector<4x384xf32>
    %972 = vector.broadcast %970 : vector<1x384xf32> to vector<4x384xf32>
    %973 = arith.mulf %971, %972 : vector<4x384xf32>
    %974 = arith.addf %966, %973 : vector<4x384xf32>
    %975 = vector.extract_strided_slice %967 {offsets = [0, 1], sizes = [4, 1], strides = [1, 1]} : vector<4x4xf32> to vector<4x1xf32>
    %976 = vector.extract_strided_slice %968 {offsets = [1, 0], sizes = [1, 384], strides = [1, 1]} : vector<4x384xf32> to vector<1x384xf32>
    %977 = vector.broadcast %975 : vector<4x1xf32> to vector<4x384xf32>
    %978 = vector.broadcast %976 : vector<1x384xf32> to vector<4x384xf32>
    %979 = arith.mulf %977, %978 : vector<4x384xf32>
    %980 = arith.addf %974, %979 : vector<4x384xf32>
    %981 = vector.extract_strided_slice %967 {offsets = [0, 2], sizes = [4, 1], strides = [1, 1]} : vector<4x4xf32> to vector<4x1xf32>
    %982 = vector.extract_strided_slice %968 {offsets = [2, 0], sizes = [1, 384], strides = [1, 1]} : vector<4x384xf32> to vector<1x384xf32>
    %983 = vector.broadcast %981 : vector<4x1xf32> to vector<4x384xf32>
    %984 = vector.broadcast %982 : vector<1x384xf32> to vector<4x384xf32>
    %985 = arith.mulf %983, %984 : vector<4x384xf32>
    %986 = arith.addf %980, %985 : vector<4x384xf32>
    %987 = vector.extract_strided_slice %967 {offsets = [0, 3], sizes = [4, 1], strides = [1, 1]} : vector<4x4xf32> to vector<4x1xf32>
    %988 = vector.extract_strided_slice %968 {offsets = [3, 0], sizes = [1, 384], strides = [1, 1]} : vector<4x384xf32> to vector<1x384xf32>
    %989 = vector.broadcast %987 : vector<4x1xf32> to vector<4x384xf32>
    %990 = vector.broadcast %988 : vector<1x384xf32> to vector<4x384xf32>
    %991 = arith.mulf %989, %990 : vector<4x384xf32>
    %992 = arith.addf %986, %991 : vector<4x384xf32>
    %c0_335 = arith.constant 0 : index
    %c28_336 = arith.constant 28 : index
    %993 = vector.load %arg6[%c0_335, %c28_336] : memref<4x36xf32, #tpu.memory_space<vmem>>, vector<4x4xf32>
    %c0_337 = arith.constant 0 : index
    %c45_338 = arith.constant 45 : index
    %994 = vector.load %arg12[%c0_337, %c45_338] : memref<4x512xf32, #tpu.memory_space<vmem>>, vector<4x384xf32>
    %995 = vector.extract_strided_slice %993 {offsets = [0, 0], sizes = [4, 1], strides = [1, 1]} : vector<4x4xf32> to vector<4x1xf32>
    %996 = vector.extract_strided_slice %994 {offsets = [0, 0], sizes = [1, 384], strides = [1, 1]} : vector<4x384xf32> to vector<1x384xf32>
    %997 = vector.broadcast %995 : vector<4x1xf32> to vector<4x384xf32>
    %998 = vector.broadcast %996 : vector<1x384xf32> to vector<4x384xf32>
    %999 = arith.mulf %997, %998 : vector<4x384xf32>
    %1000 = arith.addf %992, %999 : vector<4x384xf32>
    %1001 = vector.extract_strided_slice %993 {offsets = [0, 1], sizes = [4, 1], strides = [1, 1]} : vector<4x4xf32> to vector<4x1xf32>
    %1002 = vector.extract_strided_slice %994 {offsets = [1, 0], sizes = [1, 384], strides = [1, 1]} : vector<4x384xf32> to vector<1x384xf32>
    %1003 = vector.broadcast %1001 : vector<4x1xf32> to vector<4x384xf32>
    %1004 = vector.broadcast %1002 : vector<1x384xf32> to vector<4x384xf32>
    %1005 = arith.mulf %1003, %1004 : vector<4x384xf32>
    %1006 = arith.addf %1000, %1005 : vector<4x384xf32>
    %1007 = vector.extract_strided_slice %993 {offsets = [0, 2], sizes = [4, 1], strides = [1, 1]} : vector<4x4xf32> to vector<4x1xf32>
    %1008 = vector.extract_strided_slice %994 {offsets = [2, 0], sizes = [1, 384], strides = [1, 1]} : vector<4x384xf32> to vector<1x384xf32>
    %1009 = vector.broadcast %1007 : vector<4x1xf32> to vector<4x384xf32>
    %1010 = vector.broadcast %1008 : vector<1x384xf32> to vector<4x384xf32>
    %1011 = arith.mulf %1009, %1010 : vector<4x384xf32>
    %1012 = arith.addf %1006, %1011 : vector<4x384xf32>
    %1013 = vector.extract_strided_slice %993 {offsets = [0, 3], sizes = [4, 1], strides = [1, 1]} : vector<4x4xf32> to vector<4x1xf32>
    %1014 = vector.extract_strided_slice %994 {offsets = [3, 0], sizes = [1, 384], strides = [1, 1]} : vector<4x384xf32> to vector<1x384xf32>
    %1015 = vector.broadcast %1013 : vector<4x1xf32> to vector<4x384xf32>
    %1016 = vector.broadcast %1014 : vector<1x384xf32> to vector<4x384xf32>
    %1017 = arith.mulf %1015, %1016 : vector<4x384xf32>
    %1018 = arith.addf %1012, %1017 : vector<4x384xf32>
    %c0_339 = arith.constant 0 : index
    %c32_340 = arith.constant 32 : index
    %1019 = vector.load %arg6[%c0_339, %c32_340] : memref<4x36xf32, #tpu.memory_space<vmem>>, vector<4x4xf32>
    %c0_341 = arith.constant 0 : index
    %c46_342 = arith.constant 46 : index
    %1020 = vector.load %arg12[%c0_341, %c46_342] : memref<4x512xf32, #tpu.memory_space<vmem>>, vector<4x384xf32>
    %1021 = vector.extract_strided_slice %1019 {offsets = [0, 0], sizes = [4, 1], strides = [1, 1]} : vector<4x4xf32> to vector<4x1xf32>
    %1022 = vector.extract_strided_slice %1020 {offsets = [0, 0], sizes = [1, 384], strides = [1, 1]} : vector<4x384xf32> to vector<1x384xf32>
    %1023 = vector.broadcast %1021 : vector<4x1xf32> to vector<4x384xf32>
    %1024 = vector.broadcast %1022 : vector<1x384xf32> to vector<4x384xf32>
    %1025 = arith.mulf %1023, %1024 : vector<4x384xf32>
    %1026 = arith.addf %1018, %1025 : vector<4x384xf32>
    %1027 = vector.extract_strided_slice %1019 {offsets = [0, 1], sizes = [4, 1], strides = [1, 1]} : vector<4x4xf32> to vector<4x1xf32>
    %1028 = vector.extract_strided_slice %1020 {offsets = [1, 0], sizes = [1, 384], strides = [1, 1]} : vector<4x384xf32> to vector<1x384xf32>
    %1029 = vector.broadcast %1027 : vector<4x1xf32> to vector<4x384xf32>
    %1030 = vector.broadcast %1028 : vector<1x384xf32> to vector<4x384xf32>
    %1031 = arith.mulf %1029, %1030 : vector<4x384xf32>
    %1032 = arith.addf %1026, %1031 : vector<4x384xf32>
    %1033 = vector.extract_strided_slice %1019 {offsets = [0, 2], sizes = [4, 1], strides = [1, 1]} : vector<4x4xf32> to vector<4x1xf32>
    %1034 = vector.extract_strided_slice %1020 {offsets = [2, 0], sizes = [1, 384], strides = [1, 1]} : vector<4x384xf32> to vector<1x384xf32>
    %1035 = vector.broadcast %1033 : vector<4x1xf32> to vector<4x384xf32>
    %1036 = vector.broadcast %1034 : vector<1x384xf32> to vector<4x384xf32>
    %1037 = arith.mulf %1035, %1036 : vector<4x384xf32>
    %1038 = arith.addf %1032, %1037 : vector<4x384xf32>
    %1039 = vector.extract_strided_slice %1019 {offsets = [0, 3], sizes = [4, 1], strides = [1, 1]} : vector<4x4xf32> to vector<4x1xf32>
    %1040 = vector.extract_strided_slice %1020 {offsets = [3, 0], sizes = [1, 384], strides = [1, 1]} : vector<4x384xf32> to vector<1x384xf32>
    %1041 = vector.broadcast %1039 : vector<4x1xf32> to vector<4x384xf32>
    %1042 = vector.broadcast %1040 : vector<1x384xf32> to vector<4x384xf32>
    %1043 = arith.mulf %1041, %1042 : vector<4x384xf32>
    %1044 = arith.addf %1038, %1043 : vector<4x384xf32>
    %c0_343 = arith.constant 0 : index
    %c0_344 = arith.constant 0 : index
    %1045 = vector.load %arg7[%c0_343, %c0_344] : memref<4x1xf32, #tpu.memory_space<vmem>>, vector<4x1xf32>
    %1046 = vector.broadcast %1045 : vector<4x1xf32> to vector<4x384xf32>
    %1047 = arith.addf %1044, %1046 : vector<4x384xf32>
    %cst_345 = arith.constant 0.000000e+00 : f32
    %1048 = vector.broadcast %cst_345 : f32 to vector<4x384xf32>
    %1049 = arith.maximumf %1047, %1048 : vector<4x384xf32>
    %c0_346 = arith.constant 0 : index
    %c0_347 = arith.constant 0 : index
    %c0_348 = arith.constant 0 : index
    %1050 = vector.load %arg9[%c0_346, %c0_347, %c0_348] : memref<1x4x384xf32, #tpu.memory_space<vmem>>, vector<1x4x384xf32>
    %1051 = vector.shape_cast %1050 : vector<1x4x384xf32> to vector<4x384xf32>
    %1052 = vector.shape_cast %1049 : vector<4x384xf32> to vector<1x4x384xf32>
    tpu.vector_store %arg9[%c0_346, %c0_347, %c0_348], %1052 {strides = array<i32>} : memref<1x4x384xf32, #tpu.memory_space<vmem>>, vector<1x4x384xf32>,
    return
  }
  func.func @transform_0(%arg0: i32) -> (i32, i32, i32) {
    %c0_i32 = arith.constant 0 : i32
    %c0_i32_0 = arith.constant 0 : i32
    %c0_i32_1 = arith.constant 0 : i32
    return %arg0, %c0_i32, %c0_i32_0 : i32, i32, i32
  }
  func.func @transform_1(%arg0: i32) -> (i32, i32, i32) {
    %c0_i32 = arith.constant 0 : i32
    %c0_i32_0 = arith.constant 0 : i32
    %c0_i32_1 = arith.constant 0 : i32
    return %arg0, %c0_i32, %c0_i32_0 : i32, i32, i32
  }
  func.func @transform_2(%arg0: i32) -> (i32, i32) {
    %c0_i32 = arith.constant 0 : i32
    %c0_i32_0 = arith.constant 0 : i32
    %c0_i32_1 = arith.constant 0 : i32
    return %c0_i32, %c0_i32_0 : i32, i32
  }
  func.func @transform_3(%arg0: i32) -> (i32, i32) {
    %c0_i32 = arith.constant 0 : i32
    %c0_i32_0 = arith.constant 0 : i32
    %c0_i32_1 = arith.constant 0 : i32
    return %c0_i32, %c0_i32_0 : i32, i32
  }
  func.func @transform_4(%arg0: i32) -> (i32, i32) {
    %c0_i32 = arith.constant 0 : i32
    %c0_i32_0 = arith.constant 0 : i32
    %c0_i32_1 = arith.constant 0 : i32
    return %c0_i32, %c0_i32_0 : i32, i32
  }
  func.func @transform_5(%arg0: i32) -> (i32, i32) {
    %c0_i32 = arith.constant 0 : i32
    %c0_i32_0 = arith.constant 0 : i32
    %c0_i32_1 = arith.constant 0 : i32
    return %c0_i32, %c0_i32_0 : i32, i32
  }
  func.func @transform_6(%arg0: i32) -> (i32, i32) {
    %c0_i32 = arith.constant 0 : i32
    %c0_i32_0 = arith.constant 0 : i32
    %c0_i32_1 = arith.constant 0 : i32
    return %c0_i32, %c0_i32_0 : i32, i32
  }
  func.func @transform_7(%arg0: i32) -> (i32, i32) {
    %c0_i32 = arith.constant 0 : i32
    %c0_i32_0 = arith.constant 0 : i32
    %c0_i32_1 = arith.constant 0 : i32
    return %c0_i32, %c0_i32_0 : i32, i32
  }
  func.func @transform_8(%arg0: i32) -> (i32, i32, i32) {
    %c0_i32 = arith.constant 0 : i32
    %c0_i32_0 = arith.constant 0 : i32
    %c0_i32_1 = arith.constant 0 : i32
    return %arg0, %c0_i32, %c0_i32_0 : i32, i32, i32
  }
}

</mosaic_0001>

<llo_original>
// kernel: up_forward.2
$region0: #{up_forward.2}
  #allocation0 [shape = 'u32[]', space=smem, size = 0x4, offset = 0x4, fixed_abs, tag = 'smem constant byte address 0x4 - core index']
  #allocation1 [shape = 'u32[72,128]{1,0:T(1,128)}', space=vmem, size = 0x9000, scoped, tag = 'internal scratch']
  %s0 = inlined_call_operand.vmem [shape: f32[4,128], index: 0, kind: input, shape index: {}]
  %s1 = inlined_call_operand.vmem [shape: f32[8,4], index: 1, kind: input, shape index: {}]
  %s2 = inlined_call_operand.vmem [shape: f32[8,1], index: 2, kind: input, shape index: {}]
  %s3 = inlined_call_operand.vmem [shape: f32[8,128], index: 3, kind: output, shape index: {}]
  %s4 = sld [smem:[#allocation0]]
  $region22: #{up_forward.2} parent=0
    _
  %s6 = ssub.s32 1, %s4
  %s7 = scalar_select 0, %s6, %s4
  // Predicated region
  $region2: #{up_forward.2} parent=0 // pred_check
    _
  $region3: #{up_forward.2} parent=0 // pred_check_branch
    %9 = sbr.rel (0) target = $region5
  $region4: #{up_forward.2} parent=0 // pred_region
    _
  $region5: #{up_forward.2} parent=0 // pred_fallthru
    _
  // Predicated region
  $region6: #{up_forward.2} parent=0 // pred_check
    _
  $region7: #{up_forward.2} parent=0 // pred_check_branch
    %11 = sbr.rel (0) target = $region9
  $region8: #{up_forward.2} parent=0 // pred_region
    _
  $region9: #{up_forward.2} parent=0 // pred_fallthru
    _
  // Predicated region
  $region10: #{up_forward.2} parent=0 // pred_check
    _
  $region11: #{up_forward.2} parent=0 // pred_check_branch
    %13 = sbr.rel (0) target = $region13
  $region12: #{up_forward.2} parent=0 // pred_region
    _
  $region13: #{up_forward.2} parent=0 // pred_fallthru
    _
  %v14 = vld [vmem:[%s0] sm:$0xf]
  %v15 = vld [vmem:[%s1] sm:$0xff]
  %v16 = vld [vmem:[%s2] sm:$0xff]
  %18 = vset.pattern.permute.xlu0 0
  %19 = vperm.xlu0 %18, %v16
  %v20 = vpop.permute.xlu0 %19
  %23 = vset.pattern.permute.xlu0 0
  %24 = vperm.xlu0 %23, %v15
  %v25 = vpop.permute.xlu0 %24
  %v27 = vperm.slane %v14, 0
  %v28 = vmul.f32 %v25, %v27
  %v29 = vadd.f32 %v20, %v28
  %30 = vset.pattern.permute.xlu0 1
  %31 = vperm.xlu0 %30, %v15
  %v32 = vpop.permute.xlu0 %31
  %v34 = vperm.slane %v14, 1
  %v35 = vmul.f32 %v32, %v34
  %v36 = vadd.f32 %v29, %v35
  %37 = vset.pattern.permute.xlu0 2
  %38 = vperm.xlu0 %37, %v15
  %v39 = vpop.permute.xlu0 %38
  %v41 = vperm.slane %v14, 2
  %v42 = vmul.f32 %v39, %v41
  %v43 = vadd.f32 %v36, %v42
  %44 = vset.pattern.permute.xlu0 3
  %45 = vperm.xlu0 %44, %v15
  %v46 = vpop.permute.xlu0 %45
  %v48 = vperm.slane %v14, 3
  %v49 = vmul.f32 %v46, %v48
  %v50 = vadd.f32 %v43, %v49
  %51 = vst [vmem:[%s3] sm:$0xff] %v50
  // Predicated region
  $region14: #{up_forward.2} parent=0 // pred_check
    _
  $region15: #{up_forward.2} parent=0 // pred_check_branch
    %53 = sbr.rel (0) target = $region17
  $region16: #{up_forward.2} parent=0 // pred_region
    _
  $region17: #{up_forward.2} parent=0 // pred_fallthru
    _
  // Predicated region
  $region18: #{up_forward.2} parent=0 // pred_check
    _
  $region19: #{up_forward.2} parent=0 // pred_check_branch
    %55 = sbr.rel (0) target = $region21
  $region20: #{up_forward.2} parent=0 // pred_region
    _
  $region21: #{up_forward.2} parent=0 // pred_fallthru
    _

// kernel: up_forward.3
$region0: #{up_forward.3}
  #allocation0 [shape = 'u32[]', space=smem, size = 0x4, offset = 0x4, fixed_abs, tag = 'smem constant byte address 0x4 - core index']
  #allocation1 [shape = 'u32[72,128]{1,0:T(1,128)}', space=vmem, size = 0x9000, scoped, tag = 'internal scratch']
  #allocation2 [shape = 'f32[2,640]{1,0:T(2,128)}', space=vmem, size = 0x1400, scoped, tag = 'scratch operand']
  #allocation3 [shape = 'f32[2,640]{1,0:T(2,128)}', space=vmem, size = 0x1400, scoped, tag = 'scratch operand']
  #allocation4 [shape = 'f32[4,512]{1,0:T(4,128)}', space=vmem, size = 0x2000, scoped, tag = 'scratch operand']
  %s0 = inlined_call_operand.vmem [shape: f32[2,2,256], index: 0, kind: input, shape index: {}]
  %s1 = inlined_call_operand.vmem [shape: f32[2,2,256], index: 1, kind: input, shape index: {}]
  %s2 = inlined_call_operand.vmem [shape: f32[4,50], index: 2, kind: input, shape index: {}]
  %s3 = inlined_call_operand.vmem [shape: f32[4,50], index: 3, kind: input, shape index: {}]
  %s4 = inlined_call_operand.vmem [shape: f32[4,1], index: 4, kind: input, shape index: {}]
  %s5 = inlined_call_operand.vmem [shape: f32[4,36], index: 5, kind: input, shape index: {}]
  %s6 = inlined_call_operand.vmem [shape: f32[4,1], index: 6, kind: input, shape index: {}]
  %s7 = inlined_call_operand.vmem [shape: f32[1,512], index: 7, kind: input, shape index: {}]
  %s8 = inlined_call_operand.vmem [shape: f32[2,4,384], index: 8, kind: output, shape index: {}]
  %s9 = sld [smem:[#allocation0]]
  $region65: #{up_forward.3} parent=0
    _
  %s11 = ssub.s32 1, %s9
  %s12 = scalar_select 0, %s11, %s9
  loop: start=0, step=1, limit=4
  $region2: #{up_forward.3} parent=0 // loop_pre_header
    _
  $region3: #{up_forward.3} parent=0 // loop_header
    %s14 = sphi 0, %s18
    %p15 = scmp.ge.s32.totalorder %s14, 4
    %s24 = sphi 0, %s26
    %s27 = sphi 0, %s24
    %s28 = sphi 0, %s27
    %s44 = sphi 0, %s28
    %s50 = sphi 0, %s52
    %s53 = sphi 0, %s50
    %s54 = sphi 0, %s53
    %s70 = sphi 0, %s54
    %s74 = sphi 0, %s74
    %s76 = sphi 0, %s74
    %s77 = sphi 0, %s76
    %s91 = sphi 0, %s77
    %s95 = sphi 0, %s95
    %s97 = sphi 0, %s95
    %s98 = sphi 0, %s97
    %s112 = sphi 0, %s98
    %s116 = sphi 0, %s116
    %s118 = sphi 0, %s116
    %s119 = sphi 0, %s118
    %s133 = sphi 0, %s119
    %s137 = sphi 0, %s137
    %s139 = sphi 0, %s137
    %s140 = sphi 0, %s139
    %s154 = sphi 0, %s140
    %s158 = sphi 0, %s158
    %s160 = sphi 0, %s158
    %s161 = sphi 0, %s160
    %s175 = sphi 0, %s161
    %s179 = sphi 0, %s179
    %s181 = sphi 0, %s179
    %s182 = sphi 0, %s181
    %s196 = sphi 0, %s182
    %s202 = sphi 0, %s204
    %s205 = sphi 0, %s202
    %s206 = sphi 0, %s205
    %s222 = sphi 0, %s206
  $region4: #{up_forward.3} parent=0 // loop_header_branch
    %17 = sbr.rel (%p15) target = $region8
  $region5: #{up_forward.3} parent=0 // loop_body
    %s19 = ssub.s32 %s14, 1
    %s20 = ssub.s32 %s14, 2
    %s21 = sadd.s32 %s14, 1
    %s22 = ssub.s32 %s14, %s21
    %p23 = scmp.eq.s32.totalorder %s22, 0
    %s25 = sadd.s32 %s24, 1
    %s26 = scalar_select %p23, %s24, %s25
    %p29 = pneg %p23
    %p30 = scmp.eq.s32.totalorder %s14, 1
    %p31 = por %p29, %p30
    %p32 = scmp.ne.s32.totalorder %s24, %s27
    %p33 = scmp.eq.s32.totalorder %s14, 0
    %p34 = por %p32, %p33
    %p35 = scmp.ne.s32.totalorder %s24, %s27
    %p36 = scmp.eq.s32.totalorder %s19, 1
    %p37 = por %p35, %p36
    %p38 = scmp.ne.s32.totalorder %s27, %s28
    %p39 = scmp.eq.s32.totalorder %s19, 0
    %p40 = por %p38, %p39
    %p41 = scmp.ne.s32.totalorder %s27, %s28
    %p42 = scmp.eq.s32.totalorder %s20, 1
    %p43 = por %p41, %p42
    %p45 = scmp.ne.s32.totalorder %s28, %s44
    %p46 = scmp.eq.s32.totalorder %s20, 0
    %p47 = por %p45, %p46
    %s48 = ssub.s32 %s14, %s21
    %p49 = scmp.eq.s32.totalorder %s48, 0
    %s51 = sadd.s32 %s50, 1
    %s52 = scalar_select %p49, %s50, %s51
    %p55 = pneg %p49
    %p56 = scmp.eq.s32.totalorder %s14, 1
    %p57 = por %p55, %p56
    %p58 = scmp.ne.s32.totalorder %s50, %s53
    %p59 = scmp.eq.s32.totalorder %s14, 0
    %p60 = por %p58, %p59
    %p61 = scmp.ne.s32.totalorder %s50, %s53
    %p62 = scmp.eq.s32.totalorder %s19, 1
    %p63 = por %p61, %p62
    %p64 = scmp.ne.s32.totalorder %s53, %s54
    %p65 = scmp.eq.s32.totalorder %s19, 0
    %p66 = por %p64, %p65
    %p67 = scmp.ne.s32.totalorder %s53, %s54
    %p68 = scmp.eq.s32.totalorder %s20, 1
    %p69 = por %p67, %p68
    %p71 = scmp.ne.s32.totalorder %s54, %s70
    %p72 = scmp.eq.s32.totalorder %s20, 0
    %p73 = por %p71, %p72
    %s75 = sadd.s32 %s74, 1
    %p78 = scmp.eq.s32.totalorder %s14, 1
    %p79 = scmp.ne.s32.totalorder %s74, %s76
    %p80 = scmp.eq.s32.totalorder %s14, 0
    %p81 = por %p79, %p80
    %p82 = scmp.ne.s32.totalorder %s74, %s76
    %p83 = scmp.eq.s32.totalorder %s19, 1
    %p84 = por %p82, %p83
    %p85 = scmp.ne.s32.totalorder %s76, %s77
    %p86 = scmp.eq.s32.totalorder %s19, 0
    %p87 = por %p85, %p86
    %p88 = scmp.ne.s32.totalorder %s76, %s77
    %p89 = scmp.eq.s32.totalorder %s20, 1
    %p90 = por %p88, %p89
    %p92 = scmp.ne.s32.totalorder %s77, %s91
    %p93 = scmp.eq.s32.totalorder %s20, 0
    %p94 = por %p92, %p93
    %s96 = sadd.s32 %s95, 1
    %p99 = scmp.eq.s32.totalorder %s14, 1
    %p100 = scmp.ne.s32.totalorder %s95, %s97
    %p101 = scmp.eq.s32.totalorder %s14, 0
    %p102 = por %p100, %p101
    %p103 = scmp.ne.s32.totalorder %s95, %s97
    %p104 = scmp.eq.s32.totalorder %s19, 1
    %p105 = por %p103, %p104
    %p106 = scmp.ne.s32.totalorder %s97, %s98
    %p107 = scmp.eq.s32.totalorder %s19, 0
    %p108 = por %p106, %p107
    %p109 = scmp.ne.s32.totalorder %s97, %s98
    %p110 = scmp.eq.s32.totalorder %s20, 1
    %p111 = por %p109, %p110
    %p113 = scmp.ne.s32.totalorder %s98, %s112
    %p114 = scmp.eq.s32.totalorder %s20, 0
    %p115 = por %p113, %p114
    %s117 = sadd.s32 %s116, 1
    %p120 = scmp.eq.s32.totalorder %s14, 1
    %p121 = scmp.ne.s32.totalorder %s116, %s118
    %p122 = scmp.eq.s32.totalorder %s14, 0
    %p123 = por %p121, %p122
    %p124 = scmp.ne.s32.totalorder %s116, %s118
    %p125 = scmp.eq.s32.totalorder %s19, 1
    %p126 = por %p124, %p125
    %p127 = scmp.ne.s32.totalorder %s118, %s119
    %p128 = scmp.eq.s32.totalorder %s19, 0
    %p129 = por %p127, %p128
    %p130 = scmp.ne.s32.totalorder %s118, %s119
    %p131 = scmp.eq.s32.totalorder %s20, 1
    %p132 = por %p130, %p131
    %p134 = scmp.ne.s32.totalorder %s119, %s133
    %p135 = scmp.eq.s32.totalorder %s20, 0
    %p136 = por %p134, %p135
    %s138 = sadd.s32 %s137, 1
    %p141 = scmp.eq.s32.totalorder %s14, 1
    %p142 = scmp.ne.s32.totalorder %s137, %s139
    %p143 = scmp.eq.s32.totalorder %s14, 0
    %p144 = por %p142, %p143
    %p145 = scmp.ne.s32.totalorder %s137, %s139
    %p146 = scmp.eq.s32.totalorder %s19, 1
    %p147 = por %p145, %p146
    %p148 = scmp.ne.s32.totalorder %s139, %s140
    %p149 = scmp.eq.s32.totalorder %s19, 0
    %p150 = por %p148, %p149
    %p151 = scmp.ne.s32.totalorder %s139, %s140
    %p152 = scmp.eq.s32.totalorder %s20, 1
    %p153 = por %p151, %p152
    %p155 = scmp.ne.s32.totalorder %s140, %s154
    %p156 = scmp.eq.s32.totalorder %s20, 0
    %p157 = por %p155, %p156
    %s159 = sadd.s32 %s158, 1
    %p162 = scmp.eq.s32.totalorder %s14, 1
    %p163 = scmp.ne.s32.totalorder %s158, %s160
    %p164 = scmp.eq.s32.totalorder %s14, 0
    %p165 = por %p163, %p164
    %p166 = scmp.ne.s32.totalorder %s158, %s160
    %p167 = scmp.eq.s32.totalorder %s19, 1
    %p168 = por %p166, %p167
    %p169 = scmp.ne.s32.totalorder %s160, %s161
    %p170 = scmp.eq.s32.totalorder %s19, 0
    %p171 = por %p169, %p170
    %p172 = scmp.ne.s32.totalorder %s160, %s161
    %p173 = scmp.eq.s32.totalorder %s20, 1
    %p174 = por %p172, %p173
    %p176 = scmp.ne.s32.totalorder %s161, %s175
    %p177 = scmp.eq.s32.totalorder %s20, 0
    %p178 = por %p176, %p177
    %s180 = sadd.s32 %s179, 1
    %p183 = scmp.eq.s32.totalorder %s14, 1
    %p184 = scmp.ne.s32.totalorder %s179, %s181
    %p185 = scmp.eq.s32.totalorder %s14, 0
    %p186 = por %p184, %p185
    %p187 = scmp.ne.s32.totalorder %s179, %s181
    %p188 = scmp.eq.s32.totalorder %s19, 1
    %p189 = por %p187, %p188
    %p190 = scmp.ne.s32.totalorder %s181, %s182
    %p191 = scmp.eq.s32.totalorder %s19, 0
    %p192 = por %p190, %p191
    %p193 = scmp.ne.s32.totalorder %s181, %s182
    %p194 = scmp.eq.s32.totalorder %s20, 1
    %p195 = por %p193, %p194
    %p197 = scmp.ne.s32.totalorder %s182, %s196
    %p198 = scmp.eq.s32.totalorder %s20, 0
    %p199 = por %p197, %p198
    %s200 = ssub.s32 %s14, %s21
    %p201 = scmp.eq.s32.totalorder %s200, 0
    %s203 = sadd.s32 %s202, 1
    %s204 = scalar_select %p201, %s202, %s203
    %p207 = pneg %p201
    %p208 = scmp.eq.s32.totalorder %s14, 1
    %p209 = por %p207, %p208
    %p210 = scmp.ne.s32.totalorder %s202, %s205
    %p211 = scmp.eq.s32.totalorder %s14, 0
    %p212 = por %p210, %p211
    %p213 = scmp.ne.s32.totalorder %s202, %s205
    %p214 = scmp.eq.s32.totalorder %s19, 1
    %p215 = por %p213, %p214
    %p216 = scmp.ne.s32.totalorder %s205, %s206
    %p217 = scmp.eq.s32.totalorder %s19, 0
    %p218 = por %p216, %p217
    %p219 = scmp.ne.s32.totalorder %s205, %s206
    %p220 = scmp.eq.s32.totalorder %s20, 1
    %p221 = por %p219, %p220
    %p223 = scmp.ne.s32.totalorder %s206, %s222
    %p224 = scmp.eq.s32.totalorder %s20, 0
    %p225 = por %p223, %p224
    %p226 = scmp.le.s32.totalorder 1, %s14
    %p227 = scmp.lt.s32.totalorder %s14, 3
    %p228 = pnand %p226, %p227
    %p229 = pneg %p228
    // Predicated region
    $region9: #{up_forward.3} parent=5 // pred_check
      _
    $region10: #{up_forward.3} parent=5 // pred_check_branch
      %231 = sbr.rel (%p228) target = $region12
    $region11: #{up_forward.3} parent=5 // pred_region
      %s232 = ssub.s32 %s14, 1
      // Predicated region
      $region13: #{up_forward.3} parent=11 // pred_check
        %p233 = pneg %p87
      $region14: #{up_forward.3} parent=11 // pred_check_branch
        %235 = sbr.rel (%p233) target = $region16
      $region15: #{up_forward.3} parent=11 // pred_region
        _
      $region16: #{up_forward.3} parent=11 // pred_fallthru
        _
      // Predicated region
      $region17: #{up_forward.3} parent=11 // pred_check
        %p236 = pneg %p108
      $region18: #{up_forward.3} parent=11 // pred_check_branch
        %238 = sbr.rel (%p236) target = $region20
      $region19: #{up_forward.3} parent=11 // pred_region
        _
      $region20: #{up_forward.3} parent=11 // pred_fallthru
        _
      // Predicated region
      $region21: #{up_forward.3} parent=11 // pred_check
        %p239 = pneg %p129
      $region22: #{up_forward.3} parent=11 // pred_check_branch
        %241 = sbr.rel (%p239) target = $region24
      $region23: #{up_forward.3} parent=11 // pred_region
        _
      $region24: #{up_forward.3} parent=11 // pred_fallthru
        _
      // Predicated region
      $region25: #{up_forward.3} parent=11 // pred_check
        %p242 = pneg %p150
      $region26: #{up_forward.3} parent=11 // pred_check_branch
        %244 = sbr.rel (%p242) target = $region28
      $region27: #{up_forward.3} parent=11 // pred_region
        _
      $region28: #{up_forward.3} parent=11 // pred_fallthru
        _
      // Predicated region
      $region29: #{up_forward.3} parent=11 // pred_check
        %p245 = pneg %p171
      $region30: #{up_forward.3} parent=11 // pred_check_branch
        %247 = sbr.rel (%p245) target = $region32
      $region31: #{up_forward.3} parent=11 // pred_region
        _
      $region32: #{up_forward.3} parent=11 // pred_fallthru
        _
      // Predicated region
      $region33: #{up_forward.3} parent=11 // pred_check
        %p248 = pneg %p192
      $region34: #{up_forward.3} parent=11 // pred_check_branch
        %250 = sbr.rel (%p248) target = $region36
      $region35: #{up_forward.3} parent=11 // pred_region
        _
      $region36: #{up_forward.3} parent=11 // pred_fallthru
        _
    $region12: #{up_forward.3} parent=5 // pred_fallthru
      _
    %p251 = scmp.lt.s32.totalorder %s14, 2
    // Predicated region
    $region37: #{up_forward.3} parent=5 // pred_check
      %p252 = pneg %p251
    $region38: #{up_forward.3} parent=5 // pred_check_branch
      %254 = sbr.rel (%p252) target = $region40
    $region39: #{up_forward.3} parent=5 // pred_region
      // Predicated region
      $region41: #{up_forward.3} parent=39 // pred_check
        %p255 = pneg %p34
      $region42: #{up_forward.3} parent=39 // pred_check_branch
        %257 = sbr.rel (%p255) target = $region44
      $region43: #{up_forward.3} parent=39 // pred_region
        %p258 = scmp.lt.s32.totalorder %s14, 1
        %s259 = scalar_select %p258, %s14, 1
        %s260 = smul.addr %s259, 2
        %s261 = smul.addr %s260, 2
        %s262 = scalar_lea.vmem %s0, %s261
      $region44: #{up_forward.3} parent=39 // pred_fallthru
        _
      // Predicated region
      $region45: #{up_forward.3} parent=39 // pred_check
        %p263 = pneg %p60
      $region46: #{up_forward.3} parent=39 // pred_check_branch
        %265 = sbr.rel (%p263) target = $region48
      $region47: #{up_forward.3} parent=39 // pred_region
        %p266 = scmp.lt.s32.totalorder %s14, 1
        %s267 = scalar_select %p266, %s14, 1
        %s268 = smul.addr %s267, 2
        %s269 = smul.addr %s268, 2
        %s270 = scalar_lea.vmem %s1, %s269
      $region48: #{up_forward.3} parent=39 // pred_fallthru
        _
    $region40: #{up_forward.3} parent=5 // pred_fallthru
      _
    %p271 = scmp.le.s32.totalorder 1, %s14
    %p272 = scmp.lt.s32.totalorder %s14, 3
    %p273 = pnand %p271, %p272
    %p274 = pneg %p273
    // Predicated region
    $region49: #{up_forward.3} parent=5 // pred_check
      _
    $region50: #{up_forward.3} parent=5 // pred_check_branch
      %276 = sbr.rel (%p273) target = $region52
    $region51: #{up_forward.3} parent=5 // pred_region
      %s277 = ssub.s32 %s14, 1
      %p278 = scmp.lt.s32.totalorder %s19, 1
      %s279 = scalar_select %p278, %s19, 1
      %s280 = smul.addr %s279, 2
      %s281 = smul.addr %s280, 2
      %s282 = scalar_lea.vmem %s0, %s281
      %p283 = pneg %p40
      %p284 = pneg %p37
      %p285 = scmp.lt.s32.totalorder %s19, 1
      %s286 = scalar_select %p285, %s19, 1
      %s287 = smul.addr %s286, 2
      %s288 = smul.addr %s287, 2
      %s289 = scalar_lea.vmem %s1, %s288
      %p290 = pneg %p66
      %p291 = pneg %p63
      %p292 = pneg %p87
      %p293 = pneg %p84
      %p294 = pneg %p108
      %p295 = pneg %p105
      %p296 = pneg %p129
      %p297 = pneg %p126
      %p298 = pneg %p150
      %p299 = pneg %p147
      %p300 = pneg %p171
      %p301 = pneg %p168
      %p302 = pneg %p192
      %p303 = pneg %p189
      %p304 = pneg %p218
      %p305 = pneg %p215
      %p306 = scmp.lt.s32.totalorder %s19, 1
      %s307 = scalar_select %p306, %s19, 1
      %s308 = smul.addr %s307, 3
      %s309 = smul.addr %s308, 4
      %s310 = scalar_lea.vmem %s8, %s309
      %p311 = scmp.lt.s32.totalorder %s19, 1
      %s312 = scalar_select %p311, %s19, 1
      %s313 = smul.addr %s312, 2
      %s314 = smul.addr %s313, 2
      %s315 = scalar_lea.vmem %s0, %s314
      %p316 = scmp.lt.s32.totalorder %s19, 1
      %s317 = scalar_select %p316, %s19, 1
      %s318 = smul.addr %s317, 2
      %s319 = smul.addr %s318, 2
      %s320 = scalar_lea.vmem %s1, %s319
      %p321 = scmp.lt.s32.totalorder %s19, 1
      %s322 = scalar_select %p321, %s19, 1
      %s323 = smul.addr %s322, 3
      %s324 = smul.addr %s323, 4
      %s325 = scalar_lea.vmem %s8, %s324
      %326 = vst [vmem:[#allocation2] sm:$0xff] 0.0
      %327 = vst [vmem:[#allocation2 + $0x8] sm:$0x3] 0.0
      %328 = vst [vmem:[#allocation3] sm:$0xff] 0.0
      %329 = vst [vmem:[#allocation3 + $0x8] sm:$0x3] 0.0
      %v330 = vld [vmem:[%s315] sm:$0x3]
      %332 = vrot.lane.b32.xlu0 %v330, 69
      %v333 = vpop.permute.xlu0 %332
      %vm335 = vcmask 689704
      %336 = vst.msk [vmem:[#allocation2] sm:$0x3] %vm335, %v333
      %v337 = vld [vmem:[%s320] sm:$0x3]
      %339 = vrot.lane.b32.xlu0 %v337, 69
      %v340 = vpop.permute.xlu0 %339
      %342 = vst.msk [vmem:[#allocation3] sm:$0x3] %vm335, %v340
      %v343 = vld [vmem:[%s315] sm:$0x3]
      %345 = vrot.lane.b32.xlu0 %v343, 75
      %v346 = vpop.permute.xlu0 %345
      %vm348 = vcmask 870104
      %349 = vst.msk [vmem:[#allocation2] sm:$0x3] %vm348, %v346
      %v350 = vld [vmem:[%s320] sm:$0x3]
      %352 = vrot.lane.b32.xlu0 %v350, 75
      %v353 = vpop.permute.xlu0 %352
      %355 = vst.msk [vmem:[#allocation3] sm:$0x3] %vm348, %v353
      %v356 = vld [vmem:[%s315] sm:$0x3]
      %358 = vrot.lane.b32.xlu0 %v356, 81
      %v359 = vpop.permute.xlu0 %358
      %v360 = vrot.slane %v359, 6
      %vm361 = vcmask 662528
      %v362 = vsel %vm361, %v360, %v359
      %vm364 = vcmask 1042312
      %vm365 = vcmask 3074
      %vm366 = vmor %vm365, %vm364
      %367 = vst.msk [vmem:[#allocation2] sm:$0xf] %vm366, %v362
      %v368 = vld [vmem:[%s320] sm:$0x3]
      %370 = vrot.lane.b32.xlu0 %v368, 81
      %v371 = vpop.permute.xlu0 %370
      %v372 = vrot.slane %v371, 6
      %v373 = vsel %vm361, %v372, %v371
      %375 = vst.msk [vmem:[#allocation3] sm:$0xf] %vm366, %v373
      %v376 = vld [vmem:[%s315] sm:$0x3]
      %378 = vrot.lane.b32.xlu0 %v376, 87
      %v379 = vpop.permute.xlu0 %378
      %vm381 = vcmask 181304
      %382 = vst.msk [vmem:[#allocation2 + $0x2] sm:$0x3] %vm381, %v379
      %v383 = vld [vmem:[%s320] sm:$0x3]
      %385 = vrot.lane.b32.xlu0 %v383, 87
      %v386 = vpop.permute.xlu0 %385
      %388 = vst.msk [vmem:[#allocation3 + $0x2] sm:$0x3] %vm381, %v386
      %v389 = vld [vmem:[%s315] sm:$0x3]
      %391 = vrot.lane.b32.xlu0 %v389, 93
      %v392 = vpop.permute.xlu0 %391
      %vm394 = vcmask 361704
      %395 = vst.msk [vmem:[#allocation2 + $0x2] sm:$0x3] %vm394, %v392
      %v396 = vld [vmem:[%s320] sm:$0x3]
      %398 = vrot.lane.b32.xlu0 %v396, 93
      %v399 = vpop.permute.xlu0 %398
      %401 = vst.msk [vmem:[#allocation3 + $0x2] sm:$0x3] %vm394, %v399
      %v402 = vld [vmem:[%s315] sm:$0x3]
      %404 = vrot.lane.b32.xlu0 %v402, 99
      %v405 = vpop.permute.xlu0 %404
      %vm407 = vcmask 542104
      %408 = vst.msk [vmem:[#allocation2 + $0x2] sm:$0x3] %vm407, %v405
      %v409 = vld [vmem:[%s320] sm:$0x3]
      %411 = vrot.lane.b32.xlu0 %v409, 99
      %v412 = vpop.permute.xlu0 %411
      %414 = vst.msk [vmem:[#allocation3 + $0x2] sm:$0x3] %vm407, %v412
      %v415 = vld [vmem:[%s315] sm:$0x3]
      %417 = vrot.lane.b32.xlu0 %v415, 105
      %v418 = vpop.permute.xlu0 %417
      %vm420 = vcmask 722504
      %421 = vst.msk [vmem:[#allocation2 + $0x2] sm:$0x3] %vm420, %v418
      %v422 = vld [vmem:[%s320] sm:$0x3]
      %424 = vrot.lane.b32.xlu0 %v422, 105
      %v425 = vpop.permute.xlu0 %424
      %427 = vst.msk [vmem:[#allocation3 + $0x2] sm:$0x3] %vm420, %v425
      %v428 = vld [vmem:[%s315] sm:$0x3]
      %430 = vrot.lane.b32.xlu0 %v428, 111
      %v431 = vpop.permute.xlu0 %430
      %vm433 = vcmask 902904
      %434 = vst.msk [vmem:[#allocation2 + $0x2] sm:$0x3] %vm433, %v431
      %v435 = vld [vmem:[%s320] sm:$0x3]
      %437 = vrot.lane.b32.xlu0 %v435, 111
      %v438 = vpop.permute.xlu0 %437
      %440 = vst.msk [vmem:[#allocation3 + $0x2] sm:$0x3] %vm433, %v438
      %v441 = vld [vmem:[%s315 + $0x2] sm:$0x3]
      %443 = vrot.lane.b32.xlu0 %v441, 117
      %v444 = vpop.permute.xlu0 %443
      %v445 = vrot.slane %v444, 6
      %vm446 = vcmask 957440
      %v447 = vsel %vm446, %v445, %v444
      %vm449 = vcmask 1042344
      %vm450 = vcmask 35842
      %vm451 = vmor %vm450, %vm449
      %452 = vst.msk [vmem:[#allocation2 + $0x2] sm:$0xf] %vm451, %v447
      %v453 = vld [vmem:[%s320 + $0x2] sm:$0x3]
      %455 = vrot.lane.b32.xlu0 %v453, 117
      %v456 = vpop.permute.xlu0 %455
      %v457 = vrot.slane %v456, 6
      %v458 = vsel %vm446, %v457, %v456
      %460 = vst.msk [vmem:[#allocation3 + $0x2] sm:$0xf] %vm451, %v458
      %v461 = vld [vmem:[%s315 + $0x2] sm:$0x3]
      %463 = vrot.lane.b32.xlu0 %v461, 123
      %v464 = vpop.permute.xlu0 %463
      %vm466 = vcmask 214104
      %467 = vst.msk [vmem:[#allocation2 + $0x4] sm:$0x3] %vm466, %v464
      %v468 = vld [vmem:[%s320 + $0x2] sm:$0x3]
      %470 = vrot.lane.b32.xlu0 %v468, 123
      %v471 = vpop.permute.xlu0 %470
      %473 = vst.msk [vmem:[#allocation3 + $0x4] sm:$0x3] %vm466, %v471
      %v474 = vld [vmem:[%s315 + $0x2] sm:$0x3]
      %476 = vrot.lane.b32.xlu0 %v474, 1
      %v477 = vpop.permute.xlu0 %476
      %vm479 = vcmask 394504
      %480 = vst.msk [vmem:[#allocation2 + $0x4] sm:$0x3] %vm479, %v477
      %v481 = vld [vmem:[%s320 + $0x2] sm:$0x3]
      %483 = vrot.lane.b32.xlu0 %v481, 1
      %v484 = vpop.permute.xlu0 %483
      %486 = vst.msk [vmem:[#allocation3 + $0x4] sm:$0x3] %vm479, %v484
      %v487 = vld [vmem:[%s315 + $0x2] sm:$0x3]
      %489 = vrot.lane.b32.xlu0 %v487, 7
      %v490 = vpop.permute.xlu0 %489
      %vm492 = vcmask 574904
      %493 = vst.msk [vmem:[#allocation2 + $0x4] sm:$0x3] %vm492, %v490
      %v494 = vld [vmem:[%s320 + $0x2] sm:$0x3]
      %496 = vrot.lane.b32.xlu0 %v494, 7
      %v497 = vpop.permute.xlu0 %496
      %499 = vst.msk [vmem:[#allocation3 + $0x4] sm:$0x3] %vm492, %v497
      %v500 = vld [vmem:[%s315 + $0x2] sm:$0x3]
      %502 = vrot.lane.b32.xlu0 %v500, 13
      %v503 = vpop.permute.xlu0 %502
      %vm505 = vcmask 755304
      %506 = vst.msk [vmem:[#allocation2 + $0x4] sm:$0x3] %vm505, %v503
      %v507 = vld [vmem:[%s320 + $0x2] sm:$0x3]
      %509 = vrot.lane.b32.xlu0 %v507, 13
      %v510 = vpop.permute.xlu0 %509
      %512 = vst.msk [vmem:[#allocation3 + $0x4] sm:$0x3] %vm505, %v510
      %v513 = vld [vmem:[%s315 + $0x2] sm:$0x3]
      %515 = vrot.lane.b32.xlu0 %v513, 19
      %v516 = vpop.permute.xlu0 %515
      %vm518 = vcmask 935704
      %519 = vst.msk [vmem:[#allocation2 + $0x4] sm:$0x3] %vm518, %v516
      %v520 = vld [vmem:[%s320 + $0x2] sm:$0x3]
      %522 = vrot.lane.b32.xlu0 %v520, 19
      %v523 = vpop.permute.xlu0 %522
      %525 = vst.msk [vmem:[#allocation3 + $0x4] sm:$0x3] %vm518, %v523
      %v526 = vld [vmem:[%s315 + $0x2] sm:$0x3]
      %528 = vrot.lane.b32.xlu0 %v526, 25
      %v529 = vpop.permute.xlu0 %528
      %v530 = vrot.slane %v529, 6
      %vm531 = vcmask 203776
      %v532 = vsel %vm531, %v530, %v529
      %vm534 = vcmask 1042376
      %vm535 = vcmask 68610
      %vm536 = vmor %vm535, %vm534
      %537 = vst.msk [vmem:[#allocation2 + $0x4] sm:$0xf] %vm536, %v532
      %v538 = vld [vmem:[%s320 + $0x2] sm:$0x3]
      %540 = vrot.lane.b32.xlu0 %v538, 25
      %v541 = vpop.permute.xlu0 %540
      %v542 = vrot.slane %v541, 6
      %v543 = vsel %vm531, %v542, %v541
      %545 = vst.msk [vmem:[#allocation3 + $0x4] sm:$0xf] %vm536, %v543
      %v546 = vld [vmem:[%s315 + $0x2] sm:$0x3]
      %548 = vrot.lane.b32.xlu0 %v546, 31
      %v549 = vpop.permute.xlu0 %548
      %vm551 = vcmask 246904
      %552 = vst.msk [vmem:[#allocation2 + $0x6] sm:$0x3] %vm551, %v549
      %v553 = vld [vmem:[%s320 + $0x2] sm:$0x3]
      %555 = vrot.lane.b32.xlu0 %v553, 31
      %v556 = vpop.permute.xlu0 %555
      %558 = vst.msk [vmem:[#allocation3 + $0x6] sm:$0x3] %vm551, %v556
      %v559 = vld [vmem:[%s2] sm:$0xf]
      %v560 = vld [vmem:[#allocation2] sm:$0xff]
      %562 = vset.pattern.permute.xlu0 0
      %563 = vperm.xlu0 %562, %v559
      %v564 = vpop.permute.xlu0 %563
      %v567 = vperm.slane %v560, 0
      %v568 = vperm.slane %v560, 2
      %v569 = vperm.slane %v560, 4
      %v570 = vperm.slane %v560, 6
      %v575 = vperm.slane %v567, 0
      %v576 = vperm.slane %v568, 0
      %v577 = vperm.slane %v569, 0
      %v578 = vperm.slane %v570, 0
      %v579 = vmul.f32 %v564, %v575
      %v580 = vmul.f32 %v564, %v576
      %v581 = vmul.f32 %v564, %v577
      %v582 = vmul.f32 %v564, %v578
      %v583 = vadd.f32 %v579, 0.0
      %v584 = vadd.f32 %v580, 0.0
      %v585 = vadd.f32 %v581, 0.0
      %v586 = vadd.f32 %v582, 0.0
      %587 = vset.pattern.permute.xlu0 1
      %588 = vperm.xlu0 %587, %v559
      %v589 = vpop.permute.xlu0 %588
      %v591 = vperm.slane %v560, 1
      %v592 = vperm.slane %v560, 3
      %v593 = vperm.slane %v560, 5
      %v594 = vperm.slane %v560, 7
      %v599 = vperm.slane %v591, 1
      %v600 = vperm.slane %v592, 1
      %v601 = vperm.slane %v593, 1
      %v602 = vperm.slane %v594, 1
      %v603 = vmul.f32 %v589, %v599
      %v604 = vmul.f32 %v589, %v600
      %v605 = vmul.f32 %v589, %v601
      %v606 = vmul.f32 %v589, %v602
      %v607 = vadd.f32 %v583, %v603
      %v608 = vadd.f32 %v584, %v604
      %v609 = vadd.f32 %v585, %v605
      %v610 = vadd.f32 %v586, %v606
      %v611 = vld [vmem:[%s3] sm:$0xf]
      %v612 = vld [vmem:[#allocation3] sm:$0xff]
      %614 = vset.pattern.permute.xlu0 0
      %615 = vperm.xlu0 %614, %v611
      %v616 = vpop.permute.xlu0 %615
      %v619 = vperm.slane %v612, 0
      %v620 = vperm.slane %v612, 2
      %v621 = vperm.slane %v612, 4
      %v622 = vperm.slane %v612, 6
      %v627 = vperm.slane %v619, 0
      %v628 = vperm.slane %v620, 0
      %v629 = vperm.slane %v621, 0
      %v630 = vperm.slane %v622, 0
      %v631 = vmul.f32 %v616, %v627
      %v632 = vmul.f32 %v616, %v628
      %v633 = vmul.f32 %v616, %v629
      %v634 = vmul.f32 %v616, %v630
      %v635 = vadd.f32 %v607, %v631
      %v636 = vadd.f32 %v608, %v632
      %v637 = vadd.f32 %v609, %v633
      %v638 = vadd.f32 %v610, %v634
      %639 = vset.pattern.permute.xlu0 1
      %640 = vperm.xlu0 %639, %v611
      %v641 = vpop.permute.xlu0 %640
      %v643 = vperm.slane %v612, 1
      %v644 = vperm.slane %v612, 3
      %v645 = vperm.slane %v612, 5
      %v646 = vperm.slane %v612, 7
      %v651 = vperm.slane %v643, 1
      %v652 = vperm.slane %v644, 1
      %v653 = vperm.slane %v645, 1
      %v654 = vperm.slane %v646, 1
      %v655 = vmul.f32 %v641, %v651
      %v656 = vmul.f32 %v641, %v652
      %v657 = vmul.f32 %v641, %v653
      %v658 = vmul.f32 %v641, %v654
      %v659 = vadd.f32 %v635, %v655
      %v660 = vadd.f32 %v636, %v656
      %v661 = vadd.f32 %v637, %v657
      %v662 = vadd.f32 %v638, %v658
      %v663 = vld [vmem:[#allocation2] sm:$0xff]
      %v664 = vld [vmem:[#allocation2 + $0x8] sm:$0x3]
      %665 = vset.pattern.permute.xlu0 2
      %666 = vperm.xlu0 %665, %v559
      %v667 = vpop.permute.xlu0 %666
      %v671 = vperm.slane %v663, 0
      %v672 = vperm.slane %v663, 2
      %v673 = vperm.slane %v663, 4
      %v674 = vperm.slane %v663, 6
      %v675 = vperm.slane %v664, 0
      %v681 = vperm.slane %v671, 0
      %v682 = vperm.slane %v672, 0
      %v683 = vperm.slane %v673, 0
      %v684 = vperm.slane %v674, 0
      %v685 = vperm.slane %v675, 0
      %v686 = vmul.f32 %v667, %v681
      %v687 = vmul.f32 %v667, %v682
      %v688 = vmul.f32 %v667, %v683
      %v689 = vmul.f32 %v667, %v684
      %v690 = vmul.f32 %v667, %v685
      %696 = vrot.lane.b32.xlu0 %v686, 127
      %v697 = vpop.permute.xlu0 %696
      %698 = vrot.lane.b32.xlu0 %v687, 127
      %v699 = vpop.permute.xlu0 %698
      %700 = vrot.lane.b32.xlu0 %v688, 127
      %v701 = vpop.permute.xlu0 %700
      %702 = vrot.lane.b32.xlu0 %v689, 127
      %v703 = vpop.permute.xlu0 %702
      %704 = vrot.lane.b32.xlu0 %v690, 127
      %v705 = vpop.permute.xlu0 %704
      %vm706 = vcmask 1039360
      %v707 = vsel %vm706, %v697, %v699
      %v708 = vsel %vm706, %v699, %v701
      %v709 = vsel %vm706, %v701, %v703
      %v710 = vsel %vm706, %v703, %v705
      %v715 = vadd.f32 %v659, %v707
      %v716 = vadd.f32 %v660, %v708
      %v717 = vadd.f32 %v661, %v709
      %v718 = vadd.f32 %v662, %v710
      %719 = vset.pattern.permute.xlu0 3
      %720 = vperm.xlu0 %719, %v559
      %v721 = vpop.permute.xlu0 %720
      %v723 = vperm.slane %v663, 1
      %v724 = vperm.slane %v663, 3
      %v725 = vperm.slane %v663, 5
      %v726 = vperm.slane %v663, 7
      %v727 = vperm.slane %v664, 1
      %v733 = vperm.slane %v723, 1
      %v734 = vperm.slane %v724, 1
      %v735 = vperm.slane %v725, 1
      %v736 = vperm.slane %v726, 1
      %v737 = vperm.slane %v727, 1
      %v738 = vmul.f32 %v721, %v733
      %v739 = vmul.f32 %v721, %v734
      %v740 = vmul.f32 %v721, %v735
      %v741 = vmul.f32 %v721, %v736
      %v742 = vmul.f32 %v721, %v737
      %748 = vrot.lane.b32.xlu0 %v738, 127
      %v749 = vpop.permute.xlu0 %748
      %750 = vrot.lane.b32.xlu0 %v739, 127
      %v751 = vpop.permute.xlu0 %750
      %752 = vrot.lane.b32.xlu0 %v740, 127
      %v753 = vpop.permute.xlu0 %752
      %754 = vrot.lane.b32.xlu0 %v741, 127
      %v755 = vpop.permute.xlu0 %754
      %756 = vrot.lane.b32.xlu0 %v742, 127
      %v757 = vpop.permute.xlu0 %756
      %v758 = vsel %vm706, %v749, %v751
      %v759 = vsel %vm706, %v751, %v753
      %v760 = vsel %vm706, %v753, %v755
      %v761 = vsel %vm706, %v755, %v757
      %v766 = vadd.f32 %v715, %v758
      %v767 = vadd.f32 %v716, %v759
      %v768 = vadd.f32 %v717, %v760
      %v769 = vadd.f32 %v718, %v761
      %v770 = vld [vmem:[#allocation3] sm:$0xff]
      %v771 = vld [vmem:[#allocation3 + $0x8] sm:$0x3]
      %772 = vset.pattern.permute.xlu0 2
      %773 = vperm.xlu0 %772, %v611
      %v774 = vpop.permute.xlu0 %773
      %v778 = vperm.slane %v770, 0
      %v779 = vperm.slane %v770, 2
      %v780 = vperm.slane %v770, 4
      %v781 = vperm.slane %v770, 6
      %v782 = vperm.slane %v771, 0
      %v788 = vperm.slane %v778, 0
      %v789 = vperm.slane %v779, 0
      %v790 = vperm.slane %v780, 0
      %v791 = vperm.slane %v781, 0
      %v792 = vperm.slane %v782, 0
      %v793 = vmul.f32 %v774, %v788
      %v794 = vmul.f32 %v774, %v789
      %v795 = vmul.f32 %v774, %v790
      %v796 = vmul.f32 %v774, %v791
      %v797 = vmul.f32 %v774, %v792
      %803 = vrot.lane.b32.xlu0 %v793, 127
      %v804 = vpop.permute.xlu0 %803
      %805 = vrot.lane.b32.xlu0 %v794, 127
      %v806 = vpop.permute.xlu0 %805
      %807 = vrot.lane.b32.xlu0 %v795, 127
      %v808 = vpop.permute.xlu0 %807
      %809 = vrot.lane.b32.xlu0 %v796, 127
      %v810 = vpop.permute.xlu0 %809
      %811 = vrot.lane.b32.xlu0 %v797, 127
      %v812 = vpop.permute.xlu0 %811
      %v813 = vsel %vm706, %v804, %v806
      %v814 = vsel %vm706, %v806, %v808
      %v815 = vsel %vm706, %v808, %v810
      %v816 = vsel %vm706, %v810, %v812
      %v821 = vadd.f32 %v766, %v813
      %v822 = vadd.f32 %v767, %v814
      %v823 = vadd.f32 %v768, %v815
      %v824 = vadd.f32 %v769, %v816
      %825 = vset.pattern.permute.xlu0 3
      %826 = vperm.xlu0 %825, %v611
      %v827 = vpop.permute.xlu0 %826
      %v829 = vperm.slane %v770, 1
      %v830 = vperm.slane %v770, 3
      %v831 = vperm.slane %v770, 5
      %v832 = vperm.slane %v770, 7
      %v833 = vperm.slane %v771, 1
      %v839 = vperm.slane %v829, 1
      %v840 = vperm.slane %v830, 1
      %v841 = vperm.slane %v831, 1
      %v842 = vperm.slane %v832, 1
      %v843 = vperm.slane %v833, 1
      %v844 = vmul.f32 %v827, %v839
      %v845 = vmul.f32 %v827, %v840
      %v846 = vmul.f32 %v827, %v841
      %v847 = vmul.f32 %v827, %v842
      %v848 = vmul.f32 %v827, %v843
      %854 = vrot.lane.b32.xlu0 %v844, 127
      %v855 = vpop.permute.xlu0 %854
      %856 = vrot.lane.b32.xlu0 %v845, 127
      %v857 = vpop.permute.xlu0 %856
      %858 = vrot.lane.b32.xlu0 %v846, 127
      %v859 = vpop.permute.xlu0 %858
      %860 = vrot.lane.b32.xlu0 %v847, 127
      %v861 = vpop.permute.xlu0 %860
      %862 = vrot.lane.b32.xlu0 %v848, 127
      %v863 = vpop.permute.xlu0 %862
      %v864 = vsel %vm706, %v855, %v857
      %v865 = vsel %vm706, %v857, %v859
      %v866 = vsel %vm706, %v859, %v861
      %v867 = vsel %vm706, %v861, %v863
      %v872 = vadd.f32 %v821, %v864
      %v873 = vadd.f32 %v822, %v865
      %v874 = vadd.f32 %v823, %v866
      %v875 = vadd.f32 %v824, %v867
      %876 = vset.pattern.permute.xlu0 4
      %877 = vperm.xlu0 %876, %v559
      %v878 = vpop.permute.xlu0 %877
      %v880 = vmul.f32 %v878, %v681
      %v881 = vmul.f32 %v878, %v682
      %v882 = vmul.f32 %v878, %v683
      %v883 = vmul.f32 %v878, %v684
      %v884 = vmul.f32 %v878, %v685
      %890 = vrot.lane.b32.xlu0 %v880, 126
      %v891 = vpop.permute.xlu0 %890
      %892 = vrot.lane.b32.xlu0 %v881, 126
      %v893 = vpop.permute.xlu0 %892
      %894 = vrot.lane.b32.xlu0 %v882, 126
      %v895 = vpop.permute.xlu0 %894
      %896 = vrot.lane.b32.xlu0 %v883, 126
      %v897 = vpop.permute.xlu0 %896
      %898 = vrot.lane.b32.xlu0 %v884, 126
      %v899 = vpop.permute.xlu0 %898
      %vm900 = vcmask 1031168
      %v901 = vsel %vm900, %v891, %v893
      %v902 = vsel %vm900, %v893, %v895
      %v903 = vsel %vm900, %v895, %v897
      %v904 = vsel %vm900, %v897, %v899
      %v909 = vadd.f32 %v872, %v901
      %v910 = vadd.f32 %v873, %v902
      %v911 = vadd.f32 %v874, %v903
      %v912 = vadd.f32 %v875, %v904
      %913 = vset.pattern.permute.xlu0 5
      %914 = vperm.xlu0 %913, %v559
      %v915 = vpop.permute.xlu0 %914
      %v917 = vmul.f32 %v915, %v733
      %v918 = vmul.f32 %v915, %v734
      %v919 = vmul.f32 %v915, %v735
      %v920 = vmul.f32 %v915, %v736
      %v921 = vmul.f32 %v915, %v737
      %927 = vrot.lane.b32.xlu0 %v917, 126
      %v928 = vpop.permute.xlu0 %927
      %929 = vrot.lane.b32.xlu0 %v918, 126
      %v930 = vpop.permute.xlu0 %929
      %931 = vrot.lane.b32.xlu0 %v919, 126
      %v932 = vpop.permute.xlu0 %931
      %933 = vrot.lane.b32.xlu0 %v920, 126
      %v934 = vpop.permute.xlu0 %933
      %935 = vrot.lane.b32.xlu0 %v921, 126
      %v936 = vpop.permute.xlu0 %935
      %v937 = vsel %vm900, %v928, %v930
      %v938 = vsel %vm900, %v930, %v932
      %v939 = vsel %vm900, %v932, %v934
      %v940 = vsel %vm900, %v934, %v936
      %v945 = vadd.f32 %v909, %v937
      %v946 = vadd.f32 %v910, %v938
      %v947 = vadd.f32 %v911, %v939
      %v948 = vadd.f32 %v912, %v940
      %949 = vset.pattern.permute.xlu0 4
      %950 = vperm.xlu0 %949, %v611
      %v951 = vpop.permute.xlu0 %950
      %v953 = vmul.f32 %v951, %v788
      %v954 = vmul.f32 %v951, %v789
      %v955 = vmul.f32 %v951, %v790
      %v956 = vmul.f32 %v951, %v791
      %v957 = vmul.f32 %v951, %v792
      %963 = vrot.lane.b32.xlu0 %v953, 126
      %v964 = vpop.permute.xlu0 %963
      %965 = vrot.lane.b32.xlu0 %v954, 126
      %v966 = vpop.permute.xlu0 %965
      %967 = vrot.lane.b32.xlu0 %v955, 126
      %v968 = vpop.permute.xlu0 %967
      %969 = vrot.lane.b32.xlu0 %v956, 126
      %v970 = vpop.permute.xlu0 %969
      %971 = vrot.lane.b32.xlu0 %v957, 126
      %v972 = vpop.permute.xlu0 %971
      %v973 = vsel %vm900, %v964, %v966
      %v974 = vsel %vm900, %v966, %v968
      %v975 = vsel %vm900, %v968, %v970
      %v976 = vsel %vm900, %v970, %v972
      %v981 = vadd.f32 %v945, %v973
      %v982 = vadd.f32 %v946, %v974
      %v983 = vadd.f32 %v947, %v975
      %v984 = vadd.f32 %v948, %v976
      %985 = vset.pattern.permute.xlu0 5
      %986 = vperm.xlu0 %985, %v611
      %v987 = vpop.permute.xlu0 %986
      %v989 = vmul.f32 %v987, %v839
      %v990 = vmul.f32 %v987, %v840
      %v991 = vmul.f32 %v987, %v841
      %v992 = vmul.f32 %v987, %v842
      %v993 = vmul.f32 %v987, %v843
      %999 = vrot.lane.b32.xlu0 %v989, 126
      %v1000 = vpop.permute.xlu0 %999
      %1001 = vrot.lane.b32.xlu0 %v990, 126
      %v1002 = vpop.permute.xlu0 %1001
      %1003 = vrot.lane.b32.xlu0 %v991, 126
      %v1004 = vpop.permute.xlu0 %1003
      %1005 = vrot.lane.b32.xlu0 %v992, 126
      %v1006 = vpop.permute.xlu0 %1005
      %1007 = vrot.lane.b32.xlu0 %v993, 126
      %v1008 = vpop.permute.xlu0 %1007
      %v1009 = vsel %vm900, %v1000, %v1002
      %v1010 = vsel %vm900, %v1002, %v1004
      %v1011 = vsel %vm900, %v1004, %v1006
      %v1012 = vsel %vm900, %v1006, %v1008
      %v1017 = vadd.f32 %v981, %v1009
      %v1018 = vadd.f32 %v982, %v1010
      %v1019 = vadd.f32 %v983, %v1011
      %v1020 = vadd.f32 %v984, %v1012
      %1021 = vset.pattern.permute.xlu0 6
      %1022 = vperm.xlu0 %1021, %v559
      %v1023 = vpop.permute.xlu0 %1022
      %v1025 = vmul.f32 %v1023, %v681
      %v1026 = vmul.f32 %v1023, %v682
      %v1027 = vmul.f32 %v1023, %v683
      %v1028 = vmul.f32 %v1023, %v684
      %v1029 = vmul.f32 %v1023, %v685
      %1035 = vrot.lane.b32.xlu0 %v1025, 125
      %v1036 = vpop.permute.xlu0 %1035
      %1037 = vrot.lane.b32.xlu0 %v1026, 125
      %v1038 = vpop.permute.xlu0 %1037
      %1039 = vrot.lane.b32.xlu0 %v1027, 125
      %v1040 = vpop.permute.xlu0 %1039
      %1041 = vrot.lane.b32.xlu0 %v1028, 125
      %v1042 = vpop.permute.xlu0 %1041
      %1043 = vrot.lane.b32.xlu0 %v1029, 125
      %v1044 = vpop.permute.xlu0 %1043
      %vm1045 = vcmask 1022976
      %v1046 = vsel %vm1045, %v1036, %v1038
      %v1047 = vsel %vm1045, %v1038, %v1040
      %v1048 = vsel %vm1045, %v1040, %v1042
      %v1049 = vsel %vm1045, %v1042, %v1044
      %v1054 = vadd.f32 %v1017, %v1046
      %v1055 = vadd.f32 %v1018, %v1047
      %v1056 = vadd.f32 %v1019, %v1048
      %v1057 = vadd.f32 %v1020, %v1049
      %1058 = vset.pattern.permute.xlu0 7
      %1059 = vperm.xlu0 %1058, %v559
      %v1060 = vpop.permute.xlu0 %1059
      %v1062 = vmul.f32 %v1060, %v733
      %v1063 = vmul.f32 %v1060, %v734
      %v1064 = vmul.f32 %v1060, %v735
      %v1065 = vmul.f32 %v1060, %v736
      %v1066 = vmul.f32 %v1060, %v737
      %1072 = vrot.lane.b32.xlu0 %v1062, 125
      %v1073 = vpop.permute.xlu0 %1072
      %1074 = vrot.lane.b32.xlu0 %v1063, 125
      %v1075 = vpop.permute.xlu0 %1074
      %1076 = vrot.lane.b32.xlu0 %v1064, 125
      %v1077 = vpop.permute.xlu0 %1076
      %1078 = vrot.lane.b32.xlu0 %v1065, 125
      %v1079 = vpop.permute.xlu0 %1078
      %1080 = vrot.lane.b32.xlu0 %v1066, 125
      %v1081 = vpop.permute.xlu0 %1080
      %v1082 = vsel %vm1045, %v1073, %v1075
      %v1083 = vsel %vm1045, %v1075, %v1077
      %v1084 = vsel %vm1045, %v1077, %v1079
      %v1085 = vsel %vm1045, %v1079, %v1081
      %v1090 = vadd.f32 %v1054, %v1082
      %v1091 = vadd.f32 %v1055, %v1083
      %v1092 = vadd.f32 %v1056, %v1084
      %v1093 = vadd.f32 %v1057, %v1085
      %1094 = vset.pattern.permute.xlu0 6
      %1095 = vperm.xlu0 %1094, %v611
      %v1096 = vpop.permute.xlu0 %1095
      %v1098 = vmul.f32 %v1096, %v788
      %v1099 = vmul.f32 %v1096, %v789
      %v1100 = vmul.f32 %v1096, %v790
      %v1101 = vmul.f32 %v1096, %v791
      %v1102 = vmul.f32 %v1096, %v792
      %1108 = vrot.lane.b32.xlu0 %v1098, 125
      %v1109 = vpop.permute.xlu0 %1108
      %1110 = vrot.lane.b32.xlu0 %v1099, 125
      %v1111 = vpop.permute.xlu0 %1110
      %1112 = vrot.lane.b32.xlu0 %v1100, 125
      %v1113 = vpop.permute.xlu0 %1112
      %1114 = vrot.lane.b32.xlu0 %v1101, 125
      %v1115 = vpop.permute.xlu0 %1114
      %1116 = vrot.lane.b32.xlu0 %v1102, 125
      %v1117 = vpop.permute.xlu0 %1116
      %v1118 = vsel %vm1045, %v1109, %v1111
      %v1119 = vsel %vm1045, %v1111, %v1113
      %v1120 = vsel %vm1045, %v1113, %v1115
      %v1121 = vsel %vm1045, %v1115, %v1117
      %v1126 = vadd.f32 %v1090, %v1118
      %v1127 = vadd.f32 %v1091, %v1119
      %v1128 = vadd.f32 %v1092, %v1120
      %v1129 = vadd.f32 %v1093, %v1121
      %1130 = vset.pattern.permute.xlu0 7
      %1131 = vperm.xlu0 %1130, %v611
      %v1132 = vpop.permute.xlu0 %1131
      %v1134 = vmul.f32 %v1132, %v839
      %v1135 = vmul.f32 %v1132, %v840
      %v1136 = vmul.f32 %v1132, %v841
      %v1137 = vmul.f32 %v1132, %v842
      %v1138 = vmul.f32 %v1132, %v843
      %1144 = vrot.lane.b32.xlu0 %v1134, 125
      %v1145 = vpop.permute.xlu0 %1144
      %1146 = vrot.lane.b32.xlu0 %v1135, 125
      %v1147 = vpop.permute.xlu0 %1146
      %1148 = vrot.lane.b32.xlu0 %v1136, 125
      %v1149 = vpop.permute.xlu0 %1148
      %1150 = vrot.lane.b32.xlu0 %v1137, 125
      %v1151 = vpop.permute.xlu0 %1150
      %1152 = vrot.lane.b32.xlu0 %v1138, 125
      %v1153 = vpop.permute.xlu0 %1152
      %v1154 = vsel %vm1045, %v1145, %v1147
      %v1155 = vsel %vm1045, %v1147, %v1149
      %v1156 = vsel %vm1045, %v1149, %v1151
      %v1157 = vsel %vm1045, %v1151, %v1153
      %v1162 = vadd.f32 %v1126, %v1154
      %v1163 = vadd.f32 %v1127, %v1155
      %v1164 = vadd.f32 %v1128, %v1156
      %v1165 = vadd.f32 %v1129, %v1157
      %1166 = vset.pattern.permute.xlu0 8
      %1167 = vperm.xlu0 %1166, %v559
      %v1168 = vpop.permute.xlu0 %1167
      %v1170 = vmul.f32 %v1168, %v681
      %v1171 = vmul.f32 %v1168, %v682
      %v1172 = vmul.f32 %v1168, %v683
      %v1173 = vmul.f32 %v1168, %v684
      %v1174 = vmul.f32 %v1168, %v685
      %1180 = vrot.lane.b32.xlu0 %v1170, 124
      %v1181 = vpop.permute.xlu0 %1180
      %1182 = vrot.lane.b32.xlu0 %v1171, 124
      %v1183 = vpop.permute.xlu0 %1182
      %1184 = vrot.lane.b32.xlu0 %v1172, 124
      %v1185 = vpop.permute.xlu0 %1184
      %1186 = vrot.lane.b32.xlu0 %v1173, 124
      %v1187 = vpop.permute.xlu0 %1186
      %1188 = vrot.lane.b32.xlu0 %v1174, 124
      %v1189 = vpop.permute.xlu0 %1188
      %vm1190 = vcmask 1014784
      %v1191 = vsel %vm1190, %v1181, %v1183
      %v1192 = vsel %vm1190, %v1183, %v1185
      %v1193 = vsel %vm1190, %v1185, %v1187
      %v1194 = vsel %vm1190, %v1187, %v1189
      %v1199 = vadd.f32 %v1162, %v1191
      %v1200 = vadd.f32 %v1163, %v1192
      %v1201 = vadd.f32 %v1164, %v1193
      %v1202 = vadd.f32 %v1165, %v1194
      %1203 = vset.pattern.permute.xlu0 9
      %1204 = vperm.xlu0 %1203, %v559
      %v1205 = vpop.permute.xlu0 %1204
      %v1207 = vmul.f32 %v1205, %v733
      %v1208 = vmul.f32 %v1205, %v734
      %v1209 = vmul.f32 %v1205, %v735
      %v1210 = vmul.f32 %v1205, %v736
      %v1211 = vmul.f32 %v1205, %v737
      %1217 = vrot.lane.b32.xlu0 %v1207, 124
      %v1218 = vpop.permute.xlu0 %1217
      %1219 = vrot.lane.b32.xlu0 %v1208, 124
      %v1220 = vpop.permute.xlu0 %1219
      %1221 = vrot.lane.b32.xlu0 %v1209, 124
      %v1222 = vpop.permute.xlu0 %1221
      %1223 = vrot.lane.b32.xlu0 %v1210, 124
      %v1224 = vpop.permute.xlu0 %1223
      %1225 = vrot.lane.b32.xlu0 %v1211, 124
      %v1226 = vpop.permute.xlu0 %1225
      %v1227 = vsel %vm1190, %v1218, %v1220
      %v1228 = vsel %vm1190, %v1220, %v1222
      %v1229 = vsel %vm1190, %v1222, %v1224
      %v1230 = vsel %vm1190, %v1224, %v1226
      %v1235 = vadd.f32 %v1199, %v1227
      %v1236 = vadd.f32 %v1200, %v1228
      %v1237 = vadd.f32 %v1201, %v1229
      %v1238 = vadd.f32 %v1202, %v1230
      %1239 = vset.pattern.permute.xlu0 8
      %1240 = vperm.xlu0 %1239, %v611
      %v1241 = vpop.permute.xlu0 %1240
      %v1243 = vmul.f32 %v1241, %v788
      %v1244 = vmul.f32 %v1241, %v789
      %v1245 = vmul.f32 %v1241, %v790
      %v1246 = vmul.f32 %v1241, %v791
      %v1247 = vmul.f32 %v1241, %v792
      %1253 = vrot.lane.b32.xlu0 %v1243, 124
      %v1254 = vpop.permute.xlu0 %1253
      %1255 = vrot.lane.b32.xlu0 %v1244, 124
      %v1256 = vpop.permute.xlu0 %1255
      %1257 = vrot.lane.b32.xlu0 %v1245, 124
      %v1258 = vpop.permute.xlu0 %1257
      %1259 = vrot.lane.b32.xlu0 %v1246, 124
      %v1260 = vpop.permute.xlu0 %1259
      %1261 = vrot.lane.b32.xlu0 %v1247, 124
      %v1262 = vpop.permute.xlu0 %1261
      %v1263 = vsel %vm1190, %v1254, %v1256
      %v1264 = vsel %vm1190, %v1256, %v1258
      %v1265 = vsel %vm1190, %v1258, %v1260
      %v1266 = vsel %vm1190, %v1260, %v1262
      %v1271 = vadd.f32 %v1235, %v1263
      %v1272 = vadd.f32 %v1236, %v1264
      %v1273 = vadd.f32 %v1237, %v1265
      %v1274 = vadd.f32 %v1238, %v1266
      %1275 = vset.pattern.permute.xlu0 9
      %1276 = vperm.xlu0 %1275, %v611
      %v1277 = vpop.permute.xlu0 %1276
      %v1279 = vmul.f32 %v1277, %v839
      %v1280 = vmul.f32 %v1277, %v840
      %v1281 = vmul.f32 %v1277, %v841
      %v1282 = vmul.f32 %v1277, %v842
      %v1283 = vmul.f32 %v1277, %v843
      %1289 = vrot.lane.b32.xlu0 %v1279, 124
      %v1290 = vpop.permute.xlu0 %1289
      %1291 = vrot.lane.b32.xlu0 %v1280, 124
      %v1292 = vpop.permute.xlu0 %1291
      %1293 = vrot.lane.b32.xlu0 %v1281, 124
      %v1294 = vpop.permute.xlu0 %1293
      %1295 = vrot.lane.b32.xlu0 %v1282, 124
      %v1296 = vpop.permute.xlu0 %1295
      %1297 = vrot.lane.b32.xlu0 %v1283, 124
      %v1298 = vpop.permute.xlu0 %1297
      %v1299 = vsel %vm1190, %v1290, %v1292
      %v1300 = vsel %vm1190, %v1292, %v1294
      %v1301 = vsel %vm1190, %v1294, %v1296
      %v1302 = vsel %vm1190, %v1296, %v1298
      %v1307 = vadd.f32 %v1271, %v1299
      %v1308 = vadd.f32 %v1272, %v1300
      %v1309 = vadd.f32 %v1273, %v1301
      %v1310 = vadd.f32 %v1274, %v1302
      %1311 = vset.pattern.permute.xlu0 10
      %1312 = vperm.xlu0 %1311, %v559
      %v1313 = vpop.permute.xlu0 %1312
      %v1315 = vmul.f32 %v1313, %v681
      %v1316 = vmul.f32 %v1313, %v682
      %v1317 = vmul.f32 %v1313, %v683
      %v1318 = vmul.f32 %v1313, %v684
      %v1319 = vmul.f32 %v1313, %v685
      %1325 = vrot.lane.b32.xlu0 %v1315, 106
      %v1326 = vpop.permute.xlu0 %1325
      %1327 = vrot.lane.b32.xlu0 %v1316, 106
      %v1328 = vpop.permute.xlu0 %1327
      %1329 = vrot.lane.b32.xlu0 %v1317, 106
      %v1330 = vpop.permute.xlu0 %1329
      %1331 = vrot.lane.b32.xlu0 %v1318, 106
      %v1332 = vpop.permute.xlu0 %1331
      %1333 = vrot.lane.b32.xlu0 %v1319, 106
      %v1334 = vpop.permute.xlu0 %1333
      %vm1335 = vcmask 867328
      %v1336 = vsel %vm1335, %v1326, %v1328
      %v1337 = vsel %vm1335, %v1328, %v1330
      %v1338 = vsel %vm1335, %v1330, %v1332
      %v1339 = vsel %vm1335, %v1332, %v1334
      %v1344 = vadd.f32 %v1307, %v1336
      %v1345 = vadd.f32 %v1308, %v1337
      %v1346 = vadd.f32 %v1309, %v1338
      %v1347 = vadd.f32 %v1310, %v1339
      %1348 = vset.pattern.permute.xlu0 11
      %1349 = vperm.xlu0 %1348, %v559
      %v1350 = vpop.permute.xlu0 %1349
      %v1352 = vmul.f32 %v1350, %v733
      %v1353 = vmul.f32 %v1350, %v734
      %v1354 = vmul.f32 %v1350, %v735
      %v1355 = vmul.f32 %v1350, %v736
      %v1356 = vmul.f32 %v1350, %v737
      %1362 = vrot.lane.b32.xlu0 %v1352, 106
      %v1363 = vpop.permute.xlu0 %1362
      %1364 = vrot.lane.b32.xlu0 %v1353, 106
      %v1365 = vpop.permute.xlu0 %1364
      %1366 = vrot.lane.b32.xlu0 %v1354, 106
      %v1367 = vpop.permute.xlu0 %1366
      %1368 = vrot.lane.b32.xlu0 %v1355, 106
      %v1369 = vpop.permute.xlu0 %1368
      %1370 = vrot.lane.b32.xlu0 %v1356, 106
      %v1371 = vpop.permute.xlu0 %1370
      %v1372 = vsel %vm1335, %v1363, %v1365
      %v1373 = vsel %vm1335, %v1365, %v1367
      %v1374 = vsel %vm1335, %v1367, %v1369
      %v1375 = vsel %vm1335, %v1369, %v1371
      %v1380 = vadd.f32 %v1344, %v1372
      %v1381 = vadd.f32 %v1345, %v1373
      %v1382 = vadd.f32 %v1346, %v1374
      %v1383 = vadd.f32 %v1347, %v1375
      %1384 = vset.pattern.permute.xlu0 10
      %1385 = vperm.xlu0 %1384, %v611
      %v1386 = vpop.permute.xlu0 %1385
      %v1388 = vmul.f32 %v1386, %v788
      %v1389 = vmul.f32 %v1386, %v789
      %v1390 = vmul.f32 %v1386, %v790
      %v1391 = vmul.f32 %v1386, %v791
      %v1392 = vmul.f32 %v1386, %v792
      %1398 = vrot.lane.b32.xlu0 %v1388, 106
      %v1399 = vpop.permute.xlu0 %1398
      %1400 = vrot.lane.b32.xlu0 %v1389, 106
      %v1401 = vpop.permute.xlu0 %1400
      %1402 = vrot.lane.b32.xlu0 %v1390, 106
      %v1403 = vpop.permute.xlu0 %1402
      %1404 = vrot.lane.b32.xlu0 %v1391, 106
      %v1405 = vpop.permute.xlu0 %1404
      %1406 = vrot.lane.b32.xlu0 %v1392, 106
      %v1407 = vpop.permute.xlu0 %1406
      %v1408 = vsel %vm1335, %v1399, %v1401
      %v1409 = vsel %vm1335, %v1401, %v1403
      %v1410 = vsel %vm1335, %v1403, %v1405
      %v1411 = vsel %vm1335, %v1405, %v1407
      %v1416 = vadd.f32 %v1380, %v1408
      %v1417 = vadd.f32 %v1381, %v1409
      %v1418 = vadd.f32 %v1382, %v1410
      %v1419 = vadd.f32 %v1383, %v1411
      %1420 = vset.pattern.permute.xlu0 11
      %1421 = vperm.xlu0 %1420, %v611
      %v1422 = vpop.permute.xlu0 %1421
      %v1424 = vmul.f32 %v1422, %v839
      %v1425 = vmul.f32 %v1422, %v840
      %v1426 = vmul.f32 %v1422, %v841
      %v1427 = vmul.f32 %v1422, %v842
      %v1428 = vmul.f32 %v1422, %v843
      %1434 = vrot.lane.b32.xlu0 %v1424, 106
      %v1435 = vpop.permute.xlu0 %1434
      %1436 = vrot.lane.b32.xlu0 %v1425, 106
      %v1437 = vpop.permute.xlu0 %1436
      %1438 = vrot.lane.b32.xlu0 %v1426, 106
      %v1439 = vpop.permute.xlu0 %1438
      %1440 = vrot.lane.b32.xlu0 %v1427, 106
      %v1441 = vpop.permute.xlu0 %1440
      %1442 = vrot.lane.b32.xlu0 %v1428, 106
      %v1443 = vpop.permute.xlu0 %1442
      %v1444 = vsel %vm1335, %v1435, %v1437
      %v1445 = vsel %vm1335, %v1437, %v1439
      %v1446 = vsel %vm1335, %v1439, %v1441
      %v1447 = vsel %vm1335, %v1441, %v1443
      %v1452 = vadd.f32 %v1416, %v1444
      %v1453 = vadd.f32 %v1417, %v1445
      %v1454 = vadd.f32 %v1418, %v1446
      %v1455 = vadd.f32 %v1419, %v1447
      %1456 = vset.pattern.permute.xlu0 12
      %1457 = vperm.xlu0 %1456, %v559
      %v1458 = vpop.permute.xlu0 %1457
      %v1460 = vmul.f32 %v1458, %v681
      %v1461 = vmul.f32 %v1458, %v682
      %v1462 = vmul.f32 %v1458, %v683
      %v1463 = vmul.f32 %v1458, %v684
      %v1464 = vmul.f32 %v1458, %v685
      %1470 = vrot.lane.b32.xlu0 %v1460, 105
      %v1471 = vpop.permute.xlu0 %1470
      %1472 = vrot.lane.b32.xlu0 %v1461, 105
      %v1473 = vpop.permute.xlu0 %1472
      %1474 = vrot.lane.b32.xlu0 %v1462, 105
      %v1475 = vpop.permute.xlu0 %1474
      %1476 = vrot.lane.b32.xlu0 %v1463, 105
      %v1477 = vpop.permute.xlu0 %1476
      %1478 = vrot.lane.b32.xlu0 %v1464, 105
      %v1479 = vpop.permute.xlu0 %1478
      %vm1480 = vcmask 859136
      %v1481 = vsel %vm1480, %v1471, %v1473
      %v1482 = vsel %vm1480, %v1473, %v1475
      %v1483 = vsel %vm1480, %v1475, %v1477
      %v1484 = vsel %vm1480, %v1477, %v1479
      %v1489 = vadd.f32 %v1452, %v1481
      %v1490 = vadd.f32 %v1453, %v1482
      %v1491 = vadd.f32 %v1454, %v1483
      %v1492 = vadd.f32 %v1455, %v1484
      %1493 = vset.pattern.permute.xlu0 13
      %1494 = vperm.xlu0 %1493, %v559
      %v1495 = vpop.permute.xlu0 %1494
      %v1497 = vmul.f32 %v1495, %v733
      %v1498 = vmul.f32 %v1495, %v734
      %v1499 = vmul.f32 %v1495, %v735
      %v1500 = vmul.f32 %v1495, %v736
      %v1501 = vmul.f32 %v1495, %v737
      %1507 = vrot.lane.b32.xlu0 %v1497, 105
      %v1508 = vpop.permute.xlu0 %1507
      %1509 = vrot.lane.b32.xlu0 %v1498, 105
      %v1510 = vpop.permute.xlu0 %1509
      %1511 = vrot.lane.b32.xlu0 %v1499, 105
      %v1512 = vpop.permute.xlu0 %1511
      %1513 = vrot.lane.b32.xlu0 %v1500, 105
      %v1514 = vpop.permute.xlu0 %1513
      %1515 = vrot.lane.b32.xlu0 %v1501, 105
      %v1516 = vpop.permute.xlu0 %1515
      %v1517 = vsel %vm1480, %v1508, %v1510
      %v1518 = vsel %vm1480, %v1510, %v1512
      %v1519 = vsel %vm1480, %v1512, %v1514
      %v1520 = vsel %vm1480, %v1514, %v1516
      %v1525 = vadd.f32 %v1489, %v1517
      %v1526 = vadd.f32 %v1490, %v1518
      %v1527 = vadd.f32 %v1491, %v1519
      %v1528 = vadd.f32 %v1492, %v1520
      %1529 = vset.pattern.permute.xlu0 12
      %1530 = vperm.xlu0 %1529, %v611
      %v1531 = vpop.permute.xlu0 %1530
      %v1533 = vmul.f32 %v1531, %v788
      %v1534 = vmul.f32 %v1531, %v789
      %v1535 = vmul.f32 %v1531, %v790
      %v1536 = vmul.f32 %v1531, %v791
      %v1537 = vmul.f32 %v1531, %v792
      %1543 = vrot.lane.b32.xlu0 %v1533, 105
      %v1544 = vpop.permute.xlu0 %1543
      %1545 = vrot.lane.b32.xlu0 %v1534, 105
      %v1546 = vpop.permute.xlu0 %1545
      %1547 = vrot.lane.b32.xlu0 %v1535, 105
      %v1548 = vpop.permute.xlu0 %1547
      %1549 = vrot.lane.b32.xlu0 %v1536, 105
      %v1550 = vpop.permute.xlu0 %1549
      %1551 = vrot.lane.b32.xlu0 %v1537, 105
      %v1552 = vpop.permute.xlu0 %1551
      %v1553 = vsel %vm1480, %v1544, %v1546
      %v1554 = vsel %vm1480, %v1546, %v1548
      %v1555 = vsel %vm1480, %v1548, %v1550
      %v1556 = vsel %vm1480, %v1550, %v1552
      %v1561 = vadd.f32 %v1525, %v1553
      %v1562 = vadd.f32 %v1526, %v1554
      %v1563 = vadd.f32 %v1527, %v1555
      %v1564 = vadd.f32 %v1528, %v1556
      %1565 = vset.pattern.permute.xlu0 13
      %1566 = vperm.xlu0 %1565, %v611
      %v1567 = vpop.permute.xlu0 %1566
      %v1569 = vmul.f32 %v1567, %v839
      %v1570 = vmul.f32 %v1567, %v840
      %v1571 = vmul.f32 %v1567, %v841
      %v1572 = vmul.f32 %v1567, %v842
      %v1573 = vmul.f32 %v1567, %v843
      %1579 = vrot.lane.b32.xlu0 %v1569, 105
      %v1580 = vpop.permute.xlu0 %1579
      %1581 = vrot.lane.b32.xlu0 %v1570, 105
      %v1582 = vpop.permute.xlu0 %1581
      %1583 = vrot.lane.b32.xlu0 %v1571, 105
      %v1584 = vpop.permute.xlu0 %1583
      %1585 = vrot.lane.b32.xlu0 %v1572, 105
      %v1586 = vpop.permute.xlu0 %1585
      %1587 = vrot.lane.b32.xlu0 %v1573, 105
      %v1588 = vpop.permute.xlu0 %1587
      %v1589 = vsel %vm1480, %v1580, %v1582
      %v1590 = vsel %vm1480, %v1582, %v1584
      %v1591 = vsel %vm1480, %v1584, %v1586
      %v1592 = vsel %vm1480, %v1586, %v1588
      %v1597 = vadd.f32 %v1561, %v1589
      %v1598 = vadd.f32 %v1562, %v1590
      %v1599 = vadd.f32 %v1563, %v1591
      %v1600 = vadd.f32 %v1564, %v1592
      %1601 = vset.pattern.permute.xlu0 14
      %1602 = vperm.xlu0 %1601, %v559
      %v1603 = vpop.permute.xlu0 %1602
      %v1605 = vmul.f32 %v1603, %v681
      %v1606 = vmul.f32 %v1603, %v682
      %v1607 = vmul.f32 %v1603, %v683
      %v1608 = vmul.f32 %v1603, %v684
      %v1609 = vmul.f32 %v1603, %v685
      %1615 = vrot.lane.b32.xlu0 %v1605, 104
      %v1616 = vpop.permute.xlu0 %1615
      %1617 = vrot.lane.b32.xlu0 %v1606, 104
      %v1618 = vpop.permute.xlu0 %1617
      %1619 = vrot.lane.b32.xlu0 %v1607, 104
      %v1620 = vpop.permute.xlu0 %1619
      %1621 = vrot.lane.b32.xlu0 %v1608, 104
      %v1622 = vpop.permute.xlu0 %1621
      %1623 = vrot.lane.b32.xlu0 %v1609, 104
      %v1624 = vpop.permute.xlu0 %1623
      %vm1625 = vcmask 850944
      %v1626 = vsel %vm1625, %v1616, %v1618
      %v1627 = vsel %vm1625, %v1618, %v1620
      %v1628 = vsel %vm1625, %v1620, %v1622
      %v1629 = vsel %vm1625, %v1622, %v1624
      %v1634 = vadd.f32 %v1597, %v1626
      %v1635 = vadd.f32 %v1598, %v1627
      %v1636 = vadd.f32 %v1599, %v1628
      %v1637 = vadd.f32 %v1600, %v1629
      %1638 = vset.pattern.permute.xlu0 15
      %1639 = vperm.xlu0 %1638, %v559
      %v1640 = vpop.permute.xlu0 %1639
      %v1642 = vmul.f32 %v1640, %v733
      %v1643 = vmul.f32 %v1640, %v734
      %v1644 = vmul.f32 %v1640, %v735
      %v1645 = vmul.f32 %v1640, %v736
      %v1646 = vmul.f32 %v1640, %v737
      %1652 = vrot.lane.b32.xlu0 %v1642, 104
      %v1653 = vpop.permute.xlu0 %1652
      %1654 = vrot.lane.b32.xlu0 %v1643, 104
      %v1655 = vpop.permute.xlu0 %1654
      %1656 = vrot.lane.b32.xlu0 %v1644, 104
      %v1657 = vpop.permute.xlu0 %1656
      %1658 = vrot.lane.b32.xlu0 %v1645, 104
      %v1659 = vpop.permute.xlu0 %1658
      %1660 = vrot.lane.b32.xlu0 %v1646, 104
      %v1661 = vpop.permute.xlu0 %1660
      %v1662 = vsel %vm1625, %v1653, %v1655
      %v1663 = vsel %vm1625, %v1655, %v1657
      %v1664 = vsel %vm1625, %v1657, %v1659
      %v1665 = vsel %vm1625, %v1659, %v1661
      %v1670 = vadd.f32 %v1634, %v1662
      %v1671 = vadd.f32 %v1635, %v1663
      %v1672 = vadd.f32 %v1636, %v1664
      %v1673 = vadd.f32 %v1637, %v1665
      %1674 = vset.pattern.permute.xlu0 14
      %1675 = vperm.xlu0 %1674, %v611
      %v1676 = vpop.permute.xlu0 %1675
      %v1678 = vmul.f32 %v1676, %v788
      %v1679 = vmul.f32 %v1676, %v789
      %v1680 = vmul.f32 %v1676, %v790
      %v1681 = vmul.f32 %v1676, %v791
      %v1682 = vmul.f32 %v1676, %v792
      %1688 = vrot.lane.b32.xlu0 %v1678, 104
      %v1689 = vpop.permute.xlu0 %1688
      %1690 = vrot.lane.b32.xlu0 %v1679, 104
      %v1691 = vpop.permute.xlu0 %1690
      %1692 = vrot.lane.b32.xlu0 %v1680, 104
      %v1693 = vpop.permute.xlu0 %1692
      %1694 = vrot.lane.b32.xlu0 %v1681, 104
      %v1695 = vpop.permute.xlu0 %1694
      %1696 = vrot.lane.b32.xlu0 %v1682, 104
      %v1697 = vpop.permute.xlu0 %1696
      %v1698 = vsel %vm1625, %v1689, %v1691
      %v1699 = vsel %vm1625, %v1691, %v1693
      %v1700 = vsel %vm1625, %v1693, %v1695
      %v1701 = vsel %vm1625, %v1695, %v1697
      %v1706 = vadd.f32 %v1670, %v1698
      %v1707 = vadd.f32 %v1671, %v1699
      %v1708 = vadd.f32 %v1672, %v1700
      %v1709 = vadd.f32 %v1673, %v1701
      %1710 = vset.pattern.permute.xlu0 15
      %1711 = vperm.xlu0 %1710, %v611
      %v1712 = vpop.permute.xlu0 %1711
      %v1714 = vmul.f32 %v1712, %v839
      %v1715 = vmul.f32 %v1712, %v840
      %v1716 = vmul.f32 %v1712, %v841
      %v1717 = vmul.f32 %v1712, %v842
      %v1718 = vmul.f32 %v1712, %v843
      %1724 = vrot.lane.b32.xlu0 %v1714, 104
      %v1725 = vpop.permute.xlu0 %1724
      %1726 = vrot.lane.b32.xlu0 %v1715, 104
      %v1727 = vpop.permute.xlu0 %1726
      %1728 = vrot.lane.b32.xlu0 %v1716, 104
      %v1729 = vpop.permute.xlu0 %1728
      %1730 = vrot.lane.b32.xlu0 %v1717, 104
      %v1731 = vpop.permute.xlu0 %1730
      %1732 = vrot.lane.b32.xlu0 %v1718, 104
      %v1733 = vpop.permute.xlu0 %1732
      %v1734 = vsel %vm1625, %v1725, %v1727
      %v1735 = vsel %vm1625, %v1727, %v1729
      %v1736 = vsel %vm1625, %v1729, %v1731
      %v1737 = vsel %vm1625, %v1731, %v1733
      %v1742 = vadd.f32 %v1706, %v1734
      %v1743 = vadd.f32 %v1707, %v1735
      %v1744 = vadd.f32 %v1708, %v1736
      %v1745 = vadd.f32 %v1709, %v1737
      %1746 = vset.pattern.permute.xlu0 16
      %1747 = vperm.xlu0 %1746, %v559
      %v1748 = vpop.permute.xlu0 %1747
      %v1750 = vmul.f32 %v1748, %v681
      %v1751 = vmul.f32 %v1748, %v682
      %v1752 = vmul.f32 %v1748, %v683
      %v1753 = vmul.f32 %v1748, %v684
      %v1754 = vmul.f32 %v1748, %v685
      %1760 = vrot.lane.b32.xlu0 %v1750, 103
      %v1761 = vpop.permute.xlu0 %1760
      %1762 = vrot.lane.b32.xlu0 %v1751, 103
      %v1763 = vpop.permute.xlu0 %1762
      %1764 = vrot.lane.b32.xlu0 %v1752, 103
      %v1765 = vpop.permute.xlu0 %1764
      %1766 = vrot.lane.b32.xlu0 %v1753, 103
      %v1767 = vpop.permute.xlu0 %1766
      %1768 = vrot.lane.b32.xlu0 %v1754, 103
      %v1769 = vpop.permute.xlu0 %1768
      %vm1770 = vcmask 842752
      %v1771 = vsel %vm1770, %v1761, %v1763
      %v1772 = vsel %vm1770, %v1763, %v1765
      %v1773 = vsel %vm1770, %v1765, %v1767
      %v1774 = vsel %vm1770, %v1767, %v1769
      %v1779 = vadd.f32 %v1742, %v1771
      %v1780 = vadd.f32 %v1743, %v1772
      %v1781 = vadd.f32 %v1744, %v1773
      %v1782 = vadd.f32 %v1745, %v1774
      %1783 = vset.pattern.permute.xlu0 17
      %1784 = vperm.xlu0 %1783, %v559
      %v1785 = vpop.permute.xlu0 %1784
      %v1787 = vmul.f32 %v1785, %v733
      %v1788 = vmul.f32 %v1785, %v734
      %v1789 = vmul.f32 %v1785, %v735
      %v1790 = vmul.f32 %v1785, %v736
      %v1791 = vmul.f32 %v1785, %v737
      %1797 = vrot.lane.b32.xlu0 %v1787, 103
      %v1798 = vpop.permute.xlu0 %1797
      %1799 = vrot.lane.b32.xlu0 %v1788, 103
      %v1800 = vpop.permute.xlu0 %1799
      %1801 = vrot.lane.b32.xlu0 %v1789, 103
      %v1802 = vpop.permute.xlu0 %1801
      %1803 = vrot.lane.b32.xlu0 %v1790, 103
      %v1804 = vpop.permute.xlu0 %1803
      %1805 = vrot.lane.b32.xlu0 %v1791, 103
      %v1806 = vpop.permute.xlu0 %1805
      %v1807 = vsel %vm1770, %v1798, %v1800
      %v1808 = vsel %vm1770, %v1800, %v1802
      %v1809 = vsel %vm1770, %v1802, %v1804
      %v1810 = vsel %vm1770, %v1804, %v1806
      %v1815 = vadd.f32 %v1779, %v1807
      %v1816 = vadd.f32 %v1780, %v1808
      %v1817 = vadd.f32 %v1781, %v1809
      %v1818 = vadd.f32 %v1782, %v1810
      %1819 = vset.pattern.permute.xlu0 16
      %1820 = vperm.xlu0 %1819, %v611
      %v1821 = vpop.permute.xlu0 %1820
      %v1823 = vmul.f32 %v1821, %v788
      %v1824 = vmul.f32 %v1821, %v789
      %v1825 = vmul.f32 %v1821, %v790
      %v1826 = vmul.f32 %v1821, %v791
      %v1827 = vmul.f32 %v1821, %v792
      %1833 = vrot.lane.b32.xlu0 %v1823, 103
      %v1834 = vpop.permute.xlu0 %1833
      %1835 = vrot.lane.b32.xlu0 %v1824, 103
      %v1836 = vpop.permute.xlu0 %1835
      %1837 = vrot.lane.b32.xlu0 %v1825, 103
      %v1838 = vpop.permute.xlu0 %1837
      %1839 = vrot.lane.b32.xlu0 %v1826, 103
      %v1840 = vpop.permute.xlu0 %1839
      %1841 = vrot.lane.b32.xlu0 %v1827, 103
      %v1842 = vpop.permute.xlu0 %1841
      %v1843 = vsel %vm1770, %v1834, %v1836
      %v1844 = vsel %vm1770, %v1836, %v1838
      %v1845 = vsel %vm1770, %v1838, %v1840
      %v1846 = vsel %vm1770, %v1840, %v1842
      %v1851 = vadd.f32 %v1815, %v1843
      %v1852 = vadd.f32 %v1816, %v1844
      %v1853 = vadd.f32 %v1817, %v1845
      %v1854 = vadd.f32 %v1818, %v1846
      %1855 = vset.pattern.permute.xlu0 17
      %1856 = vperm.xlu0 %1855, %v611
      %v1857 = vpop.permute.xlu0 %1856
      %v1859 = vmul.f32 %v1857, %v839
      %v1860 = vmul.f32 %v1857, %v840
      %v1861 = vmul.f32 %v1857, %v841
      %v1862 = vmul.f32 %v1857, %v842
      %v1863 = vmul.f32 %v1857, %v843
      %1869 = vrot.lane.b32.xlu0 %v1859, 103
      %v1870 = vpop.permute.xlu0 %1869
      %1871 = vrot.lane.b32.xlu0 %v1860, 103
      %v1872 = vpop.permute.xlu0 %1871
      %1873 = vrot.lane.b32.xlu0 %v1861, 103
      %v1874 = vpop.permute.xlu0 %1873
      %1875 = vrot.lane.b32.xlu0 %v1862, 103
      %v1876 = vpop.permute.xlu0 %1875
      %1877 = vrot.lane.b32.xlu0 %v1863, 103
      %v1878 = vpop.permute.xlu0 %1877
      %v1879 = vsel %vm1770, %v1870, %v1872
      %v1880 = vsel %vm1770, %v1872, %v1874
      %v1881 = vsel %vm1770, %v1874, %v1876
      %v1882 = vsel %vm1770, %v1876, %v1878
      %v1887 = vadd.f32 %v1851, %v1879
      %v1888 = vadd.f32 %v1852, %v1880
      %v1889 = vadd.f32 %v1853, %v1881
      %v1890 = vadd.f32 %v1854, %v1882
      %1891 = vset.pattern.permute.xlu0 18
      %1892 = vperm.xlu0 %1891, %v559
      %v1893 = vpop.permute.xlu0 %1892
      %v1895 = vmul.f32 %v1893, %v681
      %v1896 = vmul.f32 %v1893, %v682
      %v1897 = vmul.f32 %v1893, %v683
      %v1898 = vmul.f32 %v1893, %v684
      %v1899 = vmul.f32 %v1893, %v685
      %1905 = vrot.lane.b32.xlu0 %v1895, 102
      %v1906 = vpop.permute.xlu0 %1905
      %1907 = vrot.lane.b32.xlu0 %v1896, 102
      %v1908 = vpop.permute.xlu0 %1907
      %1909 = vrot.lane.b32.xlu0 %v1897, 102
      %v1910 = vpop.permute.xlu0 %1909
      %1911 = vrot.lane.b32.xlu0 %v1898, 102
      %v1912 = vpop.permute.xlu0 %1911
      %1913 = vrot.lane.b32.xlu0 %v1899, 102
      %v1914 = vpop.permute.xlu0 %1913
      %vm1915 = vcmask 834560
      %v1916 = vsel %vm1915, %v1906, %v1908
      %v1917 = vsel %vm1915, %v1908, %v1910
      %v1918 = vsel %vm1915, %v1910, %v1912
      %v1919 = vsel %vm1915, %v1912, %v1914
      %v1924 = vadd.f32 %v1887, %v1916
      %v1925 = vadd.f32 %v1888, %v1917
      %v1926 = vadd.f32 %v1889, %v1918
      %v1927 = vadd.f32 %v1890, %v1919
      %1928 = vset.pattern.permute.xlu0 19
      %1929 = vperm.xlu0 %1928, %v559
      %v1930 = vpop.permute.xlu0 %1929
      %v1932 = vmul.f32 %v1930, %v733
      %v1933 = vmul.f32 %v1930, %v734
      %v1934 = vmul.f32 %v1930, %v735
      %v1935 = vmul.f32 %v1930, %v736
      %v1936 = vmul.f32 %v1930, %v737
      %1942 = vrot.lane.b32.xlu0 %v1932, 102
      %v1943 = vpop.permute.xlu0 %1942
      %1944 = vrot.lane.b32.xlu0 %v1933, 102
      %v1945 = vpop.permute.xlu0 %1944
      %1946 = vrot.lane.b32.xlu0 %v1934, 102
      %v1947 = vpop.permute.xlu0 %1946
      %1948 = vrot.lane.b32.xlu0 %v1935, 102
      %v1949 = vpop.permute.xlu0 %1948
      %1950 = vrot.lane.b32.xlu0 %v1936, 102
      %v1951 = vpop.permute.xlu0 %1950
      %v1952 = vsel %vm1915, %v1943, %v1945
      %v1953 = vsel %vm1915, %v1945, %v1947
      %v1954 = vsel %vm1915, %v1947, %v1949
      %v1955 = vsel %vm1915, %v1949, %v1951
      %v1960 = vadd.f32 %v1924, %v1952
      %v1961 = vadd.f32 %v1925, %v1953
      %v1962 = vadd.f32 %v1926, %v1954
      %v1963 = vadd.f32 %v1927, %v1955
      %1964 = vset.pattern.permute.xlu0 18
      %1965 = vperm.xlu0 %1964, %v611
      %v1966 = vpop.permute.xlu0 %1965
      %v1968 = vmul.f32 %v1966, %v788
      %v1969 = vmul.f32 %v1966, %v789
      %v1970 = vmul.f32 %v1966, %v790
      %v1971 = vmul.f32 %v1966, %v791
      %v1972 = vmul.f32 %v1966, %v792
      %1978 = vrot.lane.b32.xlu0 %v1968, 102
      %v1979 = vpop.permute.xlu0 %1978
      %1980 = vrot.lane.b32.xlu0 %v1969, 102
      %v1981 = vpop.permute.xlu0 %1980
      %1982 = vrot.lane.b32.xlu0 %v1970, 102
      %v1983 = vpop.permute.xlu0 %1982
      %1984 = vrot.lane.b32.xlu0 %v1971, 102
      %v1985 = vpop.permute.xlu0 %1984
      %1986 = vrot.lane.b32.xlu0 %v1972, 102
      %v1987 = vpop.permute.xlu0 %1986
      %v1988 = vsel %vm1915, %v1979, %v1981
      %v1989 = vsel %vm1915, %v1981, %v1983
      %v1990 = vsel %vm1915, %v1983, %v1985
      %v1991 = vsel %vm1915, %v1985, %v1987
      %v1996 = vadd.f32 %v1960, %v1988
      %v1997 = vadd.f32 %v1961, %v1989
      %v1998 = vadd.f32 %v1962, %v1990
      %v1999 = vadd.f32 %v1963, %v1991
      %2000 = vset.pattern.permute.xlu0 19
      %2001 = vperm.xlu0 %2000, %v611
      %v2002 = vpop.permute.xlu0 %2001
      %v2004 = vmul.f32 %v2002, %v839
      %v2005 = vmul.f32 %v2002, %v840
      %v2006 = vmul.f32 %v2002, %v841
      %v2007 = vmul.f32 %v2002, %v842
      %v2008 = vmul.f32 %v2002, %v843
      %2014 = vrot.lane.b32.xlu0 %v2004, 102
      %v2015 = vpop.permute.xlu0 %2014
      %2016 = vrot.lane.b32.xlu0 %v2005, 102
      %v2017 = vpop.permute.xlu0 %2016
      %2018 = vrot.lane.b32.xlu0 %v2006, 102
      %v2019 = vpop.permute.xlu0 %2018
      %2020 = vrot.lane.b32.xlu0 %v2007, 102
      %v2021 = vpop.permute.xlu0 %2020
      %2022 = vrot.lane.b32.xlu0 %v2008, 102
      %v2023 = vpop.permute.xlu0 %2022
      %v2024 = vsel %vm1915, %v2015, %v2017
      %v2025 = vsel %vm1915, %v2017, %v2019
      %v2026 = vsel %vm1915, %v2019, %v2021
      %v2027 = vsel %vm1915, %v2021, %v2023
      %v2032 = vadd.f32 %v1996, %v2024
      %v2033 = vadd.f32 %v1997, %v2025
      %v2034 = vadd.f32 %v1998, %v2026
      %v2035 = vadd.f32 %v1999, %v2027
      %2036 = vset.pattern.permute.xlu0 20
      %2037 = vperm.xlu0 %2036, %v559
      %v2038 = vpop.permute.xlu0 %2037
      %v2040 = vmul.f32 %v2038, %v681
      %v2041 = vmul.f32 %v2038, %v682
      %v2042 = vmul.f32 %v2038, %v683
      %v2043 = vmul.f32 %v2038, %v684
      %v2044 = vmul.f32 %v2038, %v685
      %2050 = vrot.lane.b32.xlu0 %v2040, 84
      %v2051 = vpop.permute.xlu0 %2050
      %2052 = vrot.lane.b32.xlu0 %v2041, 84
      %v2053 = vpop.permute.xlu0 %2052
      %2054 = vrot.lane.b32.xlu0 %v2042, 84
      %v2055 = vpop.permute.xlu0 %2054
      %2056 = vrot.lane.b32.xlu0 %v2043, 84
      %v2057 = vpop.permute.xlu0 %2056
      %2058 = vrot.lane.b32.xlu0 %v2044, 84
      %v2059 = vpop.permute.xlu0 %2058
      %vm2060 = vcmask 687104
      %v2061 = vsel %vm2060, %v2051, %v2053
      %v2062 = vsel %vm2060, %v2053, %v2055
      %v2063 = vsel %vm2060, %v2055, %v2057
      %v2064 = vsel %vm2060, %v2057, %v2059
      %v2069 = vadd.f32 %v2032, %v2061
      %v2070 = vadd.f32 %v2033, %v2062
      %v2071 = vadd.f32 %v2034, %v2063
      %v2072 = vadd.f32 %v2035, %v2064
      %2073 = vset.pattern.permute.xlu0 21
      %2074 = vperm.xlu0 %2073, %v559
      %v2075 = vpop.permute.xlu0 %2074
      %v2077 = vmul.f32 %v2075, %v733
      %v2078 = vmul.f32 %v2075, %v734
      %v2079 = vmul.f32 %v2075, %v735
      %v2080 = vmul.f32 %v2075, %v736
      %v2081 = vmul.f32 %v2075, %v737
      %2087 = vrot.lane.b32.xlu0 %v2077, 84
      %v2088 = vpop.permute.xlu0 %2087
      %2089 = vrot.lane.b32.xlu0 %v2078, 84
      %v2090 = vpop.permute.xlu0 %2089
      %2091 = vrot.lane.b32.xlu0 %v2079, 84
      %v2092 = vpop.permute.xlu0 %2091
      %2093 = vrot.lane.b32.xlu0 %v2080, 84
      %v2094 = vpop.permute.xlu0 %2093
      %2095 = vrot.lane.b32.xlu0 %v2081, 84
      %v2096 = vpop.permute.xlu0 %2095
      %v2097 = vsel %vm2060, %v2088, %v2090
      %v2098 = vsel %vm2060, %v2090, %v2092
      %v2099 = vsel %vm2060, %v2092, %v2094
      %v2100 = vsel %vm2060, %v2094, %v2096
      %v2105 = vadd.f32 %v2069, %v2097
      %v2106 = vadd.f32 %v2070, %v2098
      %v2107 = vadd.f32 %v2071, %v2099
      %v2108 = vadd.f32 %v2072, %v2100
      %2109 = vset.pattern.permute.xlu0 20
      %2110 = vperm.xlu0 %2109, %v611
      %v2111 = vpop.permute.xlu0 %2110
      %v2113 = vmul.f32 %v2111, %v788
      %v2114 = vmul.f32 %v2111, %v789
      %v2115 = vmul.f32 %v2111, %v790
      %v2116 = vmul.f32 %v2111, %v791
      %v2117 = vmul.f32 %v2111, %v792
      %2123 = vrot.lane.b32.xlu0 %v2113, 84
      %v2124 = vpop.permute.xlu0 %2123
      %2125 = vrot.lane.b32.xlu0 %v2114, 84
      %v2126 = vpop.permute.xlu0 %2125
      %2127 = vrot.lane.b32.xlu0 %v2115, 84
      %v2128 = vpop.permute.xlu0 %2127
      %2129 = vrot.lane.b32.xlu0 %v2116, 84
      %v2130 = vpop.permute.xlu0 %2129
      %2131 = vrot.lane.b32.xlu0 %v2117, 84
      %v2132 = vpop.permute.xlu0 %2131
      %v2133 = vsel %vm2060, %v2124, %v2126
      %v2134 = vsel %vm2060, %v2126, %v2128
      %v2135 = vsel %vm2060, %v2128, %v2130
      %v2136 = vsel %vm2060, %v2130, %v2132
      %v2141 = vadd.f32 %v2105, %v2133
      %v2142 = vadd.f32 %v2106, %v2134
      %v2143 = vadd.f32 %v2107, %v2135
      %v2144 = vadd.f32 %v2108, %v2136
      %2145 = vset.pattern.permute.xlu0 21
      %2146 = vperm.xlu0 %2145, %v611
      %v2147 = vpop.permute.xlu0 %2146
      %v2149 = vmul.f32 %v2147, %v839
      %v2150 = vmul.f32 %v2147, %v840
      %v2151 = vmul.f32 %v2147, %v841
      %v2152 = vmul.f32 %v2147, %v842
      %v2153 = vmul.f32 %v2147, %v843
      %2159 = vrot.lane.b32.xlu0 %v2149, 84
      %v2160 = vpop.permute.xlu0 %2159
      %2161 = vrot.lane.b32.xlu0 %v2150, 84
      %v2162 = vpop.permute.xlu0 %2161
      %2163 = vrot.lane.b32.xlu0 %v2151, 84
      %v2164 = vpop.permute.xlu0 %2163
      %2165 = vrot.lane.b32.xlu0 %v2152, 84
      %v2166 = vpop.permute.xlu0 %2165
      %2167 = vrot.lane.b32.xlu0 %v2153, 84
      %v2168 = vpop.permute.xlu0 %2167
      %v2169 = vsel %vm2060, %v2160, %v2162
      %v2170 = vsel %vm2060, %v2162, %v2164
      %v2171 = vsel %vm2060, %v2164, %v2166
      %v2172 = vsel %vm2060, %v2166, %v2168
      %v2177 = vadd.f32 %v2141, %v2169
      %v2178 = vadd.f32 %v2142, %v2170
      %v2179 = vadd.f32 %v2143, %v2171
      %v2180 = vadd.f32 %v2144, %v2172
      %2181 = vset.pattern.permute.xlu0 22
      %2182 = vperm.xlu0 %2181, %v559
      %v2183 = vpop.permute.xlu0 %2182
      %v2185 = vmul.f32 %v2183, %v681
      %v2186 = vmul.f32 %v2183, %v682
      %v2187 = vmul.f32 %v2183, %v683
      %v2188 = vmul.f32 %v2183, %v684
      %v2189 = vmul.f32 %v2183, %v685
      %2195 = vrot.lane.b32.xlu0 %v2185, 83
      %v2196 = vpop.permute.xlu0 %2195
      %2197 = vrot.lane.b32.xlu0 %v2186, 83
      %v2198 = vpop.permute.xlu0 %2197
      %2199 = vrot.lane.b32.xlu0 %v2187, 83
      %v2200 = vpop.permute.xlu0 %2199
      %2201 = vrot.lane.b32.xlu0 %v2188, 83
      %v2202 = vpop.permute.xlu0 %2201
      %2203 = vrot.lane.b32.xlu0 %v2189, 83
      %v2204 = vpop.permute.xlu0 %2203
      %vm2205 = vcmask 678912
      %v2206 = vsel %vm2205, %v2196, %v2198
      %v2207 = vsel %vm2205, %v2198, %v2200
      %v2208 = vsel %vm2205, %v2200, %v2202
      %v2209 = vsel %vm2205, %v2202, %v2204
      %v2214 = vadd.f32 %v2177, %v2206
      %v2215 = vadd.f32 %v2178, %v2207
      %v2216 = vadd.f32 %v2179, %v2208
      %v2217 = vadd.f32 %v2180, %v2209
      %2218 = vset.pattern.permute.xlu0 23
      %2219 = vperm.xlu0 %2218, %v559
      %v2220 = vpop.permute.xlu0 %2219
      %v2222 = vmul.f32 %v2220, %v733
      %v2223 = vmul.f32 %v2220, %v734
      %v2224 = vmul.f32 %v2220, %v735
      %v2225 = vmul.f32 %v2220, %v736
      %v2226 = vmul.f32 %v2220, %v737
      %2232 = vrot.lane.b32.xlu0 %v2222, 83
      %v2233 = vpop.permute.xlu0 %2232
      %2234 = vrot.lane.b32.xlu0 %v2223, 83
      %v2235 = vpop.permute.xlu0 %2234
      %2236 = vrot.lane.b32.xlu0 %v2224, 83
      %v2237 = vpop.permute.xlu0 %2236
      %2238 = vrot.lane.b32.xlu0 %v2225, 83
      %v2239 = vpop.permute.xlu0 %2238
      %2240 = vrot.lane.b32.xlu0 %v2226, 83
      %v2241 = vpop.permute.xlu0 %2240
      %v2242 = vsel %vm2205, %v2233, %v2235
      %v2243 = vsel %vm2205, %v2235, %v2237
      %v2244 = vsel %vm2205, %v2237, %v2239
      %v2245 = vsel %vm2205, %v2239, %v2241
      %v2250 = vadd.f32 %v2214, %v2242
      %v2251 = vadd.f32 %v2215, %v2243
      %v2252 = vadd.f32 %v2216, %v2244
      %v2253 = vadd.f32 %v2217, %v2245
      %2254 = vset.pattern.permute.xlu0 22
      %2255 = vperm.xlu0 %2254, %v611
      %v2256 = vpop.permute.xlu0 %2255
      %v2258 = vmul.f32 %v2256, %v788
      %v2259 = vmul.f32 %v2256, %v789
      %v2260 = vmul.f32 %v2256, %v790
      %v2261 = vmul.f32 %v2256, %v791
      %v2262 = vmul.f32 %v2256, %v792
      %2268 = vrot.lane.b32.xlu0 %v2258, 83
      %v2269 = vpop.permute.xlu0 %2268
      %2270 = vrot.lane.b32.xlu0 %v2259, 83
      %v2271 = vpop.permute.xlu0 %2270
      %2272 = vrot.lane.b32.xlu0 %v2260, 83
      %v2273 = vpop.permute.xlu0 %2272
      %2274 = vrot.lane.b32.xlu0 %v2261, 83
      %v2275 = vpop.permute.xlu0 %2274
      %2276 = vrot.lane.b32.xlu0 %v2262, 83
      %v2277 = vpop.permute.xlu0 %2276
      %v2278 = vsel %vm2205, %v2269, %v2271
      %v2279 = vsel %vm2205, %v2271, %v2273
      %v2280 = vsel %vm2205, %v2273, %v2275
      %v2281 = vsel %vm2205, %v2275, %v2277
      %v2286 = vadd.f32 %v2250, %v2278
      %v2287 = vadd.f32 %v2251, %v2279
      %v2288 = vadd.f32 %v2252, %v2280
      %v2289 = vadd.f32 %v2253, %v2281
      %2290 = vset.pattern.permute.xlu0 23
      %2291 = vperm.xlu0 %2290, %v611
      %v2292 = vpop.permute.xlu0 %2291
      %v2294 = vmul.f32 %v2292, %v839
      %v2295 = vmul.f32 %v2292, %v840
      %v2296 = vmul.f32 %v2292, %v841
      %v2297 = vmul.f32 %v2292, %v842
      %v2298 = vmul.f32 %v2292, %v843
      %2304 = vrot.lane.b32.xlu0 %v2294, 83
      %v2305 = vpop.permute.xlu0 %2304
      %2306 = vrot.lane.b32.xlu0 %v2295, 83
      %v2307 = vpop.permute.xlu0 %2306
      %2308 = vrot.lane.b32.xlu0 %v2296, 83
      %v2309 = vpop.permute.xlu0 %2308
      %2310 = vrot.lane.b32.xlu0 %v2297, 83
      %v2311 = vpop.permute.xlu0 %2310
      %2312 = vrot.lane.b32.xlu0 %v2298, 83
      %v2313 = vpop.permute.xlu0 %2312
      %v2314 = vsel %vm2205, %v2305, %v2307
      %v2315 = vsel %vm2205, %v2307, %v2309
      %v2316 = vsel %vm2205, %v2309, %v2311
      %v2317 = vsel %vm2205, %v2311, %v2313
      %v2322 = vadd.f32 %v2286, %v2314
      %v2323 = vadd.f32 %v2287, %v2315
      %v2324 = vadd.f32 %v2288, %v2316
      %v2325 = vadd.f32 %v2289, %v2317
      %2326 = vset.pattern.permute.xlu0 24
      %2327 = vperm.xlu0 %2326, %v559
      %v2328 = vpop.permute.xlu0 %2327
      %v2330 = vmul.f32 %v2328, %v681
      %v2331 = vmul.f32 %v2328, %v682
      %v2332 = vmul.f32 %v2328, %v683
      %v2333 = vmul.f32 %v2328, %v684
      %v2334 = vmul.f32 %v2328, %v685
      %2340 = vrot.lane.b32.xlu0 %v2330, 82
      %v2341 = vpop.permute.xlu0 %2340
      %2342 = vrot.lane.b32.xlu0 %v2331, 82
      %v2343 = vpop.permute.xlu0 %2342
      %2344 = vrot.lane.b32.xlu0 %v2332, 82
      %v2345 = vpop.permute.xlu0 %2344
      %2346 = vrot.lane.b32.xlu0 %v2333, 82
      %v2347 = vpop.permute.xlu0 %2346
      %2348 = vrot.lane.b32.xlu0 %v2334, 82
      %v2349 = vpop.permute.xlu0 %2348
      %vm2350 = vcmask 670720
      %v2351 = vsel %vm2350, %v2341, %v2343
      %v2352 = vsel %vm2350, %v2343, %v2345
      %v2353 = vsel %vm2350, %v2345, %v2347
      %v2354 = vsel %vm2350, %v2347, %v2349
      %v2359 = vadd.f32 %v2322, %v2351
      %v2360 = vadd.f32 %v2323, %v2352
      %v2361 = vadd.f32 %v2324, %v2353
      %v2362 = vadd.f32 %v2325, %v2354
      %2363 = vset.pattern.permute.xlu0 25
      %2364 = vperm.xlu0 %2363, %v559
      %v2365 = vpop.permute.xlu0 %2364
      %v2367 = vmul.f32 %v2365, %v733
      %v2368 = vmul.f32 %v2365, %v734
      %v2369 = vmul.f32 %v2365, %v735
      %v2370 = vmul.f32 %v2365, %v736
      %v2371 = vmul.f32 %v2365, %v737
      %2377 = vrot.lane.b32.xlu0 %v2367, 82
      %v2378 = vpop.permute.xlu0 %2377
      %2379 = vrot.lane.b32.xlu0 %v2368, 82
      %v2380 = vpop.permute.xlu0 %2379
      %2381 = vrot.lane.b32.xlu0 %v2369, 82
      %v2382 = vpop.permute.xlu0 %2381
      %2383 = vrot.lane.b32.xlu0 %v2370, 82
      %v2384 = vpop.permute.xlu0 %2383
      %2385 = vrot.lane.b32.xlu0 %v2371, 82
      %v2386 = vpop.permute.xlu0 %2385
      %v2387 = vsel %vm2350, %v2378, %v2380
      %v2388 = vsel %vm2350, %v2380, %v2382
      %v2389 = vsel %vm2350, %v2382, %v2384
      %v2390 = vsel %vm2350, %v2384, %v2386
      %v2395 = vadd.f32 %v2359, %v2387
      %v2396 = vadd.f32 %v2360, %v2388
      %v2397 = vadd.f32 %v2361, %v2389
      %v2398 = vadd.f32 %v2362, %v2390
      %2399 = vset.pattern.permute.xlu0 24
      %2400 = vperm.xlu0 %2399, %v611
      %v2401 = vpop.permute.xlu0 %2400
      %v2403 = vmul.f32 %v2401, %v788
      %v2404 = vmul.f32 %v2401, %v789
      %v2405 = vmul.f32 %v2401, %v790
      %v2406 = vmul.f32 %v2401, %v791
      %v2407 = vmul.f32 %v2401, %v792
      %2413 = vrot.lane.b32.xlu0 %v2403, 82
      %v2414 = vpop.permute.xlu0 %2413
      %2415 = vrot.lane.b32.xlu0 %v2404, 82
      %v2416 = vpop.permute.xlu0 %2415
      %2417 = vrot.lane.b32.xlu0 %v2405, 82
      %v2418 = vpop.permute.xlu0 %2417
      %2419 = vrot.lane.b32.xlu0 %v2406, 82
      %v2420 = vpop.permute.xlu0 %2419
      %2421 = vrot.lane.b32.xlu0 %v2407, 82
      %v2422 = vpop.permute.xlu0 %2421
      %v2423 = vsel %vm2350, %v2414, %v2416
      %v2424 = vsel %vm2350, %v2416, %v2418
      %v2425 = vsel %vm2350, %v2418, %v2420
      %v2426 = vsel %vm2350, %v2420, %v2422
      %v2431 = vadd.f32 %v2395, %v2423
      %v2432 = vadd.f32 %v2396, %v2424
      %v2433 = vadd.f32 %v2397, %v2425
      %v2434 = vadd.f32 %v2398, %v2426
      %2435 = vset.pattern.permute.xlu0 25
      %2436 = vperm.xlu0 %2435, %v611
      %v2437 = vpop.permute.xlu0 %2436
      %v2439 = vmul.f32 %v2437, %v839
      %v2440 = vmul.f32 %v2437, %v840
      %v2441 = vmul.f32 %v2437, %v841
      %v2442 = vmul.f32 %v2437, %v842
      %v2443 = vmul.f32 %v2437, %v843
      %2449 = vrot.lane.b32.xlu0 %v2439, 82
      %v2450 = vpop.permute.xlu0 %2449
      %2451 = vrot.lane.b32.xlu0 %v2440, 82
      %v2452 = vpop.permute.xlu0 %2451
      %2453 = vrot.lane.b32.xlu0 %v2441, 82
      %v2454 = vpop.permute.xlu0 %2453
      %2455 = vrot.lane.b32.xlu0 %v2442, 82
      %v2456 = vpop.permute.xlu0 %2455
      %2457 = vrot.lane.b32.xlu0 %v2443, 82
      %v2458 = vpop.permute.xlu0 %2457
      %v2459 = vsel %vm2350, %v2450, %v2452
      %v2460 = vsel %vm2350, %v2452, %v2454
      %v2461 = vsel %vm2350, %v2454, %v2456
      %v2462 = vsel %vm2350, %v2456, %v2458
      %v2467 = vadd.f32 %v2431, %v2459
      %v2468 = vadd.f32 %v2432, %v2460
      %v2469 = vadd.f32 %v2433, %v2461
      %v2470 = vadd.f32 %v2434, %v2462
      %2471 = vset.pattern.permute.xlu0 26
      %2472 = vperm.xlu0 %2471, %v559
      %v2473 = vpop.permute.xlu0 %2472
      %v2475 = vmul.f32 %v2473, %v681
      %v2476 = vmul.f32 %v2473, %v682
      %v2477 = vmul.f32 %v2473, %v683
      %v2478 = vmul.f32 %v2473, %v684
      %v2479 = vmul.f32 %v2473, %v685
      %2485 = vrot.lane.b32.xlu0 %v2475, 81
      %v2486 = vpop.permute.xlu0 %2485
      %2487 = vrot.lane.b32.xlu0 %v2476, 81
      %v2488 = vpop.permute.xlu0 %2487
      %2489 = vrot.lane.b32.xlu0 %v2477, 81
      %v2490 = vpop.permute.xlu0 %2489
      %2491 = vrot.lane.b32.xlu0 %v2478, 81
      %v2492 = vpop.permute.xlu0 %2491
      %2493 = vrot.lane.b32.xlu0 %v2479, 81
      %v2494 = vpop.permute.xlu0 %2493
      %v2495 = vsel %vm361, %v2486, %v2488
      %v2496 = vsel %vm361, %v2488, %v2490
      %v2497 = vsel %vm361, %v2490, %v2492
      %v2498 = vsel %vm361, %v2492, %v2494
      %v2503 = vadd.f32 %v2467, %v2495
      %v2504 = vadd.f32 %v2468, %v2496
      %v2505 = vadd.f32 %v2469, %v2497
      %v2506 = vadd.f32 %v2470, %v2498
      %2507 = vset.pattern.permute.xlu0 27
      %2508 = vperm.xlu0 %2507, %v559
      %v2509 = vpop.permute.xlu0 %2508
      %v2511 = vmul.f32 %v2509, %v733
      %v2512 = vmul.f32 %v2509, %v734
      %v2513 = vmul.f32 %v2509, %v735
      %v2514 = vmul.f32 %v2509, %v736
      %v2515 = vmul.f32 %v2509, %v737
      %2521 = vrot.lane.b32.xlu0 %v2511, 81
      %v2522 = vpop.permute.xlu0 %2521
      %2523 = vrot.lane.b32.xlu0 %v2512, 81
      %v2524 = vpop.permute.xlu0 %2523
      %2525 = vrot.lane.b32.xlu0 %v2513, 81
      %v2526 = vpop.permute.xlu0 %2525
      %2527 = vrot.lane.b32.xlu0 %v2514, 81
      %v2528 = vpop.permute.xlu0 %2527
      %2529 = vrot.lane.b32.xlu0 %v2515, 81
      %v2530 = vpop.permute.xlu0 %2529
      %v2531 = vsel %vm361, %v2522, %v2524
      %v2532 = vsel %vm361, %v2524, %v2526
      %v2533 = vsel %vm361, %v2526, %v2528
      %v2534 = vsel %vm361, %v2528, %v2530
      %v2539 = vadd.f32 %v2503, %v2531
      %v2540 = vadd.f32 %v2504, %v2532
      %v2541 = vadd.f32 %v2505, %v2533
      %v2542 = vadd.f32 %v2506, %v2534
      %2543 = vset.pattern.permute.xlu0 26
      %2544 = vperm.xlu0 %2543, %v611
      %v2545 = vpop.permute.xlu0 %2544
      %v2547 = vmul.f32 %v2545, %v788
      %v2548 = vmul.f32 %v2545, %v789
      %v2549 = vmul.f32 %v2545, %v790
      %v2550 = vmul.f32 %v2545, %v791
      %v2551 = vmul.f32 %v2545, %v792
      %2557 = vrot.lane.b32.xlu0 %v2547, 81
      %v2558 = vpop.permute.xlu0 %2557
      %2559 = vrot.lane.b32.xlu0 %v2548, 81
      %v2560 = vpop.permute.xlu0 %2559
      %2561 = vrot.lane.b32.xlu0 %v2549, 81
      %v2562 = vpop.permute.xlu0 %2561
      %2563 = vrot.lane.b32.xlu0 %v2550, 81
      %v2564 = vpop.permute.xlu0 %2563
      %2565 = vrot.lane.b32.xlu0 %v2551, 81
      %v2566 = vpop.permute.xlu0 %2565
      %v2567 = vsel %vm361, %v2558, %v2560
      %v2568 = vsel %vm361, %v2560, %v2562
      %v2569 = vsel %vm361, %v2562, %v2564
      %v2570 = vsel %vm361, %v2564, %v2566
      %v2575 = vadd.f32 %v2539, %v2567
      %v2576 = vadd.f32 %v2540, %v2568
      %v2577 = vadd.f32 %v2541, %v2569
      %v2578 = vadd.f32 %v2542, %v2570
      %2579 = vset.pattern.permute.xlu0 27
      %2580 = vperm.xlu0 %2579, %v611
      %v2581 = vpop.permute.xlu0 %2580
      %v2583 = vmul.f32 %v2581, %v839
      %v2584 = vmul.f32 %v2581, %v840
      %v2585 = vmul.f32 %v2581, %v841
      %v2586 = vmul.f32 %v2581, %v842
      %v2587 = vmul.f32 %v2581, %v843
      %2593 = vrot.lane.b32.xlu0 %v2583, 81
      %v2594 = vpop.permute.xlu0 %2593
      %2595 = vrot.lane.b32.xlu0 %v2584, 81
      %v2596 = vpop.permute.xlu0 %2595
      %2597 = vrot.lane.b32.xlu0 %v2585, 81
      %v2598 = vpop.permute.xlu0 %2597
      %2599 = vrot.lane.b32.xlu0 %v2586, 81
      %v2600 = vpop.permute.xlu0 %2599
      %2601 = vrot.lane.b32.xlu0 %v2587, 81
      %v2602 = vpop.permute.xlu0 %2601
      %v2603 = vsel %vm361, %v2594, %v2596
      %v2604 = vsel %vm361, %v2596, %v2598
      %v2605 = vsel %vm361, %v2598, %v2600
      %v2606 = vsel %vm361, %v2600, %v2602
      %v2611 = vadd.f32 %v2575, %v2603
      %v2612 = vadd.f32 %v2576, %v2604
      %v2613 = vadd.f32 %v2577, %v2605
      %v2614 = vadd.f32 %v2578, %v2606
      %2615 = vset.pattern.permute.xlu0 28
      %2616 = vperm.xlu0 %2615, %v559
      %v2617 = vpop.permute.xlu0 %2616
      %v2619 = vmul.f32 %v2617, %v681
      %v2620 = vmul.f32 %v2617, %v682
      %v2621 = vmul.f32 %v2617, %v683
      %v2622 = vmul.f32 %v2617, %v684
      %v2623 = vmul.f32 %v2617, %v685
      %2629 = vrot.lane.b32.xlu0 %v2619, 80
      %v2630 = vpop.permute.xlu0 %2629
      %2631 = vrot.lane.b32.xlu0 %v2620, 80
      %v2632 = vpop.permute.xlu0 %2631
      %2633 = vrot.lane.b32.xlu0 %v2621, 80
      %v2634 = vpop.permute.xlu0 %2633
      %2635 = vrot.lane.b32.xlu0 %v2622, 80
      %v2636 = vpop.permute.xlu0 %2635
      %2637 = vrot.lane.b32.xlu0 %v2623, 80
      %v2638 = vpop.permute.xlu0 %2637
      %vm2639 = vcmask 654336
      %v2640 = vsel %vm2639, %v2630, %v2632
      %v2641 = vsel %vm2639, %v2632, %v2634
      %v2642 = vsel %vm2639, %v2634, %v2636
      %v2643 = vsel %vm2639, %v2636, %v2638
      %v2648 = vadd.f32 %v2611, %v2640
      %v2649 = vadd.f32 %v2612, %v2641
      %v2650 = vadd.f32 %v2613, %v2642
      %v2651 = vadd.f32 %v2614, %v2643
      %2652 = vset.pattern.permute.xlu0 29
      %2653 = vperm.xlu0 %2652, %v559
      %v2654 = vpop.permute.xlu0 %2653
      %v2656 = vmul.f32 %v2654, %v733
      %v2657 = vmul.f32 %v2654, %v734
      %v2658 = vmul.f32 %v2654, %v735
      %v2659 = vmul.f32 %v2654, %v736
      %v2660 = vmul.f32 %v2654, %v737
      %2666 = vrot.lane.b32.xlu0 %v2656, 80
      %v2667 = vpop.permute.xlu0 %2666
      %2668 = vrot.lane.b32.xlu0 %v2657, 80
      %v2669 = vpop.permute.xlu0 %2668
      %2670 = vrot.lane.b32.xlu0 %v2658, 80
      %v2671 = vpop.permute.xlu0 %2670
      %2672 = vrot.lane.b32.xlu0 %v2659, 80
      %v2673 = vpop.permute.xlu0 %2672
      %2674 = vrot.lane.b32.xlu0 %v2660, 80
      %v2675 = vpop.permute.xlu0 %2674
      %v2676 = vsel %vm2639, %v2667, %v2669
      %v2677 = vsel %vm2639, %v2669, %v2671
      %v2678 = vsel %vm2639, %v2671, %v2673
      %v2679 = vsel %vm2639, %v2673, %v2675
      %v2684 = vadd.f32 %v2648, %v2676
      %v2685 = vadd.f32 %v2649, %v2677
      %v2686 = vadd.f32 %v2650, %v2678
      %v2687 = vadd.f32 %v2651, %v2679
      %2688 = vset.pattern.permute.xlu0 28
      %2689 = vperm.xlu0 %2688, %v611
      %v2690 = vpop.permute.xlu0 %2689
      %v2692 = vmul.f32 %v2690, %v788
      %v2693 = vmul.f32 %v2690, %v789
      %v2694 = vmul.f32 %v2690, %v790
      %v2695 = vmul.f32 %v2690, %v791
      %v2696 = vmul.f32 %v2690, %v792
      %2702 = vrot.lane.b32.xlu0 %v2692, 80
      %v2703 = vpop.permute.xlu0 %2702
      %2704 = vrot.lane.b32.xlu0 %v2693, 80
      %v2705 = vpop.permute.xlu0 %2704
      %2706 = vrot.lane.b32.xlu0 %v2694, 80
      %v2707 = vpop.permute.xlu0 %2706
      %2708 = vrot.lane.b32.xlu0 %v2695, 80
      %v2709 = vpop.permute.xlu0 %2708
      %2710 = vrot.lane.b32.xlu0 %v2696, 80
      %v2711 = vpop.permute.xlu0 %2710
      %v2712 = vsel %vm2639, %v2703, %v2705
      %v2713 = vsel %vm2639, %v2705, %v2707
      %v2714 = vsel %vm2639, %v2707, %v2709
      %v2715 = vsel %vm2639, %v2709, %v2711
      %v2720 = vadd.f32 %v2684, %v2712
      %v2721 = vadd.f32 %v2685, %v2713
      %v2722 = vadd.f32 %v2686, %v2714
      %v2723 = vadd.f32 %v2687, %v2715
      %2724 = vset.pattern.permute.xlu0 29
      %2725 = vperm.xlu0 %2724, %v611
      %v2726 = vpop.permute.xlu0 %2725
      %v2728 = vmul.f32 %v2726, %v839
      %v2729 = vmul.f32 %v2726, %v840
      %v2730 = vmul.f32 %v2726, %v841
      %v2731 = vmul.f32 %v2726, %v842
      %v2732 = vmul.f32 %v2726, %v843
      %2738 = vrot.lane.b32.xlu0 %v2728, 80
      %v2739 = vpop.permute.xlu0 %2738
      %2740 = vrot.lane.b32.xlu0 %v2729, 80
      %v2741 = vpop.permute.xlu0 %2740
      %2742 = vrot.lane.b32.xlu0 %v2730, 80
      %v2743 = vpop.permute.xlu0 %2742
      %2744 = vrot.lane.b32.xlu0 %v2731, 80
      %v2745 = vpop.permute.xlu0 %2744
      %2746 = vrot.lane.b32.xlu0 %v2732, 80
      %v2747 = vpop.permute.xlu0 %2746
      %v2748 = vsel %vm2639, %v2739, %v2741
      %v2749 = vsel %vm2639, %v2741, %v2743
      %v2750 = vsel %vm2639, %v2743, %v2745
      %v2751 = vsel %vm2639, %v2745, %v2747
      %v2756 = vadd.f32 %v2720, %v2748
      %v2757 = vadd.f32 %v2721, %v2749
      %v2758 = vadd.f32 %v2722, %v2750
      %v2759 = vadd.f32 %v2723, %v2751
      %2760 = vset.pattern.permute.xlu0 30
      %2761 = vperm.xlu0 %2760, %v559
      %v2762 = vpop.permute.xlu0 %2761
      %v2764 = vmul.f32 %v2762, %v681
      %v2765 = vmul.f32 %v2762, %v682
      %v2766 = vmul.f32 %v2762, %v683
      %v2767 = vmul.f32 %v2762, %v684
      %v2768 = vmul.f32 %v2762, %v685
      %2774 = vrot.lane.b32.xlu0 %v2764, 62
      %v2775 = vpop.permute.xlu0 %2774
      %2776 = vrot.lane.b32.xlu0 %v2765, 62
      %v2777 = vpop.permute.xlu0 %2776
      %2778 = vrot.lane.b32.xlu0 %v2766, 62
      %v2779 = vpop.permute.xlu0 %2778
      %2780 = vrot.lane.b32.xlu0 %v2767, 62
      %v2781 = vpop.permute.xlu0 %2780
      %2782 = vrot.lane.b32.xlu0 %v2768, 62
      %v2783 = vpop.permute.xlu0 %2782
      %vm2784 = vcmask 506880
      %v2785 = vsel %vm2784, %v2775, %v2777
      %v2786 = vsel %vm2784, %v2777, %v2779
      %v2787 = vsel %vm2784, %v2779, %v2781
      %v2788 = vsel %vm2784, %v2781, %v2783
      %v2793 = vadd.f32 %v2756, %v2785
      %v2794 = vadd.f32 %v2757, %v2786
      %v2795 = vadd.f32 %v2758, %v2787
      %v2796 = vadd.f32 %v2759, %v2788
      %2797 = vset.pattern.permute.xlu0 31
      %2798 = vperm.xlu0 %2797, %v559
      %v2799 = vpop.permute.xlu0 %2798
      %v2801 = vmul.f32 %v2799, %v733
      %v2802 = vmul.f32 %v2799, %v734
      %v2803 = vmul.f32 %v2799, %v735
      %v2804 = vmul.f32 %v2799, %v736
      %v2805 = vmul.f32 %v2799, %v737
      %2811 = vrot.lane.b32.xlu0 %v2801, 62
      %v2812 = vpop.permute.xlu0 %2811
      %2813 = vrot.lane.b32.xlu0 %v2802, 62
      %v2814 = vpop.permute.xlu0 %2813
      %2815 = vrot.lane.b32.xlu0 %v2803, 62
      %v2816 = vpop.permute.xlu0 %2815
      %2817 = vrot.lane.b32.xlu0 %v2804, 62
      %v2818 = vpop.permute.xlu0 %2817
      %2819 = vrot.lane.b32.xlu0 %v2805, 62
      %v2820 = vpop.permute.xlu0 %2819
      %v2821 = vsel %vm2784, %v2812, %v2814
      %v2822 = vsel %vm2784, %v2814, %v2816
      %v2823 = vsel %vm2784, %v2816, %v2818
      %v2824 = vsel %vm2784, %v2818, %v2820
      %v2829 = vadd.f32 %v2793, %v2821
      %v2830 = vadd.f32 %v2794, %v2822
      %v2831 = vadd.f32 %v2795, %v2823
      %v2832 = vadd.f32 %v2796, %v2824
      %2833 = vset.pattern.permute.xlu0 30
      %2834 = vperm.xlu0 %2833, %v611
      %v2835 = vpop.permute.xlu0 %2834
      %v2837 = vmul.f32 %v2835, %v788
      %v2838 = vmul.f32 %v2835, %v789
      %v2839 = vmul.f32 %v2835, %v790
      %v2840 = vmul.f32 %v2835, %v791
      %v2841 = vmul.f32 %v2835, %v792
      %2847 = vrot.lane.b32.xlu0 %v2837, 62
      %v2848 = vpop.permute.xlu0 %2847
      %2849 = vrot.lane.b32.xlu0 %v2838, 62
      %v2850 = vpop.permute.xlu0 %2849
      %2851 = vrot.lane.b32.xlu0 %v2839, 62
      %v2852 = vpop.permute.xlu0 %2851
      %2853 = vrot.lane.b32.xlu0 %v2840, 62
      %v2854 = vpop.permute.xlu0 %2853
      %2855 = vrot.lane.b32.xlu0 %v2841, 62
      %v2856 = vpop.permute.xlu0 %2855
      %v2857 = vsel %vm2784, %v2848, %v2850
      %v2858 = vsel %vm2784, %v2850, %v2852
      %v2859 = vsel %vm2784, %v2852, %v2854
      %v2860 = vsel %vm2784, %v2854, %v2856
      %v2865 = vadd.f32 %v2829, %v2857
      %v2866 = vadd.f32 %v2830, %v2858
      %v2867 = vadd.f32 %v2831, %v2859
      %v2868 = vadd.f32 %v2832, %v2860
      %2869 = vset.pattern.permute.xlu0 31
      %2870 = vperm.xlu0 %2869, %v611
      %v2871 = vpop.permute.xlu0 %2870
      %v2873 = vmul.f32 %v2871, %v839
      %v2874 = vmul.f32 %v2871, %v840
      %v2875 = vmul.f32 %v2871, %v841
      %v2876 = vmul.f32 %v2871, %v842
      %v2877 = vmul.f32 %v2871, %v843
      %2883 = vrot.lane.b32.xlu0 %v2873, 62
      %v2884 = vpop.permute.xlu0 %2883
      %2885 = vrot.lane.b32.xlu0 %v2874, 62
      %v2886 = vpop.permute.xlu0 %2885
      %2887 = vrot.lane.b32.xlu0 %v2875, 62
      %v2888 = vpop.permute.xlu0 %2887
      %2889 = vrot.lane.b32.xlu0 %v2876, 62
      %v2890 = vpop.permute.xlu0 %2889
      %2891 = vrot.lane.b32.xlu0 %v2877, 62
      %v2892 = vpop.permute.xlu0 %2891
      %v2893 = vsel %vm2784, %v2884, %v2886
      %v2894 = vsel %vm2784, %v2886, %v2888
      %v2895 = vsel %vm2784, %v2888, %v2890
      %v2896 = vsel %vm2784, %v2890, %v2892
      %v2901 = vadd.f32 %v2865, %v2893
      %v2902 = vadd.f32 %v2866, %v2894
      %v2903 = vadd.f32 %v2867, %v2895
      %v2904 = vadd.f32 %v2868, %v2896
      %2905 = vset.pattern.permute.xlu0 32
      %2906 = vperm.xlu0 %2905, %v559
      %v2907 = vpop.permute.xlu0 %2906
      %v2909 = vmul.f32 %v2907, %v681
      %v2910 = vmul.f32 %v2907, %v682
      %v2911 = vmul.f32 %v2907, %v683
      %v2912 = vmul.f32 %v2907, %v684
      %v2913 = vmul.f32 %v2907, %v685
      %2919 = vrot.lane.b32.xlu0 %v2909, 61
      %v2920 = vpop.permute.xlu0 %2919
      %2921 = vrot.lane.b32.xlu0 %v2910, 61
      %v2922 = vpop.permute.xlu0 %2921
      %2923 = vrot.lane.b32.xlu0 %v2911, 61
      %v2924 = vpop.permute.xlu0 %2923
      %2925 = vrot.lane.b32.xlu0 %v2912, 61
      %v2926 = vpop.permute.xlu0 %2925
      %2927 = vrot.lane.b32.xlu0 %v2913, 61
      %v2928 = vpop.permute.xlu0 %2927
      %vm2929 = vcmask 498688
      %v2930 = vsel %vm2929, %v2920, %v2922
      %v2931 = vsel %vm2929, %v2922, %v2924
      %v2932 = vsel %vm2929, %v2924, %v2926
      %v2933 = vsel %vm2929, %v2926, %v2928
      %v2938 = vadd.f32 %v2901, %v2930
      %v2939 = vadd.f32 %v2902, %v2931
      %v2940 = vadd.f32 %v2903, %v2932
      %v2941 = vadd.f32 %v2904, %v2933
      %2942 = vset.pattern.permute.xlu0 33
      %2943 = vperm.xlu0 %2942, %v559
      %v2944 = vpop.permute.xlu0 %2943
      %v2946 = vmul.f32 %v2944, %v733
      %v2947 = vmul.f32 %v2944, %v734
      %v2948 = vmul.f32 %v2944, %v735
      %v2949 = vmul.f32 %v2944, %v736
      %v2950 = vmul.f32 %v2944, %v737
      %2956 = vrot.lane.b32.xlu0 %v2946, 61
      %v2957 = vpop.permute.xlu0 %2956
      %2958 = vrot.lane.b32.xlu0 %v2947, 61
      %v2959 = vpop.permute.xlu0 %2958
      %2960 = vrot.lane.b32.xlu0 %v2948, 61
      %v2961 = vpop.permute.xlu0 %2960
      %2962 = vrot.lane.b32.xlu0 %v2949, 61
      %v2963 = vpop.permute.xlu0 %2962
      %2964 = vrot.lane.b32.xlu0 %v2950, 61
      %v2965 = vpop.permute.xlu0 %2964
      %v2966 = vsel %vm2929, %v2957, %v2959
      %v2967 = vsel %vm2929, %v2959, %v2961
      %v2968 = vsel %vm2929, %v2961, %v2963
      %v2969 = vsel %vm2929, %v2963, %v2965
      %v2974 = vadd.f32 %v2938, %v2966
      %v2975 = vadd.f32 %v2939, %v2967
      %v2976 = vadd.f32 %v2940, %v2968
      %v2977 = vadd.f32 %v2941, %v2969
      %2978 = vset.pattern.permute.xlu0 32
      %2979 = vperm.xlu0 %2978, %v611
      %v2980 = vpop.permute.xlu0 %2979
      %v2982 = vmul.f32 %v2980, %v788
      %v2983 = vmul.f32 %v2980, %v789
      %v2984 = vmul.f32 %v2980, %v790
      %v2985 = vmul.f32 %v2980, %v791
      %v2986 = vmul.f32 %v2980, %v792
      %2992 = vrot.lane.b32.xlu0 %v2982, 61
      %v2993 = vpop.permute.xlu0 %2992
      %2994 = vrot.lane.b32.xlu0 %v2983, 61
      %v2995 = vpop.permute.xlu0 %2994
      %2996 = vrot.lane.b32.xlu0 %v2984, 61
      %v2997 = vpop.permute.xlu0 %2996
      %2998 = vrot.lane.b32.xlu0 %v2985, 61
      %v2999 = vpop.permute.xlu0 %2998
      %3000 = vrot.lane.b32.xlu0 %v2986, 61
      %v3001 = vpop.permute.xlu0 %3000
      %v3002 = vsel %vm2929, %v2993, %v2995
      %v3003 = vsel %vm2929, %v2995, %v2997
      %v3004 = vsel %vm2929, %v2997, %v2999
      %v3005 = vsel %vm2929, %v2999, %v3001
      %v3010 = vadd.f32 %v2974, %v3002
      %v3011 = vadd.f32 %v2975, %v3003
      %v3012 = vadd.f32 %v2976, %v3004
      %v3013 = vadd.f32 %v2977, %v3005
      %3014 = vset.pattern.permute.xlu0 33
      %3015 = vperm.xlu0 %3014, %v611
      %v3016 = vpop.permute.xlu0 %3015
      %v3018 = vmul.f32 %v3016, %v839
      %v3019 = vmul.f32 %v3016, %v840
      %v3020 = vmul.f32 %v3016, %v841
      %v3021 = vmul.f32 %v3016, %v842
      %v3022 = vmul.f32 %v3016, %v843
      %3028 = vrot.lane.b32.xlu0 %v3018, 61
      %v3029 = vpop.permute.xlu0 %3028
      %3030 = vrot.lane.b32.xlu0 %v3019, 61
      %v3031 = vpop.permute.xlu0 %3030
      %3032 = vrot.lane.b32.xlu0 %v3020, 61
      %v3033 = vpop.permute.xlu0 %3032
      %3034 = vrot.lane.b32.xlu0 %v3021, 61
      %v3035 = vpop.permute.xlu0 %3034
      %3036 = vrot.lane.b32.xlu0 %v3022, 61
      %v3037 = vpop.permute.xlu0 %3036
      %v3038 = vsel %vm2929, %v3029, %v3031
      %v3039 = vsel %vm2929, %v3031, %v3033
      %v3040 = vsel %vm2929, %v3033, %v3035
      %v3041 = vsel %vm2929, %v3035, %v3037
      %v3046 = vadd.f32 %v3010, %v3038
      %v3047 = vadd.f32 %v3011, %v3039
      %v3048 = vadd.f32 %v3012, %v3040
      %v3049 = vadd.f32 %v3013, %v3041
      %3050 = vset.pattern.permute.xlu0 34
      %3051 = vperm.xlu0 %3050, %v559
      %v3052 = vpop.permute.xlu0 %3051
      %v3054 = vmul.f32 %v3052, %v681
      %v3055 = vmul.f32 %v3052, %v682
      %v3056 = vmul.f32 %v3052, %v683
      %v3057 = vmul.f32 %v3052, %v684
      %v3058 = vmul.f32 %v3052, %v685
      %3064 = vrot.lane.b32.xlu0 %v3054, 60
      %v3065 = vpop.permute.xlu0 %3064
      %3066 = vrot.lane.b32.xlu0 %v3055, 60
      %v3067 = vpop.permute.xlu0 %3066
      %3068 = vrot.lane.b32.xlu0 %v3056, 60
      %v3069 = vpop.permute.xlu0 %3068
      %3070 = vrot.lane.b32.xlu0 %v3057, 60
      %v3071 = vpop.permute.xlu0 %3070
      %3072 = vrot.lane.b32.xlu0 %v3058, 60
      %v3073 = vpop.permute.xlu0 %3072
      %vm3074 = vcmask 490496
      %v3075 = vsel %vm3074, %v3065, %v3067
      %v3076 = vsel %vm3074, %v3067, %v3069
      %v3077 = vsel %vm3074, %v3069, %v3071
      %v3078 = vsel %vm3074, %v3071, %v3073
      %v3083 = vadd.f32 %v3046, %v3075
      %v3084 = vadd.f32 %v3047, %v3076
      %v3085 = vadd.f32 %v3048, %v3077
      %v3086 = vadd.f32 %v3049, %v3078
      %3087 = vset.pattern.permute.xlu0 35
      %3088 = vperm.xlu0 %3087, %v559
      %v3089 = vpop.permute.xlu0 %3088
      %v3091 = vmul.f32 %v3089, %v733
      %v3092 = vmul.f32 %v3089, %v734
      %v3093 = vmul.f32 %v3089, %v735
      %v3094 = vmul.f32 %v3089, %v736
      %v3095 = vmul.f32 %v3089, %v737
      %3101 = vrot.lane.b32.xlu0 %v3091, 60
      %v3102 = vpop.permute.xlu0 %3101
      %3103 = vrot.lane.b32.xlu0 %v3092, 60
      %v3104 = vpop.permute.xlu0 %3103
      %3105 = vrot.lane.b32.xlu0 %v3093, 60
      %v3106 = vpop.permute.xlu0 %3105
      %3107 = vrot.lane.b32.xlu0 %v3094, 60
      %v3108 = vpop.permute.xlu0 %3107
      %3109 = vrot.lane.b32.xlu0 %v3095, 60
      %v3110 = vpop.permute.xlu0 %3109
      %v3111 = vsel %vm3074, %v3102, %v3104
      %v3112 = vsel %vm3074, %v3104, %v3106
      %v3113 = vsel %vm3074, %v3106, %v3108
      %v3114 = vsel %vm3074, %v3108, %v3110
      %v3119 = vadd.f32 %v3083, %v3111
      %v3120 = vadd.f32 %v3084, %v3112
      %v3121 = vadd.f32 %v3085, %v3113
      %v3122 = vadd.f32 %v3086, %v3114
      %3123 = vset.pattern.permute.xlu0 34
      %3124 = vperm.xlu0 %3123, %v611
      %v3125 = vpop.permute.xlu0 %3124
      %v3127 = vmul.f32 %v3125, %v788
      %v3128 = vmul.f32 %v3125, %v789
      %v3129 = vmul.f32 %v3125, %v790
      %v3130 = vmul.f32 %v3125, %v791
      %v3131 = vmul.f32 %v3125, %v792
      %3137 = vrot.lane.b32.xlu0 %v3127, 60
      %v3138 = vpop.permute.xlu0 %3137
      %3139 = vrot.lane.b32.xlu0 %v3128, 60
      %v3140 = vpop.permute.xlu0 %3139
      %3141 = vrot.lane.b32.xlu0 %v3129, 60
      %v3142 = vpop.permute.xlu0 %3141
      %3143 = vrot.lane.b32.xlu0 %v3130, 60
      %v3144 = vpop.permute.xlu0 %3143
      %3145 = vrot.lane.b32.xlu0 %v3131, 60
      %v3146 = vpop.permute.xlu0 %3145
      %v3147 = vsel %vm3074, %v3138, %v3140
      %v3148 = vsel %vm3074, %v3140, %v3142
      %v3149 = vsel %vm3074, %v3142, %v3144
      %v3150 = vsel %vm3074, %v3144, %v3146
      %v3155 = vadd.f32 %v3119, %v3147
      %v3156 = vadd.f32 %v3120, %v3148
      %v3157 = vadd.f32 %v3121, %v3149
      %v3158 = vadd.f32 %v3122, %v3150
      %3159 = vset.pattern.permute.xlu0 35
      %3160 = vperm.xlu0 %3159, %v611
      %v3161 = vpop.permute.xlu0 %3160
      %v3163 = vmul.f32 %v3161, %v839
      %v3164 = vmul.f32 %v3161, %v840
      %v3165 = vmul.f32 %v3161, %v841
      %v3166 = vmul.f32 %v3161, %v842
      %v3167 = vmul.f32 %v3161, %v843
      %3173 = vrot.lane.b32.xlu0 %v3163, 60
      %v3174 = vpop.permute.xlu0 %3173
      %3175 = vrot.lane.b32.xlu0 %v3164, 60
      %v3176 = vpop.permute.xlu0 %3175
      %3177 = vrot.lane.b32.xlu0 %v3165, 60
      %v3178 = vpop.permute.xlu0 %3177
      %3179 = vrot.lane.b32.xlu0 %v3166, 60
      %v3180 = vpop.permute.xlu0 %3179
      %3181 = vrot.lane.b32.xlu0 %v3167, 60
      %v3182 = vpop.permute.xlu0 %3181
      %v3183 = vsel %vm3074, %v3174, %v3176
      %v3184 = vsel %vm3074, %v3176, %v3178
      %v3185 = vsel %vm3074, %v3178, %v3180
      %v3186 = vsel %vm3074, %v3180, %v3182
      %v3191 = vadd.f32 %v3155, %v3183
      %v3192 = vadd.f32 %v3156, %v3184
      %v3193 = vadd.f32 %v3157, %v3185
      %v3194 = vadd.f32 %v3158, %v3186
      %3195 = vset.pattern.permute.xlu0 36
      %3196 = vperm.xlu0 %3195, %v559
      %v3197 = vpop.permute.xlu0 %3196
      %v3199 = vmul.f32 %v3197, %v681
      %v3200 = vmul.f32 %v3197, %v682
      %v3201 = vmul.f32 %v3197, %v683
      %v3202 = vmul.f32 %v3197, %v684
      %v3203 = vmul.f32 %v3197, %v685
      %3209 = vrot.lane.b32.xlu0 %v3199, 59
      %v3210 = vpop.permute.xlu0 %3209
      %3211 = vrot.lane.b32.xlu0 %v3200, 59
      %v3212 = vpop.permute.xlu0 %3211
      %3213 = vrot.lane.b32.xlu0 %v3201, 59
      %v3214 = vpop.permute.xlu0 %3213
      %3215 = vrot.lane.b32.xlu0 %v3202, 59
      %v3216 = vpop.permute.xlu0 %3215
      %3217 = vrot.lane.b32.xlu0 %v3203, 59
      %v3218 = vpop.permute.xlu0 %3217
      %vm3219 = vcmask 482304
      %v3220 = vsel %vm3219, %v3210, %v3212
      %v3221 = vsel %vm3219, %v3212, %v3214
      %v3222 = vsel %vm3219, %v3214, %v3216
      %v3223 = vsel %vm3219, %v3216, %v3218
      %v3228 = vadd.f32 %v3191, %v3220
      %v3229 = vadd.f32 %v3192, %v3221
      %v3230 = vadd.f32 %v3193, %v3222
      %v3231 = vadd.f32 %v3194, %v3223
      %3232 = vset.pattern.permute.xlu0 37
      %3233 = vperm.xlu0 %3232, %v559
      %v3234 = vpop.permute.xlu0 %3233
      %v3236 = vmul.f32 %v3234, %v733
      %v3237 = vmul.f32 %v3234, %v734
      %v3238 = vmul.f32 %v3234, %v735
      %v3239 = vmul.f32 %v3234, %v736
      %v3240 = vmul.f32 %v3234, %v737
      %3246 = vrot.lane.b32.xlu0 %v3236, 59
      %v3247 = vpop.permute.xlu0 %3246
      %3248 = vrot.lane.b32.xlu0 %v3237, 59
      %v3249 = vpop.permute.xlu0 %3248
      %3250 = vrot.lane.b32.xlu0 %v3238, 59
      %v3251 = vpop.permute.xlu0 %3250
      %3252 = vrot.lane.b32.xlu0 %v3239, 59
      %v3253 = vpop.permute.xlu0 %3252
      %3254 = vrot.lane.b32.xlu0 %v3240, 59
      %v3255 = vpop.permute.xlu0 %3254
      %v3256 = vsel %vm3219, %v3247, %v3249
      %v3257 = vsel %vm3219, %v3249, %v3251
      %v3258 = vsel %vm3219, %v3251, %v3253
      %v3259 = vsel %vm3219, %v3253, %v3255
      %v3264 = vadd.f32 %v3228, %v3256
      %v3265 = vadd.f32 %v3229, %v3257
      %v3266 = vadd.f32 %v3230, %v3258
      %v3267 = vadd.f32 %v3231, %v3259
      %3268 = vset.pattern.permute.xlu0 36
      %3269 = vperm.xlu0 %3268, %v611
      %v3270 = vpop.permute.xlu0 %3269
      %v3272 = vmul.f32 %v3270, %v788
      %v3273 = vmul.f32 %v3270, %v789
      %v3274 = vmul.f32 %v3270, %v790
      %v3275 = vmul.f32 %v3270, %v791
      %v3276 = vmul.f32 %v3270, %v792
      %3282 = vrot.lane.b32.xlu0 %v3272, 59
      %v3283 = vpop.permute.xlu0 %3282
      %3284 = vrot.lane.b32.xlu0 %v3273, 59
      %v3285 = vpop.permute.xlu0 %3284
      %3286 = vrot.lane.b32.xlu0 %v3274, 59
      %v3287 = vpop.permute.xlu0 %3286
      %3288 = vrot.lane.b32.xlu0 %v3275, 59
      %v3289 = vpop.permute.xlu0 %3288
      %3290 = vrot.lane.b32.xlu0 %v3276, 59
      %v3291 = vpop.permute.xlu0 %3290
      %v3292 = vsel %vm3219, %v3283, %v3285
      %v3293 = vsel %vm3219, %v3285, %v3287
      %v3294 = vsel %vm3219, %v3287, %v3289
      %v3295 = vsel %vm3219, %v3289, %v3291
      %v3300 = vadd.f32 %v3264, %v3292
      %v3301 = vadd.f32 %v3265, %v3293
      %v3302 = vadd.f32 %v3266, %v3294
      %v3303 = vadd.f32 %v3267, %v3295
      %3304 = vset.pattern.permute.xlu0 37
      %3305 = vperm.xlu0 %3304, %v611
      %v3306 = vpop.permute.xlu0 %3305
      %v3308 = vmul.f32 %v3306, %v839
      %v3309 = vmul.f32 %v3306, %v840
      %v3310 = vmul.f32 %v3306, %v841
      %v3311 = vmul.f32 %v3306, %v842
      %v3312 = vmul.f32 %v3306, %v843
      %3318 = vrot.lane.b32.xlu0 %v3308, 59
      %v3319 = vpop.permute.xlu0 %3318
      %3320 = vrot.lane.b32.xlu0 %v3309, 59
      %v3321 = vpop.permute.xlu0 %3320
      %3322 = vrot.lane.b32.xlu0 %v3310, 59
      %v3323 = vpop.permute.xlu0 %3322
      %3324 = vrot.lane.b32.xlu0 %v3311, 59
      %v3325 = vpop.permute.xlu0 %3324
      %3326 = vrot.lane.b32.xlu0 %v3312, 59
      %v3327 = vpop.permute.xlu0 %3326
      %v3328 = vsel %vm3219, %v3319, %v3321
      %v3329 = vsel %vm3219, %v3321, %v3323
      %v3330 = vsel %vm3219, %v3323, %v3325
      %v3331 = vsel %vm3219, %v3325, %v3327
      %v3336 = vadd.f32 %v3300, %v3328
      %v3337 = vadd.f32 %v3301, %v3329
      %v3338 = vadd.f32 %v3302, %v3330
      %v3339 = vadd.f32 %v3303, %v3331
      %3340 = vset.pattern.permute.xlu0 38
      %3341 = vperm.xlu0 %3340, %v559
      %v3342 = vpop.permute.xlu0 %3341
      %v3344 = vmul.f32 %v3342, %v681
      %v3345 = vmul.f32 %v3342, %v682
      %v3346 = vmul.f32 %v3342, %v683
      %v3347 = vmul.f32 %v3342, %v684
      %v3348 = vmul.f32 %v3342, %v685
      %3354 = vrot.lane.b32.xlu0 %v3344, 58
      %v3355 = vpop.permute.xlu0 %3354
      %3356 = vrot.lane.b32.xlu0 %v3345, 58
      %v3357 = vpop.permute.xlu0 %3356
      %3358 = vrot.lane.b32.xlu0 %v3346, 58
      %v3359 = vpop.permute.xlu0 %3358
      %3360 = vrot.lane.b32.xlu0 %v3347, 58
      %v3361 = vpop.permute.xlu0 %3360
      %3362 = vrot.lane.b32.xlu0 %v3348, 58
      %v3363 = vpop.permute.xlu0 %3362
      %vm3364 = vcmask 474112
      %v3365 = vsel %vm3364, %v3355, %v3357
      %v3366 = vsel %vm3364, %v3357, %v3359
      %v3367 = vsel %vm3364, %v3359, %v3361
      %v3368 = vsel %vm3364, %v3361, %v3363
      %v3373 = vadd.f32 %v3336, %v3365
      %v3374 = vadd.f32 %v3337, %v3366
      %v3375 = vadd.f32 %v3338, %v3367
      %v3376 = vadd.f32 %v3339, %v3368
      %3377 = vset.pattern.permute.xlu0 39
      %3378 = vperm.xlu0 %3377, %v559
      %v3379 = vpop.permute.xlu0 %3378
      %v3381 = vmul.f32 %v3379, %v733
      %v3382 = vmul.f32 %v3379, %v734
      %v3383 = vmul.f32 %v3379, %v735
      %v3384 = vmul.f32 %v3379, %v736
      %v3385 = vmul.f32 %v3379, %v737
      %3391 = vrot.lane.b32.xlu0 %v3381, 58
      %v3392 = vpop.permute.xlu0 %3391
      %3393 = vrot.lane.b32.xlu0 %v3382, 58
      %v3394 = vpop.permute.xlu0 %3393
      %3395 = vrot.lane.b32.xlu0 %v3383, 58
      %v3396 = vpop.permute.xlu0 %3395
      %3397 = vrot.lane.b32.xlu0 %v3384, 58
      %v3398 = vpop.permute.xlu0 %3397
      %3399 = vrot.lane.b32.xlu0 %v3385, 58
      %v3400 = vpop.permute.xlu0 %3399
      %v3401 = vsel %vm3364, %v3392, %v3394
      %v3402 = vsel %vm3364, %v3394, %v3396
      %v3403 = vsel %vm3364, %v3396, %v3398
      %v3404 = vsel %vm3364, %v3398, %v3400
      %v3409 = vadd.f32 %v3373, %v3401
      %v3410 = vadd.f32 %v3374, %v3402
      %v3411 = vadd.f32 %v3375, %v3403
      %v3412 = vadd.f32 %v3376, %v3404
      %3413 = vset.pattern.permute.xlu0 38
      %3414 = vperm.xlu0 %3413, %v611
      %v3415 = vpop.permute.xlu0 %3414
      %v3417 = vmul.f32 %v3415, %v788
      %v3418 = vmul.f32 %v3415, %v789
      %v3419 = vmul.f32 %v3415, %v790
      %v3420 = vmul.f32 %v3415, %v791
      %v3421 = vmul.f32 %v3415, %v792
      %3427 = vrot.lane.b32.xlu0 %v3417, 58
      %v3428 = vpop.permute.xlu0 %3427
      %3429 = vrot.lane.b32.xlu0 %v3418, 58
      %v3430 = vpop.permute.xlu0 %3429
      %3431 = vrot.lane.b32.xlu0 %v3419, 58
      %v3432 = vpop.permute.xlu0 %3431
      %3433 = vrot.lane.b32.xlu0 %v3420, 58
      %v3434 = vpop.permute.xlu0 %3433
      %3435 = vrot.lane.b32.xlu0 %v3421, 58
      %v3436 = vpop.permute.xlu0 %3435
      %v3437 = vsel %vm3364, %v3428, %v3430
      %v3438 = vsel %vm3364, %v3430, %v3432
      %v3439 = vsel %vm3364, %v3432, %v3434
      %v3440 = vsel %vm3364, %v3434, %v3436
      %v3445 = vadd.f32 %v3409, %v3437
      %v3446 = vadd.f32 %v3410, %v3438
      %v3447 = vadd.f32 %v3411, %v3439
      %v3448 = vadd.f32 %v3412, %v3440
      %3449 = vset.pattern.permute.xlu0 39
      %3450 = vperm.xlu0 %3449, %v611
      %v3451 = vpop.permute.xlu0 %3450
      %v3453 = vmul.f32 %v3451, %v839
      %v3454 = vmul.f32 %v3451, %v840
      %v3455 = vmul.f32 %v3451, %v841
      %v3456 = vmul.f32 %v3451, %v842
      %v3457 = vmul.f32 %v3451, %v843
      %3463 = vrot.lane.b32.xlu0 %v3453, 58
      %v3464 = vpop.permute.xlu0 %3463
      %3465 = vrot.lane.b32.xlu0 %v3454, 58
      %v3466 = vpop.permute.xlu0 %3465
      %3467 = vrot.lane.b32.xlu0 %v3455, 58
      %v3468 = vpop.permute.xlu0 %3467
      %3469 = vrot.lane.b32.xlu0 %v3456, 58
      %v3470 = vpop.permute.xlu0 %3469
      %3471 = vrot.lane.b32.xlu0 %v3457, 58
      %v3472 = vpop.permute.xlu0 %3471
      %v3473 = vsel %vm3364, %v3464, %v3466
      %v3474 = vsel %vm3364, %v3466, %v3468
      %v3475 = vsel %vm3364, %v3468, %v3470
      %v3476 = vsel %vm3364, %v3470, %v3472
      %v3481 = vadd.f32 %v3445, %v3473
      %v3482 = vadd.f32 %v3446, %v3474
      %v3483 = vadd.f32 %v3447, %v3475
      %v3484 = vadd.f32 %v3448, %v3476
      %3485 = vset.pattern.permute.xlu0 40
      %3486 = vperm.xlu0 %3485, %v559
      %v3487 = vpop.permute.xlu0 %3486
      %v3489 = vmul.f32 %v3487, %v681
      %v3490 = vmul.f32 %v3487, %v682
      %v3491 = vmul.f32 %v3487, %v683
      %v3492 = vmul.f32 %v3487, %v684
      %v3493 = vmul.f32 %v3487, %v685
      %3499 = vrot.lane.b32.xlu0 %v3489, 40
      %v3500 = vpop.permute.xlu0 %3499
      %3501 = vrot.lane.b32.xlu0 %v3490, 40
      %v3502 = vpop.permute.xlu0 %3501
      %3503 = vrot.lane.b32.xlu0 %v3491, 40
      %v3504 = vpop.permute.xlu0 %3503
      %3505 = vrot.lane.b32.xlu0 %v3492, 40
      %v3506 = vpop.permute.xlu0 %3505
      %3507 = vrot.lane.b32.xlu0 %v3493, 40
      %v3508 = vpop.permute.xlu0 %3507
      %vm3509 = vcmask 326656
      %v3510 = vsel %vm3509, %v3500, %v3502
      %v3511 = vsel %vm3509, %v3502, %v3504
      %v3512 = vsel %vm3509, %v3504, %v3506
      %v3513 = vsel %vm3509, %v3506, %v3508
      %v3518 = vadd.f32 %v3481, %v3510
      %v3519 = vadd.f32 %v3482, %v3511
      %v3520 = vadd.f32 %v3483, %v3512
      %v3521 = vadd.f32 %v3484, %v3513
      %3522 = vset.pattern.permute.xlu0 41
      %3523 = vperm.xlu0 %3522, %v559
      %v3524 = vpop.permute.xlu0 %3523
      %v3526 = vmul.f32 %v3524, %v733
      %v3527 = vmul.f32 %v3524, %v734
      %v3528 = vmul.f32 %v3524, %v735
      %v3529 = vmul.f32 %v3524, %v736
      %v3530 = vmul.f32 %v3524, %v737
      %3536 = vrot.lane.b32.xlu0 %v3526, 40
      %v3537 = vpop.permute.xlu0 %3536
      %3538 = vrot.lane.b32.xlu0 %v3527, 40
      %v3539 = vpop.permute.xlu0 %3538
      %3540 = vrot.lane.b32.xlu0 %v3528, 40
      %v3541 = vpop.permute.xlu0 %3540
      %3542 = vrot.lane.b32.xlu0 %v3529, 40
      %v3543 = vpop.permute.xlu0 %3542
      %3544 = vrot.lane.b32.xlu0 %v3530, 40
      %v3545 = vpop.permute.xlu0 %3544
      %v3546 = vsel %vm3509, %v3537, %v3539
      %v3547 = vsel %vm3509, %v3539, %v3541
      %v3548 = vsel %vm3509, %v3541, %v3543
      %v3549 = vsel %vm3509, %v3543, %v3545
      %v3554 = vadd.f32 %v3518, %v3546
      %v3555 = vadd.f32 %v3519, %v3547
      %v3556 = vadd.f32 %v3520, %v3548
      %v3557 = vadd.f32 %v3521, %v3549
      %3558 = vset.pattern.permute.xlu0 40
      %3559 = vperm.xlu0 %3558, %v611
      %v3560 = vpop.permute.xlu0 %3559
      %v3562 = vmul.f32 %v3560, %v788
      %v3563 = vmul.f32 %v3560, %v789
      %v3564 = vmul.f32 %v3560, %v790
      %v3565 = vmul.f32 %v3560, %v791
      %v3566 = vmul.f32 %v3560, %v792
      %3572 = vrot.lane.b32.xlu0 %v3562, 40
      %v3573 = vpop.permute.xlu0 %3572
      %3574 = vrot.lane.b32.xlu0 %v3563, 40
      %v3575 = vpop.permute.xlu0 %3574
      %3576 = vrot.lane.b32.xlu0 %v3564, 40
      %v3577 = vpop.permute.xlu0 %3576
      %3578 = vrot.lane.b32.xlu0 %v3565, 40
      %v3579 = vpop.permute.xlu0 %3578
      %3580 = vrot.lane.b32.xlu0 %v3566, 40
      %v3581 = vpop.permute.xlu0 %3580
      %v3582 = vsel %vm3509, %v3573, %v3575
      %v3583 = vsel %vm3509, %v3575, %v3577
      %v3584 = vsel %vm3509, %v3577, %v3579
      %v3585 = vsel %vm3509, %v3579, %v3581
      %v3590 = vadd.f32 %v3554, %v3582
      %v3591 = vadd.f32 %v3555, %v3583
      %v3592 = vadd.f32 %v3556, %v3584
      %v3593 = vadd.f32 %v3557, %v3585
      %3594 = vset.pattern.permute.xlu0 41
      %3595 = vperm.xlu0 %3594, %v611
      %v3596 = vpop.permute.xlu0 %3595
      %v3598 = vmul.f32 %v3596, %v839
      %v3599 = vmul.f32 %v3596, %v840
      %v3600 = vmul.f32 %v3596, %v841
      %v3601 = vmul.f32 %v3596, %v842
      %v3602 = vmul.f32 %v3596, %v843
      %3608 = vrot.lane.b32.xlu0 %v3598, 40
      %v3609 = vpop.permute.xlu0 %3608
      %3610 = vrot.lane.b32.xlu0 %v3599, 40
      %v3611 = vpop.permute.xlu0 %3610
      %3612 = vrot.lane.b32.xlu0 %v3600, 40
      %v3613 = vpop.permute.xlu0 %3612
      %3614 = vrot.lane.b32.xlu0 %v3601, 40
      %v3615 = vpop.permute.xlu0 %3614
      %3616 = vrot.lane.b32.xlu0 %v3602, 40
      %v3617 = vpop.permute.xlu0 %3616
      %v3618 = vsel %vm3509, %v3609, %v3611
      %v3619 = vsel %vm3509, %v3611, %v3613
      %v3620 = vsel %vm3509, %v3613, %v3615
      %v3621 = vsel %vm3509, %v3615, %v3617
      %v3626 = vadd.f32 %v3590, %v3618
      %v3627 = vadd.f32 %v3591, %v3619
      %v3628 = vadd.f32 %v3592, %v3620
      %v3629 = vadd.f32 %v3593, %v3621
      %3630 = vset.pattern.permute.xlu0 42
      %3631 = vperm.xlu0 %3630, %v559
      %v3632 = vpop.permute.xlu0 %3631
      %v3634 = vmul.f32 %v3632, %v681
      %v3635 = vmul.f32 %v3632, %v682
      %v3636 = vmul.f32 %v3632, %v683
      %v3637 = vmul.f32 %v3632, %v684
      %v3638 = vmul.f32 %v3632, %v685
      %3644 = vrot.lane.b32.xlu0 %v3634, 39
      %v3645 = vpop.permute.xlu0 %3644
      %3646 = vrot.lane.b32.xlu0 %v3635, 39
      %v3647 = vpop.permute.xlu0 %3646
      %3648 = vrot.lane.b32.xlu0 %v3636, 39
      %v3649 = vpop.permute.xlu0 %3648
      %3650 = vrot.lane.b32.xlu0 %v3637, 39
      %v3651 = vpop.permute.xlu0 %3650
      %3652 = vrot.lane.b32.xlu0 %v3638, 39
      %v3653 = vpop.permute.xlu0 %3652
      %vm3654 = vcmask 318464
      %v3655 = vsel %vm3654, %v3645, %v3647
      %v3656 = vsel %vm3654, %v3647, %v3649
      %v3657 = vsel %vm3654, %v3649, %v3651
      %v3658 = vsel %vm3654, %v3651, %v3653
      %v3663 = vadd.f32 %v3626, %v3655
      %v3664 = vadd.f32 %v3627, %v3656
      %v3665 = vadd.f32 %v3628, %v3657
      %v3666 = vadd.f32 %v3629, %v3658
      %3667 = vset.pattern.permute.xlu0 43
      %3668 = vperm.xlu0 %3667, %v559
      %v3669 = vpop.permute.xlu0 %3668
      %v3671 = vmul.f32 %v3669, %v733
      %v3672 = vmul.f32 %v3669, %v734
      %v3673 = vmul.f32 %v3669, %v735
      %v3674 = vmul.f32 %v3669, %v736
      %v3675 = vmul.f32 %v3669, %v737
      %3681 = vrot.lane.b32.xlu0 %v3671, 39
      %v3682 = vpop.permute.xlu0 %3681
      %3683 = vrot.lane.b32.xlu0 %v3672, 39
      %v3684 = vpop.permute.xlu0 %3683
      %3685 = vrot.lane.b32.xlu0 %v3673, 39
      %v3686 = vpop.permute.xlu0 %3685
      %3687 = vrot.lane.b32.xlu0 %v3674, 39
      %v3688 = vpop.permute.xlu0 %3687
      %3689 = vrot.lane.b32.xlu0 %v3675, 39
      %v3690 = vpop.permute.xlu0 %3689
      %v3691 = vsel %vm3654, %v3682, %v3684
      %v3692 = vsel %vm3654, %v3684, %v3686
      %v3693 = vsel %vm3654, %v3686, %v3688
      %v3694 = vsel %vm3654, %v3688, %v3690
      %v3699 = vadd.f32 %v3663, %v3691
      %v3700 = vadd.f32 %v3664, %v3692
      %v3701 = vadd.f32 %v3665, %v3693
      %v3702 = vadd.f32 %v3666, %v3694
      %3703 = vset.pattern.permute.xlu0 42
      %3704 = vperm.xlu0 %3703, %v611
      %v3705 = vpop.permute.xlu0 %3704
      %v3707 = vmul.f32 %v3705, %v788
      %v3708 = vmul.f32 %v3705, %v789
      %v3709 = vmul.f32 %v3705, %v790
      %v3710 = vmul.f32 %v3705, %v791
      %v3711 = vmul.f32 %v3705, %v792
      %3717 = vrot.lane.b32.xlu0 %v3707, 39
      %v3718 = vpop.permute.xlu0 %3717
      %3719 = vrot.lane.b32.xlu0 %v3708, 39
      %v3720 = vpop.permute.xlu0 %3719
      %3721 = vrot.lane.b32.xlu0 %v3709, 39
      %v3722 = vpop.permute.xlu0 %3721
      %3723 = vrot.lane.b32.xlu0 %v3710, 39
      %v3724 = vpop.permute.xlu0 %3723
      %3725 = vrot.lane.b32.xlu0 %v3711, 39
      %v3726 = vpop.permute.xlu0 %3725
      %v3727 = vsel %vm3654, %v3718, %v3720
      %v3728 = vsel %vm3654, %v3720, %v3722
      %v3729 = vsel %vm3654, %v3722, %v3724
      %v3730 = vsel %vm3654, %v3724, %v3726
      %v3735 = vadd.f32 %v3699, %v3727
      %v3736 = vadd.f32 %v3700, %v3728
      %v3737 = vadd.f32 %v3701, %v3729
      %v3738 = vadd.f32 %v3702, %v3730
      %3739 = vset.pattern.permute.xlu0 43
      %3740 = vperm.xlu0 %3739, %v611
      %v3741 = vpop.permute.xlu0 %3740
      %v3743 = vmul.f32 %v3741, %v839
      %v3744 = vmul.f32 %v3741, %v840
      %v3745 = vmul.f32 %v3741, %v841
      %v3746 = vmul.f32 %v3741, %v842
      %v3747 = vmul.f32 %v3741, %v843
      %3753 = vrot.lane.b32.xlu0 %v3743, 39
      %v3754 = vpop.permute.xlu0 %3753
      %3755 = vrot.lane.b32.xlu0 %v3744, 39
      %v3756 = vpop.permute.xlu0 %3755
      %3757 = vrot.lane.b32.xlu0 %v3745, 39
      %v3758 = vpop.permute.xlu0 %3757
      %3759 = vrot.lane.b32.xlu0 %v3746, 39
      %v3760 = vpop.permute.xlu0 %3759
      %3761 = vrot.lane.b32.xlu0 %v3747, 39
      %v3762 = vpop.permute.xlu0 %3761
      %v3763 = vsel %vm3654, %v3754, %v3756
      %v3764 = vsel %vm3654, %v3756, %v3758
      %v3765 = vsel %vm3654, %v3758, %v3760
      %v3766 = vsel %vm3654, %v3760, %v3762
      %v3771 = vadd.f32 %v3735, %v3763
      %v3772 = vadd.f32 %v3736, %v3764
      %v3773 = vadd.f32 %v3737, %v3765
      %v3774 = vadd.f32 %v3738, %v3766
      %3775 = vset.pattern.permute.xlu0 44
      %3776 = vperm.xlu0 %3775, %v559
      %v3777 = vpop.permute.xlu0 %3776
      %v3779 = vmul.f32 %v3777, %v681
      %v3780 = vmul.f32 %v3777, %v682
      %v3781 = vmul.f32 %v3777, %v683
      %v3782 = vmul.f32 %v3777, %v684
      %v3783 = vmul.f32 %v3777, %v685
      %3789 = vrot.lane.b32.xlu0 %v3779, 38
      %v3790 = vpop.permute.xlu0 %3789
      %3791 = vrot.lane.b32.xlu0 %v3780, 38
      %v3792 = vpop.permute.xlu0 %3791
      %3793 = vrot.lane.b32.xlu0 %v3781, 38
      %v3794 = vpop.permute.xlu0 %3793
      %3795 = vrot.lane.b32.xlu0 %v3782, 38
      %v3796 = vpop.permute.xlu0 %3795
      %3797 = vrot.lane.b32.xlu0 %v3783, 38
      %v3798 = vpop.permute.xlu0 %3797
      %vm3799 = vcmask 310272
      %v3800 = vsel %vm3799, %v3790, %v3792
      %v3801 = vsel %vm3799, %v3792, %v3794
      %v3802 = vsel %vm3799, %v3794, %v3796
      %v3803 = vsel %vm3799, %v3796, %v3798
      %v3808 = vadd.f32 %v3771, %v3800
      %v3809 = vadd.f32 %v3772, %v3801
      %v3810 = vadd.f32 %v3773, %v3802
      %v3811 = vadd.f32 %v3774, %v3803
      %3812 = vset.pattern.permute.xlu0 45
      %3813 = vperm.xlu0 %3812, %v559
      %v3814 = vpop.permute.xlu0 %3813
      %v3816 = vmul.f32 %v3814, %v733
      %v3817 = vmul.f32 %v3814, %v734
      %v3818 = vmul.f32 %v3814, %v735
      %v3819 = vmul.f32 %v3814, %v736
      %v3820 = vmul.f32 %v3814, %v737
      %3826 = vrot.lane.b32.xlu0 %v3816, 38
      %v3827 = vpop.permute.xlu0 %3826
      %3828 = vrot.lane.b32.xlu0 %v3817, 38
      %v3829 = vpop.permute.xlu0 %3828
      %3830 = vrot.lane.b32.xlu0 %v3818, 38
      %v3831 = vpop.permute.xlu0 %3830
      %3832 = vrot.lane.b32.xlu0 %v3819, 38
      %v3833 = vpop.permute.xlu0 %3832
      %3834 = vrot.lane.b32.xlu0 %v3820, 38
      %v3835 = vpop.permute.xlu0 %3834
      %v3836 = vsel %vm3799, %v3827, %v3829
      %v3837 = vsel %vm3799, %v3829, %v3831
      %v3838 = vsel %vm3799, %v3831, %v3833
      %v3839 = vsel %vm3799, %v3833, %v3835
      %v3844 = vadd.f32 %v3808, %v3836
      %v3845 = vadd.f32 %v3809, %v3837
      %v3846 = vadd.f32 %v3810, %v3838
      %v3847 = vadd.f32 %v3811, %v3839
      %3848 = vset.pattern.permute.xlu0 44
      %3849 = vperm.xlu0 %3848, %v611
      %v3850 = vpop.permute.xlu0 %3849
      %v3852 = vmul.f32 %v3850, %v788
      %v3853 = vmul.f32 %v3850, %v789
      %v3854 = vmul.f32 %v3850, %v790
      %v3855 = vmul.f32 %v3850, %v791
      %v3856 = vmul.f32 %v3850, %v792
      %3862 = vrot.lane.b32.xlu0 %v3852, 38
      %v3863 = vpop.permute.xlu0 %3862
      %3864 = vrot.lane.b32.xlu0 %v3853, 38
      %v3865 = vpop.permute.xlu0 %3864
      %3866 = vrot.lane.b32.xlu0 %v3854, 38
      %v3867 = vpop.permute.xlu0 %3866
      %3868 = vrot.lane.b32.xlu0 %v3855, 38
      %v3869 = vpop.permute.xlu0 %3868
      %3870 = vrot.lane.b32.xlu0 %v3856, 38
      %v3871 = vpop.permute.xlu0 %3870
      %v3872 = vsel %vm3799, %v3863, %v3865
      %v3873 = vsel %vm3799, %v3865, %v3867
      %v3874 = vsel %vm3799, %v3867, %v3869
      %v3875 = vsel %vm3799, %v3869, %v3871
      %v3880 = vadd.f32 %v3844, %v3872
      %v3881 = vadd.f32 %v3845, %v3873
      %v3882 = vadd.f32 %v3846, %v3874
      %v3883 = vadd.f32 %v3847, %v3875
      %3884 = vset.pattern.permute.xlu0 45
      %3885 = vperm.xlu0 %3884, %v611
      %v3886 = vpop.permute.xlu0 %3885
      %v3888 = vmul.f32 %v3886, %v839
      %v3889 = vmul.f32 %v3886, %v840
      %v3890 = vmul.f32 %v3886, %v841
      %v3891 = vmul.f32 %v3886, %v842
      %v3892 = vmul.f32 %v3886, %v843
      %3898 = vrot.lane.b32.xlu0 %v3888, 38
      %v3899 = vpop.permute.xlu0 %3898
      %3900 = vrot.lane.b32.xlu0 %v3889, 38
      %v3901 = vpop.permute.xlu0 %3900
      %3902 = vrot.lane.b32.xlu0 %v3890, 38
      %v3903 = vpop.permute.xlu0 %3902
      %3904 = vrot.lane.b32.xlu0 %v3891, 38
      %v3905 = vpop.permute.xlu0 %3904
      %3906 = vrot.lane.b32.xlu0 %v3892, 38
      %v3907 = vpop.permute.xlu0 %3906
      %v3908 = vsel %vm3799, %v3899, %v3901
      %v3909 = vsel %vm3799, %v3901, %v3903
      %v3910 = vsel %vm3799, %v3903, %v3905
      %v3911 = vsel %vm3799, %v3905, %v3907
      %v3916 = vadd.f32 %v3880, %v3908
      %v3917 = vadd.f32 %v3881, %v3909
      %v3918 = vadd.f32 %v3882, %v3910
      %v3919 = vadd.f32 %v3883, %v3911
      %3920 = vset.pattern.permute.xlu0 46
      %3921 = vperm.xlu0 %3920, %v559
      %v3922 = vpop.permute.xlu0 %3921
      %v3924 = vmul.f32 %v3922, %v681
      %v3925 = vmul.f32 %v3922, %v682
      %v3926 = vmul.f32 %v3922, %v683
      %v3927 = vmul.f32 %v3922, %v684
      %v3928 = vmul.f32 %v3922, %v685
      %3934 = vrot.lane.b32.xlu0 %v3924, 37
      %v3935 = vpop.permute.xlu0 %3934
      %3936 = vrot.lane.b32.xlu0 %v3925, 37
      %v3937 = vpop.permute.xlu0 %3936
      %3938 = vrot.lane.b32.xlu0 %v3926, 37
      %v3939 = vpop.permute.xlu0 %3938
      %3940 = vrot.lane.b32.xlu0 %v3927, 37
      %v3941 = vpop.permute.xlu0 %3940
      %3942 = vrot.lane.b32.xlu0 %v3928, 37
      %v3943 = vpop.permute.xlu0 %3942
      %vm3944 = vcmask 302080
      %v3945 = vsel %vm3944, %v3935, %v3937
      %v3946 = vsel %vm3944, %v3937, %v3939
      %v3947 = vsel %vm3944, %v3939, %v3941
      %v3948 = vsel %vm3944, %v3941, %v3943
      %v3953 = vadd.f32 %v3916, %v3945
      %v3954 = vadd.f32 %v3917, %v3946
      %v3955 = vadd.f32 %v3918, %v3947
      %v3956 = vadd.f32 %v3919, %v3948
      %3957 = vset.pattern.permute.xlu0 47
      %3958 = vperm.xlu0 %3957, %v559
      %v3959 = vpop.permute.xlu0 %3958
      %v3961 = vmul.f32 %v3959, %v733
      %v3962 = vmul.f32 %v3959, %v734
      %v3963 = vmul.f32 %v3959, %v735
      %v3964 = vmul.f32 %v3959, %v736
      %v3965 = vmul.f32 %v3959, %v737
      %3971 = vrot.lane.b32.xlu0 %v3961, 37
      %v3972 = vpop.permute.xlu0 %3971
      %3973 = vrot.lane.b32.xlu0 %v3962, 37
      %v3974 = vpop.permute.xlu0 %3973
      %3975 = vrot.lane.b32.xlu0 %v3963, 37
      %v3976 = vpop.permute.xlu0 %3975
      %3977 = vrot.lane.b32.xlu0 %v3964, 37
      %v3978 = vpop.permute.xlu0 %3977
      %3979 = vrot.lane.b32.xlu0 %v3965, 37
      %v3980 = vpop.permute.xlu0 %3979
      %v3981 = vsel %vm3944, %v3972, %v3974
      %v3982 = vsel %vm3944, %v3974, %v3976
      %v3983 = vsel %vm3944, %v3976, %v3978
      %v3984 = vsel %vm3944, %v3978, %v3980
      %v3989 = vadd.f32 %v3953, %v3981
      %v3990 = vadd.f32 %v3954, %v3982
      %v3991 = vadd.f32 %v3955, %v3983
      %v3992 = vadd.f32 %v3956, %v3984
      %3993 = vset.pattern.permute.xlu0 46
      %3994 = vperm.xlu0 %3993, %v611
      %v3995 = vpop.permute.xlu0 %3994
      %v3997 = vmul.f32 %v3995, %v788
      %v3998 = vmul.f32 %v3995, %v789
      %v3999 = vmul.f32 %v3995, %v790
      %v4000 = vmul.f32 %v3995, %v791
      %v4001 = vmul.f32 %v3995, %v792
      %4007 = vrot.lane.b32.xlu0 %v3997, 37
      %v4008 = vpop.permute.xlu0 %4007
      %4009 = vrot.lane.b32.xlu0 %v3998, 37
      %v4010 = vpop.permute.xlu0 %4009
      %4011 = vrot.lane.b32.xlu0 %v3999, 37
      %v4012 = vpop.permute.xlu0 %4011
      %4013 = vrot.lane.b32.xlu0 %v4000, 37
      %v4014 = vpop.permute.xlu0 %4013
      %4015 = vrot.lane.b32.xlu0 %v4001, 37
      %v4016 = vpop.permute.xlu0 %4015
      %v4017 = vsel %vm3944, %v4008, %v4010
      %v4018 = vsel %vm3944, %v4010, %v4012
      %v4019 = vsel %vm3944, %v4012, %v4014
      %v4020 = vsel %vm3944, %v4014, %v4016
      %v4025 = vadd.f32 %v3989, %v4017
      %v4026 = vadd.f32 %v3990, %v4018
      %v4027 = vadd.f32 %v3991, %v4019
      %v4028 = vadd.f32 %v3992, %v4020
      %4029 = vset.pattern.permute.xlu0 47
      %4030 = vperm.xlu0 %4029, %v611
      %v4031 = vpop.permute.xlu0 %4030
      %v4033 = vmul.f32 %v4031, %v839
      %v4034 = vmul.f32 %v4031, %v840
      %v4035 = vmul.f32 %v4031, %v841
      %v4036 = vmul.f32 %v4031, %v842
      %v4037 = vmul.f32 %v4031, %v843
      %4043 = vrot.lane.b32.xlu0 %v4033, 37
      %v4044 = vpop.permute.xlu0 %4043
      %4045 = vrot.lane.b32.xlu0 %v4034, 37
      %v4046 = vpop.permute.xlu0 %4045
      %4047 = vrot.lane.b32.xlu0 %v4035, 37
      %v4048 = vpop.permute.xlu0 %4047
      %4049 = vrot.lane.b32.xlu0 %v4036, 37
      %v4050 = vpop.permute.xlu0 %4049
      %4051 = vrot.lane.b32.xlu0 %v4037, 37
      %v4052 = vpop.permute.xlu0 %4051
      %v4053 = vsel %vm3944, %v4044, %v4046
      %v4054 = vsel %vm3944, %v4046, %v4048
      %v4055 = vsel %vm3944, %v4048, %v4050
      %v4056 = vsel %vm3944, %v4050, %v4052
      %v4061 = vadd.f32 %v4025, %v4053
      %v4062 = vadd.f32 %v4026, %v4054
      %v4063 = vadd.f32 %v4027, %v4055
      %v4064 = vadd.f32 %v4028, %v4056
      %4065 = vset.pattern.permute.xlu0 48
      %4066 = vperm.xlu0 %4065, %v559
      %v4067 = vpop.permute.xlu0 %4066
      %v4069 = vmul.f32 %v4067, %v681
      %v4070 = vmul.f32 %v4067, %v682
      %v4071 = vmul.f32 %v4067, %v683
      %v4072 = vmul.f32 %v4067, %v684
      %v4073 = vmul.f32 %v4067, %v685
      %4079 = vrot.lane.b32.xlu0 %v4069, 36
      %v4080 = vpop.permute.xlu0 %4079
      %4081 = vrot.lane.b32.xlu0 %v4070, 36
      %v4082 = vpop.permute.xlu0 %4081
      %4083 = vrot.lane.b32.xlu0 %v4071, 36
      %v4084 = vpop.permute.xlu0 %4083
      %4085 = vrot.lane.b32.xlu0 %v4072, 36
      %v4086 = vpop.permute.xlu0 %4085
      %4087 = vrot.lane.b32.xlu0 %v4073, 36
      %v4088 = vpop.permute.xlu0 %4087
      %vm4089 = vcmask 293888
      %v4090 = vsel %vm4089, %v4080, %v4082
      %v4091 = vsel %vm4089, %v4082, %v4084
      %v4092 = vsel %vm4089, %v4084, %v4086
      %v4093 = vsel %vm4089, %v4086, %v4088
      %v4098 = vadd.f32 %v4061, %v4090
      %v4099 = vadd.f32 %v4062, %v4091
      %v4100 = vadd.f32 %v4063, %v4092
      %v4101 = vadd.f32 %v4064, %v4093
      %4102 = vset.pattern.permute.xlu0 49
      %4103 = vperm.xlu0 %4102, %v559
      %v4104 = vpop.permute.xlu0 %4103
      %v4106 = vmul.f32 %v4104, %v733
      %v4107 = vmul.f32 %v4104, %v734
      %v4108 = vmul.f32 %v4104, %v735
      %v4109 = vmul.f32 %v4104, %v736
      %v4110 = vmul.f32 %v4104, %v737
      %4116 = vrot.lane.b32.xlu0 %v4106, 36
      %v4117 = vpop.permute.xlu0 %4116
      %4118 = vrot.lane.b32.xlu0 %v4107, 36
      %v4119 = vpop.permute.xlu0 %4118
      %4120 = vrot.lane.b32.xlu0 %v4108, 36
      %v4121 = vpop.permute.xlu0 %4120
      %4122 = vrot.lane.b32.xlu0 %v4109, 36
      %v4123 = vpop.permute.xlu0 %4122
      %4124 = vrot.lane.b32.xlu0 %v4110, 36
      %v4125 = vpop.permute.xlu0 %4124
      %v4126 = vsel %vm4089, %v4117, %v4119
      %v4127 = vsel %vm4089, %v4119, %v4121
      %v4128 = vsel %vm4089, %v4121, %v4123
      %v4129 = vsel %vm4089, %v4123, %v4125
      %v4134 = vadd.f32 %v4098, %v4126
      %v4135 = vadd.f32 %v4099, %v4127
      %v4136 = vadd.f32 %v4100, %v4128
      %v4137 = vadd.f32 %v4101, %v4129
      %4138 = vset.pattern.permute.xlu0 48
      %4139 = vperm.xlu0 %4138, %v611
      %v4140 = vpop.permute.xlu0 %4139
      %v4142 = vmul.f32 %v4140, %v788
      %v4143 = vmul.f32 %v4140, %v789
      %v4144 = vmul.f32 %v4140, %v790
      %v4145 = vmul.f32 %v4140, %v791
      %v4146 = vmul.f32 %v4140, %v792
      %4152 = vrot.lane.b32.xlu0 %v4142, 36
      %v4153 = vpop.permute.xlu0 %4152
      %4154 = vrot.lane.b32.xlu0 %v4143, 36
      %v4155 = vpop.permute.xlu0 %4154
      %4156 = vrot.lane.b32.xlu0 %v4144, 36
      %v4157 = vpop.permute.xlu0 %4156
      %4158 = vrot.lane.b32.xlu0 %v4145, 36
      %v4159 = vpop.permute.xlu0 %4158
      %4160 = vrot.lane.b32.xlu0 %v4146, 36
      %v4161 = vpop.permute.xlu0 %4160
      %v4162 = vsel %vm4089, %v4153, %v4155
      %v4163 = vsel %vm4089, %v4155, %v4157
      %v4164 = vsel %vm4089, %v4157, %v4159
      %v4165 = vsel %vm4089, %v4159, %v4161
      %v4170 = vadd.f32 %v4134, %v4162
      %v4171 = vadd.f32 %v4135, %v4163
      %v4172 = vadd.f32 %v4136, %v4164
      %v4173 = vadd.f32 %v4137, %v4165
      %4174 = vset.pattern.permute.xlu0 49
      %4175 = vperm.xlu0 %4174, %v611
      %v4176 = vpop.permute.xlu0 %4175
      %v4178 = vmul.f32 %v4176, %v839
      %v4179 = vmul.f32 %v4176, %v840
      %v4180 = vmul.f32 %v4176, %v841
      %v4181 = vmul.f32 %v4176, %v842
      %v4182 = vmul.f32 %v4176, %v843
      %4188 = vrot.lane.b32.xlu0 %v4178, 36
      %v4189 = vpop.permute.xlu0 %4188
      %4190 = vrot.lane.b32.xlu0 %v4179, 36
      %v4191 = vpop.permute.xlu0 %4190
      %4192 = vrot.lane.b32.xlu0 %v4180, 36
      %v4193 = vpop.permute.xlu0 %4192
      %4194 = vrot.lane.b32.xlu0 %v4181, 36
      %v4195 = vpop.permute.xlu0 %4194
      %4196 = vrot.lane.b32.xlu0 %v4182, 36
      %v4197 = vpop.permute.xlu0 %4196
      %v4198 = vsel %vm4089, %v4189, %v4191
      %v4199 = vsel %vm4089, %v4191, %v4193
      %v4200 = vsel %vm4089, %v4193, %v4195
      %v4201 = vsel %vm4089, %v4195, %v4197
      %v4206 = vadd.f32 %v4170, %v4198
      %v4207 = vadd.f32 %v4171, %v4199
      %v4208 = vadd.f32 %v4172, %v4200
      %v4209 = vadd.f32 %v4173, %v4201
      %v4210 = vld [vmem:[%s4] sm:$0xf]
      %4212 = vset.pattern.permute.xlu0 0
      %4213 = vperm.xlu0 %4212, %v4210
      %v4214 = vpop.permute.xlu0 %4213
      %v4216 = vadd.f32 %v4206, %v4214
      %v4217 = vadd.f32 %v4207, %v4214
      %v4218 = vadd.f32 %v4208, %v4214
      %v4219 = vadd.f32 %v4209, %v4214
      %v4220 = vmax.f32 %v4216, 0.0
      %v4221 = vmax.f32 %v4217, 0.0
      %v4222 = vmax.f32 %v4218, 0.0
      %v4223 = vmax.f32 %v4219, 0.0
      %v4224 = vld [vmem:[%s7] sm:$0xf]
      %v4226 = vperm.slane %v4224, 0
      %v4227 = vperm.slane %v4224, 1
      %v4228 = vperm.slane %v4224, 2
      %v4229 = vperm.slane %v4224, 3
      %v4234 = vmul.f32 %v4220, %v4226
      %v4235 = vmul.f32 %v4221, %v4227
      %v4236 = vmul.f32 %v4222, %v4228
      %v4237 = vmul.f32 %v4223, %v4229
      %v4242 = vrot.slane %v4235, 4
      %v4243 = vrot.slane %v4237, 4
      %vm4244 = vcmask 1043456
      %v4245 = vsel %vm4244, %v4234, %v4242
      %v4246 = vsel %vm4244, %v4236, %v4243
      %4249 = vst [vmem:[#allocation4] sm:$0xff] %v4245
      %4250 = vst [vmem:[#allocation4 + $0x8] sm:$0xff] %v4246
      %v4251 = vld [vmem:[%s5] sm:$0xf]
      %v4252 = vld [vmem:[#allocation4] sm:$0xff]
      %v4253 = vld [vmem:[#allocation4 + $0x8] sm:$0xf]
      %4255 = vset.pattern.permute.xlu0 0
      %4256 = vperm.xlu0 %4255, %v4251
      %v4257 = vpop.permute.xlu0 %4256
      %v4261 = vperm.slane %v4252, 0
      %v4262 = vperm.slane %v4252, 4
      %v4263 = vperm.slane %v4253, 0
      %v4267 = vperm.slane %v4261, 0
      %v4268 = vperm.slane %v4262, 0
      %v4269 = vperm.slane %v4263, 0
      %v4270 = vmul.f32 %v4257, %v4267
      %v4271 = vmul.f32 %v4257, %v4268
      %v4272 = vmul.f32 %v4257, %v4269
      %v4273 = vadd.f32 %v4270, 0.0
      %v4274 = vadd.f32 %v4271, 0.0
      %v4275 = vadd.f32 %v4272, 0.0
      %4276 = vset.pattern.permute.xlu0 1
      %4277 = vperm.xlu0 %4276, %v4251
      %v4278 = vpop.permute.xlu0 %4277
      %v4280 = vperm.slane %v4252, 1
      %v4281 = vperm.slane %v4252, 5
      %v4282 = vperm.slane %v4253, 1
      %v4286 = vperm.slane %v4280, 1
      %v4287 = vperm.slane %v4281, 1
      %v4288 = vperm.slane %v4282, 1
      %v4289 = vmul.f32 %v4278, %v4286
      %v4290 = vmul.f32 %v4278, %v4287
      %v4291 = vmul.f32 %v4278, %v4288
      %v4292 = vadd.f32 %v4273, %v4289
      %v4293 = vadd.f32 %v4274, %v4290
      %v4294 = vadd.f32 %v4275, %v4291
      %4295 = vset.pattern.permute.xlu0 2
      %4296 = vperm.xlu0 %4295, %v4251
      %v4297 = vpop.permute.xlu0 %4296
      %v4299 = vperm.slane %v4252, 2
      %v4300 = vperm.slane %v4252, 6
      %v4301 = vperm.slane %v4253, 2
      %v4305 = vperm.slane %v4299, 2
      %v4306 = vperm.slane %v4300, 2
      %v4307 = vperm.slane %v4301, 2
      %v4308 = vmul.f32 %v4297, %v4305
      %v4309 = vmul.f32 %v4297, %v4306
      %v4310 = vmul.f32 %v4297, %v4307
      %v4311 = vadd.f32 %v4292, %v4308
      %v4312 = vadd.f32 %v4293, %v4309
      %v4313 = vadd.f32 %v4294, %v4310
      %4314 = vset.pattern.permute.xlu0 3
      %4315 = vperm.xlu0 %4314, %v4251
      %v4316 = vpop.permute.xlu0 %4315
      %v4318 = vperm.slane %v4252, 3
      %v4319 = vperm.slane %v4252, 7
      %v4320 = vperm.slane %v4253, 3
      %v4324 = vperm.slane %v4318, 3
      %v4325 = vperm.slane %v4319, 3
      %v4326 = vperm.slane %v4320, 3
      %v4327 = vmul.f32 %v4316, %v4324
      %v4328 = vmul.f32 %v4316, %v4325
      %v4329 = vmul.f32 %v4316, %v4326
      %v4330 = vadd.f32 %v4311, %v4327
      %v4331 = vadd.f32 %v4312, %v4328
      %v4332 = vadd.f32 %v4313, %v4329
      %v4333 = vld [vmem:[#allocation4] sm:$0xff]
      %v4334 = vld [vmem:[#allocation4 + $0x8] sm:$0xff]
      %4335 = vset.pattern.permute.xlu0 4
      %4336 = vperm.xlu0 %4335, %v4251
      %v4337 = vpop.permute.xlu0 %4336
      %v4341 = vperm.slane %v4333, 0
      %v4342 = vperm.slane %v4333, 4
      %v4343 = vperm.slane %v4334, 0
      %v4344 = vperm.slane %v4334, 4
      %v4349 = vperm.slane %v4341, 0
      %v4350 = vperm.slane %v4342, 0
      %v4351 = vperm.slane %v4343, 0
      %v4352 = vperm.slane %v4344, 0
      %v4353 = vmul.f32 %v4337, %v4349
      %v4354 = vmul.f32 %v4337, %v4350
      %v4355 = vmul.f32 %v4337, %v4351
      %v4356 = vmul.f32 %v4337, %v4352
      %4361 = vrot.lane.b32.xlu0 %v4353, 127
      %v4362 = vpop.permute.xlu0 %4361
      %4363 = vrot.lane.b32.xlu0 %v4354, 127
      %v4364 = vpop.permute.xlu0 %4363
      %4365 = vrot.lane.b32.xlu0 %v4355, 127
      %v4366 = vpop.permute.xlu0 %4365
      %4367 = vrot.lane.b32.xlu0 %v4356, 127
      %v4368 = vpop.permute.xlu0 %4367
      %v4369 = vsel %vm706, %v4362, %v4364
      %v4370 = vsel %vm706, %v4364, %v4366
      %v4371 = vsel %vm706, %v4366, %v4368
      %v4375 = vadd.f32 %v4330, %v4369
      %v4376 = vadd.f32 %v4331, %v4370
      %v4377 = vadd.f32 %v4332, %v4371
      %4378 = vset.pattern.permute.xlu0 5
      %4379 = vperm.xlu0 %4378, %v4251
      %v4380 = vpop.permute.xlu0 %4379
      %v4382 = vperm.slane %v4333, 1
      %v4383 = vperm.slane %v4333, 5
      %v4384 = vperm.slane %v4334, 1
      %v4385 = vperm.slane %v4334, 5
      %v4390 = vperm.slane %v4382, 1
      %v4391 = vperm.slane %v4383, 1
      %v4392 = vperm.slane %v4384, 1
      %v4393 = vperm.slane %v4385, 1
      %v4394 = vmul.f32 %v4380, %v4390
      %v4395 = vmul.f32 %v4380, %v4391
      %v4396 = vmul.f32 %v4380, %v4392
      %v4397 = vmul.f32 %v4380, %v4393
      %4402 = vrot.lane.b32.xlu0 %v4394, 127
      %v4403 = vpop.permute.xlu0 %4402
      %4404 = vrot.lane.b32.xlu0 %v4395, 127
      %v4405 = vpop.permute.xlu0 %4404
      %4406 = vrot.lane.b32.xlu0 %v4396, 127
      %v4407 = vpop.permute.xlu0 %4406
      %4408 = vrot.lane.b32.xlu0 %v4397, 127
      %v4409 = vpop.permute.xlu0 %4408
      %v4410 = vsel %vm706, %v4403, %v4405
      %v4411 = vsel %vm706, %v4405, %v4407
      %v4412 = vsel %vm706, %v4407, %v4409
      %v4416 = vadd.f32 %v4375, %v4410
      %v4417 = vadd.f32 %v4376, %v4411
      %v4418 = vadd.f32 %v4377, %v4412
      %4419 = vset.pattern.permute.xlu0 6
      %4420 = vperm.xlu0 %4419, %v4251
      %v4421 = vpop.permute.xlu0 %4420
      %v4423 = vperm.slane %v4333, 2
      %v4424 = vperm.slane %v4333, 6
      %v4425 = vperm.slane %v4334, 2
      %v4426 = vperm.slane %v4334, 6
      %v4431 = vperm.slane %v4423, 2
      %v4432 = vperm.slane %v4424, 2
      %v4433 = vperm.slane %v4425, 2
      %v4434 = vperm.slane %v4426, 2
      %v4435 = vmul.f32 %v4421, %v4431
      %v4436 = vmul.f32 %v4421, %v4432
      %v4437 = vmul.f32 %v4421, %v4433
      %v4438 = vmul.f32 %v4421, %v4434
      %4443 = vrot.lane.b32.xlu0 %v4435, 127
      %v4444 = vpop.permute.xlu0 %4443
      %4445 = vrot.lane.b32.xlu0 %v4436, 127
      %v4446 = vpop.permute.xlu0 %4445
      %4447 = vrot.lane.b32.xlu0 %v4437, 127
      %v4448 = vpop.permute.xlu0 %4447
      %4449 = vrot.lane.b32.xlu0 %v4438, 127
      %v4450 = vpop.permute.xlu0 %4449
      %v4451 = vsel %vm706, %v4444, %v4446
      %v4452 = vsel %vm706, %v4446, %v4448
      %v4453 = vsel %vm706, %v4448, %v4450
      %v4457 = vadd.f32 %v4416, %v4451
      %v4458 = vadd.f32 %v4417, %v4452
      %v4459 = vadd.f32 %v4418, %v4453
      %4460 = vset.pattern.permute.xlu0 7
      %4461 = vperm.xlu0 %4460, %v4251
      %v4462 = vpop.permute.xlu0 %4461
      %v4464 = vperm.slane %v4333, 3
      %v4465 = vperm.slane %v4333, 7
      %v4466 = vperm.slane %v4334, 3
      %v4467 = vperm.slane %v4334, 7
      %v4472 = vperm.slane %v4464, 3
      %v4473 = vperm.slane %v4465, 3
      %v4474 = vperm.slane %v4466, 3
      %v4475 = vperm.slane %v4467, 3
      %v4476 = vmul.f32 %v4462, %v4472
      %v4477 = vmul.f32 %v4462, %v4473
      %v4478 = vmul.f32 %v4462, %v4474
      %v4479 = vmul.f32 %v4462, %v4475
      %4484 = vrot.lane.b32.xlu0 %v4476, 127
      %v4485 = vpop.permute.xlu0 %4484
      %4486 = vrot.lane.b32.xlu0 %v4477, 127
      %v4487 = vpop.permute.xlu0 %4486
      %4488 = vrot.lane.b32.xlu0 %v4478, 127
      %v4489 = vpop.permute.xlu0 %4488
      %4490 = vrot.lane.b32.xlu0 %v4479, 127
      %v4491 = vpop.permute.xlu0 %4490
      %v4492 = vsel %vm706, %v4485, %v4487
      %v4493 = vsel %vm706, %v4487, %v4489
      %v4494 = vsel %vm706, %v4489, %v4491
      %v4498 = vadd.f32 %v4457, %v4492
      %v4499 = vadd.f32 %v4458, %v4493
      %v4500 = vadd.f32 %v4459, %v4494
      %4501 = vset.pattern.permute.xlu0 8
      %4502 = vperm.xlu0 %4501, %v4251
      %v4503 = vpop.permute.xlu0 %4502
      %v4505 = vmul.f32 %v4503, %v4349
      %v4506 = vmul.f32 %v4503, %v4350
      %v4507 = vmul.f32 %v4503, %v4351
      %v4508 = vmul.f32 %v4503, %v4352
      %4513 = vrot.lane.b32.xlu0 %v4505, 126
      %v4514 = vpop.permute.xlu0 %4513
      %4515 = vrot.lane.b32.xlu0 %v4506, 126
      %v4516 = vpop.permute.xlu0 %4515
      %4517 = vrot.lane.b32.xlu0 %v4507, 126
      %v4518 = vpop.permute.xlu0 %4517
      %4519 = vrot.lane.b32.xlu0 %v4508, 126
      %v4520 = vpop.permute.xlu0 %4519
      %v4521 = vsel %vm900, %v4514, %v4516
      %v4522 = vsel %vm900, %v4516, %v4518
      %v4523 = vsel %vm900, %v4518, %v4520
      %v4527 = vadd.f32 %v4498, %v4521
      %v4528 = vadd.f32 %v4499, %v4522
      %v4529 = vadd.f32 %v4500, %v4523
      %4530 = vset.pattern.permute.xlu0 9
      %4531 = vperm.xlu0 %4530, %v4251
      %v4532 = vpop.permute.xlu0 %4531
      %v4534 = vmul.f32 %v4532, %v4390
      %v4535 = vmul.f32 %v4532, %v4391
      %v4536 = vmul.f32 %v4532, %v4392
      %v4537 = vmul.f32 %v4532, %v4393
      %4542 = vrot.lane.b32.xlu0 %v4534, 126
      %v4543 = vpop.permute.xlu0 %4542
      %4544 = vrot.lane.b32.xlu0 %v4535, 126
      %v4545 = vpop.permute.xlu0 %4544
      %4546 = vrot.lane.b32.xlu0 %v4536, 126
      %v4547 = vpop.permute.xlu0 %4546
      %4548 = vrot.lane.b32.xlu0 %v4537, 126
      %v4549 = vpop.permute.xlu0 %4548
      %v4550 = vsel %vm900, %v4543, %v4545
      %v4551 = vsel %vm900, %v4545, %v4547
      %v4552 = vsel %vm900, %v4547, %v4549
      %v4556 = vadd.f32 %v4527, %v4550
      %v4557 = vadd.f32 %v4528, %v4551
      %v4558 = vadd.f32 %v4529, %v4552
      %4559 = vset.pattern.permute.xlu0 10
      %4560 = vperm.xlu0 %4559, %v4251
      %v4561 = vpop.permute.xlu0 %4560
      %v4563 = vmul.f32 %v4561, %v4431
      %v4564 = vmul.f32 %v4561, %v4432
      %v4565 = vmul.f32 %v4561, %v4433
      %v4566 = vmul.f32 %v4561, %v4434
      %4571 = vrot.lane.b32.xlu0 %v4563, 126
      %v4572 = vpop.permute.xlu0 %4571
      %4573 = vrot.lane.b32.xlu0 %v4564, 126
      %v4574 = vpop.permute.xlu0 %4573
      %4575 = vrot.lane.b32.xlu0 %v4565, 126
      %v4576 = vpop.permute.xlu0 %4575
      %4577 = vrot.lane.b32.xlu0 %v4566, 126
      %v4578 = vpop.permute.xlu0 %4577
      %v4579 = vsel %vm900, %v4572, %v4574
      %v4580 = vsel %vm900, %v4574, %v4576
      %v4581 = vsel %vm900, %v4576, %v4578
      %v4585 = vadd.f32 %v4556, %v4579
      %v4586 = vadd.f32 %v4557, %v4580
      %v4587 = vadd.f32 %v4558, %v4581
      %4588 = vset.pattern.permute.xlu0 11
      %4589 = vperm.xlu0 %4588, %v4251
      %v4590 = vpop.permute.xlu0 %4589
      %v4592 = vmul.f32 %v4590, %v4472
      %v4593 = vmul.f32 %v4590, %v4473
      %v4594 = vmul.f32 %v4590, %v4474
      %v4595 = vmul.f32 %v4590, %v4475
      %4600 = vrot.lane.b32.xlu0 %v4592, 126
      %v4601 = vpop.permute.xlu0 %4600
      %4602 = vrot.lane.b32.xlu0 %v4593, 126
      %v4603 = vpop.permute.xlu0 %4602
      %4604 = vrot.lane.b32.xlu0 %v4594, 126
      %v4605 = vpop.permute.xlu0 %4604
      %4606 = vrot.lane.b32.xlu0 %v4595, 126
      %v4607 = vpop.permute.xlu0 %4606
      %v4608 = vsel %vm900, %v4601, %v4603
      %v4609 = vsel %vm900, %v4603, %v4605
      %v4610 = vsel %vm900, %v4605, %v4607
      %v4614 = vadd.f32 %v4585, %v4608
      %v4615 = vadd.f32 %v4586, %v4609
      %v4616 = vadd.f32 %v4587, %v4610
      %4617 = vset.pattern.permute.xlu0 12
      %4618 = vperm.xlu0 %4617, %v4251
      %v4619 = vpop.permute.xlu0 %4618
      %v4621 = vmul.f32 %v4619, %v4349
      %v4622 = vmul.f32 %v4619, %v4350
      %v4623 = vmul.f32 %v4619, %v4351
      %v4624 = vmul.f32 %v4619, %v4352
      %4629 = vrot.lane.b32.xlu0 %v4621, 106
      %v4630 = vpop.permute.xlu0 %4629
      %4631 = vrot.lane.b32.xlu0 %v4622, 106
      %v4632 = vpop.permute.xlu0 %4631
      %4633 = vrot.lane.b32.xlu0 %v4623, 106
      %v4634 = vpop.permute.xlu0 %4633
      %4635 = vrot.lane.b32.xlu0 %v4624, 106
      %v4636 = vpop.permute.xlu0 %4635
      %v4637 = vsel %vm1335, %v4630, %v4632
      %v4638 = vsel %vm1335, %v4632, %v4634
      %v4639 = vsel %vm1335, %v4634, %v4636
      %v4643 = vadd.f32 %v4614, %v4637
      %v4644 = vadd.f32 %v4615, %v4638
      %v4645 = vadd.f32 %v4616, %v4639
      %4646 = vset.pattern.permute.xlu0 13
      %4647 = vperm.xlu0 %4646, %v4251
      %v4648 = vpop.permute.xlu0 %4647
      %v4650 = vmul.f32 %v4648, %v4390
      %v4651 = vmul.f32 %v4648, %v4391
      %v4652 = vmul.f32 %v4648, %v4392
      %v4653 = vmul.f32 %v4648, %v4393
      %4658 = vrot.lane.b32.xlu0 %v4650, 106
      %v4659 = vpop.permute.xlu0 %4658
      %4660 = vrot.lane.b32.xlu0 %v4651, 106
      %v4661 = vpop.permute.xlu0 %4660
      %4662 = vrot.lane.b32.xlu0 %v4652, 106
      %v4663 = vpop.permute.xlu0 %4662
      %4664 = vrot.lane.b32.xlu0 %v4653, 106
      %v4665 = vpop.permute.xlu0 %4664
      %v4666 = vsel %vm1335, %v4659, %v4661
      %v4667 = vsel %vm1335, %v4661, %v4663
      %v4668 = vsel %vm1335, %v4663, %v4665
      %v4672 = vadd.f32 %v4643, %v4666
      %v4673 = vadd.f32 %v4644, %v4667
      %v4674 = vadd.f32 %v4645, %v4668
      %4675 = vset.pattern.permute.xlu0 14
      %4676 = vperm.xlu0 %4675, %v4251
      %v4677 = vpop.permute.xlu0 %4676
      %v4679 = vmul.f32 %v4677, %v4431
      %v4680 = vmul.f32 %v4677, %v4432
      %v4681 = vmul.f32 %v4677, %v4433
      %v4682 = vmul.f32 %v4677, %v4434
      %4687 = vrot.lane.b32.xlu0 %v4679, 106
      %v4688 = vpop.permute.xlu0 %4687
      %4689 = vrot.lane.b32.xlu0 %v4680, 106
      %v4690 = vpop.permute.xlu0 %4689
      %4691 = vrot.lane.b32.xlu0 %v4681, 106
      %v4692 = vpop.permute.xlu0 %4691
      %4693 = vrot.lane.b32.xlu0 %v4682, 106
      %v4694 = vpop.permute.xlu0 %4693
      %v4695 = vsel %vm1335, %v4688, %v4690
      %v4696 = vsel %vm1335, %v4690, %v4692
      %v4697 = vsel %vm1335, %v4692, %v4694
      %v4701 = vadd.f32 %v4672, %v4695
      %v4702 = vadd.f32 %v4673, %v4696
      %v4703 = vadd.f32 %v4674, %v4697
      %4704 = vset.pattern.permute.xlu0 15
      %4705 = vperm.xlu0 %4704, %v4251
      %v4706 = vpop.permute.xlu0 %4705
      %v4708 = vmul.f32 %v4706, %v4472
      %v4709 = vmul.f32 %v4706, %v4473
      %v4710 = vmul.f32 %v4706, %v4474
      %v4711 = vmul.f32 %v4706, %v4475
      %4716 = vrot.lane.b32.xlu0 %v4708, 106
      %v4717 = vpop.permute.xlu0 %4716
      %4718 = vrot.lane.b32.xlu0 %v4709, 106
      %v4719 = vpop.permute.xlu0 %4718
      %4720 = vrot.lane.b32.xlu0 %v4710, 106
      %v4721 = vpop.permute.xlu0 %4720
      %4722 = vrot.lane.b32.xlu0 %v4711, 106
      %v4723 = vpop.permute.xlu0 %4722
      %v4724 = vsel %vm1335, %v4717, %v4719
      %v4725 = vsel %vm1335, %v4719, %v4721
      %v4726 = vsel %vm1335, %v4721, %v4723
      %v4730 = vadd.f32 %v4701, %v4724
      %v4731 = vadd.f32 %v4702, %v4725
      %v4732 = vadd.f32 %v4703, %v4726
      %4733 = vset.pattern.permute.xlu0 16
      %4734 = vperm.xlu0 %4733, %v4251
      %v4735 = vpop.permute.xlu0 %4734
      %v4737 = vmul.f32 %v4735, %v4349
      %v4738 = vmul.f32 %v4735, %v4350
      %v4739 = vmul.f32 %v4735, %v4351
      %v4740 = vmul.f32 %v4735, %v4352
      %4745 = vrot.lane.b32.xlu0 %v4737, 105
      %v4746 = vpop.permute.xlu0 %4745
      %4747 = vrot.lane.b32.xlu0 %v4738, 105
      %v4748 = vpop.permute.xlu0 %4747
      %4749 = vrot.lane.b32.xlu0 %v4739, 105
      %v4750 = vpop.permute.xlu0 %4749
      %4751 = vrot.lane.b32.xlu0 %v4740, 105
      %v4752 = vpop.permute.xlu0 %4751
      %v4753 = vsel %vm1480, %v4746, %v4748
      %v4754 = vsel %vm1480, %v4748, %v4750
      %v4755 = vsel %vm1480, %v4750, %v4752
      %v4759 = vadd.f32 %v4730, %v4753
      %v4760 = vadd.f32 %v4731, %v4754
      %v4761 = vadd.f32 %v4732, %v4755
      %4762 = vset.pattern.permute.xlu0 17
      %4763 = vperm.xlu0 %4762, %v4251
      %v4764 = vpop.permute.xlu0 %4763
      %v4766 = vmul.f32 %v4764, %v4390
      %v4767 = vmul.f32 %v4764, %v4391
      %v4768 = vmul.f32 %v4764, %v4392
      %v4769 = vmul.f32 %v4764, %v4393
      %4774 = vrot.lane.b32.xlu0 %v4766, 105
      %v4775 = vpop.permute.xlu0 %4774
      %4776 = vrot.lane.b32.xlu0 %v4767, 105
      %v4777 = vpop.permute.xlu0 %4776
      %4778 = vrot.lane.b32.xlu0 %v4768, 105
      %v4779 = vpop.permute.xlu0 %4778
      %4780 = vrot.lane.b32.xlu0 %v4769, 105
      %v4781 = vpop.permute.xlu0 %4780
      %v4782 = vsel %vm1480, %v4775, %v4777
      %v4783 = vsel %vm1480, %v4777, %v4779
      %v4784 = vsel %vm1480, %v4779, %v4781
      %v4788 = vadd.f32 %v4759, %v4782
      %v4789 = vadd.f32 %v4760, %v4783
      %v4790 = vadd.f32 %v4761, %v4784
      %4791 = vset.pattern.permute.xlu0 18
      %4792 = vperm.xlu0 %4791, %v4251
      %v4793 = vpop.permute.xlu0 %4792
      %v4795 = vmul.f32 %v4793, %v4431
      %v4796 = vmul.f32 %v4793, %v4432
      %v4797 = vmul.f32 %v4793, %v4433
      %v4798 = vmul.f32 %v4793, %v4434
      %4803 = vrot.lane.b32.xlu0 %v4795, 105
      %v4804 = vpop.permute.xlu0 %4803
      %4805 = vrot.lane.b32.xlu0 %v4796, 105
      %v4806 = vpop.permute.xlu0 %4805
      %4807 = vrot.lane.b32.xlu0 %v4797, 105
      %v4808 = vpop.permute.xlu0 %4807
      %4809 = vrot.lane.b32.xlu0 %v4798, 105
      %v4810 = vpop.permute.xlu0 %4809
      %v4811 = vsel %vm1480, %v4804, %v4806
      %v4812 = vsel %vm1480, %v4806, %v4808
      %v4813 = vsel %vm1480, %v4808, %v4810
      %v4817 = vadd.f32 %v4788, %v4811
      %v4818 = vadd.f32 %v4789, %v4812
      %v4819 = vadd.f32 %v4790, %v4813
      %4820 = vset.pattern.permute.xlu0 19
      %4821 = vperm.xlu0 %4820, %v4251
      %v4822 = vpop.permute.xlu0 %4821
      %v4824 = vmul.f32 %v4822, %v4472
      %v4825 = vmul.f32 %v4822, %v4473
      %v4826 = vmul.f32 %v4822, %v4474
      %v4827 = vmul.f32 %v4822, %v4475
      %4832 = vrot.lane.b32.xlu0 %v4824, 105
      %v4833 = vpop.permute.xlu0 %4832
      %4834 = vrot.lane.b32.xlu0 %v4825, 105
      %v4835 = vpop.permute.xlu0 %4834
      %4836 = vrot.lane.b32.xlu0 %v4826, 105
      %v4837 = vpop.permute.xlu0 %4836
      %4838 = vrot.lane.b32.xlu0 %v4827, 105
      %v4839 = vpop.permute.xlu0 %4838
      %v4840 = vsel %vm1480, %v4833, %v4835
      %v4841 = vsel %vm1480, %v4835, %v4837
      %v4842 = vsel %vm1480, %v4837, %v4839
      %v4846 = vadd.f32 %v4817, %v4840
      %v4847 = vadd.f32 %v4818, %v4841
      %v4848 = vadd.f32 %v4819, %v4842
      %4849 = vset.pattern.permute.xlu0 20
      %4850 = vperm.xlu0 %4849, %v4251
      %v4851 = vpop.permute.xlu0 %4850
      %v4853 = vmul.f32 %v4851, %v4349
      %v4854 = vmul.f32 %v4851, %v4350
      %v4855 = vmul.f32 %v4851, %v4351
      %v4856 = vmul.f32 %v4851, %v4352
      %4861 = vrot.lane.b32.xlu0 %v4853, 104
      %v4862 = vpop.permute.xlu0 %4861
      %4863 = vrot.lane.b32.xlu0 %v4854, 104
      %v4864 = vpop.permute.xlu0 %4863
      %4865 = vrot.lane.b32.xlu0 %v4855, 104
      %v4866 = vpop.permute.xlu0 %4865
      %4867 = vrot.lane.b32.xlu0 %v4856, 104
      %v4868 = vpop.permute.xlu0 %4867
      %v4869 = vsel %vm1625, %v4862, %v4864
      %v4870 = vsel %vm1625, %v4864, %v4866
      %v4871 = vsel %vm1625, %v4866, %v4868
      %v4875 = vadd.f32 %v4846, %v4869
      %v4876 = vadd.f32 %v4847, %v4870
      %v4877 = vadd.f32 %v4848, %v4871
      %4878 = vset.pattern.permute.xlu0 21
      %4879 = vperm.xlu0 %4878, %v4251
      %v4880 = vpop.permute.xlu0 %4879
      %v4882 = vmul.f32 %v4880, %v4390
      %v4883 = vmul.f32 %v4880, %v4391
      %v4884 = vmul.f32 %v4880, %v4392
      %v4885 = vmul.f32 %v4880, %v4393
      %4890 = vrot.lane.b32.xlu0 %v4882, 104
      %v4891 = vpop.permute.xlu0 %4890
      %4892 = vrot.lane.b32.xlu0 %v4883, 104
      %v4893 = vpop.permute.xlu0 %4892
      %4894 = vrot.lane.b32.xlu0 %v4884, 104
      %v4895 = vpop.permute.xlu0 %4894
      %4896 = vrot.lane.b32.xlu0 %v4885, 104
      %v4897 = vpop.permute.xlu0 %4896
      %v4898 = vsel %vm1625, %v4891, %v4893
      %v4899 = vsel %vm1625, %v4893, %v4895
      %v4900 = vsel %vm1625, %v4895, %v4897
      %v4904 = vadd.f32 %v4875, %v4898
      %v4905 = vadd.f32 %v4876, %v4899
      %v4906 = vadd.f32 %v4877, %v4900
      %4907 = vset.pattern.permute.xlu0 22
      %4908 = vperm.xlu0 %4907, %v4251
      %v4909 = vpop.permute.xlu0 %4908
      %v4911 = vmul.f32 %v4909, %v4431
      %v4912 = vmul.f32 %v4909, %v4432
      %v4913 = vmul.f32 %v4909, %v4433
      %v4914 = vmul.f32 %v4909, %v4434
      %4919 = vrot.lane.b32.xlu0 %v4911, 104
      %v4920 = vpop.permute.xlu0 %4919
      %4921 = vrot.lane.b32.xlu0 %v4912, 104
      %v4922 = vpop.permute.xlu0 %4921
      %4923 = vrot.lane.b32.xlu0 %v4913, 104
      %v4924 = vpop.permute.xlu0 %4923
      %4925 = vrot.lane.b32.xlu0 %v4914, 104
      %v4926 = vpop.permute.xlu0 %4925
      %v4927 = vsel %vm1625, %v4920, %v4922
      %v4928 = vsel %vm1625, %v4922, %v4924
      %v4929 = vsel %vm1625, %v4924, %v4926
      %v4933 = vadd.f32 %v4904, %v4927
      %v4934 = vadd.f32 %v4905, %v4928
      %v4935 = vadd.f32 %v4906, %v4929
      %4936 = vset.pattern.permute.xlu0 23
      %4937 = vperm.xlu0 %4936, %v4251
      %v4938 = vpop.permute.xlu0 %4937
      %v4940 = vmul.f32 %v4938, %v4472
      %v4941 = vmul.f32 %v4938, %v4473
      %v4942 = vmul.f32 %v4938, %v4474
      %v4943 = vmul.f32 %v4938, %v4475
      %4948 = vrot.lane.b32.xlu0 %v4940, 104
      %v4949 = vpop.permute.xlu0 %4948
      %4950 = vrot.lane.b32.xlu0 %v4941, 104
      %v4951 = vpop.permute.xlu0 %4950
      %4952 = vrot.lane.b32.xlu0 %v4942, 104
      %v4953 = vpop.permute.xlu0 %4952
      %4954 = vrot.lane.b32.xlu0 %v4943, 104
      %v4955 = vpop.permute.xlu0 %4954
      %v4956 = vsel %vm1625, %v4949, %v4951
      %v4957 = vsel %vm1625, %v4951, %v4953
      %v4958 = vsel %vm1625, %v4953, %v4955
      %v4962 = vadd.f32 %v4933, %v4956
      %v4963 = vadd.f32 %v4934, %v4957
      %v4964 = vadd.f32 %v4935, %v4958
      %4965 = vset.pattern.permute.xlu0 24
      %4966 = vperm.xlu0 %4965, %v4251
      %v4967 = vpop.permute.xlu0 %4966
      %v4969 = vmul.f32 %v4967, %v4349
      %v4970 = vmul.f32 %v4967, %v4350
      %v4971 = vmul.f32 %v4967, %v4351
      %v4972 = vmul.f32 %v4967, %v4352
      %4977 = vrot.lane.b32.xlu0 %v4969, 84
      %v4978 = vpop.permute.xlu0 %4977
      %4979 = vrot.lane.b32.xlu0 %v4970, 84
      %v4980 = vpop.permute.xlu0 %4979
      %4981 = vrot.lane.b32.xlu0 %v4971, 84
      %v4982 = vpop.permute.xlu0 %4981
      %4983 = vrot.lane.b32.xlu0 %v4972, 84
      %v4984 = vpop.permute.xlu0 %4983
      %v4985 = vsel %vm2060, %v4978, %v4980
      %v4986 = vsel %vm2060, %v4980, %v4982
      %v4987 = vsel %vm2060, %v4982, %v4984
      %v4991 = vadd.f32 %v4962, %v4985
      %v4992 = vadd.f32 %v4963, %v4986
      %v4993 = vadd.f32 %v4964, %v4987
      %4994 = vset.pattern.permute.xlu0 25
      %4995 = vperm.xlu0 %4994, %v4251
      %v4996 = vpop.permute.xlu0 %4995
      %v4998 = vmul.f32 %v4996, %v4390
      %v4999 = vmul.f32 %v4996, %v4391
      %v5000 = vmul.f32 %v4996, %v4392
      %v5001 = vmul.f32 %v4996, %v4393
      %5006 = vrot.lane.b32.xlu0 %v4998, 84
      %v5007 = vpop.permute.xlu0 %5006
      %5008 = vrot.lane.b32.xlu0 %v4999, 84
      %v5009 = vpop.permute.xlu0 %5008
      %5010 = vrot.lane.b32.xlu0 %v5000, 84
      %v5011 = vpop.permute.xlu0 %5010
      %5012 = vrot.lane.b32.xlu0 %v5001, 84
      %v5013 = vpop.permute.xlu0 %5012
      %v5014 = vsel %vm2060, %v5007, %v5009
      %v5015 = vsel %vm2060, %v5009, %v5011
      %v5016 = vsel %vm2060, %v5011, %v5013
      %v5020 = vadd.f32 %v4991, %v5014
      %v5021 = vadd.f32 %v4992, %v5015
      %v5022 = vadd.f32 %v4993, %v5016
      %5023 = vset.pattern.permute.xlu0 26
      %5024 = vperm.xlu0 %5023, %v4251
      %v5025 = vpop.permute.xlu0 %5024
      %v5027 = vmul.f32 %v5025, %v4431
      %v5028 = vmul.f32 %v5025, %v4432
      %v5029 = vmul.f32 %v5025, %v4433
      %v5030 = vmul.f32 %v5025, %v4434
      %5035 = vrot.lane.b32.xlu0 %v5027, 84
      %v5036 = vpop.permute.xlu0 %5035
      %5037 = vrot.lane.b32.xlu0 %v5028, 84
      %v5038 = vpop.permute.xlu0 %5037
      %5039 = vrot.lane.b32.xlu0 %v5029, 84
      %v5040 = vpop.permute.xlu0 %5039
      %5041 = vrot.lane.b32.xlu0 %v5030, 84
      %v5042 = vpop.permute.xlu0 %5041
      %v5043 = vsel %vm2060, %v5036, %v5038
      %v5044 = vsel %vm2060, %v5038, %v5040
      %v5045 = vsel %vm2060, %v5040, %v5042
      %v5049 = vadd.f32 %v5020, %v5043
      %v5050 = vadd.f32 %v5021, %v5044
      %v5051 = vadd.f32 %v5022, %v5045
      %5052 = vset.pattern.permute.xlu0 27
      %5053 = vperm.xlu0 %5052, %v4251
      %v5054 = vpop.permute.xlu0 %5053
      %v5056 = vmul.f32 %v5054, %v4472
      %v5057 = vmul.f32 %v5054, %v4473
      %v5058 = vmul.f32 %v5054, %v4474
      %v5059 = vmul.f32 %v5054, %v4475
      %5064 = vrot.lane.b32.xlu0 %v5056, 84
      %v5065 = vpop.permute.xlu0 %5064
      %5066 = vrot.lane.b32.xlu0 %v5057, 84
      %v5067 = vpop.permute.xlu0 %5066
      %5068 = vrot.lane.b32.xlu0 %v5058, 84
      %v5069 = vpop.permute.xlu0 %5068
      %5070 = vrot.lane.b32.xlu0 %v5059, 84
      %v5071 = vpop.permute.xlu0 %5070
      %v5072 = vsel %vm2060, %v5065, %v5067
      %v5073 = vsel %vm2060, %v5067, %v5069
      %v5074 = vsel %vm2060, %v5069, %v5071
      %v5078 = vadd.f32 %v5049, %v5072
      %v5079 = vadd.f32 %v5050, %v5073
      %v5080 = vadd.f32 %v5051, %v5074
      %5081 = vset.pattern.permute.xlu0 28
      %5082 = vperm.xlu0 %5081, %v4251
      %v5083 = vpop.permute.xlu0 %5082
      %v5085 = vmul.f32 %v5083, %v4349
      %v5086 = vmul.f32 %v5083, %v4350
      %v5087 = vmul.f32 %v5083, %v4351
      %v5088 = vmul.f32 %v5083, %v4352
      %5093 = vrot.lane.b32.xlu0 %v5085, 83
      %v5094 = vpop.permute.xlu0 %5093
      %5095 = vrot.lane.b32.xlu0 %v5086, 83
      %v5096 = vpop.permute.xlu0 %5095
      %5097 = vrot.lane.b32.xlu0 %v5087, 83
      %v5098 = vpop.permute.xlu0 %5097
      %5099 = vrot.lane.b32.xlu0 %v5088, 83
      %v5100 = vpop.permute.xlu0 %5099
      %v5101 = vsel %vm2205, %v5094, %v5096
      %v5102 = vsel %vm2205, %v5096, %v5098
      %v5103 = vsel %vm2205, %v5098, %v5100
      %v5107 = vadd.f32 %v5078, %v5101
      %v5108 = vadd.f32 %v5079, %v5102
      %v5109 = vadd.f32 %v5080, %v5103
      %5110 = vset.pattern.permute.xlu0 29
      %5111 = vperm.xlu0 %5110, %v4251
      %v5112 = vpop.permute.xlu0 %5111
      %v5114 = vmul.f32 %v5112, %v4390
      %v5115 = vmul.f32 %v5112, %v4391
      %v5116 = vmul.f32 %v5112, %v4392
      %v5117 = vmul.f32 %v5112, %v4393
      %5122 = vrot.lane.b32.xlu0 %v5114, 83
      %v5123 = vpop.permute.xlu0 %5122
      %5124 = vrot.lane.b32.xlu0 %v5115, 83
      %v5125 = vpop.permute.xlu0 %5124
      %5126 = vrot.lane.b32.xlu0 %v5116, 83
      %v5127 = vpop.permute.xlu0 %5126
      %5128 = vrot.lane.b32.xlu0 %v5117, 83
      %v5129 = vpop.permute.xlu0 %5128
      %v5130 = vsel %vm2205, %v5123, %v5125
      %v5131 = vsel %vm2205, %v5125, %v5127
      %v5132 = vsel %vm2205, %v5127, %v5129
      %v5136 = vadd.f32 %v5107, %v5130
      %v5137 = vadd.f32 %v5108, %v5131
      %v5138 = vadd.f32 %v5109, %v5132
      %5139 = vset.pattern.permute.xlu0 30
      %5140 = vperm.xlu0 %5139, %v4251
      %v5141 = vpop.permute.xlu0 %5140
      %v5143 = vmul.f32 %v5141, %v4431
      %v5144 = vmul.f32 %v5141, %v4432
      %v5145 = vmul.f32 %v5141, %v4433
      %v5146 = vmul.f32 %v5141, %v4434
      %5151 = vrot.lane.b32.xlu0 %v5143, 83
      %v5152 = vpop.permute.xlu0 %5151
      %5153 = vrot.lane.b32.xlu0 %v5144, 83
      %v5154 = vpop.permute.xlu0 %5153
      %5155 = vrot.lane.b32.xlu0 %v5145, 83
      %v5156 = vpop.permute.xlu0 %5155
      %5157 = vrot.lane.b32.xlu0 %v5146, 83
      %v5158 = vpop.permute.xlu0 %5157
      %v5159 = vsel %vm2205, %v5152, %v5154
      %v5160 = vsel %vm2205, %v5154, %v5156
      %v5161 = vsel %vm2205, %v5156, %v5158
      %v5165 = vadd.f32 %v5136, %v5159
      %v5166 = vadd.f32 %v5137, %v5160
      %v5167 = vadd.f32 %v5138, %v5161
      %5168 = vset.pattern.permute.xlu0 31
      %5169 = vperm.xlu0 %5168, %v4251
      %v5170 = vpop.permute.xlu0 %5169
      %v5172 = vmul.f32 %v5170, %v4472
      %v5173 = vmul.f32 %v5170, %v4473
      %v5174 = vmul.f32 %v5170, %v4474
      %v5175 = vmul.f32 %v5170, %v4475
      %5180 = vrot.lane.b32.xlu0 %v5172, 83
      %v5181 = vpop.permute.xlu0 %5180
      %5182 = vrot.lane.b32.xlu0 %v5173, 83
      %v5183 = vpop.permute.xlu0 %5182
      %5184 = vrot.lane.b32.xlu0 %v5174, 83
      %v5185 = vpop.permute.xlu0 %5184
      %5186 = vrot.lane.b32.xlu0 %v5175, 83
      %v5187 = vpop.permute.xlu0 %5186
      %v5188 = vsel %vm2205, %v5181, %v5183
      %v5189 = vsel %vm2205, %v5183, %v5185
      %v5190 = vsel %vm2205, %v5185, %v5187
      %v5194 = vadd.f32 %v5165, %v5188
      %v5195 = vadd.f32 %v5166, %v5189
      %v5196 = vadd.f32 %v5167, %v5190
      %5197 = vset.pattern.permute.xlu0 32
      %5198 = vperm.xlu0 %5197, %v4251
      %v5199 = vpop.permute.xlu0 %5198
      %v5201 = vmul.f32 %v5199, %v4349
      %v5202 = vmul.f32 %v5199, %v4350
      %v5203 = vmul.f32 %v5199, %v4351
      %v5204 = vmul.f32 %v5199, %v4352
      %5209 = vrot.lane.b32.xlu0 %v5201, 82
      %v5210 = vpop.permute.xlu0 %5209
      %5211 = vrot.lane.b32.xlu0 %v5202, 82
      %v5212 = vpop.permute.xlu0 %5211
      %5213 = vrot.lane.b32.xlu0 %v5203, 82
      %v5214 = vpop.permute.xlu0 %5213
      %5215 = vrot.lane.b32.xlu0 %v5204, 82
      %v5216 = vpop.permute.xlu0 %5215
      %v5217 = vsel %vm2350, %v5210, %v5212
      %v5218 = vsel %vm2350, %v5212, %v5214
      %v5219 = vsel %vm2350, %v5214, %v5216
      %v5223 = vadd.f32 %v5194, %v5217
      %v5224 = vadd.f32 %v5195, %v5218
      %v5225 = vadd.f32 %v5196, %v5219
      %5226 = vset.pattern.permute.xlu0 33
      %5227 = vperm.xlu0 %5226, %v4251
      %v5228 = vpop.permute.xlu0 %5227
      %v5230 = vmul.f32 %v5228, %v4390
      %v5231 = vmul.f32 %v5228, %v4391
      %v5232 = vmul.f32 %v5228, %v4392
      %v5233 = vmul.f32 %v5228, %v4393
      %5238 = vrot.lane.b32.xlu0 %v5230, 82
      %v5239 = vpop.permute.xlu0 %5238
      %5240 = vrot.lane.b32.xlu0 %v5231, 82
      %v5241 = vpop.permute.xlu0 %5240
      %5242 = vrot.lane.b32.xlu0 %v5232, 82
      %v5243 = vpop.permute.xlu0 %5242
      %5244 = vrot.lane.b32.xlu0 %v5233, 82
      %v5245 = vpop.permute.xlu0 %5244
      %v5246 = vsel %vm2350, %v5239, %v5241
      %v5247 = vsel %vm2350, %v5241, %v5243
      %v5248 = vsel %vm2350, %v5243, %v5245
      %v5252 = vadd.f32 %v5223, %v5246
      %v5253 = vadd.f32 %v5224, %v5247
      %v5254 = vadd.f32 %v5225, %v5248
      %5255 = vset.pattern.permute.xlu0 34
      %5256 = vperm.xlu0 %5255, %v4251
      %v5257 = vpop.permute.xlu0 %5256
      %v5259 = vmul.f32 %v5257, %v4431
      %v5260 = vmul.f32 %v5257, %v4432
      %v5261 = vmul.f32 %v5257, %v4433
      %v5262 = vmul.f32 %v5257, %v4434
      %5267 = vrot.lane.b32.xlu0 %v5259, 82
      %v5268 = vpop.permute.xlu0 %5267
      %5269 = vrot.lane.b32.xlu0 %v5260, 82
      %v5270 = vpop.permute.xlu0 %5269
      %5271 = vrot.lane.b32.xlu0 %v5261, 82
      %v5272 = vpop.permute.xlu0 %5271
      %5273 = vrot.lane.b32.xlu0 %v5262, 82
      %v5274 = vpop.permute.xlu0 %5273
      %v5275 = vsel %vm2350, %v5268, %v5270
      %v5276 = vsel %vm2350, %v5270, %v5272
      %v5277 = vsel %vm2350, %v5272, %v5274
      %v5281 = vadd.f32 %v5252, %v5275
      %v5282 = vadd.f32 %v5253, %v5276
      %v5283 = vadd.f32 %v5254, %v5277
      %5284 = vset.pattern.permute.xlu0 35
      %5285 = vperm.xlu0 %5284, %v4251
      %v5286 = vpop.permute.xlu0 %5285
      %v5288 = vmul.f32 %v5286, %v4472
      %v5289 = vmul.f32 %v5286, %v4473
      %v5290 = vmul.f32 %v5286, %v4474
      %v5291 = vmul.f32 %v5286, %v4475
      %5296 = vrot.lane.b32.xlu0 %v5288, 82
      %v5297 = vpop.permute.xlu0 %5296
      %5298 = vrot.lane.b32.xlu0 %v5289, 82
      %v5299 = vpop.permute.xlu0 %5298
      %5300 = vrot.lane.b32.xlu0 %v5290, 82
      %v5301 = vpop.permute.xlu0 %5300
      %5302 = vrot.lane.b32.xlu0 %v5291, 82
      %v5303 = vpop.permute.xlu0 %5302
      %v5304 = vsel %vm2350, %v5297, %v5299
      %v5305 = vsel %vm2350, %v5299, %v5301
      %v5306 = vsel %vm2350, %v5301, %v5303
      %v5310 = vadd.f32 %v5281, %v5304
      %v5311 = vadd.f32 %v5282, %v5305
      %v5312 = vadd.f32 %v5283, %v5306
      %v5313 = vld [vmem:[%s6] sm:$0xf]
      %5315 = vset.pattern.permute.xlu0 0
      %5316 = vperm.xlu0 %5315, %v5313
      %v5317 = vpop.permute.xlu0 %5316
      %v5319 = vadd.f32 %v5310, %v5317
      %v5320 = vadd.f32 %v5311, %v5317
      %v5321 = vadd.f32 %v5312, %v5317
      %v5322 = vmax.f32 %v5319, 0.0
      %v5323 = vmax.f32 %v5320, 0.0
      %v5324 = vmax.f32 %v5321, 0.0
      %v5327 = vrot.slane %v5323, 4
      %v5328 = vsel %vm4244, %v5322, %v5327
      %5330 = vst [vmem:[%s325] sm:$0xff] %v5328
      %5331 = vst [vmem:[%s325 + $0x8] sm:$0xf] %v5324
      %p5332 = scmp.lt.s32.totalorder %s19, 1
      %s5333 = scalar_select %p5332, %s19, 1
      %s5334 = smul.addr %s5333, 3
      %s5335 = smul.addr %s5334, 4
      %s5336 = scalar_lea.vmem %s8, %s5335
      // Predicated region
      $region53: #{up_forward.3} parent=51 // pred_check
        %p5337 = pneg %p215
      $region54: #{up_forward.3} parent=51 // pred_check_branch
        %5339 = sbr.rel (%p5337) target = $region56
      $region55: #{up_forward.3} parent=51 // pred_region
        _
      $region56: #{up_forward.3} parent=51 // pred_fallthru
        _
    $region52: #{up_forward.3} parent=5 // pred_fallthru
      _
    %p5340 = scmp.le.s32.totalorder 2, %s14
    // Predicated region
    $region57: #{up_forward.3} parent=5 // pred_check
      %p5341 = pneg %p5340
    $region58: #{up_forward.3} parent=5 // pred_check_branch
      %5343 = sbr.rel (%p5341) target = $region60
    $region59: #{up_forward.3} parent=5 // pred_region
      %s5344 = ssub.s32 %s14, 2
      // Predicated region
      $region61: #{up_forward.3} parent=59 // pred_check
        %p5345 = pneg %p221
      $region62: #{up_forward.3} parent=59 // pred_check_branch
        %5347 = sbr.rel (%p5345) target = $region64
      $region63: #{up_forward.3} parent=59 // pred_region
        %p5348 = scmp.lt.s32.totalorder %s20, 1
        %s5349 = scalar_select %p5348, %s20, 1
        %s5350 = smul.addr %s5349, 3
        %s5351 = smul.addr %s5350, 4
        %s5352 = scalar_lea.vmem %s8, %s5351
      $region64: #{up_forward.3} parent=59 // pred_fallthru
        _
    $region60: #{up_forward.3} parent=5 // pred_fallthru
      _
  $region6: #{up_forward.3} parent=0 // loop_footer
    %s18 = sadd.s32 1, %s14
  $region7: #{up_forward.3} parent=0 // loop_footer_branch
    %13 = sbr.rel target = $region3
  $region8: #{up_forward.3} parent=0 // loop_exit
    _

</llo_original>
